<compile_context>
chip_gen: v7x
topology: tpu7x:2x2x1
jax: 0.10.0
libtpu: 0.0.40
codegen_flags: <defaults>
</compile_context>

<pallas_src>
from functools import partial

import numpy as np
import jax
import jax.numpy as jnp
from jax.experimental import pallas as pl
from jax.experimental.pallas import tpu as pltpu


ACT_DTYPE = jnp.bfloat16                    # inter-kernel activation dtype
VMEM_LIMIT_BYTES = 48 * 1024 * 1024         # fits v5e/v6e (128 MiB) and v7x (64 MiB) w/ headroom


def _cp(n_parallel, n_arbitrary=0):
    """CompilerParams with explicit dimension semantics + VMEM budget."""
    sem = ("parallel",) * n_parallel + ("arbitrary",) * n_arbitrary
    return pltpu.CompilerParams(dimension_semantics=sem,
                                vmem_limit_bytes=VMEM_LIMIT_BYTES)


def _const(shape):
    """BlockSpec for a grid-invariant operand: constant index_map, single-buffered."""
    nd = len(shape)
    idx = lambda i: (0,) * nd
    try:
        return pl.BlockSpec(shape, idx, pipeline_mode=pl.Buffered(1))
    except Exception:       # pragma: no cover — older jax without pipeline_mode kwarg
        return pl.BlockSpec(shape, idx)


def _row_block(m, target=512):
    """(row_tile, padded_rows): full block if small, else an 8-aligned tile of padded rows."""
    if m <= target:
        return m, m                          # single full block -> no divisibility constraint
    tm = target - (target % 8)
    mp = ((m + tm - 1) // tm) * tm
    return tm, mp


def _pad_rows(x, mp):
    m = x.shape[0]
    if mp == m:
        return x
    pad = jnp.zeros((mp - m,) + x.shape[1:], x.dtype)
    return jnp.concatenate([x, pad], axis=0)


def _pick_windows(batch, n_win, n_tok, target_rows=256):
    """Windows per attention grid step: 8-aligned rows, aligned to image boundaries."""
    total = batch * n_win
    cands = []
    for wt in range(1, total + 1):
        if total % wt:
            continue
        if (n_win % wt != 0) and (wt % n_win != 0):
            continue
        rows = wt * n_tok
        if rows % 8 != 0 and rows != total * n_tok:
            continue
        cands.append(wt)
    pick = None
    for wt in cands:                          # prefer per-image tiles under the row target
        if wt <= n_win and wt * n_tok <= target_rows:
            pick = wt if pick is None else max(pick, wt)
    if pick is None:
        for wt in cands:
            if wt * n_tok <= target_rows:
                pick = wt if pick is None else max(pick, wt)
    if pick is None:
        pick = min(cands)
    return pick


# --------------------------- in-kernel math helpers ---------------------------

def _ln(x, g, b, eps=1e-5):
    mean = jnp.mean(x, axis=-1, keepdims=True)
    var = jnp.mean((x - mean) ** 2, axis=-1, keepdims=True)
    return (x - mean) * jax.lax.rsqrt(var + eps) * g + b


def _erf(x):
    # Abramowitz & Stegun 7.1.26 rational approximation, |err| <= 1.5e-7 (~f32 eps);
    # uses only exp + VPU arithmetic (guaranteed Mosaic lowerings).
    a1, a2, a3, a4, a5 = 0.254829592, -0.284496736, 1.421413741, -1.453152027, 1.061405429
    pp = 0.3275911
    z = jnp.abs(x)
    t = 1.0 / (1.0 + pp * z)
    poly = ((((a5 * t + a4) * t + a3) * t + a2) * t + a1) * t
    y = 1.0 - poly * jnp.exp(-z * z)
    return jnp.where(x >= 0, y, -y)


def _gelu_exact(x):
    # nn.GELU default (erf form): 0.5 * x * (1 + erf(x / sqrt(2)))
    return 0.5 * x * (1.0 + _erf(x * 0.7071067811865476))


# ------------------------------- Pallas kernels -------------------------------

def _embed_kernel(x_ref, w_ref, b_ref, g_ref, beta_ref, o_ref):
    """Patch-embed: (patch-flattened pixels) @ W + b  ->  LayerNorm."""
    h = jnp.dot(x_ref[...], w_ref[...], preferred_element_type=jnp.float32) + b_ref[...]
    o_ref[...] = _ln(h, g_ref[...], beta_ref[...]).astype(o_ref.dtype)


def _attn_block_kernel(x_ref, g_ref, beta_ref, wqkv_ref, bqkv_ref, wproj_ref, bproj_ref,
                       relb_ref, *rest, heads, wt, win_n, scale, has_mask):
    """Fused: LN -> QKV -> windowed MHSA (+rel-bias/+shift-mask) -> proj -> residual.

    x_ref:     [wt*N, C]  rows of `wt` windows (token-minor), already rolled/partitioned
    relb_ref:  [heads, N, N]   resident relative-position bias
    mask_ref:  [wt, N, N]      per-window shift mask (only when has_mask)
    """
    if has_mask:
        mask_ref, o_ref = rest
    else:
        mask_ref = None
        (o_ref,) = rest

    x = x_ref[...].astype(jnp.float32)                       # [M, C], M = wt * N
    m_rows, c_dim = x.shape
    d = c_dim // heads

    h = _ln(x, g_ref[...], beta_ref[...])
    qkv = jnp.dot(h.astype(jnp.bfloat16), wqkv_ref[...],
                  preferred_element_type=jnp.float32) + bqkv_ref[...]     # [M, 3C]

    # Head-batched layout [heads*wt, N, d].
    # TODO(synk): per-head extraction is a sub-128-lane slice; lane-aligned layout needs
    #             C padded to 128 per head (see lane-density TODO above).
    def heads_of(base):
        parts = [qkv[:, base + hh * d: base + (hh + 1) * d].reshape(wt, win_n, d)
                 for hh in range(heads)]
        return jnp.stack(parts, axis=0).reshape(heads * wt, win_n, d)

    q = heads_of(0) * scale
    k = heads_of(c_dim)
    v = heads_of(2 * c_dim)

    s = jnp.einsum('bnd,bmd->bnm', q.astype(jnp.bfloat16), k.astype(jnp.bfloat16),
                   preferred_element_type=jnp.float32)                    # [heads*wt, N, N]
    s = s.reshape(heads, wt, win_n, win_n) + relb_ref[...][:, None, :, :]
    if has_mask:
        s = s + mask_ref[...][None, :, :, :]
    s = s - jnp.max(s, axis=-1, keepdims=True)
    p = jnp.exp(s)
    p = p * pl.reciprocal(jnp.sum(p, axis=-1, keepdims=True), approx=True)
    p = p.reshape(heads * wt, win_n, win_n)

    o = jnp.einsum('bnm,bmd->bnd', p.astype(jnp.bfloat16), v.astype(jnp.bfloat16),
                   preferred_element_type=jnp.float32)                    # [heads*wt, N, d]
    o = o.reshape(heads, m_rows, d)

    # concat_heads(o) @ Wproj == sum_h o[h] @ Wproj[h]  (batched einsum + reduce over heads)
    out = jnp.einsum('hmd,hdc->hmc', o.astype(jnp.bfloat16), wproj_ref[...],
                     preferred_element_type=jnp.float32)
    out = jnp.sum(out, axis=0) + bproj_ref[...]
    o_ref[...] = (x + out).astype(o_ref.dtype)


def _mlp_block_kernel(x_ref, g_ref, beta_ref, w1_ref, b1_ref, w2_ref, b2_ref, o_ref):
    """Fused: LN -> fc1 -> GELU -> fc2 -> residual."""
    x = x_ref[...].astype(jnp.float32)
    h = _ln(x, g_ref[...], beta_ref[...])
    h = jnp.dot(h.astype(jnp.bfloat16), w1_ref[...],
                preferred_element_type=jnp.float32) + b1_ref[...]
    h = _gelu_exact(h)
    h = jnp.dot(h.astype(jnp.bfloat16), w2_ref[...],
                preferred_element_type=jnp.float32) + b2_ref[...]
    o_ref[...] = (x + h).astype(o_ref.dtype)


def _merge_kernel(x_ref, g_ref, beta_ref, w_ref, o_ref):
    """PatchMerging: LN(4C) -> Linear(4C, 2C, bias=False)."""
    x = x_ref[...].astype(jnp.float32)
    h = _ln(x, g_ref[...], beta_ref[...])
    o_ref[...] = jnp.dot(h.astype(jnp.bfloat16), w_ref[...],
                         preferred_element_type=jnp.float32).astype(o_ref.dtype)


def _head_kernel(x_ref, g_ref, beta_ref, w_ref, b_ref, o_ref):
    """Fused: LN -> global average pool over tokens -> classifier Linear."""
    x = x_ref[...].astype(jnp.float32)               # [B, HW, C]
    h = _ln(x, g_ref[...], beta_ref[...])
    pooled = jnp.mean(h, axis=1)                     # [B, C]
    o_ref[...] = (jnp.dot(pooled.astype(jnp.bfloat16), w_ref[...],
                          preferred_element_type=jnp.float32) + b_ref[...]).astype(o_ref.dtype)


# ------------------------------- glue (JAX/numpy) -------------------------------

def window_partition(x, ws):
    B, H, W, C = x.shape
    x = x.reshape(B, H // ws, ws, W // ws, ws, C)
    return x.transpose(0, 1, 3, 2, 4, 5).reshape(B * (H // ws) * (W // ws), ws * ws, C)


def window_reverse(x, ws, B, H, W, C):
    x = x.reshape(B, H // ws, W // ws, ws, ws, C)
    return x.transpose(0, 1, 3, 2, 4, 5).reshape(B, H, W, C)


def rel_pos_index(ws):
    coords = np.stack(np.meshgrid(np.arange(ws), np.arange(ws), indexing='ij'))
    cf = coords.reshape(2, -1)
    rel = (cf[:, :, None] - cf[:, None, :]).transpose(1, 2, 0).astype(np.int64)
    rel[:, :, 0] += ws - 1
    rel[:, :, 1] += ws - 1
    rel[:, :, 0] *= 2 * ws - 1
    return rel.sum(-1)  # [N, N]


def get_rel_bias(table, ws, heads):
    idx = rel_pos_index(ws)
    N = ws * ws
    bias = jnp.asarray(table)[idx.reshape(-1)]            # [N*N, heads]
    return bias.reshape(N, N, heads).transpose(2, 0, 1)   # [heads, N, N]


def make_attn_mask(H, W, ws, shift):
    """Region-label shift mask; handles a zero shift on a single axis correctly."""
    img = np.zeros((H, W), np.float32)

    def axis_slices(L, s):
        if s == 0:
            return ((0, L),)
        return ((0, L - ws), (L - ws, L - s), (L - s, L))

    cnt = 0
    for h0, h1 in axis_slices(H, shift[0]):
        for w0, w1 in axis_slices(W, shift[1]):
            img[h0:h1, w0:w1] = cnt
            cnt += 1
    img = img.reshape(H // ws, ws, W // ws, ws).transpose(0, 2, 1, 3).reshape(-1, ws * ws)
    mask = img[:, None, :] - img[:, :, None]
    mask = np.where(mask != 0, -100.0, 0.0).astype(np.float32)
    return jnp.asarray(mask)  # [nW, N, N]


# ------------------------------- model stages -------------------------------

def patch_embed(x, p, patch, embed_dim):
    # x: [B, Cin, H, W] (NCHW); conv(k=patch, s=patch) == patch flatten + matmul.
    B, Cin, H, W = x.shape
    x = x.transpose(0, 2, 3, 1)
    x = x.reshape(B, H // patch, patch, W // patch, patch, Cin)
    x = x.transpose(0, 1, 3, 2, 4, 5).reshape(B * (H // patch) * (W // patch),
                                              patch * patch * Cin)
    x = x.astype(ACT_DTYPE)
    M, K = x.shape
    tm, Mp = _row_block(M)
    xp = _pad_rows(x, Mp)
    out = pl.pallas_call(
        _embed_kernel,
        out_shape=jax.ShapeDtypeStruct((Mp, embed_dim), ACT_DTYPE),
        grid=(Mp // tm,),
        in_specs=[
            pl.BlockSpec((tm, K), lambda i: (i, 0)),
            _const((K, embed_dim)),
            _const((1, embed_dim)),
            _const((1, embed_dim)),
            _const((1, embed_dim)),
        ],
        out_specs=pl.BlockSpec((tm, embed_dim), lambda i: (i, 0)),
        compiler_params=_cp(1),
    )(xp, p['w'], p['b'], p['ln_g'], p['ln_b'])
    return out[:M].reshape(B, H // patch, W // patch, embed_dim)


def shifted_window_attn_block(x, p, num_heads, ws, shift_size):
    """x -> x + W-MSA(LN(x)), one pallas_call gridded over window tiles."""
    B, H, W, C = x.shape
    shift = list(shift_size)
    if ws >= H:
        shift[0] = 0
    if ws >= W:
        shift[1] = 0
    shifted = (shift[0] > 0) or (shift[1] > 0)

    if shifted:
        x = jnp.roll(x, shift=(-shift[0], -shift[1]), axis=(1, 2))

    nW = (H // ws) * (W // ws)
    N = ws * ws
    xw = window_partition(x, ws).reshape(B * nW * N, C)              # [B*nW*N, C] bf16
    wt = _pick_windows(B, nW, N)
    grid = ((B * nW) // wt,)
    d = C // num_heads

    in_specs = [
        pl.BlockSpec((wt * N, C), lambda g: (g, 0)),                 # window-tile rows
        _const((1, C)), _const((1, C)),                              # norm1 gamma/beta
        _const((C, 3 * C)), _const((1, 3 * C)),                      # qkv weight/bias
        _const((num_heads, d, C)), _const((1, C)),                   # proj weight/bias
        _const((num_heads, N, N)),                                   # rel-pos bias
    ]
    operands = [xw, p['norm1_g'], p['norm1_b'], p['qkv_w'], p['qkv_b'],
                p['proj_w'], p['proj_b'], p['rel_bias']]
    if shifted:
        mask = make_attn_mask(H, W, ws, shift)                       # [nW, N, N] f32
        if wt <= nW:
            per = nW // wt
            in_specs.append(pl.BlockSpec((wt, N, N), lambda g: (g % per, 0, 0)))
            operands.append(mask)
        else:
            in_specs.append(_const((wt, N, N)))
            operands.append(jnp.tile(mask, (wt // nW, 1, 1)))

    kern = partial(_attn_block_kernel, heads=num_heads, wt=wt, win_n=N,
                   scale=d ** -0.5, has_mask=shifted)
    out = pl.pallas_call(
        kern,
        out_shape=jax.ShapeDtypeStruct((B * nW * N, C), ACT_DTYPE),
        grid=grid,
        in_specs=in_specs,
        out_specs=pl.BlockSpec((wt * N, C), lambda g: (g, 0)),
        compiler_params=_cp(1),
    )(*operands)

    x = window_reverse(out.reshape(B * nW, N, C), ws, B, H, W, C)
    if shifted:
        x = jnp.roll(x, shift=(shift[0], shift[1]), axis=(1, 2))
    return x


def mlp_block(x, p):
    """x -> x + MLP(LN(x)), one pallas_call gridded over row tiles."""
    B, H, W, C = x.shape
    M = B * H * W
    hidden = p['fc1_b'].shape[-1]
    tm, Mp = _row_block(M)
    xp = _pad_rows(x.reshape(M, C), Mp)
    out = pl.pallas_call(
        _mlp_block_kernel,
        out_shape=jax.ShapeDtypeStruct((Mp, C), ACT_DTYPE),
        grid=(Mp // tm,),
        in_specs=[
            pl.BlockSpec((tm, C), lambda i: (i, 0)),
            _const((1, C)), _const((1, C)),
            _const((C, hidden)), _const((1, hidden)),
            _const((hidden, C)), _const((1, C)),
        ],
        out_specs=pl.BlockSpec((tm, C), lambda i: (i, 0)),
        compiler_params=_cp(1),
    )(xp, p['norm2_g'], p['norm2_b'], p['fc1_w'], p['fc1_b'], p['fc2_w'], p['fc2_b'])
    return out[:M].reshape(B, H, W, C)


def patch_merging(x, p):
    B, H, W, C = x.shape
    x0 = x[:, 0::2, 0::2, :]
    x1 = x[:, 1::2, 0::2, :]
    x2 = x[:, 0::2, 1::2, :]
    x3 = x[:, 1::2, 1::2, :]
    xc = jnp.concatenate([x0, x1, x2, x3], axis=-1)        # [B, H/2, W/2, 4C] bf16
    Bn, Hn, Wn, C4 = xc.shape
    M = Bn * Hn * Wn
    tm, Mp = _row_block(M)
    xp = _pad_rows(xc.reshape(M, C4), Mp)
    out = pl.pallas_call(
        _merge_kernel,
        out_shape=jax.ShapeDtypeStruct((Mp, 2 * C), ACT_DTYPE),
        grid=(Mp // tm,),
        in_specs=[
            pl.BlockSpec((tm, C4), lambda i: (i, 0)),
            _const((1, C4)), _const((1, C4)),
            _const((C4, 2 * C)),
        ],
        out_specs=pl.BlockSpec((tm, 2 * C), lambda i: (i, 0)),
        compiler_params=_cp(1),
    )(xp, p['norm_g'], p['norm_b'], p['red_w'])
    return out[:M].reshape(Bn, Hn, Wn, 2 * C)


def final_head(x, params):
    B, H, W, C = x.shape
    HW = H * W
    ncls = params['head_b'].shape[-1]
    out = pl.pallas_call(
        _head_kernel,
        out_shape=jax.ShapeDtypeStruct((B, ncls), jnp.float32),
        grid=(1,),
        in_specs=[
            pl.BlockSpec((B, HW, C), lambda i: (0, 0, 0)),
            _const((1, C)), _const((1, C)),
            _const((C, ncls)), _const((1, ncls)),
        ],
        out_specs=pl.BlockSpec((B, ncls), lambda i: (0, 0)),
        compiler_params=_cp(1),
    )(x.reshape(B, HW, C), params['norm_g'], params['norm_b'],
      params['head_w'], params['head_b'])
    return out


def swin_forward(x, params, cfg):
    x = patch_embed(x, params['patch_embed'], cfg['patch'], cfg['embed_dim'])
    ws = cfg['window']
    for i, depth in enumerate(cfg['depths']):
        heads = cfg['heads'][i]
        for bidx in range(depth):
            shift = (0, 0) if bidx % 2 == 0 else (ws // 2, ws // 2)
            bp = params['stages'][i]['blocks'][bidx]
            x = shifted_window_attn_block(x, bp, heads, ws, shift)
            x = mlp_block(x, bp)
        if i < len(cfg['depths']) - 1:
            x = patch_merging(x, params['stages'][i]['merge'])
    return final_head(x, params)


# ------------------------------- parameters -------------------------------

def init_params(key, cfg, num_classes):
    """Synthetic weights in torch layout ([out, in] linears, [O,Cin,kh,kw] conv)."""
    cnt = [0]

    def nxt():
        cnt[0] += 1
        return jax.random.fold_in(key, cnt[0])

    def w(shape, std=0.02):
        return std * jax.random.normal(nxt(), shape, jnp.float32)

    def zeros(shape):
        return jnp.zeros(shape, jnp.float32)

    def ones(shape):
        return jnp.ones(shape, jnp.float32)

    ed, patch, ws = cfg['embed_dim'], cfg['patch'], cfg['window']
    mlp_ratio = cfg['mlp_ratio']
    params = {
        'patch_embed': {
            'w': w((ed, 3, patch, patch)),
            'b': zeros((ed,)),
            'ln_g': ones((ed,)),
            'ln_b': zeros((ed,)),
        },
        'stages': [],
    }

    dim = ed
    for i, depth in enumerate(cfg['depths']):
        heads = cfg['heads'][i]
        blocks = []
        for _ in range(depth):
            mlp = int(dim * mlp_ratio)
            blocks.append({
                'norm1_g': ones((dim,)), 'norm1_b': zeros((dim,)),
                'qkv_w': w((3 * dim, dim)), 'qkv_b': zeros((3 * dim,)),
                'rel_table': w(((2 * ws - 1) ** 2, heads)),
                'proj_w': w((dim, dim)), 'proj_b': zeros((dim,)),
                'norm2_g': ones((dim,)), 'norm2_b': zeros((dim,)),
                'fc1_w': w((mlp, dim)), 'fc1_b': zeros((mlp,)),
                'fc2_w': w((dim, mlp)), 'fc2_b': zeros((dim,)),
            })
        stage = {'blocks': blocks}
        if i < len(cfg['depths']) - 1:
            stage['merge'] = {
                'norm_g': ones((4 * dim,)), 'norm_b': zeros((4 * dim,)),
                'red_w': w((2 * dim, 4 * dim)),
            }
            dim *= 2
        params['stages'].append(stage)

    params['norm_g'] = ones((dim,))
    params['norm_b'] = zeros((dim,))
    params['head_w'] = w((num_classes, dim))
    params['head_b'] = zeros((num_classes,))
    return params


def prepare_params(params, cfg):
    """One-time conversion to kernel-ready layouts/dtypes (transposes, bf16 casts,
    per-head projection split, relative-position-bias gather) outside the forward path."""
    ed, patch, ws = cfg['embed_dim'], cfg['patch'], cfg['window']
    pe = params['patch_embed']
    out = {
        'patch_embed': {
            'w': pe['w'].transpose(2, 3, 1, 0).reshape(patch * patch * 3, ed).astype(jnp.bfloat16),
            'b': pe['b'].reshape(1, ed).astype(jnp.float32),
            'ln_g': pe['ln_g'].reshape(1, ed).astype(jnp.float32),
            'ln_b': pe['ln_b'].reshape(1, ed).astype(jnp.float32),
        },
        'stages': [],
    }
    dim = ed
    for i, depth in enumerate(cfg['depths']):
        heads = cfg['heads'][i]
        d = dim // heads
        blocks = []
        for bidx in range(depth):
            p = params['stages'][i]['blocks'][bidx]
            hidden = p['fc1_b'].shape[0]
            blocks.append({
                'norm1_g': p['norm1_g'].reshape(1, dim).astype(jnp.float32),
                'norm1_b': p['norm1_b'].reshape(1, dim).astype(jnp.float32),
                'qkv_w': p['qkv_w'].T.astype(jnp.bfloat16),                     # [C, 3C]
                'qkv_b': p['qkv_b'].reshape(1, 3 * dim).astype(jnp.float32),
                'proj_w': p['proj_w'].T.reshape(heads, d, dim).astype(jnp.bfloat16),
                'proj_b': p['proj_b'].reshape(1, dim).astype(jnp.float32),
                'rel_bias': get_rel_bias(p['rel_table'], ws, heads).astype(jnp.float32),
                'norm2_g': p['norm2_g'].reshape(1, dim).astype(jnp.float32),
                'norm2_b': p['norm2_b'].reshape(1, dim).astype(jnp.float32),
                'fc1_w': p['fc1_w'].T.astype(jnp.bfloat16),                     # [C, hidden]
                'fc1_b': p['fc1_b'].reshape(1, hidden).astype(jnp.float32),
                'fc2_w': p['fc2_w'].T.astype(jnp.bfloat16),                     # [hidden, C]
                'fc2_b': p['fc2_b'].reshape(1, dim).astype(jnp.float32),
            })
        stage = {'blocks': blocks}
        if i < len(cfg['depths']) - 1:
            m = params['stages'][i]['merge']
            stage['merge'] = {
                'norm_g': m['norm_g'].reshape(1, 4 * dim).astype(jnp.float32),
                'norm_b': m['norm_b'].reshape(1, 4 * dim).astype(jnp.float32),
                'red_w': m['red_w'].T.astype(jnp.bfloat16),                     # [4C, 2C]
            }
            dim *= 2
        out['stages'].append(stage)
    out['norm_g'] = params['norm_g'].reshape(1, dim).astype(jnp.float32)
    out['norm_b'] = params['norm_b'].reshape(1, dim).astype(jnp.float32)
    out['head_w'] = params['head_w'].T.astype(jnp.bfloat16)                     # [C, ncls]
    out['head_b'] = params['head_b'].reshape(1, -1).astype(jnp.float32)
    return out


# ---------------------------------- main -----------------------------------

if __name__ == "__main__":
    # Tiny Swin-T-style config (same topology, scaled-down dims for a small test).
    cfg = dict(patch=4, embed_dim=16, depths=(2, 2), heads=(2, 4), window=2, mlp_ratio=4.0)
    num_classes = 5

    key = jax.random.PRNGKey(0)
    raw_params = init_params(key, cfg, num_classes)
    params = prepare_params(raw_params, cfg)          # kernel-ready layouts, done once
    x = jax.random.normal(jax.random.fold_in(key, 12345), (2, 3, 16, 16), jnp.float32)

    fwd = jax.jit(lambda inp: swin_forward(inp, params, cfg))
    out = fwd(x)
    jax.block_until_ready(out)
    assert out.shape == (2, num_classes), out.shape
    assert jnp.all(jnp.isfinite(out))
    print("KERNEL_OK")
</pallas_src>

<mosaic_0001>
module attributes {stable_mosaic.version = 11 : i64} {
  func.func @_embed_kernel(%arg0: i32, %arg1: memref<32x48xbf16, #tpu.memory_space<vmem>>, %arg2: memref<48x16xbf16, #tpu.memory_space<vmem>>, %arg3: memref<1x16xf32, #tpu.memory_space<vmem>>, %arg4: memref<1x16xf32, #tpu.memory_space<vmem>>, %arg5: memref<1x16xf32, #tpu.memory_space<vmem>>, %arg6: memref<32x16xbf16, #tpu.memory_space<vmem>>) attributes {dimension_semantics = [#tpu.dimension_semantics<parallel>], iteration_bounds = array<i64: 1>, scalar_prefetch = 0 : i64, scratch_operands = 0 : i64, tpu.core_type = #tpu.core_type<tc>, window_params = [{transform_indices = @transform_0, window_bounds = array<i64: 32, 48>}, {pipeline_mode = #tpu.pipeline_mode<synchronous>, transform_indices = @transform_1, window_bounds = array<i64: 48, 16>}, {pipeline_mode = #tpu.pipeline_mode<synchronous>, transform_indices = @transform_2, window_bounds = array<i64: 1, 16>}, {pipeline_mode = #tpu.pipeline_mode<synchronous>, transform_indices = @transform_3, window_bounds = array<i64: 1, 16>}, {pipeline_mode = #tpu.pipeline_mode<synchronous>, transform_indices = @transform_4, window_bounds = array<i64: 1, 16>}, {transform_indices = @transform_5, window_bounds = array<i64: 32, 16>}]} {
    %c0 = arith.constant 0 : index
    %c0_0 = arith.constant 0 : index
    %0 = vector.load %arg1[%c0, %c0_0] : memref<32x48xbf16, #tpu.memory_space<vmem>>, vector<32x48xbf16>
    %c0_1 = arith.constant 0 : index
    %c0_2 = arith.constant 0 : index
    %1 = vector.load %arg2[%c0_1, %c0_2] : memref<48x16xbf16, #tpu.memory_space<vmem>>, vector<48x16xbf16>
    %cst = arith.constant dense<0.000000e+00> : vector<32x16xf32>
    %2 = tpu.matmul %0, %1, %cst {dimension_numbers = #tpu.dot_dimension_numbers<[1], [0], [0], [1], [0, 0, 1, 1], [], []>} : vector<32x48xbf16>, vector<48x16xbf16>, vector<32x16xf32> -> vector<32x16xf32>
    %c0_3 = arith.constant 0 : index
    %c0_4 = arith.constant 0 : index
    %3 = vector.load %arg3[%c0_3, %c0_4] : memref<1x16xf32, #tpu.memory_space<vmem>>, vector<1x16xf32>
    %4 = vector.broadcast %3 : vector<1x16xf32> to vector<32x16xf32>
    %5 = arith.addf %2, %4 : vector<32x16xf32>
    %c0_5 = arith.constant 0 : index
    %c0_6 = arith.constant 0 : index
    %6 = vector.load %arg4[%c0_5, %c0_6] : memref<1x16xf32, #tpu.memory_space<vmem>>, vector<1x16xf32>
    %c0_7 = arith.constant 0 : index
    %c0_8 = arith.constant 0 : index
    %7 = vector.load %arg5[%c0_7, %c0_8] : memref<1x16xf32, #tpu.memory_space<vmem>>, vector<1x16xf32>
    %cst_9 = arith.constant dense<0.000000e+00> : vector<32xf32>
    %8 = vector.multi_reduction <add>, %5, %cst_9 [1] : vector<32x16xf32> to vector<32xf32>
    %9 = vector.shape_cast %8 : vector<32xf32> to vector<32x1xf32>
    %cst_10 = arith.constant 1.600000e+01 : f32
    %10 = vector.broadcast %cst_10 : f32 to vector<32x1xf32>
    %11 = arith.divf %9, %10 : vector<32x1xf32>
    %12 = vector.broadcast %11 : vector<32x1xf32> to vector<32x16xf32>
    %13 = arith.subf %5, %12 : vector<32x16xf32>
    %14 = arith.mulf %13, %13 : vector<32x16xf32>
    %cst_11 = arith.constant dense<0.000000e+00> : vector<32xf32>
    %15 = vector.multi_reduction <add>, %14, %cst_11 [1] : vector<32x16xf32> to vector<32xf32>
    %16 = vector.shape_cast %15 : vector<32xf32> to vector<32x1xf32>
    %cst_12 = arith.constant 1.600000e+01 : f32
    %17 = vector.broadcast %cst_12 : f32 to vector<32x1xf32>
    %18 = arith.divf %16, %17 : vector<32x1xf32>
    %19 = vector.broadcast %11 : vector<32x1xf32> to vector<32x16xf32>
    %20 = arith.subf %5, %19 : vector<32x16xf32>
    %cst_13 = arith.constant 9.99999974E-6 : f32
    %21 = vector.broadcast %cst_13 : f32 to vector<32x1xf32>
    %22 = arith.addf %18, %21 : vector<32x1xf32>
    %23 = math.rsqrt %22 : vector<32x1xf32>
    %24 = vector.broadcast %23 : vector<32x1xf32> to vector<32x16xf32>
    %25 = arith.mulf %20, %24 : vector<32x16xf32>
    %26 = vector.broadcast %6 : vector<1x16xf32> to vector<32x16xf32>
    %27 = arith.mulf %25, %26 : vector<32x16xf32>
    %28 = vector.broadcast %7 : vector<1x16xf32> to vector<32x16xf32>
    %29 = arith.addf %27, %28 : vector<32x16xf32>
    %30 = arith.truncf %29 : vector<32x16xf32> to vector<32x16xbf16>
    %c0_14 = arith.constant 0 : index
    %c0_15 = arith.constant 0 : index
    %31 = vector.load %arg6[%c0_14, %c0_15] : memref<32x16xbf16, #tpu.memory_space<vmem>>, vector<32x16xbf16>
    tpu.vector_store %arg6[%c0_14, %c0_15], %30 {strides = array<i32>} : memref<32x16xbf16, #tpu.memory_space<vmem>>, vector<32x16xbf16>,
    return
  }
  func.func @transform_0(%arg0: i32) -> (i32, i32) {
    %c0_i32 = arith.constant 0 : i32
    %c0_i32_0 = arith.constant 0 : i32
    return %arg0, %c0_i32 : i32, i32
  }
  func.func @transform_1(%arg0: i32) -> (i32, i32) {
    %c0_i32 = arith.constant 0 : i32
    %c0_i32_0 = arith.constant 0 : i32
    %c0_i32_1 = arith.constant 0 : i32
    return %c0_i32, %c0_i32_0 : i32, i32
  }
  func.func @transform_2(%arg0: i32) -> (i32, i32) {
    %c0_i32 = arith.constant 0 : i32
    %c0_i32_0 = arith.constant 0 : i32
    %c0_i32_1 = arith.constant 0 : i32
    return %c0_i32, %c0_i32_0 : i32, i32
  }
  func.func @transform_3(%arg0: i32) -> (i32, i32) {
    %c0_i32 = arith.constant 0 : i32
    %c0_i32_0 = arith.constant 0 : i32
    %c0_i32_1 = arith.constant 0 : i32
    return %c0_i32, %c0_i32_0 : i32, i32
  }
  func.func @transform_4(%arg0: i32) -> (i32, i32) {
    %c0_i32 = arith.constant 0 : i32
    %c0_i32_0 = arith.constant 0 : i32
    %c0_i32_1 = arith.constant 0 : i32
    return %c0_i32, %c0_i32_0 : i32, i32
  }
  func.func @transform_5(%arg0: i32) -> (i32, i32) {
    %c0_i32 = arith.constant 0 : i32
    %c0_i32_0 = arith.constant 0 : i32
    return %arg0, %c0_i32 : i32, i32
  }
}

module attributes {stable_mosaic.version = 11 : i64} {
  func.func @_attn_block_kernel(%arg0: i32, %arg1: memref<16x16xbf16, #tpu.memory_space<vmem>>, %arg2: memref<1x16xf32, #tpu.memory_space<vmem>>, %arg3: memref<1x16xf32, #tpu.memory_space<vmem>>, %arg4: memref<16x48xbf16, #tpu.memory_space<vmem>>, %arg5: memref<1x48xf32, #tpu.memory_space<vmem>>, %arg6: memref<2x8x16xbf16, #tpu.memory_space<vmem>>, %arg7: memref<1x16xf32, #tpu.memory_space<vmem>>, %arg8: memref<2x4x4xf32, #tpu.memory_space<vmem>>, %arg9: memref<16x16xbf16, #tpu.memory_space<vmem>>) attributes {dimension_semantics = [#tpu.dimension_semantics<parallel>], iteration_bounds = array<i64: 2>, scalar_prefetch = 0 : i64, scratch_operands = 0 : i64, tpu.core_type = #tpu.core_type<tc>, window_params = [{transform_indices = @transform_0, window_bounds = array<i64: 16, 16>}, {pipeline_mode = #tpu.pipeline_mode<synchronous>, transform_indices = @transform_1, window_bounds = array<i64: 1, 16>}, {pipeline_mode = #tpu.pipeline_mode<synchronous>, transform_indices = @transform_2, window_bounds = array<i64: 1, 16>}, {pipeline_mode = #tpu.pipeline_mode<synchronous>, transform_indices = @transform_3, window_bounds = array<i64: 16, 48>}, {pipeline_mode = #tpu.pipeline_mode<synchronous>, transform_indices = @transform_4, window_bounds = array<i64: 1, 48>}, {pipeline_mode = #tpu.pipeline_mode<synchronous>, transform_indices = @transform_5, window_bounds = array<i64: 2, 8, 16>}, {pipeline_mode = #tpu.pipeline_mode<synchronous>, transform_indices = @transform_6, window_bounds = array<i64: 1, 16>}, {pipeline_mode = #tpu.pipeline_mode<synchronous>, transform_indices = @transform_7, window_bounds = array<i64: 2, 4, 4>}, {transform_indices = @transform_8, window_bounds = array<i64: 16, 16>}]} {
    %c0 = arith.constant 0 : index
    %c0_0 = arith.constant 0 : index
    %0 = vector.load %arg1[%c0, %c0_0] : memref<16x16xbf16, #tpu.memory_space<vmem>>, vector<16x16xbf16>
    %1 = arith.extf %0 : vector<16x16xbf16> to vector<16x16xf32>
    %c0_1 = arith.constant 0 : index
    %c0_2 = arith.constant 0 : index
    %2 = vector.load %arg2[%c0_1, %c0_2] : memref<1x16xf32, #tpu.memory_space<vmem>>, vector<1x16xf32>
    %c0_3 = arith.constant 0 : index
    %c0_4 = arith.constant 0 : index
    %3 = vector.load %arg3[%c0_3, %c0_4] : memref<1x16xf32, #tpu.memory_space<vmem>>, vector<1x16xf32>
    %cst = arith.constant dense<0.000000e+00> : vector<16xf32>
    %4 = vector.multi_reduction <add>, %1, %cst [1] : vector<16x16xf32> to vector<16xf32>
    %5 = vector.shape_cast %4 : vector<16xf32> to vector<16x1xf32>
    %cst_5 = arith.constant 1.600000e+01 : f32
    %6 = vector.broadcast %cst_5 : f32 to vector<16x1xf32>
    %7 = arith.divf %5, %6 : vector<16x1xf32>
    %8 = vector.broadcast %7 : vector<16x1xf32> to vector<16x16xf32>
    %9 = arith.subf %1, %8 : vector<16x16xf32>
    %10 = arith.mulf %9, %9 : vector<16x16xf32>
    %cst_6 = arith.constant dense<0.000000e+00> : vector<16xf32>
    %11 = vector.multi_reduction <add>, %10, %cst_6 [1] : vector<16x16xf32> to vector<16xf32>
    %12 = vector.shape_cast %11 : vector<16xf32> to vector<16x1xf32>
    %cst_7 = arith.constant 1.600000e+01 : f32
    %13 = vector.broadcast %cst_7 : f32 to vector<16x1xf32>
    %14 = arith.divf %12, %13 : vector<16x1xf32>
    %15 = vector.broadcast %7 : vector<16x1xf32> to vector<16x16xf32>
    %16 = arith.subf %1, %15 : vector<16x16xf32>
    %cst_8 = arith.constant 9.99999974E-6 : f32
    %17 = vector.broadcast %cst_8 : f32 to vector<16x1xf32>
    %18 = arith.addf %14, %17 : vector<16x1xf32>
    %19 = math.rsqrt %18 : vector<16x1xf32>
    %20 = vector.broadcast %19 : vector<16x1xf32> to vector<16x16xf32>
    %21 = arith.mulf %16, %20 : vector<16x16xf32>
    %22 = vector.broadcast %2 : vector<1x16xf32> to vector<16x16xf32>
    %23 = arith.mulf %21, %22 : vector<16x16xf32>
    %24 = vector.broadcast %3 : vector<1x16xf32> to vector<16x16xf32>
    %25 = arith.addf %23, %24 : vector<16x16xf32>
    %26 = arith.truncf %25 : vector<16x16xf32> to vector<16x16xbf16>
    %c0_9 = arith.constant 0 : index
    %c0_10 = arith.constant 0 : index
    %27 = vector.load %arg4[%c0_9, %c0_10] : memref<16x48xbf16, #tpu.memory_space<vmem>>, vector<16x48xbf16>
    %cst_11 = arith.constant dense<0.000000e+00> : vector<16x48xf32>
    %28 = tpu.matmul %26, %27, %cst_11 {dimension_numbers = #tpu.dot_dimension_numbers<[1], [0], [0], [1], [0, 0, 1, 1], [], []>} : vector<16x16xbf16>, vector<16x48xbf16>, vector<16x48xf32> -> vector<16x48xf32>
    %c0_12 = arith.constant 0 : index
    %c0_13 = arith.constant 0 : index
    %29 = vector.load %arg5[%c0_12, %c0_13] : memref<1x48xf32, #tpu.memory_space<vmem>>, vector<1x48xf32>
    %30 = vector.broadcast %29 : vector<1x48xf32> to vector<16x48xf32>
    %31 = arith.addf %28, %30 : vector<16x48xf32>
    %32 = vector.extract_strided_slice %31 {offsets = [0, 0], sizes = [16, 8], strides = [1, 1]} : vector<16x48xf32> to vector<16x8xf32>
    %33 = vector.shape_cast %32 : vector<16x8xf32> to vector<4x4x8xf32>
    %34 = vector.extract_strided_slice %31 {offsets = [0, 8], sizes = [16, 8], strides = [1, 1]} : vector<16x48xf32> to vector<16x8xf32>
    %35 = vector.shape_cast %34 : vector<16x8xf32> to vector<4x4x8xf32>
    %36 = vector.shape_cast %33 : vector<4x4x8xf32> to vector<1x4x4x8xf32>
    %37 = vector.shape_cast %35 : vector<4x4x8xf32> to vector<1x4x4x8xf32>
    %38 = tpu.concatenate %36, %37 in 0 : vector<1x4x4x8xf32>, vector<1x4x4x8xf32> -> vector<2x4x4x8xf32>
    %39 = vector.shape_cast %38 : vector<2x4x4x8xf32> to vector<8x4x8xf32>
    %cst_14 = arith.constant 0.353553385 : f32
    %40 = vector.broadcast %cst_14 : f32 to vector<8x4x8xf32>
    %41 = arith.mulf %39, %40 : vector<8x4x8xf32>
    %42 = vector.extract_strided_slice %31 {offsets = [0, 16], sizes = [16, 8], strides = [1, 1]} : vector<16x48xf32> to vector<16x8xf32>
    %43 = vector.shape_cast %42 : vector<16x8xf32> to vector<4x4x8xf32>
    %44 = vector.extract_strided_slice %31 {offsets = [0, 24], sizes = [16, 8], strides = [1, 1]} : vector<16x48xf32> to vector<16x8xf32>
    %45 = vector.shape_cast %44 : vector<16x8xf32> to vector<4x4x8xf32>
    %46 = vector.shape_cast %43 : vector<4x4x8xf32> to vector<1x4x4x8xf32>
    %47 = vector.shape_cast %45 : vector<4x4x8xf32> to vector<1x4x4x8xf32>
    %48 = tpu.concatenate %46, %47 in 0 : vector<1x4x4x8xf32>, vector<1x4x4x8xf32> -> vector<2x4x4x8xf32>
    %49 = vector.shape_cast %48 : vector<2x4x4x8xf32> to vector<8x4x8xf32>
    %50 = vector.extract_strided_slice %31 {offsets = [0, 32], sizes = [16, 8], strides = [1, 1]} : vector<16x48xf32> to vector<16x8xf32>
    %51 = vector.shape_cast %50 : vector<16x8xf32> to vector<4x4x8xf32>
    %52 = vector.extract_strided_slice %31 {offsets = [0, 40], sizes = [16, 8], strides = [1, 1]} : vector<16x48xf32> to vector<16x8xf32>
    %53 = vector.shape_cast %52 : vector<16x8xf32> to vector<4x4x8xf32>
    %54 = vector.shape_cast %51 : vector<4x4x8xf32> to vector<1x4x4x8xf32>
    %55 = vector.shape_cast %53 : vector<4x4x8xf32> to vector<1x4x4x8xf32>
    %56 = tpu.concatenate %54, %55 in 0 : vector<1x4x4x8xf32>, vector<1x4x4x8xf32> -> vector<2x4x4x8xf32>
    %57 = vector.shape_cast %56 : vector<2x4x4x8xf32> to vector<8x4x8xf32>
    %58 = arith.truncf %41 : vector<8x4x8xf32> to vector<8x4x8xbf16>
    %59 = arith.truncf %49 : vector<8x4x8xf32> to vector<8x4x8xbf16>
    "tpu.trace_start"() <{level = 10 : i32, message = "bnd,bmd->bnm"}> : () -> ()
    %cst_15 = arith.constant dense<0.000000e+00> : vector<8x4x4xf32>
    %60 = tpu.matmul %58, %59, %cst_15 {dimension_numbers = #tpu.dot_dimension_numbers<[2], [2], [1], [1], [0, 0, 0, 1, 1, 1], [0], [0]>} : vector<8x4x8xbf16>, vector<8x4x8xbf16>, vector<8x4x4xf32> -> vector<8x4x4xf32>
    "tpu.trace_stop"() : () -> ()
    %61 = vector.shape_cast %60 : vector<8x4x4xf32> to vector<2x4x4x4xf32>
    %c0_16 = arith.constant 0 : index
    %c0_17 = arith.constant 0 : index
    %c0_18 = arith.constant 0 : index
    %62 = vector.load %arg8[%c0_16, %c0_17, %c0_18] : memref<2x4x4xf32, #tpu.memory_space<vmem>>, vector<2x4x4xf32>
    %63 = vector.shape_cast %62 : vector<2x4x4xf32> to vector<2x1x4x4xf32>
    %64 = vector.broadcast %63 : vector<2x1x4x4xf32> to vector<2x4x4x4xf32>
    %65 = arith.addf %61, %64 : vector<2x4x4x4xf32>
    %cst_19 = arith.constant dense<0xFF800000> : vector<2x4x4xf32>
    %66 = vector.multi_reduction <maximumf>, %65, %cst_19 [3] : vector<2x4x4x4xf32> to vector<2x4x4xf32>
    %67 = vector.shape_cast %66 : vector<2x4x4xf32> to vector<2x4x4x1xf32>
    %68 = vector.broadcast %67 : vector<2x4x4x1xf32> to vector<2x4x4x4xf32>
    %69 = arith.subf %65, %68 : vector<2x4x4x4xf32>
    %70 = math.exp %69 : vector<2x4x4x4xf32>
    %cst_20 = arith.constant dense<0.000000e+00> : vector<2x4x4xf32>
    %71 = vector.multi_reduction <add>, %70, %cst_20 [3] : vector<2x4x4x4xf32> to vector<2x4x4xf32>
    %72 = vector.shape_cast %71 : vector<2x4x4xf32> to vector<2x4x4x1xf32>
    %73 = tpu.reciprocal %72 {approx = true} : vector<2x4x4x1xf32> -> vector<2x4x4x1xf32>
    %74 = vector.broadcast %73 : vector<2x4x4x1xf32> to vector<2x4x4x4xf32>
    %75 = arith.mulf %70, %74 : vector<2x4x4x4xf32>
    %76 = vector.shape_cast %75 : vector<2x4x4x4xf32> to vector<8x4x4xf32>
    %77 = arith.truncf %76 : vector<8x4x4xf32> to vector<8x4x4xbf16>
    %78 = arith.truncf %57 : vector<8x4x8xf32> to vector<8x4x8xbf16>
    "tpu.trace_start"() <{level = 10 : i32, message = "bnm,bmd->bnd"}> : () -> ()
    %cst_21 = arith.constant dense<0.000000e+00> : vector<8x4x8xf32>
    %79 = tpu.matmul %77, %78, %cst_21 {dimension_numbers = #tpu.dot_dimension_numbers<[2], [1], [1], [2], [0, 0, 0, 1, 1, 2], [0], [0]>} : vector<8x4x4xbf16>, vector<8x4x8xbf16>, vector<8x4x8xf32> -> vector<8x4x8xf32>
    "tpu.trace_stop"() : () -> ()
    %80 = vector.shape_cast %79 : vector<8x4x8xf32> to vector<2x16x8xf32>
    %81 = arith.truncf %80 : vector<2x16x8xf32> to vector<2x16x8xbf16>
    %c0_22 = arith.constant 0 : index
    %c0_23 = arith.constant 0 : index
    %c0_24 = arith.constant 0 : index
    %82 = vector.load %arg6[%c0_22, %c0_23, %c0_24] : memref<2x8x16xbf16, #tpu.memory_space<vmem>>, vector<2x8x16xbf16>
    "tpu.trace_start"() <{level = 10 : i32, message = "hmd,hdc->hmc"}> : () -> ()
    %cst_25 = arith.constant dense<0.000000e+00> : vector<2x16x16xf32>
    %83 = tpu.matmul %81, %82, %cst_25 {dimension_numbers = #tpu.dot_dimension_numbers<[2], [1], [1], [2], [0, 0, 0, 1, 1, 2], [0], [0]>} : vector<2x16x8xbf16>, vector<2x8x16xbf16>, vector<2x16x16xf32> -> vector<2x16x16xf32>
    "tpu.trace_stop"() : () -> ()
    %cst_26 = arith.constant dense<0.000000e+00> : vector<16x16xf32>
    %84 = vector.multi_reduction <add>, %83, %cst_26 [0] : vector<2x16x16xf32> to vector<16x16xf32>
    %c0_27 = arith.constant 0 : index
    %c0_28 = arith.constant 0 : index
    %85 = vector.load %arg7[%c0_27, %c0_28] : memref<1x16xf32, #tpu.memory_space<vmem>>, vector<1x16xf32>
    %86 = vector.broadcast %85 : vector<1x16xf32> to vector<16x16xf32>
    %87 = arith.addf %84, %86 : vector<16x16xf32>
    %88 = arith.addf %1, %87 : vector<16x16xf32>
    %89 = arith.truncf %88 : vector<16x16xf32> to vector<16x16xbf16>
    %c0_29 = arith.constant 0 : index
    %c0_30 = arith.constant 0 : index
    %90 = vector.load %arg9[%c0_29, %c0_30] : memref<16x16xbf16, #tpu.memory_space<vmem>>, vector<16x16xbf16>
    tpu.vector_store %arg9[%c0_29, %c0_30], %89 {strides = array<i32>} : memref<16x16xbf16, #tpu.memory_space<vmem>>, vector<16x16xbf16>,
    return
  }
  func.func @transform_0(%arg0: i32) -> (i32, i32) {
    %c0_i32 = arith.constant 0 : i32
    %c0_i32_0 = arith.constant 0 : i32
    return %arg0, %c0_i32 : i32, i32
  }
  func.func @transform_1(%arg0: i32) -> (i32, i32) {
    %c0_i32 = arith.constant 0 : i32
    %c0_i32_0 = arith.constant 0 : i32
    %c0_i32_1 = arith.constant 0 : i32
    return %c0_i32, %c0_i32_0 : i32, i32
  }
  func.func @transform_2(%arg0: i32) -> (i32, i32) {
    %c0_i32 = arith.constant 0 : i32
    %c0_i32_0 = arith.constant 0 : i32
    %c0_i32_1 = arith.constant 0 : i32
    return %c0_i32, %c0_i32_0 : i32, i32
  }
  func.func @transform_3(%arg0: i32) -> (i32, i32) {
    %c0_i32 = arith.constant 0 : i32
    %c0_i32_0 = arith.constant 0 : i32
    %c0_i32_1 = arith.constant 0 : i32
    return %c0_i32, %c0_i32_0 : i32, i32
  }
  func.func @transform_4(%arg0: i32) -> (i32, i32) {
    %c0_i32 = arith.constant 0 : i32
    %c0_i32_0 = arith.constant 0 : i32
    %c0_i32_1 = arith.constant 0 : i32
    return %c0_i32, %c0_i32_0 : i32, i32
  }
  func.func @transform_5(%arg0: i32) -> (i32, i32, i32) {
    %c0_i32 = arith.constant 0 : i32
    %c0_i32_0 = arith.constant 0 : i32
    %c0_i32_1 = arith.constant 0 : i32
    %c0_i32_2 = arith.constant 0 : i32
    return %c0_i32, %c0_i32_0, %c0_i32_1 : i32, i32, i32
  }
  func.func @transform_6(%arg0: i32) -> (i32, i32) {
    %c0_i32 = arith.constant 0 : i32
    %c0_i32_0 = arith.constant 0 : i32
    %c0_i32_1 = arith.constant 0 : i32
    return %c0_i32, %c0_i32_0 : i32, i32
  }
  func.func @transform_7(%arg0: i32) -> (i32, i32, i32) {
    %c0_i32 = arith.constant 0 : i32
    %c0_i32_0 = arith.constant 0 : i32
    %c0_i32_1 = arith.constant 0 : i32
    %c0_i32_2 = arith.constant 0 : i32
    return %c0_i32, %c0_i32_0, %c0_i32_1 : i32, i32, i32
  }
  func.func @transform_8(%arg0: i32) -> (i32, i32) {
    %c0_i32 = arith.constant 0 : i32
    %c0_i32_0 = arith.constant 0 : i32
    return %arg0, %c0_i32 : i32, i32
  }
}

module attributes {stable_mosaic.version = 11 : i64} {
  func.func @_mlp_block_kernel(%arg0: i32, %arg1: memref<32x16xbf16, #tpu.memory_space<vmem>>, %arg2: memref<1x16xf32, #tpu.memory_space<vmem>>, %arg3: memref<1x16xf32, #tpu.memory_space<vmem>>, %arg4: memref<16x64xbf16, #tpu.memory_space<vmem>>, %arg5: memref<1x64xf32, #tpu.memory_space<vmem>>, %arg6: memref<64x16xbf16, #tpu.memory_space<vmem>>, %arg7: memref<1x16xf32, #tpu.memory_space<vmem>>, %arg8: memref<32x16xbf16, #tpu.memory_space<vmem>>) attributes {dimension_semantics = [#tpu.dimension_semantics<parallel>], iteration_bounds = array<i64: 1>, scalar_prefetch = 0 : i64, scratch_operands = 0 : i64, tpu.core_type = #tpu.core_type<tc>, window_params = [{transform_indices = @transform_0, window_bounds = array<i64: 32, 16>}, {pipeline_mode = #tpu.pipeline_mode<synchronous>, transform_indices = @transform_1, window_bounds = array<i64: 1, 16>}, {pipeline_mode = #tpu.pipeline_mode<synchronous>, transform_indices = @transform_2, window_bounds = array<i64: 1, 16>}, {pipeline_mode = #tpu.pipeline_mode<synchronous>, transform_indices = @transform_3, window_bounds = array<i64: 16, 64>}, {pipeline_mode = #tpu.pipeline_mode<synchronous>, transform_indices = @transform_4, window_bounds = array<i64: 1, 64>}, {pipeline_mode = #tpu.pipeline_mode<synchronous>, transform_indices = @transform_5, window_bounds = array<i64: 64, 16>}, {pipeline_mode = #tpu.pipeline_mode<synchronous>, transform_indices = @transform_6, window_bounds = array<i64: 1, 16>}, {transform_indices = @transform_7, window_bounds = array<i64: 32, 16>}]} {
    %c0 = arith.constant 0 : index
    %c0_0 = arith.constant 0 : index
    %0 = vector.load %arg1[%c0, %c0_0] : memref<32x16xbf16, #tpu.memory_space<vmem>>, vector<32x16xbf16>
    %1 = arith.extf %0 : vector<32x16xbf16> to vector<32x16xf32>
    %c0_1 = arith.constant 0 : index
    %c0_2 = arith.constant 0 : index
    %2 = vector.load %arg2[%c0_1, %c0_2] : memref<1x16xf32, #tpu.memory_space<vmem>>, vector<1x16xf32>
    %c0_3 = arith.constant 0 : index
    %c0_4 = arith.constant 0 : index
    %3 = vector.load %arg3[%c0_3, %c0_4] : memref<1x16xf32, #tpu.memory_space<vmem>>, vector<1x16xf32>
    %cst = arith.constant dense<0.000000e+00> : vector<32xf32>
    %4 = vector.multi_reduction <add>, %1, %cst [1] : vector<32x16xf32> to vector<32xf32>
    %5 = vector.shape_cast %4 : vector<32xf32> to vector<32x1xf32>
    %cst_5 = arith.constant 1.600000e+01 : f32
    %6 = vector.broadcast %cst_5 : f32 to vector<32x1xf32>
    %7 = arith.divf %5, %6 : vector<32x1xf32>
    %8 = vector.broadcast %7 : vector<32x1xf32> to vector<32x16xf32>
    %9 = arith.subf %1, %8 : vector<32x16xf32>
    %10 = arith.mulf %9, %9 : vector<32x16xf32>
    %cst_6 = arith.constant dense<0.000000e+00> : vector<32xf32>
    %11 = vector.multi_reduction <add>, %10, %cst_6 [1] : vector<32x16xf32> to vector<32xf32>
    %12 = vector.shape_cast %11 : vector<32xf32> to vector<32x1xf32>
    %cst_7 = arith.constant 1.600000e+01 : f32
    %13 = vector.broadcast %cst_7 : f32 to vector<32x1xf32>
    %14 = arith.divf %12, %13 : vector<32x1xf32>
    %15 = vector.broadcast %7 : vector<32x1xf32> to vector<32x16xf32>
    %16 = arith.subf %1, %15 : vector<32x16xf32>
    %cst_8 = arith.constant 9.99999974E-6 : f32
    %17 = vector.broadcast %cst_8 : f32 to vector<32x1xf32>
    %18 = arith.addf %14, %17 : vector<32x1xf32>
    %19 = math.rsqrt %18 : vector<32x1xf32>
    %20 = vector.broadcast %19 : vector<32x1xf32> to vector<32x16xf32>
    %21 = arith.mulf %16, %20 : vector<32x16xf32>
    %22 = vector.broadcast %2 : vector<1x16xf32> to vector<32x16xf32>
    %23 = arith.mulf %21, %22 : vector<32x16xf32>
    %24 = vector.broadcast %3 : vector<1x16xf32> to vector<32x16xf32>
    %25 = arith.addf %23, %24 : vector<32x16xf32>
    %26 = arith.truncf %25 : vector<32x16xf32> to vector<32x16xbf16>
    %c0_9 = arith.constant 0 : index
    %c0_10 = arith.constant 0 : index
    %27 = vector.load %arg4[%c0_9, %c0_10] : memref<16x64xbf16, #tpu.memory_space<vmem>>, vector<16x64xbf16>
    %cst_11 = arith.constant dense<0.000000e+00> : vector<32x64xf32>
    %28 = tpu.matmul %26, %27, %cst_11 {dimension_numbers = #tpu.dot_dimension_numbers<[1], [0], [0], [1], [0, 0, 1, 1], [], []>} : vector<32x16xbf16>, vector<16x64xbf16>, vector<32x64xf32> -> vector<32x64xf32>
    %c0_12 = arith.constant 0 : index
    %c0_13 = arith.constant 0 : index
    %29 = vector.load %arg5[%c0_12, %c0_13] : memref<1x64xf32, #tpu.memory_space<vmem>>, vector<1x64xf32>
    %30 = vector.broadcast %29 : vector<1x64xf32> to vector<32x64xf32>
    %31 = arith.addf %28, %30 : vector<32x64xf32>
    %cst_14 = arith.constant 5.000000e-01 : f32
    %32 = vector.broadcast %cst_14 : f32 to vector<32x64xf32>
    %33 = arith.mulf %32, %31 : vector<32x64xf32>
    %cst_15 = arith.constant 0.707106769 : f32
    %34 = vector.broadcast %cst_15 : f32 to vector<32x64xf32>
    %35 = arith.mulf %31, %34 : vector<32x64xf32>
    %36 = math.absf %35 : vector<32x64xf32>
    %cst_16 = arith.constant 0.327591091 : f32
    %37 = vector.broadcast %cst_16 : f32 to vector<32x64xf32>
    %38 = arith.mulf %37, %36 : vector<32x64xf32>
    %cst_17 = arith.constant 1.000000e+00 : f32
    %39 = vector.broadcast %cst_17 : f32 to vector<32x64xf32>
    %40 = arith.addf %39, %38 : vector<32x64xf32>
    %cst_18 = arith.constant 1.000000e+00 : f32
    %41 = vector.broadcast %cst_18 : f32 to vector<32x64xf32>
    %42 = arith.divf %41, %40 : vector<32x64xf32>
    %cst_19 = arith.constant 1.06140542 : f32
    %43 = vector.broadcast %cst_19 : f32 to vector<32x64xf32>
    %44 = arith.mulf %43, %42 : vector<32x64xf32>
    %cst_20 = arith.constant -1.45315206 : f32
    %45 = vector.broadcast %cst_20 : f32 to vector<32x64xf32>
    %46 = arith.addf %44, %45 : vector<32x64xf32>
    %47 = arith.mulf %46, %42 : vector<32x64xf32>
    %cst_21 = arith.constant 1.42141378 : f32
    %48 = vector.broadcast %cst_21 : f32 to vector<32x64xf32>
    %49 = arith.addf %47, %48 : vector<32x64xf32>
    %50 = arith.mulf %49, %42 : vector<32x64xf32>
    %cst_22 = arith.constant -0.284496725 : f32
    %51 = vector.broadcast %cst_22 : f32 to vector<32x64xf32>
    %52 = arith.addf %50, %51 : vector<32x64xf32>
    %53 = arith.mulf %52, %42 : vector<32x64xf32>
    %cst_23 = arith.constant 0.254829586 : f32
    %54 = vector.broadcast %cst_23 : f32 to vector<32x64xf32>
    %55 = arith.addf %53, %54 : vector<32x64xf32>
    %56 = arith.mulf %55, %42 : vector<32x64xf32>
    %cst_24 = arith.constant 0.000000e+00 : f32
    %57 = vector.broadcast %cst_24 : f32 to vector<32x64xf32>
    %58 = arith.subf %57, %36 : vector<32x64xf32>
    %59 = arith.mulf %58, %36 : vector<32x64xf32>
    %60 = math.exp %59 : vector<32x64xf32>
    %61 = arith.mulf %56, %60 : vector<32x64xf32>
    %cst_25 = arith.constant 1.000000e+00 : f32
    %62 = vector.broadcast %cst_25 : f32 to vector<32x64xf32>
    %63 = arith.subf %62, %61 : vector<32x64xf32>
    %cst_26 = arith.constant 0.000000e+00 : f32
    %64 = vector.broadcast %cst_26 : f32 to vector<32x64xf32>
    %65 = arith.cmpf oge, %35, %64 : vector<32x64xf32>
    %cst_27 = arith.constant 0.000000e+00 : f32
    %66 = vector.broadcast %cst_27 : f32 to vector<32x64xf32>
    %67 = arith.subf %66, %63 : vector<32x64xf32>
    %68 = arith.select %65, %63, %67 : vector<32x64xi1>, vector<32x64xf32>
    %cst_28 = arith.constant 1.000000e+00 : f32
    %69 = vector.broadcast %cst_28 : f32 to vector<32x64xf32>
    %70 = arith.addf %69, %68 : vector<32x64xf32>
    %71 = arith.mulf %33, %70 : vector<32x64xf32>
    %72 = arith.truncf %71 : vector<32x64xf32> to vector<32x64xbf16>
    %c0_29 = arith.constant 0 : index
    %c0_30 = arith.constant 0 : index
    %73 = vector.load %arg6[%c0_29, %c0_30] : memref<64x16xbf16, #tpu.memory_space<vmem>>, vector<64x16xbf16>
    %cst_31 = arith.constant dense<0.000000e+00> : vector<32x16xf32>
    %74 = tpu.matmul %72, %73, %cst_31 {dimension_numbers = #tpu.dot_dimension_numbers<[1], [0], [0], [1], [0, 0, 1, 1], [], []>} : vector<32x64xbf16>, vector<64x16xbf16>, vector<32x16xf32> -> vector<32x16xf32>
    %c0_32 = arith.constant 0 : index
    %c0_33 = arith.constant 0 : index
    %75 = vector.load %arg7[%c0_32, %c0_33] : memref<1x16xf32, #tpu.memory_space<vmem>>, vector<1x16xf32>
    %76 = vector.broadcast %75 : vector<1x16xf32> to vector<32x16xf32>
    %77 = arith.addf %74, %76 : vector<32x16xf32>
    %78 = arith.addf %1, %77 : vector<32x16xf32>
    %79 = arith.truncf %78 : vector<32x16xf32> to vector<32x16xbf16>
    %c0_34 = arith.constant 0 : index
    %c0_35 = arith.constant 0 : index
    %80 = vector.load %arg8[%c0_34, %c0_35] : memref<32x16xbf16, #tpu.memory_space<vmem>>, vector<32x16xbf16>
    tpu.vector_store %arg8[%c0_34, %c0_35], %79 {strides = array<i32>} : memref<32x16xbf16, #tpu.memory_space<vmem>>, vector<32x16xbf16>,
    return
  }
  func.func @transform_0(%arg0: i32) -> (i32, i32) {
    %c0_i32 = arith.constant 0 : i32
    %c0_i32_0 = arith.constant 0 : i32
    return %arg0, %c0_i32 : i32, i32
  }
  func.func @transform_1(%arg0: i32) -> (i32, i32) {
    %c0_i32 = arith.constant 0 : i32
    %c0_i32_0 = arith.constant 0 : i32
    %c0_i32_1 = arith.constant 0 : i32
    return %c0_i32, %c0_i32_0 : i32, i32
  }
  func.func @transform_2(%arg0: i32) -> (i32, i32) {
    %c0_i32 = arith.constant 0 : i32
    %c0_i32_0 = arith.constant 0 : i32
    %c0_i32_1 = arith.constant 0 : i32
    return %c0_i32, %c0_i32_0 : i32, i32
  }
  func.func @transform_3(%arg0: i32) -> (i32, i32) {
    %c0_i32 = arith.constant 0 : i32
    %c0_i32_0 = arith.constant 0 : i32
    %c0_i32_1 = arith.constant 0 : i32
    return %c0_i32, %c0_i32_0 : i32, i32
  }
  func.func @transform_4(%arg0: i32) -> (i32, i32) {
    %c0_i32 = arith.constant 0 : i32
    %c0_i32_0 = arith.constant 0 : i32
    %c0_i32_1 = arith.constant 0 : i32
    return %c0_i32, %c0_i32_0 : i32, i32
  }
  func.func @transform_5(%arg0: i32) -> (i32, i32) {
    %c0_i32 = arith.constant 0 : i32
    %c0_i32_0 = arith.constant 0 : i32
    %c0_i32_1 = arith.constant 0 : i32
    return %c0_i32, %c0_i32_0 : i32, i32
  }
  func.func @transform_6(%arg0: i32) -> (i32, i32) {
    %c0_i32 = arith.constant 0 : i32
    %c0_i32_0 = arith.constant 0 : i32
    %c0_i32_1 = arith.constant 0 : i32
    return %c0_i32, %c0_i32_0 : i32, i32
  }
  func.func @transform_7(%arg0: i32) -> (i32, i32) {
    %c0_i32 = arith.constant 0 : i32
    %c0_i32_0 = arith.constant 0 : i32
    return %arg0, %c0_i32 : i32, i32
  }
}

module attributes {stable_mosaic.version = 11 : i64} {
  func.func @_attn_block_kernel(%arg0: i32, %arg1: memref<16x16xbf16, #tpu.memory_space<vmem>>, %arg2: memref<1x16xf32, #tpu.memory_space<vmem>>, %arg3: memref<1x16xf32, #tpu.memory_space<vmem>>, %arg4: memref<16x48xbf16, #tpu.memory_space<vmem>>, %arg5: memref<1x48xf32, #tpu.memory_space<vmem>>, %arg6: memref<2x8x16xbf16, #tpu.memory_space<vmem>>, %arg7: memref<1x16xf32, #tpu.memory_space<vmem>>, %arg8: memref<2x4x4xf32, #tpu.memory_space<vmem>>, %arg9: memref<4x4x4xf32, #tpu.memory_space<vmem>>, %arg10: memref<16x16xbf16, #tpu.memory_space<vmem>>) attributes {dimension_semantics = [#tpu.dimension_semantics<parallel>], iteration_bounds = array<i64: 2>, scalar_prefetch = 0 : i64, scratch_operands = 0 : i64, tpu.core_type = #tpu.core_type<tc>, window_params = [{transform_indices = @transform_0, window_bounds = array<i64: 16, 16>}, {pipeline_mode = #tpu.pipeline_mode<synchronous>, transform_indices = @transform_1, window_bounds = array<i64: 1, 16>}, {pipeline_mode = #tpu.pipeline_mode<synchronous>, transform_indices = @transform_2, window_bounds = array<i64: 1, 16>}, {pipeline_mode = #tpu.pipeline_mode<synchronous>, transform_indices = @transform_3, window_bounds = array<i64: 16, 48>}, {pipeline_mode = #tpu.pipeline_mode<synchronous>, transform_indices = @transform_4, window_bounds = array<i64: 1, 48>}, {pipeline_mode = #tpu.pipeline_mode<synchronous>, transform_indices = @transform_5, window_bounds = array<i64: 2, 8, 16>}, {pipeline_mode = #tpu.pipeline_mode<synchronous>, transform_indices = @transform_6, window_bounds = array<i64: 1, 16>}, {pipeline_mode = #tpu.pipeline_mode<synchronous>, transform_indices = @transform_7, window_bounds = array<i64: 2, 4, 4>}, {transform_indices = @transform_8, window_bounds = array<i64: 4, 4, 4>}, {transform_indices = @transform_9, window_bounds = array<i64: 16, 16>}]} {
    %c0 = arith.constant 0 : index
    %c0_0 = arith.constant 0 : index
    %0 = vector.load %arg1[%c0, %c0_0] : memref<16x16xbf16, #tpu.memory_space<vmem>>, vector<16x16xbf16>
    %1 = arith.extf %0 : vector<16x16xbf16> to vector<16x16xf32>
    %c0_1 = arith.constant 0 : index
    %c0_2 = arith.constant 0 : index
    %2 = vector.load %arg2[%c0_1, %c0_2] : memref<1x16xf32, #tpu.memory_space<vmem>>, vector<1x16xf32>
    %c0_3 = arith.constant 0 : index
    %c0_4 = arith.constant 0 : index
    %3 = vector.load %arg3[%c0_3, %c0_4] : memref<1x16xf32, #tpu.memory_space<vmem>>, vector<1x16xf32>
    %cst = arith.constant dense<0.000000e+00> : vector<16xf32>
    %4 = vector.multi_reduction <add>, %1, %cst [1] : vector<16x16xf32> to vector<16xf32>
    %5 = vector.shape_cast %4 : vector<16xf32> to vector<16x1xf32>
    %cst_5 = arith.constant 1.600000e+01 : f32
    %6 = vector.broadcast %cst_5 : f32 to vector<16x1xf32>
    %7 = arith.divf %5, %6 : vector<16x1xf32>
    %8 = vector.broadcast %7 : vector<16x1xf32> to vector<16x16xf32>
    %9 = arith.subf %1, %8 : vector<16x16xf32>
    %10 = arith.mulf %9, %9 : vector<16x16xf32>
    %cst_6 = arith.constant dense<0.000000e+00> : vector<16xf32>
    %11 = vector.multi_reduction <add>, %10, %cst_6 [1] : vector<16x16xf32> to vector<16xf32>
    %12 = vector.shape_cast %11 : vector<16xf32> to vector<16x1xf32>
    %cst_7 = arith.constant 1.600000e+01 : f32
    %13 = vector.broadcast %cst_7 : f32 to vector<16x1xf32>
    %14 = arith.divf %12, %13 : vector<16x1xf32>
    %15 = vector.broadcast %7 : vector<16x1xf32> to vector<16x16xf32>
    %16 = arith.subf %1, %15 : vector<16x16xf32>
    %cst_8 = arith.constant 9.99999974E-6 : f32
    %17 = vector.broadcast %cst_8 : f32 to vector<16x1xf32>
    %18 = arith.addf %14, %17 : vector<16x1xf32>
    %19 = math.rsqrt %18 : vector<16x1xf32>
    %20 = vector.broadcast %19 : vector<16x1xf32> to vector<16x16xf32>
    %21 = arith.mulf %16, %20 : vector<16x16xf32>
    %22 = vector.broadcast %2 : vector<1x16xf32> to vector<16x16xf32>
    %23 = arith.mulf %21, %22 : vector<16x16xf32>
    %24 = vector.broadcast %3 : vector<1x16xf32> to vector<16x16xf32>
    %25 = arith.addf %23, %24 : vector<16x16xf32>
    %26 = arith.truncf %25 : vector<16x16xf32> to vector<16x16xbf16>
    %c0_9 = arith.constant 0 : index
    %c0_10 = arith.constant 0 : index
    %27 = vector.load %arg4[%c0_9, %c0_10] : memref<16x48xbf16, #tpu.memory_space<vmem>>, vector<16x48xbf16>
    %cst_11 = arith.constant dense<0.000000e+00> : vector<16x48xf32>
    %28 = tpu.matmul %26, %27, %cst_11 {dimension_numbers = #tpu.dot_dimension_numbers<[1], [0], [0], [1], [0, 0, 1, 1], [], []>} : vector<16x16xbf16>, vector<16x48xbf16>, vector<16x48xf32> -> vector<16x48xf32>
    %c0_12 = arith.constant 0 : index
    %c0_13 = arith.constant 0 : index
    %29 = vector.load %arg5[%c0_12, %c0_13] : memref<1x48xf32, #tpu.memory_space<vmem>>, vector<1x48xf32>
    %30 = vector.broadcast %29 : vector<1x48xf32> to vector<16x48xf32>
    %31 = arith.addf %28, %30 : vector<16x48xf32>
    %32 = vector.extract_strided_slice %31 {offsets = [0, 0], sizes = [16, 8], strides = [1, 1]} : vector<16x48xf32> to vector<16x8xf32>
    %33 = vector.shape_cast %32 : vector<16x8xf32> to vector<4x4x8xf32>
    %34 = vector.extract_strided_slice %31 {offsets = [0, 8], sizes = [16, 8], strides = [1, 1]} : vector<16x48xf32> to vector<16x8xf32>
    %35 = vector.shape_cast %34 : vector<16x8xf32> to vector<4x4x8xf32>
    %36 = vector.shape_cast %33 : vector<4x4x8xf32> to vector<1x4x4x8xf32>
    %37 = vector.shape_cast %35 : vector<4x4x8xf32> to vector<1x4x4x8xf32>
    %38 = tpu.concatenate %36, %37 in 0 : vector<1x4x4x8xf32>, vector<1x4x4x8xf32> -> vector<2x4x4x8xf32>
    %39 = vector.shape_cast %38 : vector<2x4x4x8xf32> to vector<8x4x8xf32>
    %cst_14 = arith.constant 0.353553385 : f32
    %40 = vector.broadcast %cst_14 : f32 to vector<8x4x8xf32>
    %41 = arith.mulf %39, %40 : vector<8x4x8xf32>
    %42 = vector.extract_strided_slice %31 {offsets = [0, 16], sizes = [16, 8], strides = [1, 1]} : vector<16x48xf32> to vector<16x8xf32>
    %43 = vector.shape_cast %42 : vector<16x8xf32> to vector<4x4x8xf32>
    %44 = vector.extract_strided_slice %31 {offsets = [0, 24], sizes = [16, 8], strides = [1, 1]} : vector<16x48xf32> to vector<16x8xf32>
    %45 = vector.shape_cast %44 : vector<16x8xf32> to vector<4x4x8xf32>
    %46 = vector.shape_cast %43 : vector<4x4x8xf32> to vector<1x4x4x8xf32>
    %47 = vector.shape_cast %45 : vector<4x4x8xf32> to vector<1x4x4x8xf32>
    %48 = tpu.concatenate %46, %47 in 0 : vector<1x4x4x8xf32>, vector<1x4x4x8xf32> -> vector<2x4x4x8xf32>
    %49 = vector.shape_cast %48 : vector<2x4x4x8xf32> to vector<8x4x8xf32>
    %50 = vector.extract_strided_slice %31 {offsets = [0, 32], sizes = [16, 8], strides = [1, 1]} : vector<16x48xf32> to vector<16x8xf32>
    %51 = vector.shape_cast %50 : vector<16x8xf32> to vector<4x4x8xf32>
    %52 = vector.extract_strided_slice %31 {offsets = [0, 40], sizes = [16, 8], strides = [1, 1]} : vector<16x48xf32> to vector<16x8xf32>
    %53 = vector.shape_cast %52 : vector<16x8xf32> to vector<4x4x8xf32>
    %54 = vector.shape_cast %51 : vector<4x4x8xf32> to vector<1x4x4x8xf32>
    %55 = vector.shape_cast %53 : vector<4x4x8xf32> to vector<1x4x4x8xf32>
    %56 = tpu.concatenate %54, %55 in 0 : vector<1x4x4x8xf32>, vector<1x4x4x8xf32> -> vector<2x4x4x8xf32>
    %57 = vector.shape_cast %56 : vector<2x4x4x8xf32> to vector<8x4x8xf32>
    %58 = arith.truncf %41 : vector<8x4x8xf32> to vector<8x4x8xbf16>
    %59 = arith.truncf %49 : vector<8x4x8xf32> to vector<8x4x8xbf16>
    "tpu.trace_start"() <{level = 10 : i32, message = "bnd,bmd->bnm"}> : () -> ()
    %cst_15 = arith.constant dense<0.000000e+00> : vector<8x4x4xf32>
    %60 = tpu.matmul %58, %59, %cst_15 {dimension_numbers = #tpu.dot_dimension_numbers<[2], [2], [1], [1], [0, 0, 0, 1, 1, 1], [0], [0]>} : vector<8x4x8xbf16>, vector<8x4x8xbf16>, vector<8x4x4xf32> -> vector<8x4x4xf32>
    "tpu.trace_stop"() : () -> ()
    %61 = vector.shape_cast %60 : vector<8x4x4xf32> to vector<2x4x4x4xf32>
    %c0_16 = arith.constant 0 : index
    %c0_17 = arith.constant 0 : index
    %c0_18 = arith.constant 0 : index
    %62 = vector.load %arg8[%c0_16, %c0_17, %c0_18] : memref<2x4x4xf32, #tpu.memory_space<vmem>>, vector<2x4x4xf32>
    %63 = vector.shape_cast %62 : vector<2x4x4xf32> to vector<2x1x4x4xf32>
    %64 = vector.broadcast %63 : vector<2x1x4x4xf32> to vector<2x4x4x4xf32>
    %65 = arith.addf %61, %64 : vector<2x4x4x4xf32>
    %c0_19 = arith.constant 0 : index
    %c0_20 = arith.constant 0 : index
    %c0_21 = arith.constant 0 : index
    %66 = vector.load %arg9[%c0_19, %c0_20, %c0_21] : memref<4x4x4xf32, #tpu.memory_space<vmem>>, vector<4x4x4xf32>
    %67 = vector.shape_cast %66 : vector<4x4x4xf32> to vector<1x4x4x4xf32>
    %68 = vector.broadcast %67 : vector<1x4x4x4xf32> to vector<2x4x4x4xf32>
    %69 = arith.addf %65, %68 : vector<2x4x4x4xf32>
    %cst_22 = arith.constant dense<0xFF800000> : vector<2x4x4xf32>
    %70 = vector.multi_reduction <maximumf>, %69, %cst_22 [3] : vector<2x4x4x4xf32> to vector<2x4x4xf32>
    %71 = vector.shape_cast %70 : vector<2x4x4xf32> to vector<2x4x4x1xf32>
    %72 = vector.broadcast %71 : vector<2x4x4x1xf32> to vector<2x4x4x4xf32>
    %73 = arith.subf %69, %72 : vector<2x4x4x4xf32>
    %74 = math.exp %73 : vector<2x4x4x4xf32>
    %cst_23 = arith.constant dense<0.000000e+00> : vector<2x4x4xf32>
    %75 = vector.multi_reduction <add>, %74, %cst_23 [3] : vector<2x4x4x4xf32> to vector<2x4x4xf32>
    %76 = vector.shape_cast %75 : vector<2x4x4xf32> to vector<2x4x4x1xf32>
    %77 = tpu.reciprocal %76 {approx = true} : vector<2x4x4x1xf32> -> vector<2x4x4x1xf32>
    %78 = vector.broadcast %77 : vector<2x4x4x1xf32> to vector<2x4x4x4xf32>
    %79 = arith.mulf %74, %78 : vector<2x4x4x4xf32>
    %80 = vector.shape_cast %79 : vector<2x4x4x4xf32> to vector<8x4x4xf32>
    %81 = arith.truncf %80 : vector<8x4x4xf32> to vector<8x4x4xbf16>
    %82 = arith.truncf %57 : vector<8x4x8xf32> to vector<8x4x8xbf16>
    "tpu.trace_start"() <{level = 10 : i32, message = "bnm,bmd->bnd"}> : () -> ()
    %cst_24 = arith.constant dense<0.000000e+00> : vector<8x4x8xf32>
    %83 = tpu.matmul %81, %82, %cst_24 {dimension_numbers = #tpu.dot_dimension_numbers<[2], [1], [1], [2], [0, 0, 0, 1, 1, 2], [0], [0]>} : vector<8x4x4xbf16>, vector<8x4x8xbf16>, vector<8x4x8xf32> -> vector<8x4x8xf32>
    "tpu.trace_stop"() : () -> ()
    %84 = vector.shape_cast %83 : vector<8x4x8xf32> to vector<2x16x8xf32>
    %85 = arith.truncf %84 : vector<2x16x8xf32> to vector<2x16x8xbf16>
    %c0_25 = arith.constant 0 : index
    %c0_26 = arith.constant 0 : index
    %c0_27 = arith.constant 0 : index
    %86 = vector.load %arg6[%c0_25, %c0_26, %c0_27] : memref<2x8x16xbf16, #tpu.memory_space<vmem>>, vector<2x8x16xbf16>
    "tpu.trace_start"() <{level = 10 : i32, message = "hmd,hdc->hmc"}> : () -> ()
    %cst_28 = arith.constant dense<0.000000e+00> : vector<2x16x16xf32>
    %87 = tpu.matmul %85, %86, %cst_28 {dimension_numbers = #tpu.dot_dimension_numbers<[2], [1], [1], [2], [0, 0, 0, 1, 1, 2], [0], [0]>} : vector<2x16x8xbf16>, vector<2x8x16xbf16>, vector<2x16x16xf32> -> vector<2x16x16xf32>
    "tpu.trace_stop"() : () -> ()
    %cst_29 = arith.constant dense<0.000000e+00> : vector<16x16xf32>
    %88 = vector.multi_reduction <add>, %87, %cst_29 [0] : vector<2x16x16xf32> to vector<16x16xf32>
    %c0_30 = arith.constant 0 : index
    %c0_31 = arith.constant 0 : index
    %89 = vector.load %arg7[%c0_30, %c0_31] : memref<1x16xf32, #tpu.memory_space<vmem>>, vector<1x16xf32>
    %90 = vector.broadcast %89 : vector<1x16xf32> to vector<16x16xf32>
    %91 = arith.addf %88, %90 : vector<16x16xf32>
    %92 = arith.addf %1, %91 : vector<16x16xf32>
    %93 = arith.truncf %92 : vector<16x16xf32> to vector<16x16xbf16>
    %c0_32 = arith.constant 0 : index
    %c0_33 = arith.constant 0 : index
    %94 = vector.load %arg10[%c0_32, %c0_33] : memref<16x16xbf16, #tpu.memory_space<vmem>>, vector<16x16xbf16>
    tpu.vector_store %arg10[%c0_32, %c0_33], %93 {strides = array<i32>} : memref<16x16xbf16, #tpu.memory_space<vmem>>, vector<16x16xbf16>,
    return
  }
  func.func @transform_0(%arg0: i32) -> (i32, i32) {
    %c0_i32 = arith.constant 0 : i32
    %c0_i32_0 = arith.constant 0 : i32
    return %arg0, %c0_i32 : i32, i32
  }
  func.func @transform_1(%arg0: i32) -> (i32, i32) {
    %c0_i32 = arith.constant 0 : i32
    %c0_i32_0 = arith.constant 0 : i32
    %c0_i32_1 = arith.constant 0 : i32
    return %c0_i32, %c0_i32_0 : i32, i32
  }
  func.func @transform_2(%arg0: i32) -> (i32, i32) {
    %c0_i32 = arith.constant 0 : i32
    %c0_i32_0 = arith.constant 0 : i32
    %c0_i32_1 = arith.constant 0 : i32
    return %c0_i32, %c0_i32_0 : i32, i32
  }
  func.func @transform_3(%arg0: i32) -> (i32, i32) {
    %c0_i32 = arith.constant 0 : i32
    %c0_i32_0 = arith.constant 0 : i32
    %c0_i32_1 = arith.constant 0 : i32
    return %c0_i32, %c0_i32_0 : i32, i32
  }
  func.func @transform_4(%arg0: i32) -> (i32, i32) {
    %c0_i32 = arith.constant 0 : i32
    %c0_i32_0 = arith.constant 0 : i32
    %c0_i32_1 = arith.constant 0 : i32
    return %c0_i32, %c0_i32_0 : i32, i32
  }
  func.func @transform_5(%arg0: i32) -> (i32, i32, i32) {
    %c0_i32 = arith.constant 0 : i32
    %c0_i32_0 = arith.constant 0 : i32
    %c0_i32_1 = arith.constant 0 : i32
    %c0_i32_2 = arith.constant 0 : i32
    return %c0_i32, %c0_i32_0, %c0_i32_1 : i32, i32, i32
  }
  func.func @transform_6(%arg0: i32) -> (i32, i32) {
    %c0_i32 = arith.constant 0 : i32
    %c0_i32_0 = arith.constant 0 : i32
    %c0_i32_1 = arith.constant 0 : i32
    return %c0_i32, %c0_i32_0 : i32, i32
  }
  func.func @transform_7(%arg0: i32) -> (i32, i32, i32) {
    %c0_i32 = arith.constant 0 : i32
    %c0_i32_0 = arith.constant 0 : i32
    %c0_i32_1 = arith.constant 0 : i32
    %c0_i32_2 = arith.constant 0 : i32
    return %c0_i32, %c0_i32_0, %c0_i32_1 : i32, i32, i32
  }
  func.func @transform_8(%arg0: i32) -> (i32, i32, i32) {
    %c1_i32 = arith.constant 1 : i32
    %c0_i32 = arith.constant 0 : i32
    %0 = arith.cmpi eq, %c1_i32, %c0_i32 : i32
    %c1_i32_0 = arith.constant 1 : i32
    %1 = arith.select %0, %c1_i32_0, %c1_i32 : i32
    %2 = arith.remsi %arg0, %1 : i32
    %c0_i32_1 = arith.constant 0 : i32
    %3 = arith.cmpi ne, %2, %c0_i32_1 : i32
    %c0_i32_2 = arith.constant 0 : i32
    %4 = arith.cmpi slt, %2, %c0_i32_2 : i32
    %c0_i32_3 = arith.constant 0 : i32
    %5 = arith.cmpi slt, %1, %c0_i32_3 : i32
    %6 = arith.xori %4, %5 : i1
    %7 = arith.andi %6, %3 : i1
    %8 = arith.addi %2, %1 : i32
    %9 = arith.select %7, %8, %2 : i32
    %c0_i32_4 = arith.constant 0 : i32
    %c0_i32_5 = arith.constant 0 : i32
    %c0_i32_6 = arith.constant 0 : i32
    return %9, %c0_i32_4, %c0_i32_5 : i32, i32, i32
  }
  func.func @transform_9(%arg0: i32) -> (i32, i32) {
    %c0_i32 = arith.constant 0 : i32
    %c0_i32_0 = arith.constant 0 : i32
    return %arg0, %c0_i32 : i32, i32
  }
}

module attributes {stable_mosaic.version = 11 : i64} {
  func.func @_merge_kernel(%arg0: i32, %arg1: memref<8x64xbf16, #tpu.memory_space<vmem>>, %arg2: memref<1x64xf32, #tpu.memory_space<vmem>>, %arg3: memref<1x64xf32, #tpu.memory_space<vmem>>, %arg4: memref<64x32xbf16, #tpu.memory_space<vmem>>, %arg5: memref<8x32xbf16, #tpu.memory_space<vmem>>) attributes {dimension_semantics = [#tpu.dimension_semantics<parallel>], iteration_bounds = array<i64: 1>, scalar_prefetch = 0 : i64, scratch_operands = 0 : i64, tpu.core_type = #tpu.core_type<tc>, window_params = [{transform_indices = @transform_0, window_bounds = array<i64: 8, 64>}, {pipeline_mode = #tpu.pipeline_mode<synchronous>, transform_indices = @transform_1, window_bounds = array<i64: 1, 64>}, {pipeline_mode = #tpu.pipeline_mode<synchronous>, transform_indices = @transform_2, window_bounds = array<i64: 1, 64>}, {pipeline_mode = #tpu.pipeline_mode<synchronous>, transform_indices = @transform_3, window_bounds = array<i64: 64, 32>}, {transform_indices = @transform_4, window_bounds = array<i64: 8, 32>}]} {
    %c0 = arith.constant 0 : index
    %c0_0 = arith.constant 0 : index
    %0 = vector.load %arg1[%c0, %c0_0] : memref<8x64xbf16, #tpu.memory_space<vmem>>, vector<8x64xbf16>
    %1 = arith.extf %0 : vector<8x64xbf16> to vector<8x64xf32>
    %c0_1 = arith.constant 0 : index
    %c0_2 = arith.constant 0 : index
    %2 = vector.load %arg2[%c0_1, %c0_2] : memref<1x64xf32, #tpu.memory_space<vmem>>, vector<1x64xf32>
    %c0_3 = arith.constant 0 : index
    %c0_4 = arith.constant 0 : index
    %3 = vector.load %arg3[%c0_3, %c0_4] : memref<1x64xf32, #tpu.memory_space<vmem>>, vector<1x64xf32>
    %cst = arith.constant dense<0.000000e+00> : vector<8xf32>
    %4 = vector.multi_reduction <add>, %1, %cst [1] : vector<8x64xf32> to vector<8xf32>
    %5 = vector.shape_cast %4 : vector<8xf32> to vector<8x1xf32>
    %cst_5 = arith.constant 6.400000e+01 : f32
    %6 = vector.broadcast %cst_5 : f32 to vector<8x1xf32>
    %7 = arith.divf %5, %6 : vector<8x1xf32>
    %8 = vector.broadcast %7 : vector<8x1xf32> to vector<8x64xf32>
    %9 = arith.subf %1, %8 : vector<8x64xf32>
    %10 = arith.mulf %9, %9 : vector<8x64xf32>
    %cst_6 = arith.constant dense<0.000000e+00> : vector<8xf32>
    %11 = vector.multi_reduction <add>, %10, %cst_6 [1] : vector<8x64xf32> to vector<8xf32>
    %12 = vector.shape_cast %11 : vector<8xf32> to vector<8x1xf32>
    %cst_7 = arith.constant 6.400000e+01 : f32
    %13 = vector.broadcast %cst_7 : f32 to vector<8x1xf32>
    %14 = arith.divf %12, %13 : vector<8x1xf32>
    %15 = vector.broadcast %7 : vector<8x1xf32> to vector<8x64xf32>
    %16 = arith.subf %1, %15 : vector<8x64xf32>
    %cst_8 = arith.constant 9.99999974E-6 : f32
    %17 = vector.broadcast %cst_8 : f32 to vector<8x1xf32>
    %18 = arith.addf %14, %17 : vector<8x1xf32>
    %19 = math.rsqrt %18 : vector<8x1xf32>
    %20 = vector.broadcast %19 : vector<8x1xf32> to vector<8x64xf32>
    %21 = arith.mulf %16, %20 : vector<8x64xf32>
    %22 = vector.broadcast %2 : vector<1x64xf32> to vector<8x64xf32>
    %23 = arith.mulf %21, %22 : vector<8x64xf32>
    %24 = vector.broadcast %3 : vector<1x64xf32> to vector<8x64xf32>
    %25 = arith.addf %23, %24 : vector<8x64xf32>
    %26 = arith.truncf %25 : vector<8x64xf32> to vector<8x64xbf16>
    %c0_9 = arith.constant 0 : index
    %c0_10 = arith.constant 0 : index
    %27 = vector.load %arg4[%c0_9, %c0_10] : memref<64x32xbf16, #tpu.memory_space<vmem>>, vector<64x32xbf16>
    %cst_11 = arith.constant dense<0.000000e+00> : vector<8x32xf32>
    %28 = tpu.matmul %26, %27, %cst_11 {dimension_numbers = #tpu.dot_dimension_numbers<[1], [0], [0], [1], [0, 0, 1, 1], [], []>} : vector<8x64xbf16>, vector<64x32xbf16>, vector<8x32xf32> -> vector<8x32xf32>
    %29 = arith.truncf %28 : vector<8x32xf32> to vector<8x32xbf16>
    %c0_12 = arith.constant 0 : index
    %c0_13 = arith.constant 0 : index
    %30 = vector.load %arg5[%c0_12, %c0_13] : memref<8x32xbf16, #tpu.memory_space<vmem>>, vector<8x32xbf16>
    tpu.vector_store %arg5[%c0_12, %c0_13], %29 {strides = array<i32>} : memref<8x32xbf16, #tpu.memory_space<vmem>>, vector<8x32xbf16>,
    return
  }
  func.func @transform_0(%arg0: i32) -> (i32, i32) {
    %c0_i32 = arith.constant 0 : i32
    %c0_i32_0 = arith.constant 0 : i32
    return %arg0, %c0_i32 : i32, i32
  }
  func.func @transform_1(%arg0: i32) -> (i32, i32) {
    %c0_i32 = arith.constant 0 : i32
    %c0_i32_0 = arith.constant 0 : i32
    %c0_i32_1 = arith.constant 0 : i32
    return %c0_i32, %c0_i32_0 : i32, i32
  }
  func.func @transform_2(%arg0: i32) -> (i32, i32) {
    %c0_i32 = arith.constant 0 : i32
    %c0_i32_0 = arith.constant 0 : i32
    %c0_i32_1 = arith.constant 0 : i32
    return %c0_i32, %c0_i32_0 : i32, i32
  }
  func.func @transform_3(%arg0: i32) -> (i32, i32) {
    %c0_i32 = arith.constant 0 : i32
    %c0_i32_0 = arith.constant 0 : i32
    %c0_i32_1 = arith.constant 0 : i32
    return %c0_i32, %c0_i32_0 : i32, i32
  }
  func.func @transform_4(%arg0: i32) -> (i32, i32) {
    %c0_i32 = arith.constant 0 : i32
    %c0_i32_0 = arith.constant 0 : i32
    return %arg0, %c0_i32 : i32, i32
  }
}

module attributes {stable_mosaic.version = 11 : i64} {
  func.func @_attn_block_kernel(%arg0: i32, %arg1: memref<8x32xbf16, #tpu.memory_space<vmem>>, %arg2: memref<1x32xf32, #tpu.memory_space<vmem>>, %arg3: memref<1x32xf32, #tpu.memory_space<vmem>>, %arg4: memref<32x96xbf16, #tpu.memory_space<vmem>>, %arg5: memref<1x96xf32, #tpu.memory_space<vmem>>, %arg6: memref<4x8x32xbf16, #tpu.memory_space<vmem>>, %arg7: memref<1x32xf32, #tpu.memory_space<vmem>>, %arg8: memref<4x4x4xf32, #tpu.memory_space<vmem>>, %arg9: memref<8x32xbf16, #tpu.memory_space<vmem>>) attributes {dimension_semantics = [#tpu.dimension_semantics<parallel>], iteration_bounds = array<i64: 1>, scalar_prefetch = 0 : i64, scratch_operands = 0 : i64, tpu.core_type = #tpu.core_type<tc>, window_params = [{transform_indices = @transform_0, window_bounds = array<i64: 8, 32>}, {pipeline_mode = #tpu.pipeline_mode<synchronous>, transform_indices = @transform_1, window_bounds = array<i64: 1, 32>}, {pipeline_mode = #tpu.pipeline_mode<synchronous>, transform_indices = @transform_2, window_bounds = array<i64: 1, 32>}, {pipeline_mode = #tpu.pipeline_mode<synchronous>, transform_indices = @transform_3, window_bounds = array<i64: 32, 96>}, {pipeline_mode = #tpu.pipeline_mode<synchronous>, transform_indices = @transform_4, window_bounds = array<i64: 1, 96>}, {pipeline_mode = #tpu.pipeline_mode<synchronous>, transform_indices = @transform_5, window_bounds = array<i64: 4, 8, 32>}, {pipeline_mode = #tpu.pipeline_mode<synchronous>, transform_indices = @transform_6, window_bounds = array<i64: 1, 32>}, {pipeline_mode = #tpu.pipeline_mode<synchronous>, transform_indices = @transform_7, window_bounds = array<i64: 4, 4, 4>}, {transform_indices = @transform_8, window_bounds = array<i64: 8, 32>}]} {
    %c0 = arith.constant 0 : index
    %c0_0 = arith.constant 0 : index
    %0 = vector.load %arg1[%c0, %c0_0] : memref<8x32xbf16, #tpu.memory_space<vmem>>, vector<8x32xbf16>
    %1 = arith.extf %0 : vector<8x32xbf16> to vector<8x32xf32>
    %c0_1 = arith.constant 0 : index
    %c0_2 = arith.constant 0 : index
    %2 = vector.load %arg2[%c0_1, %c0_2] : memref<1x32xf32, #tpu.memory_space<vmem>>, vector<1x32xf32>
    %c0_3 = arith.constant 0 : index
    %c0_4 = arith.constant 0 : index
    %3 = vector.load %arg3[%c0_3, %c0_4] : memref<1x32xf32, #tpu.memory_space<vmem>>, vector<1x32xf32>
    %cst = arith.constant dense<0.000000e+00> : vector<8xf32>
    %4 = vector.multi_reduction <add>, %1, %cst [1] : vector<8x32xf32> to vector<8xf32>
    %5 = vector.shape_cast %4 : vector<8xf32> to vector<8x1xf32>
    %cst_5 = arith.constant 3.200000e+01 : f32
    %6 = vector.broadcast %cst_5 : f32 to vector<8x1xf32>
    %7 = arith.divf %5, %6 : vector<8x1xf32>
    %8 = vector.broadcast %7 : vector<8x1xf32> to vector<8x32xf32>
    %9 = arith.subf %1, %8 : vector<8x32xf32>
    %10 = arith.mulf %9, %9 : vector<8x32xf32>
    %cst_6 = arith.constant dense<0.000000e+00> : vector<8xf32>
    %11 = vector.multi_reduction <add>, %10, %cst_6 [1] : vector<8x32xf32> to vector<8xf32>
    %12 = vector.shape_cast %11 : vector<8xf32> to vector<8x1xf32>
    %cst_7 = arith.constant 3.200000e+01 : f32
    %13 = vector.broadcast %cst_7 : f32 to vector<8x1xf32>
    %14 = arith.divf %12, %13 : vector<8x1xf32>
    %15 = vector.broadcast %7 : vector<8x1xf32> to vector<8x32xf32>
    %16 = arith.subf %1, %15 : vector<8x32xf32>
    %cst_8 = arith.constant 9.99999974E-6 : f32
    %17 = vector.broadcast %cst_8 : f32 to vector<8x1xf32>
    %18 = arith.addf %14, %17 : vector<8x1xf32>
    %19 = math.rsqrt %18 : vector<8x1xf32>
    %20 = vector.broadcast %19 : vector<8x1xf32> to vector<8x32xf32>
    %21 = arith.mulf %16, %20 : vector<8x32xf32>
    %22 = vector.broadcast %2 : vector<1x32xf32> to vector<8x32xf32>
    %23 = arith.mulf %21, %22 : vector<8x32xf32>
    %24 = vector.broadcast %3 : vector<1x32xf32> to vector<8x32xf32>
    %25 = arith.addf %23, %24 : vector<8x32xf32>
    %26 = arith.truncf %25 : vector<8x32xf32> to vector<8x32xbf16>
    %c0_9 = arith.constant 0 : index
    %c0_10 = arith.constant 0 : index
    %27 = vector.load %arg4[%c0_9, %c0_10] : memref<32x96xbf16, #tpu.memory_space<vmem>>, vector<32x96xbf16>
    %cst_11 = arith.constant dense<0.000000e+00> : vector<8x96xf32>
    %28 = tpu.matmul %26, %27, %cst_11 {dimension_numbers = #tpu.dot_dimension_numbers<[1], [0], [0], [1], [0, 0, 1, 1], [], []>} : vector<8x32xbf16>, vector<32x96xbf16>, vector<8x96xf32> -> vector<8x96xf32>
    %c0_12 = arith.constant 0 : index
    %c0_13 = arith.constant 0 : index
    %29 = vector.load %arg5[%c0_12, %c0_13] : memref<1x96xf32, #tpu.memory_space<vmem>>, vector<1x96xf32>
    %30 = vector.broadcast %29 : vector<1x96xf32> to vector<8x96xf32>
    %31 = arith.addf %28, %30 : vector<8x96xf32>
    %32 = vector.extract_strided_slice %31 {offsets = [0, 0], sizes = [8, 8], strides = [1, 1]} : vector<8x96xf32> to vector<8x8xf32>
    %33 = vector.shape_cast %32 : vector<8x8xf32> to vector<2x4x8xf32>
    %34 = vector.extract_strided_slice %31 {offsets = [0, 8], sizes = [8, 8], strides = [1, 1]} : vector<8x96xf32> to vector<8x8xf32>
    %35 = vector.shape_cast %34 : vector<8x8xf32> to vector<2x4x8xf32>
    %36 = vector.extract_strided_slice %31 {offsets = [0, 16], sizes = [8, 8], strides = [1, 1]} : vector<8x96xf32> to vector<8x8xf32>
    %37 = vector.shape_cast %36 : vector<8x8xf32> to vector<2x4x8xf32>
    %38 = vector.extract_strided_slice %31 {offsets = [0, 24], sizes = [8, 8], strides = [1, 1]} : vector<8x96xf32> to vector<8x8xf32>
    %39 = vector.shape_cast %38 : vector<8x8xf32> to vector<2x4x8xf32>
    %40 = vector.shape_cast %33 : vector<2x4x8xf32> to vector<1x2x4x8xf32>
    %41 = vector.shape_cast %35 : vector<2x4x8xf32> to vector<1x2x4x8xf32>
    %42 = vector.shape_cast %37 : vector<2x4x8xf32> to vector<1x2x4x8xf32>
    %43 = vector.shape_cast %39 : vector<2x4x8xf32> to vector<1x2x4x8xf32>
    %44 = tpu.concatenate %40, %41, %42, %43 in 0 : vector<1x2x4x8xf32>, vector<1x2x4x8xf32>, vector<1x2x4x8xf32>, vector<1x2x4x8xf32> -> vector<4x2x4x8xf32>
    %45 = vector.shape_cast %44 : vector<4x2x4x8xf32> to vector<8x4x8xf32>
    %cst_14 = arith.constant 0.353553385 : f32
    %46 = vector.broadcast %cst_14 : f32 to vector<8x4x8xf32>
    %47 = arith.mulf %45, %46 : vector<8x4x8xf32>
    %48 = vector.extract_strided_slice %31 {offsets = [0, 32], sizes = [8, 8], strides = [1, 1]} : vector<8x96xf32> to vector<8x8xf32>
    %49 = vector.shape_cast %48 : vector<8x8xf32> to vector<2x4x8xf32>
    %50 = vector.extract_strided_slice %31 {offsets = [0, 40], sizes = [8, 8], strides = [1, 1]} : vector<8x96xf32> to vector<8x8xf32>
    %51 = vector.shape_cast %50 : vector<8x8xf32> to vector<2x4x8xf32>
    %52 = vector.extract_strided_slice %31 {offsets = [0, 48], sizes = [8, 8], strides = [1, 1]} : vector<8x96xf32> to vector<8x8xf32>
    %53 = vector.shape_cast %52 : vector<8x8xf32> to vector<2x4x8xf32>
    %54 = vector.extract_strided_slice %31 {offsets = [0, 56], sizes = [8, 8], strides = [1, 1]} : vector<8x96xf32> to vector<8x8xf32>
    %55 = vector.shape_cast %54 : vector<8x8xf32> to vector<2x4x8xf32>
    %56 = vector.shape_cast %49 : vector<2x4x8xf32> to vector<1x2x4x8xf32>
    %57 = vector.shape_cast %51 : vector<2x4x8xf32> to vector<1x2x4x8xf32>
    %58 = vector.shape_cast %53 : vector<2x4x8xf32> to vector<1x2x4x8xf32>
    %59 = vector.shape_cast %55 : vector<2x4x8xf32> to vector<1x2x4x8xf32>
    %60 = tpu.concatenate %56, %57, %58, %59 in 0 : vector<1x2x4x8xf32>, vector<1x2x4x8xf32>, vector<1x2x4x8xf32>, vector<1x2x4x8xf32> -> vector<4x2x4x8xf32>
    %61 = vector.shape_cast %60 : vector<4x2x4x8xf32> to vector<8x4x8xf32>
    %62 = vector.extract_strided_slice %31 {offsets = [0, 64], sizes = [8, 8], strides = [1, 1]} : vector<8x96xf32> to vector<8x8xf32>
    %63 = vector.shape_cast %62 : vector<8x8xf32> to vector<2x4x8xf32>
    %64 = vector.extract_strided_slice %31 {offsets = [0, 72], sizes = [8, 8], strides = [1, 1]} : vector<8x96xf32> to vector<8x8xf32>
    %65 = vector.shape_cast %64 : vector<8x8xf32> to vector<2x4x8xf32>
    %66 = vector.extract_strided_slice %31 {offsets = [0, 80], sizes = [8, 8], strides = [1, 1]} : vector<8x96xf32> to vector<8x8xf32>
    %67 = vector.shape_cast %66 : vector<8x8xf32> to vector<2x4x8xf32>
    %68 = vector.extract_strided_slice %31 {offsets = [0, 88], sizes = [8, 8], strides = [1, 1]} : vector<8x96xf32> to vector<8x8xf32>
    %69 = vector.shape_cast %68 : vector<8x8xf32> to vector<2x4x8xf32>
    %70 = vector.shape_cast %63 : vector<2x4x8xf32> to vector<1x2x4x8xf32>
    %71 = vector.shape_cast %65 : vector<2x4x8xf32> to vector<1x2x4x8xf32>
    %72 = vector.shape_cast %67 : vector<2x4x8xf32> to vector<1x2x4x8xf32>
    %73 = vector.shape_cast %69 : vector<2x4x8xf32> to vector<1x2x4x8xf32>
    %74 = tpu.concatenate %70, %71, %72, %73 in 0 : vector<1x2x4x8xf32>, vector<1x2x4x8xf32>, vector<1x2x4x8xf32>, vector<1x2x4x8xf32> -> vector<4x2x4x8xf32>
    %75 = vector.shape_cast %74 : vector<4x2x4x8xf32> to vector<8x4x8xf32>
    %76 = arith.truncf %47 : vector<8x4x8xf32> to vector<8x4x8xbf16>
    %77 = arith.truncf %61 : vector<8x4x8xf32> to vector<8x4x8xbf16>
    "tpu.trace_start"() <{level = 10 : i32, message = "bnd,bmd->bnm"}> : () -> ()
    %cst_15 = arith.constant dense<0.000000e+00> : vector<8x4x4xf32>
    %78 = tpu.matmul %76, %77, %cst_15 {dimension_numbers = #tpu.dot_dimension_numbers<[2], [2], [1], [1], [0, 0, 0, 1, 1, 1], [0], [0]>} : vector<8x4x8xbf16>, vector<8x4x8xbf16>, vector<8x4x4xf32> -> vector<8x4x4xf32>
    "tpu.trace_stop"() : () -> ()
    %79 = vector.shape_cast %78 : vector<8x4x4xf32> to vector<4x2x4x4xf32>
    %c0_16 = arith.constant 0 : index
    %c0_17 = arith.constant 0 : index
    %c0_18 = arith.constant 0 : index
    %80 = vector.load %arg8[%c0_16, %c0_17, %c0_18] : memref<4x4x4xf32, #tpu.memory_space<vmem>>, vector<4x4x4xf32>
    %81 = vector.shape_cast %80 : vector<4x4x4xf32> to vector<4x1x4x4xf32>
    %82 = vector.broadcast %81 : vector<4x1x4x4xf32> to vector<4x2x4x4xf32>
    %83 = arith.addf %79, %82 : vector<4x2x4x4xf32>
    %cst_19 = arith.constant dense<0xFF800000> : vector<4x2x4xf32>
    %84 = vector.multi_reduction <maximumf>, %83, %cst_19 [3] : vector<4x2x4x4xf32> to vector<4x2x4xf32>
    %85 = vector.shape_cast %84 : vector<4x2x4xf32> to vector<4x2x4x1xf32>
    %86 = vector.broadcast %85 : vector<4x2x4x1xf32> to vector<4x2x4x4xf32>
    %87 = arith.subf %83, %86 : vector<4x2x4x4xf32>
    %88 = math.exp %87 : vector<4x2x4x4xf32>
    %cst_20 = arith.constant dense<0.000000e+00> : vector<4x2x4xf32>
    %89 = vector.multi_reduction <add>, %88, %cst_20 [3] : vector<4x2x4x4xf32> to vector<4x2x4xf32>
    %90 = vector.shape_cast %89 : vector<4x2x4xf32> to vector<4x2x4x1xf32>
    %91 = tpu.reciprocal %90 {approx = true} : vector<4x2x4x1xf32> -> vector<4x2x4x1xf32>
    %92 = vector.broadcast %91 : vector<4x2x4x1xf32> to vector<4x2x4x4xf32>
    %93 = arith.mulf %88, %92 : vector<4x2x4x4xf32>
    %94 = vector.shape_cast %93 : vector<4x2x4x4xf32> to vector<8x4x4xf32>
    %95 = arith.truncf %94 : vector<8x4x4xf32> to vector<8x4x4xbf16>
    %96 = arith.truncf %75 : vector<8x4x8xf32> to vector<8x4x8xbf16>
    "tpu.trace_start"() <{level = 10 : i32, message = "bnm,bmd->bnd"}> : () -> ()
    %cst_21 = arith.constant dense<0.000000e+00> : vector<8x4x8xf32>
    %97 = tpu.matmul %95, %96, %cst_21 {dimension_numbers = #tpu.dot_dimension_numbers<[2], [1], [1], [2], [0, 0, 0, 1, 1, 2], [0], [0]>} : vector<8x4x4xbf16>, vector<8x4x8xbf16>, vector<8x4x8xf32> -> vector<8x4x8xf32>
    "tpu.trace_stop"() : () -> ()
    %98 = vector.shape_cast %97 : vector<8x4x8xf32> to vector<4x8x8xf32>
    %99 = arith.truncf %98 : vector<4x8x8xf32> to vector<4x8x8xbf16>
    %c0_22 = arith.constant 0 : index
    %c0_23 = arith.constant 0 : index
    %c0_24 = arith.constant 0 : index
    %100 = vector.load %arg6[%c0_22, %c0_23, %c0_24] : memref<4x8x32xbf16, #tpu.memory_space<vmem>>, vector<4x8x32xbf16>
    "tpu.trace_start"() <{level = 10 : i32, message = "hmd,hdc->hmc"}> : () -> ()
    %cst_25 = arith.constant dense<0.000000e+00> : vector<4x8x32xf32>
    %101 = tpu.matmul %99, %100, %cst_25 {dimension_numbers = #tpu.dot_dimension_numbers<[2], [1], [1], [2], [0, 0, 0, 1, 1, 2], [0], [0]>} : vector<4x8x8xbf16>, vector<4x8x32xbf16>, vector<4x8x32xf32> -> vector<4x8x32xf32>
    "tpu.trace_stop"() : () -> ()
    %cst_26 = arith.constant dense<0.000000e+00> : vector<8x32xf32>
    %102 = vector.multi_reduction <add>, %101, %cst_26 [0] : vector<4x8x32xf32> to vector<8x32xf32>
    %c0_27 = arith.constant 0 : index
    %c0_28 = arith.constant 0 : index
    %103 = vector.load %arg7[%c0_27, %c0_28] : memref<1x32xf32, #tpu.memory_space<vmem>>, vector<1x32xf32>
    %104 = vector.broadcast %103 : vector<1x32xf32> to vector<8x32xf32>
    %105 = arith.addf %102, %104 : vector<8x32xf32>
    %106 = arith.addf %1, %105 : vector<8x32xf32>
    %107 = arith.truncf %106 : vector<8x32xf32> to vector<8x32xbf16>
    %c0_29 = arith.constant 0 : index
    %c0_30 = arith.constant 0 : index
    %108 = vector.load %arg9[%c0_29, %c0_30] : memref<8x32xbf16, #tpu.memory_space<vmem>>, vector<8x32xbf16>
    tpu.vector_store %arg9[%c0_29, %c0_30], %107 {strides = array<i32>} : memref<8x32xbf16, #tpu.memory_space<vmem>>, vector<8x32xbf16>,
    return
  }
  func.func @transform_0(%arg0: i32) -> (i32, i32) {
    %c0_i32 = arith.constant 0 : i32
    %c0_i32_0 = arith.constant 0 : i32
    return %arg0, %c0_i32 : i32, i32
  }
  func.func @transform_1(%arg0: i32) -> (i32, i32) {
    %c0_i32 = arith.constant 0 : i32
    %c0_i32_0 = arith.constant 0 : i32
    %c0_i32_1 = arith.constant 0 : i32
    return %c0_i32, %c0_i32_0 : i32, i32
  }
  func.func @transform_2(%arg0: i32) -> (i32, i32) {
    %c0_i32 = arith.constant 0 : i32
    %c0_i32_0 = arith.constant 0 : i32
    %c0_i32_1 = arith.constant 0 : i32
    return %c0_i32, %c0_i32_0 : i32, i32
  }
  func.func @transform_3(%arg0: i32) -> (i32, i32) {
    %c0_i32 = arith.constant 0 : i32
    %c0_i32_0 = arith.constant 0 : i32
    %c0_i32_1 = arith.constant 0 : i32
    return %c0_i32, %c0_i32_0 : i32, i32
  }
  func.func @transform_4(%arg0: i32) -> (i32, i32) {
    %c0_i32 = arith.constant 0 : i32
    %c0_i32_0 = arith.constant 0 : i32
    %c0_i32_1 = arith.constant 0 : i32
    return %c0_i32, %c0_i32_0 : i32, i32
  }
  func.func @transform_5(%arg0: i32) -> (i32, i32, i32) {
    %c0_i32 = arith.constant 0 : i32
    %c0_i32_0 = arith.constant 0 : i32
    %c0_i32_1 = arith.constant 0 : i32
    %c0_i32_2 = arith.constant 0 : i32
    return %c0_i32, %c0_i32_0, %c0_i32_1 : i32, i32, i32
  }
  func.func @transform_6(%arg0: i32) -> (i32, i32) {
    %c0_i32 = arith.constant 0 : i32
    %c0_i32_0 = arith.constant 0 : i32
    %c0_i32_1 = arith.constant 0 : i32
    return %c0_i32, %c0_i32_0 : i32, i32
  }
  func.func @transform_7(%arg0: i32) -> (i32, i32, i32) {
    %c0_i32 = arith.constant 0 : i32
    %c0_i32_0 = arith.constant 0 : i32
    %c0_i32_1 = arith.constant 0 : i32
    %c0_i32_2 = arith.constant 0 : i32
    return %c0_i32, %c0_i32_0, %c0_i32_1 : i32, i32, i32
  }
  func.func @transform_8(%arg0: i32) -> (i32, i32) {
    %c0_i32 = arith.constant 0 : i32
    %c0_i32_0 = arith.constant 0 : i32
    return %arg0, %c0_i32 : i32, i32
  }
}

module attributes {stable_mosaic.version = 11 : i64} {
  func.func @_mlp_block_kernel(%arg0: i32, %arg1: memref<8x32xbf16, #tpu.memory_space<vmem>>, %arg2: memref<1x32xf32, #tpu.memory_space<vmem>>, %arg3: memref<1x32xf32, #tpu.memory_space<vmem>>, %arg4: memref<32x128xbf16, #tpu.memory_space<vmem>>, %arg5: memref<1x128xf32, #tpu.memory_space<vmem>>, %arg6: memref<128x32xbf16, #tpu.memory_space<vmem>>, %arg7: memref<1x32xf32, #tpu.memory_space<vmem>>, %arg8: memref<8x32xbf16, #tpu.memory_space<vmem>>) attributes {dimension_semantics = [#tpu.dimension_semantics<parallel>], iteration_bounds = array<i64: 1>, scalar_prefetch = 0 : i64, scratch_operands = 0 : i64, tpu.core_type = #tpu.core_type<tc>, window_params = [{transform_indices = @transform_0, window_bounds = array<i64: 8, 32>}, {pipeline_mode = #tpu.pipeline_mode<synchronous>, transform_indices = @transform_1, window_bounds = array<i64: 1, 32>}, {pipeline_mode = #tpu.pipeline_mode<synchronous>, transform_indices = @transform_2, window_bounds = array<i64: 1, 32>}, {pipeline_mode = #tpu.pipeline_mode<synchronous>, transform_indices = @transform_3, window_bounds = array<i64: 32, 128>}, {pipeline_mode = #tpu.pipeline_mode<synchronous>, transform_indices = @transform_4, window_bounds = array<i64: 1, 128>}, {pipeline_mode = #tpu.pipeline_mode<synchronous>, transform_indices = @transform_5, window_bounds = array<i64: 128, 32>}, {pipeline_mode = #tpu.pipeline_mode<synchronous>, transform_indices = @transform_6, window_bounds = array<i64: 1, 32>}, {transform_indices = @transform_7, window_bounds = array<i64: 8, 32>}]} {
    %c0 = arith.constant 0 : index
    %c0_0 = arith.constant 0 : index
    %0 = vector.load %arg1[%c0, %c0_0] : memref<8x32xbf16, #tpu.memory_space<vmem>>, vector<8x32xbf16>
    %1 = arith.extf %0 : vector<8x32xbf16> to vector<8x32xf32>
    %c0_1 = arith.constant 0 : index
    %c0_2 = arith.constant 0 : index
    %2 = vector.load %arg2[%c0_1, %c0_2] : memref<1x32xf32, #tpu.memory_space<vmem>>, vector<1x32xf32>
    %c0_3 = arith.constant 0 : index
    %c0_4 = arith.constant 0 : index
    %3 = vector.load %arg3[%c0_3, %c0_4] : memref<1x32xf32, #tpu.memory_space<vmem>>, vector<1x32xf32>
    %cst = arith.constant dense<0.000000e+00> : vector<8xf32>
    %4 = vector.multi_reduction <add>, %1, %cst [1] : vector<8x32xf32> to vector<8xf32>
    %5 = vector.shape_cast %4 : vector<8xf32> to vector<8x1xf32>
    %cst_5 = arith.constant 3.200000e+01 : f32
    %6 = vector.broadcast %cst_5 : f32 to vector<8x1xf32>
    %7 = arith.divf %5, %6 : vector<8x1xf32>
    %8 = vector.broadcast %7 : vector<8x1xf32> to vector<8x32xf32>
    %9 = arith.subf %1, %8 : vector<8x32xf32>
    %10 = arith.mulf %9, %9 : vector<8x32xf32>
    %cst_6 = arith.constant dense<0.000000e+00> : vector<8xf32>
    %11 = vector.multi_reduction <add>, %10, %cst_6 [1] : vector<8x32xf32> to vector<8xf32>
    %12 = vector.shape_cast %11 : vector<8xf32> to vector<8x1xf32>
    %cst_7 = arith.constant 3.200000e+01 : f32
    %13 = vector.broadcast %cst_7 : f32 to vector<8x1xf32>
    %14 = arith.divf %12, %13 : vector<8x1xf32>
    %15 = vector.broadcast %7 : vector<8x1xf32> to vector<8x32xf32>
    %16 = arith.subf %1, %15 : vector<8x32xf32>
    %cst_8 = arith.constant 9.99999974E-6 : f32
    %17 = vector.broadcast %cst_8 : f32 to vector<8x1xf32>
    %18 = arith.addf %14, %17 : vector<8x1xf32>
    %19 = math.rsqrt %18 : vector<8x1xf32>
    %20 = vector.broadcast %19 : vector<8x1xf32> to vector<8x32xf32>
    %21 = arith.mulf %16, %20 : vector<8x32xf32>
    %22 = vector.broadcast %2 : vector<1x32xf32> to vector<8x32xf32>
    %23 = arith.mulf %21, %22 : vector<8x32xf32>
    %24 = vector.broadcast %3 : vector<1x32xf32> to vector<8x32xf32>
    %25 = arith.addf %23, %24 : vector<8x32xf32>
    %26 = arith.truncf %25 : vector<8x32xf32> to vector<8x32xbf16>
    %c0_9 = arith.constant 0 : index
    %c0_10 = arith.constant 0 : index
    %27 = vector.load %arg4[%c0_9, %c0_10] : memref<32x128xbf16, #tpu.memory_space<vmem>>, vector<32x128xbf16>
    %cst_11 = arith.constant dense<0.000000e+00> : vector<8x128xf32>
    %28 = tpu.matmul %26, %27, %cst_11 {dimension_numbers = #tpu.dot_dimension_numbers<[1], [0], [0], [1], [0, 0, 1, 1], [], []>} : vector<8x32xbf16>, vector<32x128xbf16>, vector<8x128xf32> -> vector<8x128xf32>
    %c0_12 = arith.constant 0 : index
    %c0_13 = arith.constant 0 : index
    %29 = vector.load %arg5[%c0_12, %c0_13] : memref<1x128xf32, #tpu.memory_space<vmem>>, vector<1x128xf32>
    %30 = vector.broadcast %29 : vector<1x128xf32> to vector<8x128xf32>
    %31 = arith.addf %28, %30 : vector<8x128xf32>
    %cst_14 = arith.constant 5.000000e-01 : f32
    %32 = vector.broadcast %cst_14 : f32 to vector<8x128xf32>
    %33 = arith.mulf %32, %31 : vector<8x128xf32>
    %cst_15 = arith.constant 0.707106769 : f32
    %34 = vector.broadcast %cst_15 : f32 to vector<8x128xf32>
    %35 = arith.mulf %31, %34 : vector<8x128xf32>
    %36 = math.absf %35 : vector<8x128xf32>
    %cst_16 = arith.constant 0.327591091 : f32
    %37 = vector.broadcast %cst_16 : f32 to vector<8x128xf32>
    %38 = arith.mulf %37, %36 : vector<8x128xf32>
    %cst_17 = arith.constant 1.000000e+00 : f32
    %39 = vector.broadcast %cst_17 : f32 to vector<8x128xf32>
    %40 = arith.addf %39, %38 : vector<8x128xf32>
    %cst_18 = arith.constant 1.000000e+00 : f32
    %41 = vector.broadcast %cst_18 : f32 to vector<8x128xf32>
    %42 = arith.divf %41, %40 : vector<8x128xf32>
    %cst_19 = arith.constant 1.06140542 : f32
    %43 = vector.broadcast %cst_19 : f32 to vector<8x128xf32>
    %44 = arith.mulf %43, %42 : vector<8x128xf32>
    %cst_20 = arith.constant -1.45315206 : f32
    %45 = vector.broadcast %cst_20 : f32 to vector<8x128xf32>
    %46 = arith.addf %44, %45 : vector<8x128xf32>
    %47 = arith.mulf %46, %42 : vector<8x128xf32>
    %cst_21 = arith.constant 1.42141378 : f32
    %48 = vector.broadcast %cst_21 : f32 to vector<8x128xf32>
    %49 = arith.addf %47, %48 : vector<8x128xf32>
    %50 = arith.mulf %49, %42 : vector<8x128xf32>
    %cst_22 = arith.constant -0.284496725 : f32
    %51 = vector.broadcast %cst_22 : f32 to vector<8x128xf32>
    %52 = arith.addf %50, %51 : vector<8x128xf32>
    %53 = arith.mulf %52, %42 : vector<8x128xf32>
    %cst_23 = arith.constant 0.254829586 : f32
    %54 = vector.broadcast %cst_23 : f32 to vector<8x128xf32>
    %55 = arith.addf %53, %54 : vector<8x128xf32>
    %56 = arith.mulf %55, %42 : vector<8x128xf32>
    %cst_24 = arith.constant 0.000000e+00 : f32
    %57 = vector.broadcast %cst_24 : f32 to vector<8x128xf32>
    %58 = arith.subf %57, %36 : vector<8x128xf32>
    %59 = arith.mulf %58, %36 : vector<8x128xf32>
    %60 = math.exp %59 : vector<8x128xf32>
    %61 = arith.mulf %56, %60 : vector<8x128xf32>
    %cst_25 = arith.constant 1.000000e+00 : f32
    %62 = vector.broadcast %cst_25 : f32 to vector<8x128xf32>
    %63 = arith.subf %62, %61 : vector<8x128xf32>
    %cst_26 = arith.constant 0.000000e+00 : f32
    %64 = vector.broadcast %cst_26 : f32 to vector<8x128xf32>
    %65 = arith.cmpf oge, %35, %64 : vector<8x128xf32>
    %cst_27 = arith.constant 0.000000e+00 : f32
    %66 = vector.broadcast %cst_27 : f32 to vector<8x128xf32>
    %67 = arith.subf %66, %63 : vector<8x128xf32>
    %68 = arith.select %65, %63, %67 : vector<8x128xi1>, vector<8x128xf32>
    %cst_28 = arith.constant 1.000000e+00 : f32
    %69 = vector.broadcast %cst_28 : f32 to vector<8x128xf32>
    %70 = arith.addf %69, %68 : vector<8x128xf32>
    %71 = arith.mulf %33, %70 : vector<8x128xf32>
    %72 = arith.truncf %71 : vector<8x128xf32> to vector<8x128xbf16>
    %c0_29 = arith.constant 0 : index
    %c0_30 = arith.constant 0 : index
    %73 = vector.load %arg6[%c0_29, %c0_30] : memref<128x32xbf16, #tpu.memory_space<vmem>>, vector<128x32xbf16>
    %cst_31 = arith.constant dense<0.000000e+00> : vector<8x32xf32>
    %74 = tpu.matmul %72, %73, %cst_31 {dimension_numbers = #tpu.dot_dimension_numbers<[1], [0], [0], [1], [0, 0, 1, 1], [], []>} : vector<8x128xbf16>, vector<128x32xbf16>, vector<8x32xf32> -> vector<8x32xf32>
    %c0_32 = arith.constant 0 : index
    %c0_33 = arith.constant 0 : index
    %75 = vector.load %arg7[%c0_32, %c0_33] : memref<1x32xf32, #tpu.memory_space<vmem>>, vector<1x32xf32>
    %76 = vector.broadcast %75 : vector<1x32xf32> to vector<8x32xf32>
    %77 = arith.addf %74, %76 : vector<8x32xf32>
    %78 = arith.addf %1, %77 : vector<8x32xf32>
    %79 = arith.truncf %78 : vector<8x32xf32> to vector<8x32xbf16>
    %c0_34 = arith.constant 0 : index
    %c0_35 = arith.constant 0 : index
    %80 = vector.load %arg8[%c0_34, %c0_35] : memref<8x32xbf16, #tpu.memory_space<vmem>>, vector<8x32xbf16>
    tpu.vector_store %arg8[%c0_34, %c0_35], %79 {strides = array<i32>} : memref<8x32xbf16, #tpu.memory_space<vmem>>, vector<8x32xbf16>,
    return
  }
  func.func @transform_0(%arg0: i32) -> (i32, i32) {
    %c0_i32 = arith.constant 0 : i32
    %c0_i32_0 = arith.constant 0 : i32
    return %arg0, %c0_i32 : i32, i32
  }
  func.func @transform_1(%arg0: i32) -> (i32, i32) {
    %c0_i32 = arith.constant 0 : i32
    %c0_i32_0 = arith.constant 0 : i32
    %c0_i32_1 = arith.constant 0 : i32
    return %c0_i32, %c0_i32_0 : i32, i32
  }
  func.func @transform_2(%arg0: i32) -> (i32, i32) {
    %c0_i32 = arith.constant 0 : i32
    %c0_i32_0 = arith.constant 0 : i32
    %c0_i32_1 = arith.constant 0 : i32
    return %c0_i32, %c0_i32_0 : i32, i32
  }
  func.func @transform_3(%arg0: i32) -> (i32, i32) {
    %c0_i32 = arith.constant 0 : i32
    %c0_i32_0 = arith.constant 0 : i32
    %c0_i32_1 = arith.constant 0 : i32
    return %c0_i32, %c0_i32_0 : i32, i32
  }
  func.func @transform_4(%arg0: i32) -> (i32, i32) {
    %c0_i32 = arith.constant 0 : i32
    %c0_i32_0 = arith.constant 0 : i32
    %c0_i32_1 = arith.constant 0 : i32
    return %c0_i32, %c0_i32_0 : i32, i32
  }
  func.func @transform_5(%arg0: i32) -> (i32, i32) {
    %c0_i32 = arith.constant 0 : i32
    %c0_i32_0 = arith.constant 0 : i32
    %c0_i32_1 = arith.constant 0 : i32
    return %c0_i32, %c0_i32_0 : i32, i32
  }
  func.func @transform_6(%arg0: i32) -> (i32, i32) {
    %c0_i32 = arith.constant 0 : i32
    %c0_i32_0 = arith.constant 0 : i32
    %c0_i32_1 = arith.constant 0 : i32
    return %c0_i32, %c0_i32_0 : i32, i32
  }
  func.func @transform_7(%arg0: i32) -> (i32, i32) {
    %c0_i32 = arith.constant 0 : i32
    %c0_i32_0 = arith.constant 0 : i32
    return %arg0, %c0_i32 : i32, i32
  }
}

module attributes {stable_mosaic.version = 11 : i64} {
  func.func @_head_kernel(%arg0: i32, %arg1: memref<2x4x32xbf16, #tpu.memory_space<vmem>>, %arg2: memref<1x32xf32, #tpu.memory_space<vmem>>, %arg3: memref<1x32xf32, #tpu.memory_space<vmem>>, %arg4: memref<32x5xbf16, #tpu.memory_space<vmem>>, %arg5: memref<1x5xf32, #tpu.memory_space<vmem>>, %arg6: memref<2x5xf32, #tpu.memory_space<vmem>>) attributes {dimension_semantics = [#tpu.dimension_semantics<parallel>], iteration_bounds = array<i64: 1>, scalar_prefetch = 0 : i64, scratch_operands = 0 : i64, tpu.core_type = #tpu.core_type<tc>, window_params = [{pipeline_mode = #tpu.pipeline_mode<synchronous>, transform_indices = @transform_0, window_bounds = array<i64: 2, 4, 32>}, {pipeline_mode = #tpu.pipeline_mode<synchronous>, transform_indices = @transform_1, window_bounds = array<i64: 1, 32>}, {pipeline_mode = #tpu.pipeline_mode<synchronous>, transform_indices = @transform_2, window_bounds = array<i64: 1, 32>}, {pipeline_mode = #tpu.pipeline_mode<synchronous>, transform_indices = @transform_3, window_bounds = array<i64: 32, 5>}, {pipeline_mode = #tpu.pipeline_mode<synchronous>, transform_indices = @transform_4, window_bounds = array<i64: 1, 5>}, {pipeline_mode = #tpu.pipeline_mode<synchronous>, transform_indices = @transform_5, window_bounds = array<i64: 2, 5>}]} {
    %c0 = arith.constant 0 : index
    %c0_0 = arith.constant 0 : index
    %c0_1 = arith.constant 0 : index
    %0 = vector.load %arg1[%c0, %c0_0, %c0_1] : memref<2x4x32xbf16, #tpu.memory_space<vmem>>, vector<2x4x32xbf16>
    %1 = arith.extf %0 : vector<2x4x32xbf16> to vector<2x4x32xf32>
    %c0_2 = arith.constant 0 : index
    %c0_3 = arith.constant 0 : index
    %2 = vector.load %arg2[%c0_2, %c0_3] : memref<1x32xf32, #tpu.memory_space<vmem>>, vector<1x32xf32>
    %c0_4 = arith.constant 0 : index
    %c0_5 = arith.constant 0 : index
    %3 = vector.load %arg3[%c0_4, %c0_5] : memref<1x32xf32, #tpu.memory_space<vmem>>, vector<1x32xf32>
    %cst = arith.constant dense<0.000000e+00> : vector<2x4xf32>
    %4 = vector.multi_reduction <add>, %1, %cst [2] : vector<2x4x32xf32> to vector<2x4xf32>
    %5 = vector.shape_cast %4 : vector<2x4xf32> to vector<2x4x1xf32>
    %cst_6 = arith.constant 3.200000e+01 : f32
    %6 = vector.broadcast %cst_6 : f32 to vector<2x4x1xf32>
    %7 = arith.divf %5, %6 : vector<2x4x1xf32>
    %8 = vector.broadcast %7 : vector<2x4x1xf32> to vector<2x4x32xf32>
    %9 = arith.subf %1, %8 : vector<2x4x32xf32>
    %10 = arith.mulf %9, %9 : vector<2x4x32xf32>
    %cst_7 = arith.constant dense<0.000000e+00> : vector<2x4xf32>
    %11 = vector.multi_reduction <add>, %10, %cst_7 [2] : vector<2x4x32xf32> to vector<2x4xf32>
    %12 = vector.shape_cast %11 : vector<2x4xf32> to vector<2x4x1xf32>
    %cst_8 = arith.constant 3.200000e+01 : f32
    %13 = vector.broadcast %cst_8 : f32 to vector<2x4x1xf32>
    %14 = arith.divf %12, %13 : vector<2x4x1xf32>
    %15 = vector.broadcast %7 : vector<2x4x1xf32> to vector<2x4x32xf32>
    %16 = arith.subf %1, %15 : vector<2x4x32xf32>
    %cst_9 = arith.constant 9.99999974E-6 : f32
    %17 = vector.broadcast %cst_9 : f32 to vector<2x4x1xf32>
    %18 = arith.addf %14, %17 : vector<2x4x1xf32>
    %19 = math.rsqrt %18 : vector<2x4x1xf32>
    %20 = vector.broadcast %19 : vector<2x4x1xf32> to vector<2x4x32xf32>
    %21 = arith.mulf %16, %20 : vector<2x4x32xf32>
    %22 = vector.shape_cast %2 : vector<1x32xf32> to vector<1x1x32xf32>
    %23 = vector.broadcast %22 : vector<1x1x32xf32> to vector<2x4x32xf32>
    %24 = arith.mulf %21, %23 : vector<2x4x32xf32>
    %25 = vector.shape_cast %3 : vector<1x32xf32> to vector<1x1x32xf32>
    %26 = vector.broadcast %25 : vector<1x1x32xf32> to vector<2x4x32xf32>
    %27 = arith.addf %24, %26 : vector<2x4x32xf32>
    %cst_10 = arith.constant dense<0.000000e+00> : vector<2x32xf32>
    %28 = vector.multi_reduction <add>, %27, %cst_10 [1] : vector<2x4x32xf32> to vector<2x32xf32>
    %cst_11 = arith.constant 4.000000e+00 : f32
    %29 = vector.broadcast %cst_11 : f32 to vector<2x32xf32>
    %30 = arith.divf %28, %29 : vector<2x32xf32>
    %31 = arith.truncf %30 : vector<2x32xf32> to vector<2x32xbf16>
    %c0_12 = arith.constant 0 : index
    %c0_13 = arith.constant 0 : index
    %32 = vector.load %arg4[%c0_12, %c0_13] : memref<32x5xbf16, #tpu.memory_space<vmem>>, vector<32x5xbf16>
    %cst_14 = arith.constant dense<0.000000e+00> : vector<2x5xf32>
    %33 = tpu.matmul %31, %32, %cst_14 {dimension_numbers = #tpu.dot_dimension_numbers<[1], [0], [0], [1], [0, 0, 1, 1], [], []>} : vector<2x32xbf16>, vector<32x5xbf16>, vector<2x5xf32> -> vector<2x5xf32>
    %c0_15 = arith.constant 0 : index
    %c0_16 = arith.constant 0 : index
    %34 = vector.load %arg5[%c0_15, %c0_16] : memref<1x5xf32, #tpu.memory_space<vmem>>, vector<1x5xf32>
    %35 = vector.broadcast %34 : vector<1x5xf32> to vector<2x5xf32>
    %36 = arith.addf %33, %35 : vector<2x5xf32>
    %c0_17 = arith.constant 0 : index
    %c0_18 = arith.constant 0 : index
    %37 = vector.load %arg6[%c0_17, %c0_18] : memref<2x5xf32, #tpu.memory_space<vmem>>, vector<2x5xf32>
    tpu.vector_store %arg6[%c0_17, %c0_18], %36 {strides = array<i32>} : memref<2x5xf32, #tpu.memory_space<vmem>>, vector<2x5xf32>,
    return
  }
  func.func @transform_0(%arg0: i32) -> (i32, i32, i32) {
    %c0_i32 = arith.constant 0 : i32
    %c0_i32_0 = arith.constant 0 : i32
    %c0_i32_1 = arith.constant 0 : i32
    %c0_i32_2 = arith.constant 0 : i32
    return %c0_i32, %c0_i32_0, %c0_i32_1 : i32, i32, i32
  }
  func.func @transform_1(%arg0: i32) -> (i32, i32) {
    %c0_i32 = arith.constant 0 : i32
    %c0_i32_0 = arith.constant 0 : i32
    %c0_i32_1 = arith.constant 0 : i32
    return %c0_i32, %c0_i32_0 : i32, i32
  }
  func.func @transform_2(%arg0: i32) -> (i32, i32) {
    %c0_i32 = arith.constant 0 : i32
    %c0_i32_0 = arith.constant 0 : i32
    %c0_i32_1 = arith.constant 0 : i32
    return %c0_i32, %c0_i32_0 : i32, i32
  }
  func.func @transform_3(%arg0: i32) -> (i32, i32) {
    %c0_i32 = arith.constant 0 : i32
    %c0_i32_0 = arith.constant 0 : i32
    %c0_i32_1 = arith.constant 0 : i32
    return %c0_i32, %c0_i32_0 : i32, i32
  }
  func.func @transform_4(%arg0: i32) -> (i32, i32) {
    %c0_i32 = arith.constant 0 : i32
    %c0_i32_0 = arith.constant 0 : i32
    %c0_i32_1 = arith.constant 0 : i32
    return %c0_i32, %c0_i32_0 : i32, i32
  }
  func.func @transform_5(%arg0: i32) -> (i32, i32) {
    %c0_i32 = arith.constant 0 : i32
    %c0_i32_0 = arith.constant 0 : i32
    %c0_i32_1 = arith.constant 0 : i32
    return %c0_i32, %c0_i32_0 : i32, i32
  }
}

</mosaic_0001>

<llo_original>
// kernel: _lambda_.11
$region0: #{_lambda_.11}
  #allocation0 [shape = 'u32[]', space=smem, size = 0x4, offset = 0x4, fixed_abs, tag = 'smem constant byte address 0x4 - core index']
  #allocation1 [shape = 'u32[144,128]{1,0:T(1,128)}', space=vmem, size = 0x12000, scoped, tag = 'internal scratch']
  %s0 = inlined_call_operand.vmem [shape: bf16[32,48], index: 0, kind: input, shape index: {}]
  %s1 = inlined_call_operand.vmem [shape: bf16[48,16], index: 1, kind: input, shape index: {}]
  %s2 = inlined_call_operand.vmem [shape: f32[1,16], index: 2, kind: input, shape index: {}, may-alias: {2,4}]
  %s3 = inlined_call_operand.vmem [shape: f32[1,16], index: 3, kind: input, shape index: {}]
  %s4 = inlined_call_operand.vmem [shape: f32[1,16], index: 4, kind: input, shape index: {}, may-alias: {2,4}]
  %s5 = inlined_call_operand.vmem [shape: bf16[32,16], index: 5, kind: output, shape index: {}]
  %s6 = sld [smem:[#allocation0]]
  $region30: #{_lambda_.11} parent=0
    _
  %s8 = ssub.s32 1, %s6
  %s9 = scalar_select 0, %s8, %s6
  // Predicated region
  $region2: #{_lambda_.11} parent=0 // pred_check
    _
  $region3: #{_lambda_.11} parent=0 // pred_check_branch
    %11 = sbr.rel (0) target = $region5
  $region4: #{_lambda_.11} parent=0 // pred_region
    _
  $region5: #{_lambda_.11} parent=0 // pred_fallthru
    _
  // Predicated region
  $region6: #{_lambda_.11} parent=0 // pred_check
    _
  $region7: #{_lambda_.11} parent=0 // pred_check_branch
    %13 = sbr.rel (0) target = $region9
  $region8: #{_lambda_.11} parent=0 // pred_region
    _
  $region9: #{_lambda_.11} parent=0 // pred_fallthru
    _
  // Predicated region
  $region10: #{_lambda_.11} parent=0 // pred_check
    _
  $region11: #{_lambda_.11} parent=0 // pred_check_branch
    %15 = sbr.rel (0) target = $region13
  $region12: #{_lambda_.11} parent=0 // pred_region
    _
  $region13: #{_lambda_.11} parent=0 // pred_fallthru
    _
  // Predicated region
  $region14: #{_lambda_.11} parent=0 // pred_check
    _
  $region15: #{_lambda_.11} parent=0 // pred_check_branch
    %17 = sbr.rel (0) target = $region17
  $region16: #{_lambda_.11} parent=0 // pred_region
    _
  $region17: #{_lambda_.11} parent=0 // pred_fallthru
    _
  // Predicated region
  $region18: #{_lambda_.11} parent=0 // pred_check
    _
  $region19: #{_lambda_.11} parent=0 // pred_check_branch
    %19 = sbr.rel (0) target = $region21
  $region20: #{_lambda_.11} parent=0 // pred_region
    _
  $region21: #{_lambda_.11} parent=0 // pred_fallthru
    _
  %v21 = vld [vmem:[%s0] sm:$0xf]
  %v22 = vld [vmem:[%s0 + $0x4] sm:$0xf]
  %v23 = vld [vmem:[%s0 + $0x8] sm:$0xf]
  %v24 = vld [vmem:[%s0 + $0xc] sm:$0xf]
  %v25 = vld [vmem:[%s1] sm:$0xf]
  %v26 = vld [vmem:[%s1 + $0x4] sm:$0xf]
  %v27 = vld [vmem:[%s1 + $0x8] sm:$0xf]
  %v28 = vld [vmem:[%s1 + $0xc] sm:$0xf]
  %v29 = vld [vmem:[%s1 + $0x10] sm:$0xf]
  %v30 = vld [vmem:[%s1 + $0x14] sm:$0xf]
  %v31 = vld [vmem:[%s2] sm:$0x1]
  %v33 = vlaneseq
  %v34 = vshrl.u32 %v33, 7
  %v35 = vsub.s32 0, %v34
  %v36 = vrot.slane %v31, %v35
  %v42 = vunpack.c.l.b16 %v21
  %v43 = vunpack.c.l.b16 %v22
  %v44 = vunpack.c.l.b16 %v23
  %v45 = vunpack.c.l.b16 %v24
  %v46 = vpack.c.b16 %v43, %v42
  %v47 = vpack.c.b16 %v45, %v44
  %v54 = vunpack.c.l.b16 %v25
  %v55 = vunpack.c.l.b16 %v26
  %v56 = vunpack.c.l.b16 %v27
  %v57 = vunpack.c.l.b16 %v28
  %v58 = vunpack.c.l.b16 %v29
  %v59 = vunpack.c.l.b16 %v30
  %v60 = vpack.c.b16 %v55, %v54
  %v61 = vpack.c.b16 %v57, %v56
  %v62 = vpack.c.b16 %v59, %v58
  %vm66 = vcmask 392192
  %v68 = vsel %vm66, %v46, 0
  %v71 = vsel %vm66, %v47, 0
  %73 = vmatprep.subr.bf16.mxu0 0
  %74 = vmatpush1.bf16.msra.mxu0 %v60
  %75 = vmatprep.subr.bf16.mxu0 0
  %76 = vmatpush1.bf16.msra.mxu0 %v61
  %77 = vmatprep.subr.bf16.mxu0 0
  %78 = vmatpush1.bf16.msra.mxu0 %v62
  %79 = vmatprep.subr.bf16.mxu0 0
  %80 = vmatpush1.bf16.msra.mxu0 0
  %81 = vmatprep.subr.bf16.mxu0 0
  %82 = vmatpush1.bf16.msra.mxu0 0
  %83 = vmatprep.subr.bf16.mxu0 0
  %84 = vmatpush1.bf16.msra.mxu0 0
  %85 = vmatprep.subr.bf16.mxu0 0
  %86 = vmatpush1.bf16.msra.mxu0 0
  %87 = vmatprep.subr.bf16.mxu0 0
  %88 = vmatpush1.bf16.msra.mxu0 0
  %89 = vmatprep.subr.bf16.mxu0 0
  %90 = vmatpush1.bf16.msra.mxu0 0
  %91 = vmatprep.subr.bf16.mxu0 0
  %92 = vmatpush1.bf16.msra.mxu0 0
  %93 = vmatprep.subr.bf16.mxu0 0
  %94 = vmatpush1.bf16.msra.mxu0 0
  %95 = vmatprep.subr.bf16.mxu0 0
  %96 = vmatpush1.bf16.msra.mxu0 0
  %97 = vmatprep.subr.bf16.mxu0 0
  %98 = vmatpush1.bf16.msra.mxu0 0
  %99 = vmatprep.subr.bf16.mxu0 0
  %100 = vmatpush1.bf16.msra.mxu0 0
  %101 = vmatprep.subr.bf16.mxu0 0
  %102 = vmatpush1.bf16.msra.mxu0 0
  %103 = vmatprep.subr.bf16.mxu0 0
  %104 = vmatpush1.bf16.msra.mxu0 0
  %105 = vmatprep.mubr.bf16.mxu0 0
  %106 = vmatmul.mubr.bf16.gmra.mrb[0].mxu0 %v68
  %v107 = vpop.f32.mrb[0].mxu0
  %v108 = vadd.f32 %v36, %v107
  %v109 = vpop.f32.mrb[0].mxu0
  %v110 = vpop.f32.mrb[0].mxu0
  %v111 = vadd.f32 %v36, %v110
  %v112 = vpop.f32.mrb[0].mxu0
  %113 = vmatprep.mubr.bf16.mxu0 0
  %114 = vmatmul.mubr.bf16.gmra.mrb[0].mxu0 %v71
  %v115 = vpop.f32.mrb[0].mxu0
  %v116 = vadd.f32 %v36, %v115
  %v117 = vpop.f32.mrb[0].mxu0
  %v118 = vpop.f32.mrb[0].mxu0
  %v119 = vadd.f32 %v36, %v118
  %v120 = vpop.f32.mrb[0].mxu0
  %121 = vdwg.mxu0
  %v122 = vld [vmem:[%s3] sm:$0x1]
  %v123 = vld [vmem:[%s4] sm:$0x1]
  %vm124 = vcmask 130048
  %v125 = vsel %vm124, %v108, 0.0
  %126 = vadd.xlane.f32.xlu0 %v125
  %v127 = vpop.xlane.xlu0 %126
  %v128 = vsel %vm124, %v111, 0.0
  %129 = vadd.xlane.f32.xlu0 %v128
  %v130 = vpop.xlane.xlu0 %129
  %v131 = vsel %vm124, %v116, 0.0
  %132 = vadd.xlane.f32.xlu0 %v131
  %v133 = vpop.xlane.xlu0 %132
  %v134 = vsel %vm124, %v119, 0.0
  %135 = vadd.xlane.f32.xlu0 %v134
  %v136 = vpop.xlane.xlu0 %135
  %v137 = vrcp.pop 16.0
  %v138 = vmul.f32 %v127, %v137
  %v139 = vmul.f32 %v130, %v137
  %v140 = vmul.f32 %v133, %v137
  %v141 = vmul.f32 %v136, %v137
  %v142 = vsub.f32 %v108, %v138
  %v143 = vsub.f32 %v111, %v139
  %v144 = vsub.f32 %v116, %v140
  %v145 = vsub.f32 %v119, %v141
  %v146 = vmul.f32 %v142, %v142
  %v147 = vmul.f32 %v143, %v143
  %v148 = vmul.f32 %v144, %v144
  %v149 = vmul.f32 %v145, %v145
  %v150 = vsel %vm124, %v146, 0.0
  %151 = vadd.xlane.f32.xlu0 %v150
  %v152 = vpop.xlane.xlu0 %151
  %v153 = vsel %vm124, %v147, 0.0
  %154 = vadd.xlane.f32.xlu0 %v153
  %v155 = vpop.xlane.xlu0 %154
  %v156 = vsel %vm124, %v148, 0.0
  %157 = vadd.xlane.f32.xlu0 %v156
  %v158 = vpop.xlane.xlu0 %157
  %v159 = vsel %vm124, %v149, 0.0
  %160 = vadd.xlane.f32.xlu0 %v159
  %v161 = vpop.xlane.xlu0 %160
  %v162 = vmul.f32 %v152, %v137
  %v163 = vmul.f32 %v155, %v137
  %v164 = vmul.f32 %v158, %v137
  %v165 = vmul.f32 %v161, %v137
  %v166 = vadd.f32 %v162, 1e-05
  %v167 = vadd.f32 %v163, 1e-05
  %v168 = vadd.f32 %v164, 1e-05
  %v169 = vadd.f32 %v165, 1e-05
  %v170 = vrsqrt.pop %v166
  %v171 = vrsqrt.pop %v167
  %v172 = vrsqrt.pop %v168
  %v173 = vrsqrt.pop %v169
  %v174 = vmul.f32 %v142, %v170
  %v175 = vmul.f32 %v143, %v171
  %v176 = vmul.f32 %v144, %v172
  %v177 = vmul.f32 %v145, %v173
  %v179 = vlaneseq
  %v180 = vshrl.u32 %v179, 7
  %v181 = vsub.s32 0, %v180
  %v182 = vrot.slane %v122, %v181
  %v184 = vmul.f32 %v174, %v182
  %v185 = vmul.f32 %v175, %v182
  %v186 = vmul.f32 %v176, %v182
  %v187 = vmul.f32 %v177, %v182
  %v189 = vlaneseq
  %v190 = vshrl.u32 %v189, 7
  %v191 = vsub.s32 0, %v190
  %v192 = vrot.slane %v123, %v191
  %v194 = vadd.f32 %v184, %v192
  %v195 = vadd.f32 %v185, %v192
  %v196 = vadd.f32 %v186, %v192
  %v197 = vadd.f32 %v187, %v192
  %v198 = vpack.c.bf16 %v195, %v194
  %v199 = vpack.c.bf16 %v197, %v196
  %v202 = vunpack.c.l.b16 %v198
  %v203 = vunpack.c.h.b16 %v198
  %v204 = vunpack.c.l.b16 %v199
  %v205 = vunpack.c.h.b16 %v199
  %v206 = vpack.c.b16 %v202, %v202
  %v207 = vpack.c.b16 %v203, %v203
  %v208 = vpack.c.b16 %v204, %v204
  %v209 = vpack.c.b16 %v205, %v205
  %vm214 = vcmask 125952
  %215 = vst.msk [vmem:[%s5] sm:$0xf] %vm214, %v206
  %216 = vst.msk [vmem:[%s5 + $0x4] sm:$0xf] %vm214, %v207
  %217 = vst.msk [vmem:[%s5 + $0x8] sm:$0xf] %vm214, %v208
  %218 = vst.msk [vmem:[%s5 + $0xc] sm:$0xf] %vm214, %v209
  // Predicated region
  $region22: #{_lambda_.11} parent=0 // pred_check
    _
  $region23: #{_lambda_.11} parent=0 // pred_check_branch
    %220 = sbr.rel (0) target = $region25
  $region24: #{_lambda_.11} parent=0 // pred_region
    _
  $region25: #{_lambda_.11} parent=0 // pred_fallthru
    _
  // Predicated region
  $region26: #{_lambda_.11} parent=0 // pred_check
    _
  $region27: #{_lambda_.11} parent=0 // pred_check_branch
    %222 = sbr.rel (0) target = $region29
  $region28: #{_lambda_.11} parent=0 // pred_region
    _
  $region29: #{_lambda_.11} parent=0 // pred_fallthru
    _

// kernel: _lambda_.13
$region0: #{_lambda_.13}
  #allocation0 [shape = 'u32[]', space=smem, size = 0x4, offset = 0x4, fixed_abs, tag = 'smem constant byte address 0x4 - core index']
  #allocation1 [shape = 'u32[144,128]{1,0:T(1,128)}', space=vmem, size = 0x12000, scoped, tag = 'internal scratch']
  %s0 = inlined_call_operand.vmem [shape: bf16[32,16], index: 0, kind: input, shape index: {}]
  %s1 = inlined_call_operand.vmem [shape: f32[1,16], index: 1, kind: input, shape index: {}]
  %s2 = inlined_call_operand.vmem [shape: f32[1,16], index: 2, kind: input, shape index: {}, may-alias: {2,6}]
  %s3 = inlined_call_operand.vmem [shape: bf16[16,64], index: 3, kind: input, shape index: {}]
  %s4 = inlined_call_operand.vmem [shape: f32[1,64], index: 4, kind: input, shape index: {}]
  %s5 = inlined_call_operand.vmem [shape: bf16[64,16], index: 5, kind: input, shape index: {}]
  %s6 = inlined_call_operand.vmem [shape: f32[1,16], index: 6, kind: input, shape index: {}, may-alias: {2,6}]
  %s7 = inlined_call_operand.vmem [shape: bf16[32,16], index: 7, kind: output, shape index: {}]
  %s8 = sld [smem:[#allocation0]]
  $region38: #{_lambda_.13} parent=0
    _
  %s10 = ssub.s32 1, %s8
  %s11 = scalar_select 0, %s10, %s8
  // Predicated region
  $region2: #{_lambda_.13} parent=0 // pred_check
    _
  $region3: #{_lambda_.13} parent=0 // pred_check_branch
    %13 = sbr.rel (0) target = $region5
  $region4: #{_lambda_.13} parent=0 // pred_region
    _
  $region5: #{_lambda_.13} parent=0 // pred_fallthru
    _
  // Predicated region
  $region6: #{_lambda_.13} parent=0 // pred_check
    _
  $region7: #{_lambda_.13} parent=0 // pred_check_branch
    %15 = sbr.rel (0) target = $region9
  $region8: #{_lambda_.13} parent=0 // pred_region
    _
  $region9: #{_lambda_.13} parent=0 // pred_fallthru
    _
  // Predicated region
  $region10: #{_lambda_.13} parent=0 // pred_check
    _
  $region11: #{_lambda_.13} parent=0 // pred_check_branch
    %17 = sbr.rel (0) target = $region13
  $region12: #{_lambda_.13} parent=0 // pred_region
    _
  $region13: #{_lambda_.13} parent=0 // pred_fallthru
    _
  // Predicated region
  $region14: #{_lambda_.13} parent=0 // pred_check
    _
  $region15: #{_lambda_.13} parent=0 // pred_check_branch
    %19 = sbr.rel (0) target = $region17
  $region16: #{_lambda_.13} parent=0 // pred_region
    _
  $region17: #{_lambda_.13} parent=0 // pred_fallthru
    _
  // Predicated region
  $region18: #{_lambda_.13} parent=0 // pred_check
    _
  $region19: #{_lambda_.13} parent=0 // pred_check_branch
    %21 = sbr.rel (0) target = $region21
  $region20: #{_lambda_.13} parent=0 // pred_region
    _
  $region21: #{_lambda_.13} parent=0 // pred_fallthru
    _
  // Predicated region
  $region22: #{_lambda_.13} parent=0 // pred_check
    _
  $region23: #{_lambda_.13} parent=0 // pred_check_branch
    %23 = sbr.rel (0) target = $region25
  $region24: #{_lambda_.13} parent=0 // pred_region
    _
  $region25: #{_lambda_.13} parent=0 // pred_fallthru
    _
  // Predicated region
  $region26: #{_lambda_.13} parent=0 // pred_check
    _
  $region27: #{_lambda_.13} parent=0 // pred_check_branch
    %25 = sbr.rel (0) target = $region29
  $region28: #{_lambda_.13} parent=0 // pred_region
    _
  $region29: #{_lambda_.13} parent=0 // pred_fallthru
    _
  %v27 = vld [vmem:[%s0] sm:$0xf]
  %v28 = vld [vmem:[%s0 + $0x4] sm:$0xf]
  %v29 = vld [vmem:[%s0 + $0x8] sm:$0xf]
  %v30 = vld [vmem:[%s0 + $0xc] sm:$0xf]
  %v31 = vunpack.c.l.bf16 %v27
  %v32 = vunpack.c.l.bf16 %v28
  %v33 = vunpack.c.l.bf16 %v29
  %v34 = vunpack.c.l.bf16 %v30
  %v35 = vld [vmem:[%s1] sm:$0x1]
  %v36 = vld [vmem:[%s2] sm:$0x1]
  %vm37 = vcmask 130048
  %v38 = vsel %vm37, %v31, 0.0
  %39 = vadd.xlane.f32.xlu0 %v38
  %v40 = vpop.xlane.xlu0 %39
  %v41 = vsel %vm37, %v32, 0.0
  %42 = vadd.xlane.f32.xlu0 %v41
  %v43 = vpop.xlane.xlu0 %42
  %v44 = vsel %vm37, %v33, 0.0
  %45 = vadd.xlane.f32.xlu0 %v44
  %v46 = vpop.xlane.xlu0 %45
  %v47 = vsel %vm37, %v34, 0.0
  %48 = vadd.xlane.f32.xlu0 %v47
  %v49 = vpop.xlane.xlu0 %48
  %v50 = vrcp.pop 16.0
  %v51 = vmul.f32 %v40, %v50
  %v52 = vmul.f32 %v43, %v50
  %v53 = vmul.f32 %v46, %v50
  %v54 = vmul.f32 %v49, %v50
  %v55 = vsub.f32 %v31, %v51
  %v56 = vsub.f32 %v32, %v52
  %v57 = vsub.f32 %v33, %v53
  %v58 = vsub.f32 %v34, %v54
  %v59 = vmul.f32 %v55, %v55
  %v60 = vmul.f32 %v56, %v56
  %v61 = vmul.f32 %v57, %v57
  %v62 = vmul.f32 %v58, %v58
  %v63 = vsel %vm37, %v59, 0.0
  %64 = vadd.xlane.f32.xlu0 %v63
  %v65 = vpop.xlane.xlu0 %64
  %v66 = vsel %vm37, %v60, 0.0
  %67 = vadd.xlane.f32.xlu0 %v66
  %v68 = vpop.xlane.xlu0 %67
  %v69 = vsel %vm37, %v61, 0.0
  %70 = vadd.xlane.f32.xlu0 %v69
  %v71 = vpop.xlane.xlu0 %70
  %v72 = vsel %vm37, %v62, 0.0
  %73 = vadd.xlane.f32.xlu0 %v72
  %v74 = vpop.xlane.xlu0 %73
  %v75 = vmul.f32 %v65, %v50
  %v76 = vmul.f32 %v68, %v50
  %v77 = vmul.f32 %v71, %v50
  %v78 = vmul.f32 %v74, %v50
  %v79 = vadd.f32 %v75, 1e-05
  %v80 = vadd.f32 %v76, 1e-05
  %v81 = vadd.f32 %v77, 1e-05
  %v82 = vadd.f32 %v78, 1e-05
  %v83 = vrsqrt.pop %v79
  %v84 = vrsqrt.pop %v80
  %v85 = vrsqrt.pop %v81
  %v86 = vrsqrt.pop %v82
  %v87 = vmul.f32 %v55, %v83
  %v88 = vmul.f32 %v56, %v84
  %v89 = vmul.f32 %v57, %v85
  %v90 = vmul.f32 %v58, %v86
  %v92 = vlaneseq
  %v93 = vshrl.u32 %v92, 7
  %v94 = vsub.s32 0, %v93
  %v95 = vrot.slane %v35, %v94
  %v97 = vmul.f32 %v87, %v95
  %v98 = vmul.f32 %v88, %v95
  %v99 = vmul.f32 %v89, %v95
  %v100 = vmul.f32 %v90, %v95
  %v102 = vlaneseq
  %v103 = vshrl.u32 %v102, 7
  %v104 = vsub.s32 0, %v103
  %v105 = vrot.slane %v36, %v104
  %v107 = vadd.f32 %v97, %v105
  %v108 = vadd.f32 %v98, %v105
  %v109 = vadd.f32 %v99, %v105
  %v110 = vadd.f32 %v100, %v105
  %v111 = vpack.c.bf16 %v108, %v107
  %v112 = vpack.c.bf16 %v110, %v109
  %v113 = vld [vmem:[%s3] sm:$0xf]
  %v114 = vld [vmem:[%s3 + $0x4] sm:$0xf]
  %v115 = vld [vmem:[%s4] sm:$0x1]
  %v117 = vlaneseq
  %v118 = vshrl.u32 %v117, 7
  %v119 = vsub.s32 0, %v118
  %v120 = vrot.slane %v115, %v119
  %v124 = vunpack.c.l.b16 %v113
  %v125 = vunpack.c.l.b16 %v114
  %v126 = vpack.c.b16 %v125, %v124
  %v129 = vsel %vm37, %v111, 0
  %v132 = vsel %vm37, %v112, 0
  %134 = vmatprep.subr.bf16.mxu0 0
  %135 = vmatpush1.bf16.msra.mxu0 %v126
  %136 = vmatprep.subr.bf16.mxu0 0
  %137 = vmatpush1.bf16.msra.mxu0 0
  %138 = vmatprep.subr.bf16.mxu0 0
  %139 = vmatpush1.bf16.msra.mxu0 0
  %140 = vmatprep.subr.bf16.mxu0 0
  %141 = vmatpush1.bf16.msra.mxu0 0
  %142 = vmatprep.subr.bf16.mxu0 0
  %143 = vmatpush1.bf16.msra.mxu0 0
  %144 = vmatprep.subr.bf16.mxu0 0
  %145 = vmatpush1.bf16.msra.mxu0 0
  %146 = vmatprep.subr.bf16.mxu0 0
  %147 = vmatpush1.bf16.msra.mxu0 0
  %148 = vmatprep.subr.bf16.mxu0 0
  %149 = vmatpush1.bf16.msra.mxu0 0
  %150 = vmatprep.subr.bf16.mxu0 0
  %151 = vmatpush1.bf16.msra.mxu0 0
  %152 = vmatprep.subr.bf16.mxu0 0
  %153 = vmatpush1.bf16.msra.mxu0 0
  %154 = vmatprep.subr.bf16.mxu0 0
  %155 = vmatpush1.bf16.msra.mxu0 0
  %156 = vmatprep.subr.bf16.mxu0 0
  %157 = vmatpush1.bf16.msra.mxu0 0
  %158 = vmatprep.subr.bf16.mxu0 0
  %159 = vmatpush1.bf16.msra.mxu0 0
  %160 = vmatprep.subr.bf16.mxu0 0
  %161 = vmatpush1.bf16.msra.mxu0 0
  %162 = vmatprep.subr.bf16.mxu0 0
  %163 = vmatpush1.bf16.msra.mxu0 0
  %164 = vmatprep.subr.bf16.mxu0 0
  %165 = vmatpush1.bf16.msra.mxu0 0
  %166 = vmatprep.mubr.bf16.mxu0 0
  %167 = vmatmul.mubr.bf16.gmra.mrb[0].mxu0 %v129
  %v168 = vpop.f32.mrb[0].mxu0
  %v169 = vadd.f32 %v120, %v168
  %v170 = vpop.f32.mrb[0].mxu0
  %v171 = vpop.f32.mrb[0].mxu0
  %v172 = vadd.f32 %v120, %v171
  %v173 = vpop.f32.mrb[0].mxu0
  %174 = vmatprep.mubr.bf16.mxu0 0
  %175 = vmatmul.mubr.bf16.gmra.mrb[0].mxu0 %v132
  %v176 = vpop.f32.mrb[0].mxu0
  %v177 = vadd.f32 %v120, %v176
  %v178 = vpop.f32.mrb[0].mxu0
  %v179 = vpop.f32.mrb[0].mxu0
  %v180 = vadd.f32 %v120, %v179
  %v181 = vpop.f32.mrb[0].mxu0
  %182 = vdwg.mxu0
  %v183 = vmul.f32 %v169, 0.5
  %v184 = vmul.f32 %v172, 0.5
  %v185 = vmul.f32 %v177, 0.5
  %v186 = vmul.f32 %v180, 0.5
  %v187 = vmul.f32 %v169, 0.70710677
  %v188 = vmul.f32 %v172, 0.70710677
  %v189 = vmul.f32 %v177, 0.70710677
  %v190 = vmul.f32 %v180, 0.70710677
  %v191 = vand.u32 2147483647, %v187
  %v192 = vand.u32 2147483647, %v188
  %v193 = vand.u32 2147483647, %v189
  %v194 = vand.u32 2147483647, %v190
  %v195 = vmul.f32 %v191, 0.3275911
  %v196 = vmul.f32 %v192, 0.3275911
  %v197 = vmul.f32 %v193, 0.3275911
  %v198 = vmul.f32 %v194, 0.3275911
  %v199 = vadd.f32 %v195, 1.0
  %v200 = vadd.f32 %v196, 1.0
  %v201 = vadd.f32 %v197, 1.0
  %v202 = vadd.f32 %v198, 1.0
  %v203 = vrcp.pop %v199
  %v204 = vmul.f32 1.0, %v203
  %v205 = vrcp.pop %v200
  %v206 = vmul.f32 1.0, %v205
  %v207 = vrcp.pop %v201
  %v208 = vmul.f32 1.0, %v207
  %v209 = vrcp.pop %v202
  %v210 = vmul.f32 1.0, %v209
  %v211 = vmul.f32 %v204, 1.0614054
  %v212 = vmul.f32 %v206, 1.0614054
  %v213 = vmul.f32 %v208, 1.0614054
  %v214 = vmul.f32 %v210, 1.0614054
  %v215 = vadd.f32 %v211, -1.4531521
  %v216 = vadd.f32 %v212, -1.4531521
  %v217 = vadd.f32 %v213, -1.4531521
  %v218 = vadd.f32 %v214, -1.4531521
  %v219 = vmul.f32 %v215, %v204
  %v220 = vmul.f32 %v216, %v206
  %v221 = vmul.f32 %v217, %v208
  %v222 = vmul.f32 %v218, %v210
  %v223 = vadd.f32 %v219, 1.4214138
  %v224 = vadd.f32 %v220, 1.4214138
  %v225 = vadd.f32 %v221, 1.4214138
  %v226 = vadd.f32 %v222, 1.4214138
  %v227 = vmul.f32 %v223, %v204
  %v228 = vmul.f32 %v224, %v206
  %v229 = vmul.f32 %v225, %v208
  %v230 = vmul.f32 %v226, %v210
  %v231 = vadd.f32 %v227, -0.28449672
  %v232 = vadd.f32 %v228, -0.28449672
  %v233 = vadd.f32 %v229, -0.28449672
  %v234 = vadd.f32 %v230, -0.28449672
  %v235 = vmul.f32 %v231, %v204
  %v236 = vmul.f32 %v232, %v206
  %v237 = vmul.f32 %v233, %v208
  %v238 = vmul.f32 %v234, %v210
  %v239 = vadd.f32 %v235, 0.2548296
  %v240 = vadd.f32 %v236, 0.2548296
  %v241 = vadd.f32 %v237, 0.2548296
  %v242 = vadd.f32 %v238, 0.2548296
  %v243 = vmul.f32 %v239, %v204
  %v244 = vmul.f32 %v240, %v206
  %v245 = vmul.f32 %v241, %v208
  %v246 = vmul.f32 %v242, %v210
  %v247 = vsub.f32 0.0, %v191
  %v248 = vsub.f32 0.0, %v192
  %v249 = vsub.f32 0.0, %v193
  %v250 = vsub.f32 0.0, %v194
  %v251 = vmul.f32 %v247, %v191
  %v252 = vmul.f32 %v248, %v192
  %v253 = vmul.f32 %v249, %v193
  %v254 = vmul.f32 %v250, %v194
  %v255 = vmul.f32 %v251, 1.442695
  %v256 = vpow.pop %v255
  %v257 = vmul.f32 %v252, 1.442695
  %v258 = vpow.pop %v257
  %v259 = vmul.f32 %v253, 1.442695
  %v260 = vpow.pop %v259
  %v261 = vmul.f32 %v254, 1.442695
  %v262 = vpow.pop %v261
  %v263 = vmul.f32 %v243, %v256
  %v264 = vmul.f32 %v244, %v258
  %v265 = vmul.f32 %v245, %v260
  %v266 = vmul.f32 %v246, %v262
  %v267 = vsub.f32 1.0, %v263
  %v268 = vsub.f32 1.0, %v264
  %v269 = vsub.f32 1.0, %v265
  %v270 = vsub.f32 1.0, %v266
  %vm271 = vcmp.ge.f32.partialorder %v187, 0.0
  %vm272 = vcmp.ge.f32.partialorder %v188, 0.0
  %vm273 = vcmp.ge.f32.partialorder %v189, 0.0
  %vm274 = vcmp.ge.f32.partialorder %v190, 0.0
  %v275 = vsub.f32 0.0, %v267
  %v276 = vsub.f32 0.0, %v268
  %v277 = vsub.f32 0.0, %v269
  %v278 = vsub.f32 0.0, %v270
  %v279 = vsel %vm271, %v267, %v275
  %v280 = vsel %vm272, %v268, %v276
  %v281 = vsel %vm273, %v269, %v277
  %v282 = vsel %vm274, %v270, %v278
  %v283 = vadd.f32 %v279, 1.0
  %v284 = vadd.f32 %v280, 1.0
  %v285 = vadd.f32 %v281, 1.0
  %v286 = vadd.f32 %v282, 1.0
  %v287 = vmul.f32 %v183, %v283
  %v288 = vmul.f32 %v184, %v284
  %v289 = vmul.f32 %v185, %v285
  %v290 = vmul.f32 %v186, %v286
  %v291 = vpack.c.bf16 %v288, %v287
  %v292 = vpack.c.bf16 %v290, %v289
  %v293 = vld [vmem:[%s5] sm:$0xf]
  %v294 = vld [vmem:[%s5 + $0x4] sm:$0xf]
  %v295 = vld [vmem:[%s5 + $0x8] sm:$0xf]
  %v296 = vld [vmem:[%s5 + $0xc] sm:$0xf]
  %v297 = vld [vmem:[%s5 + $0x10] sm:$0xf]
  %v298 = vld [vmem:[%s5 + $0x14] sm:$0xf]
  %v299 = vld [vmem:[%s5 + $0x18] sm:$0xf]
  %v300 = vld [vmem:[%s5 + $0x1c] sm:$0xf]
  %v301 = vld [vmem:[%s6] sm:$0x1]
  %v303 = vlaneseq
  %v304 = vshrl.u32 %v303, 7
  %v305 = vsub.s32 0, %v304
  %v306 = vrot.slane %v301, %v305
  %v316 = vunpack.c.l.b16 %v293
  %v317 = vunpack.c.l.b16 %v294
  %v318 = vunpack.c.l.b16 %v295
  %v319 = vunpack.c.l.b16 %v296
  %v320 = vunpack.c.l.b16 %v297
  %v321 = vunpack.c.l.b16 %v298
  %v322 = vunpack.c.l.b16 %v299
  %v323 = vunpack.c.l.b16 %v300
  %v324 = vpack.c.b16 %v317, %v316
  %v325 = vpack.c.b16 %v319, %v318
  %v326 = vpack.c.b16 %v321, %v320
  %v327 = vpack.c.b16 %v323, %v322
  %vm332 = vcmask 523264
  %v334 = vsel %vm332, %v291, 0
  %v337 = vsel %vm332, %v292, 0
  %339 = vmatprep.subr.bf16.mxu0 0
  %340 = vmatpush1.bf16.msra.mxu0 %v324
  %341 = vmatprep.subr.bf16.mxu0 0
  %342 = vmatpush1.bf16.msra.mxu0 %v325
  %343 = vmatprep.subr.bf16.mxu0 0
  %344 = vmatpush1.bf16.msra.mxu0 %v326
  %345 = vmatprep.subr.bf16.mxu0 0
  %346 = vmatpush1.bf16.msra.mxu0 %v327
  %347 = vmatprep.subr.bf16.mxu0 0
  %348 = vmatpush1.bf16.msra.mxu0 0
  %349 = vmatprep.subr.bf16.mxu0 0
  %350 = vmatpush1.bf16.msra.mxu0 0
  %351 = vmatprep.subr.bf16.mxu0 0
  %352 = vmatpush1.bf16.msra.mxu0 0
  %353 = vmatprep.subr.bf16.mxu0 0
  %354 = vmatpush1.bf16.msra.mxu0 0
  %355 = vmatprep.subr.bf16.mxu0 0
  %356 = vmatpush1.bf16.msra.mxu0 0
  %357 = vmatprep.subr.bf16.mxu0 0
  %358 = vmatpush1.bf16.msra.mxu0 0
  %359 = vmatprep.subr.bf16.mxu0 0
  %360 = vmatpush1.bf16.msra.mxu0 0
  %361 = vmatprep.subr.bf16.mxu0 0
  %362 = vmatpush1.bf16.msra.mxu0 0
  %363 = vmatprep.subr.bf16.mxu0 0
  %364 = vmatpush1.bf16.msra.mxu0 0
  %365 = vmatprep.subr.bf16.mxu0 0
  %366 = vmatpush1.bf16.msra.mxu0 0
  %367 = vmatprep.subr.bf16.mxu0 0
  %368 = vmatpush1.bf16.msra.mxu0 0
  %369 = vmatprep.subr.bf16.mxu0 0
  %370 = vmatpush1.bf16.msra.mxu0 0
  %371 = vmatprep.mubr.bf16.mxu0 0
  %372 = vmatmul.mubr.bf16.gmra.mrb[0].mxu0 %v334
  %v373 = vpop.f32.mrb[0].mxu0
  %v374 = vadd.f32 %v306, %v373
  %v375 = vpop.f32.mrb[0].mxu0
  %v376 = vpop.f32.mrb[0].mxu0
  %v377 = vadd.f32 %v306, %v376
  %v378 = vpop.f32.mrb[0].mxu0
  %379 = vmatprep.mubr.bf16.mxu0 0
  %380 = vmatmul.mubr.bf16.gmra.mrb[0].mxu0 %v337
  %v381 = vpop.f32.mrb[0].mxu0
  %v382 = vadd.f32 %v306, %v381
  %v383 = vpop.f32.mrb[0].mxu0
  %v384 = vpop.f32.mrb[0].mxu0
  %v385 = vadd.f32 %v306, %v384
  %v386 = vpop.f32.mrb[0].mxu0
  %387 = vdwg.mxu0
  %v388 = vadd.f32 %v31, %v374
  %v389 = vadd.f32 %v32, %v377
  %v390 = vadd.f32 %v33, %v382
  %v391 = vadd.f32 %v34, %v385
  %v392 = vpack.c.bf16 %v389, %v388
  %v393 = vpack.c.bf16 %v391, %v390
  %v396 = vunpack.c.l.b16 %v392
  %v397 = vunpack.c.h.b16 %v392
  %v398 = vunpack.c.l.b16 %v393
  %v399 = vunpack.c.h.b16 %v393
  %v400 = vpack.c.b16 %v396, %v396
  %v401 = vpack.c.b16 %v397, %v397
  %v402 = vpack.c.b16 %v398, %v398
  %v403 = vpack.c.b16 %v399, %v399
  %vm408 = vcmask 125952
  %409 = vst.msk [vmem:[%s7] sm:$0xf] %vm408, %v400
  %410 = vst.msk [vmem:[%s7 + $0x4] sm:$0xf] %vm408, %v401
  %411 = vst.msk [vmem:[%s7 + $0x8] sm:$0xf] %vm408, %v402
  %412 = vst.msk [vmem:[%s7 + $0xc] sm:$0xf] %vm408, %v403
  // Predicated region
  $region30: #{_lambda_.13} parent=0 // pred_check
    _
  $region31: #{_lambda_.13} parent=0 // pred_check_branch
    %414 = sbr.rel (0) target = $region33
  $region32: #{_lambda_.13} parent=0 // pred_region
    _
  $region33: #{_lambda_.13} parent=0 // pred_fallthru
    _
  // Predicated region
  $region34: #{_lambda_.13} parent=0 // pred_check
    _
  $region35: #{_lambda_.13} parent=0 // pred_check_branch
    %416 = sbr.rel (0) target = $region37
  $region36: #{_lambda_.13} parent=0 // pred_region
    _
  $region37: #{_lambda_.13} parent=0 // pred_fallthru
    _

// kernel: _lambda_.12
$region0: #{_lambda_.12}
  #allocation0 [shape = 'u32[]', space=smem, size = 0x4, offset = 0x4, fixed_abs, tag = 'smem constant byte address 0x4 - core index']
  #allocation1 [shape = 'u32[144,128]{1,0:T(1,128)}', space=vmem, size = 0x12000, scoped, tag = 'internal scratch']
  %s0 = inlined_call_operand.vmem [shape: bf16[32,16], index: 0, kind: input, shape index: {}]
  %s1 = inlined_call_operand.vmem [shape: f32[1,16], index: 1, kind: input, shape index: {}]
  %s2 = inlined_call_operand.vmem [shape: f32[1,16], index: 2, kind: input, shape index: {}, may-alias: {2,6}]
  %s3 = inlined_call_operand.vmem [shape: bf16[16,48], index: 3, kind: input, shape index: {}]
  %s4 = inlined_call_operand.vmem [shape: f32[1,48], index: 4, kind: input, shape index: {}]
  %s5 = inlined_call_operand.vmem [shape: bf16[2,8,16], index: 5, kind: input, shape index: {}]
  %s6 = inlined_call_operand.vmem [shape: f32[1,16], index: 6, kind: input, shape index: {}, may-alias: {2,6}]
  %s7 = inlined_call_operand.vmem [shape: f32[2,4,4], index: 7, kind: input, shape index: {}]
  %s8 = inlined_call_operand.vmem [shape: bf16[32,16], index: 8, kind: output, shape index: {}]
  %s9 = sld [smem:[#allocation0]]
  $region65: #{_lambda_.12} parent=0
    _
  %s11 = ssub.s32 1, %s9
  %s12 = scalar_select 0, %s11, %s9
  loop: start=0, step=1, limit=4
  $region2: #{_lambda_.12} parent=0 // loop_pre_header
    _
  $region3: #{_lambda_.12} parent=0 // loop_header
    %s14 = sphi 0, %s18
    %p15 = scmp.ge.s32.totalorder %s14, 4
    %s24 = sphi 0, %s26
    %s27 = sphi 0, %s24
    %s28 = sphi 0, %s27
    %s44 = sphi 0, %s28
    %s48 = sphi 0, %s48
    %s50 = sphi 0, %s48
    %s51 = sphi 0, %s50
    %s65 = sphi 0, %s51
    %s69 = sphi 0, %s69
    %s71 = sphi 0, %s69
    %s72 = sphi 0, %s71
    %s86 = sphi 0, %s72
    %s90 = sphi 0, %s90
    %s92 = sphi 0, %s90
    %s93 = sphi 0, %s92
    %s107 = sphi 0, %s93
    %s111 = sphi 0, %s111
    %s113 = sphi 0, %s111
    %s114 = sphi 0, %s113
    %s128 = sphi 0, %s114
    %s132 = sphi 0, %s132
    %s134 = sphi 0, %s132
    %s135 = sphi 0, %s134
    %s149 = sphi 0, %s135
    %s153 = sphi 0, %s153
    %s155 = sphi 0, %s153
    %s156 = sphi 0, %s155
    %s170 = sphi 0, %s156
    %s174 = sphi 0, %s174
    %s176 = sphi 0, %s174
    %s177 = sphi 0, %s176
    %s191 = sphi 0, %s177
    %s197 = sphi 0, %s199
    %s200 = sphi 0, %s197
    %s201 = sphi 0, %s200
    %s217 = sphi 0, %s201
  $region4: #{_lambda_.12} parent=0 // loop_header_branch
    %17 = sbr.rel (%p15) target = $region8
  $region5: #{_lambda_.12} parent=0 // loop_body
    %s19 = ssub.s32 %s14, 1
    %s20 = ssub.s32 %s14, 2
    %s21 = sadd.s32 %s14, 1
    %s22 = ssub.s32 %s14, %s21
    %p23 = scmp.eq.s32.totalorder %s22, 0
    %s25 = sadd.s32 %s24, 1
    %s26 = scalar_select %p23, %s24, %s25
    %p29 = pneg %p23
    %p30 = scmp.eq.s32.totalorder %s14, 1
    %p31 = por %p29, %p30
    %p32 = scmp.ne.s32.totalorder %s24, %s27
    %p33 = scmp.eq.s32.totalorder %s14, 0
    %p34 = por %p32, %p33
    %p35 = scmp.ne.s32.totalorder %s24, %s27
    %p36 = scmp.eq.s32.totalorder %s19, 1
    %p37 = por %p35, %p36
    %p38 = scmp.ne.s32.totalorder %s27, %s28
    %p39 = scmp.eq.s32.totalorder %s19, 0
    %p40 = por %p38, %p39
    %p41 = scmp.ne.s32.totalorder %s27, %s28
    %p42 = scmp.eq.s32.totalorder %s20, 1
    %p43 = por %p41, %p42
    %p45 = scmp.ne.s32.totalorder %s28, %s44
    %p46 = scmp.eq.s32.totalorder %s20, 0
    %p47 = por %p45, %p46
    %s49 = sadd.s32 %s48, 1
    %p52 = scmp.eq.s32.totalorder %s14, 1
    %p53 = scmp.ne.s32.totalorder %s48, %s50
    %p54 = scmp.eq.s32.totalorder %s14, 0
    %p55 = por %p53, %p54
    %p56 = scmp.ne.s32.totalorder %s48, %s50
    %p57 = scmp.eq.s32.totalorder %s19, 1
    %p58 = por %p56, %p57
    %p59 = scmp.ne.s32.totalorder %s50, %s51
    %p60 = scmp.eq.s32.totalorder %s19, 0
    %p61 = por %p59, %p60
    %p62 = scmp.ne.s32.totalorder %s50, %s51
    %p63 = scmp.eq.s32.totalorder %s20, 1
    %p64 = por %p62, %p63
    %p66 = scmp.ne.s32.totalorder %s51, %s65
    %p67 = scmp.eq.s32.totalorder %s20, 0
    %p68 = por %p66, %p67
    %s70 = sadd.s32 %s69, 1
    %p73 = scmp.eq.s32.totalorder %s14, 1
    %p74 = scmp.ne.s32.totalorder %s69, %s71
    %p75 = scmp.eq.s32.totalorder %s14, 0
    %p76 = por %p74, %p75
    %p77 = scmp.ne.s32.totalorder %s69, %s71
    %p78 = scmp.eq.s32.totalorder %s19, 1
    %p79 = por %p77, %p78
    %p80 = scmp.ne.s32.totalorder %s71, %s72
    %p81 = scmp.eq.s32.totalorder %s19, 0
    %p82 = por %p80, %p81
    %p83 = scmp.ne.s32.totalorder %s71, %s72
    %p84 = scmp.eq.s32.totalorder %s20, 1
    %p85 = por %p83, %p84
    %p87 = scmp.ne.s32.totalorder %s72, %s86
    %p88 = scmp.eq.s32.totalorder %s20, 0
    %p89 = por %p87, %p88
    %s91 = sadd.s32 %s90, 1
    %p94 = scmp.eq.s32.totalorder %s14, 1
    %p95 = scmp.ne.s32.totalorder %s90, %s92
    %p96 = scmp.eq.s32.totalorder %s14, 0
    %p97 = por %p95, %p96
    %p98 = scmp.ne.s32.totalorder %s90, %s92
    %p99 = scmp.eq.s32.totalorder %s19, 1
    %p100 = por %p98, %p99
    %p101 = scmp.ne.s32.totalorder %s92, %s93
    %p102 = scmp.eq.s32.totalorder %s19, 0
    %p103 = por %p101, %p102
    %p104 = scmp.ne.s32.totalorder %s92, %s93
    %p105 = scmp.eq.s32.totalorder %s20, 1
    %p106 = por %p104, %p105
    %p108 = scmp.ne.s32.totalorder %s93, %s107
    %p109 = scmp.eq.s32.totalorder %s20, 0
    %p110 = por %p108, %p109
    %s112 = sadd.s32 %s111, 1
    %p115 = scmp.eq.s32.totalorder %s14, 1
    %p116 = scmp.ne.s32.totalorder %s111, %s113
    %p117 = scmp.eq.s32.totalorder %s14, 0
    %p118 = por %p116, %p117
    %p119 = scmp.ne.s32.totalorder %s111, %s113
    %p120 = scmp.eq.s32.totalorder %s19, 1
    %p121 = por %p119, %p120
    %p122 = scmp.ne.s32.totalorder %s113, %s114
    %p123 = scmp.eq.s32.totalorder %s19, 0
    %p124 = por %p122, %p123
    %p125 = scmp.ne.s32.totalorder %s113, %s114
    %p126 = scmp.eq.s32.totalorder %s20, 1
    %p127 = por %p125, %p126
    %p129 = scmp.ne.s32.totalorder %s114, %s128
    %p130 = scmp.eq.s32.totalorder %s20, 0
    %p131 = por %p129, %p130
    %s133 = sadd.s32 %s132, 1
    %p136 = scmp.eq.s32.totalorder %s14, 1
    %p137 = scmp.ne.s32.totalorder %s132, %s134
    %p138 = scmp.eq.s32.totalorder %s14, 0
    %p139 = por %p137, %p138
    %p140 = scmp.ne.s32.totalorder %s132, %s134
    %p141 = scmp.eq.s32.totalorder %s19, 1
    %p142 = por %p140, %p141
    %p143 = scmp.ne.s32.totalorder %s134, %s135
    %p144 = scmp.eq.s32.totalorder %s19, 0
    %p145 = por %p143, %p144
    %p146 = scmp.ne.s32.totalorder %s134, %s135
    %p147 = scmp.eq.s32.totalorder %s20, 1
    %p148 = por %p146, %p147
    %p150 = scmp.ne.s32.totalorder %s135, %s149
    %p151 = scmp.eq.s32.totalorder %s20, 0
    %p152 = por %p150, %p151
    %s154 = sadd.s32 %s153, 1
    %p157 = scmp.eq.s32.totalorder %s14, 1
    %p158 = scmp.ne.s32.totalorder %s153, %s155
    %p159 = scmp.eq.s32.totalorder %s14, 0
    %p160 = por %p158, %p159
    %p161 = scmp.ne.s32.totalorder %s153, %s155
    %p162 = scmp.eq.s32.totalorder %s19, 1
    %p163 = por %p161, %p162
    %p164 = scmp.ne.s32.totalorder %s155, %s156
    %p165 = scmp.eq.s32.totalorder %s19, 0
    %p166 = por %p164, %p165
    %p167 = scmp.ne.s32.totalorder %s155, %s156
    %p168 = scmp.eq.s32.totalorder %s20, 1
    %p169 = por %p167, %p168
    %p171 = scmp.ne.s32.totalorder %s156, %s170
    %p172 = scmp.eq.s32.totalorder %s20, 0
    %p173 = por %p171, %p172
    %s175 = sadd.s32 %s174, 1
    %p178 = scmp.eq.s32.totalorder %s14, 1
    %p179 = scmp.ne.s32.totalorder %s174, %s176
    %p180 = scmp.eq.s32.totalorder %s14, 0
    %p181 = por %p179, %p180
    %p182 = scmp.ne.s32.totalorder %s174, %s176
    %p183 = scmp.eq.s32.totalorder %s19, 1
    %p184 = por %p182, %p183
    %p185 = scmp.ne.s32.totalorder %s176, %s177
    %p186 = scmp.eq.s32.totalorder %s19, 0
    %p187 = por %p185, %p186
    %p188 = scmp.ne.s32.totalorder %s176, %s177
    %p189 = scmp.eq.s32.totalorder %s20, 1
    %p190 = por %p188, %p189
    %p192 = scmp.ne.s32.totalorder %s177, %s191
    %p193 = scmp.eq.s32.totalorder %s20, 0
    %p194 = por %p192, %p193
    %s195 = ssub.s32 %s14, %s21
    %p196 = scmp.eq.s32.totalorder %s195, 0
    %s198 = sadd.s32 %s197, 1
    %s199 = scalar_select %p196, %s197, %s198
    %p202 = pneg %p196
    %p203 = scmp.eq.s32.totalorder %s14, 1
    %p204 = por %p202, %p203
    %p205 = scmp.ne.s32.totalorder %s197, %s200
    %p206 = scmp.eq.s32.totalorder %s14, 0
    %p207 = por %p205, %p206
    %p208 = scmp.ne.s32.totalorder %s197, %s200
    %p209 = scmp.eq.s32.totalorder %s19, 1
    %p210 = por %p208, %p209
    %p211 = scmp.ne.s32.totalorder %s200, %s201
    %p212 = scmp.eq.s32.totalorder %s19, 0
    %p213 = por %p211, %p212
    %p214 = scmp.ne.s32.totalorder %s200, %s201
    %p215 = scmp.eq.s32.totalorder %s20, 1
    %p216 = por %p214, %p215
    %p218 = scmp.ne.s32.totalorder %s201, %s217
    %p219 = scmp.eq.s32.totalorder %s20, 0
    %p220 = por %p218, %p219
    %p221 = scmp.le.s32.totalorder 1, %s14
    %p222 = scmp.lt.s32.totalorder %s14, 3
    %p223 = pnand %p221, %p222
    %p224 = pneg %p223
    // Predicated region
    $region9: #{_lambda_.12} parent=5 // pred_check
      _
    $region10: #{_lambda_.12} parent=5 // pred_check_branch
      %226 = sbr.rel (%p223) target = $region12
    $region11: #{_lambda_.12} parent=5 // pred_region
      %s227 = ssub.s32 %s14, 1
      // Predicated region
      $region13: #{_lambda_.12} parent=11 // pred_check
        %p228 = pneg %p61
      $region14: #{_lambda_.12} parent=11 // pred_check_branch
        %230 = sbr.rel (%p228) target = $region16
      $region15: #{_lambda_.12} parent=11 // pred_region
        _
      $region16: #{_lambda_.12} parent=11 // pred_fallthru
        _
      // Predicated region
      $region17: #{_lambda_.12} parent=11 // pred_check
        %p231 = pneg %p82
      $region18: #{_lambda_.12} parent=11 // pred_check_branch
        %233 = sbr.rel (%p231) target = $region20
      $region19: #{_lambda_.12} parent=11 // pred_region
        _
      $region20: #{_lambda_.12} parent=11 // pred_fallthru
        _
      // Predicated region
      $region21: #{_lambda_.12} parent=11 // pred_check
        %p234 = pneg %p103
      $region22: #{_lambda_.12} parent=11 // pred_check_branch
        %236 = sbr.rel (%p234) target = $region24
      $region23: #{_lambda_.12} parent=11 // pred_region
        _
      $region24: #{_lambda_.12} parent=11 // pred_fallthru
        _
      // Predicated region
      $region25: #{_lambda_.12} parent=11 // pred_check
        %p237 = pneg %p124
      $region26: #{_lambda_.12} parent=11 // pred_check_branch
        %239 = sbr.rel (%p237) target = $region28
      $region27: #{_lambda_.12} parent=11 // pred_region
        _
      $region28: #{_lambda_.12} parent=11 // pred_fallthru
        _
      // Predicated region
      $region29: #{_lambda_.12} parent=11 // pred_check
        %p240 = pneg %p145
      $region30: #{_lambda_.12} parent=11 // pred_check_branch
        %242 = sbr.rel (%p240) target = $region32
      $region31: #{_lambda_.12} parent=11 // pred_region
        _
      $region32: #{_lambda_.12} parent=11 // pred_fallthru
        _
      // Predicated region
      $region33: #{_lambda_.12} parent=11 // pred_check
        %p243 = pneg %p166
      $region34: #{_lambda_.12} parent=11 // pred_check_branch
        %245 = sbr.rel (%p243) target = $region36
      $region35: #{_lambda_.12} parent=11 // pred_region
        _
      $region36: #{_lambda_.12} parent=11 // pred_fallthru
        _
      // Predicated region
      $region37: #{_lambda_.12} parent=11 // pred_check
        %p246 = pneg %p187
      $region38: #{_lambda_.12} parent=11 // pred_check_branch
        %248 = sbr.rel (%p246) target = $region40
      $region39: #{_lambda_.12} parent=11 // pred_region
        _
      $region40: #{_lambda_.12} parent=11 // pred_fallthru
        _
    $region12: #{_lambda_.12} parent=5 // pred_fallthru
      _
    %p249 = scmp.lt.s32.totalorder %s14, 2
    // Predicated region
    $region41: #{_lambda_.12} parent=5 // pred_check
      %p250 = pneg %p249
    $region42: #{_lambda_.12} parent=5 // pred_check_branch
      %252 = sbr.rel (%p250) target = $region44
    $region43: #{_lambda_.12} parent=5 // pred_region
      // Predicated region
      $region45: #{_lambda_.12} parent=43 // pred_check
        %p253 = pneg %p34
      $region46: #{_lambda_.12} parent=43 // pred_check_branch
        %255 = sbr.rel (%p253) target = $region48
      $region47: #{_lambda_.12} parent=43 // pred_region
        %s256 = smul.u32 2, %s14
        %p257 = scmp.lt.s32.totalorder %s256, 3
        %s258 = scalar_select %p257, %s256, 3
        %s259 = smul.addr %s258, 4
        %s260 = scalar_lea.vmem %s0, %s259
        %s261 = smul.u32 2, %s14
      $region48: #{_lambda_.12} parent=43 // pred_fallthru
        _
    $region44: #{_lambda_.12} parent=5 // pred_fallthru
      _
    %p262 = scmp.le.s32.totalorder 1, %s14
    %p263 = scmp.lt.s32.totalorder %s14, 3
    %p264 = pnand %p262, %p263
    %p265 = pneg %p264
    // Predicated region
    $region49: #{_lambda_.12} parent=5 // pred_check
      _
    $region50: #{_lambda_.12} parent=5 // pred_check_branch
      %267 = sbr.rel (%p264) target = $region52
    $region51: #{_lambda_.12} parent=5 // pred_region
      %s268 = ssub.s32 %s14, 1
      %s269 = smul.u32 2, %s19
      %p270 = scmp.lt.s32.totalorder %s269, 3
      %s271 = scalar_select %p270, %s269, 3
      %s272 = smul.addr %s271, 4
      %s273 = scalar_lea.vmem %s0, %s272
      %p274 = pneg %p40
      %p275 = pneg %p37
      %p276 = pneg %p61
      %p277 = pneg %p58
      %p278 = pneg %p82
      %p279 = pneg %p79
      %p280 = pneg %p103
      %p281 = pneg %p100
      %p282 = pneg %p124
      %p283 = pneg %p121
      %p284 = pneg %p145
      %p285 = pneg %p142
      %p286 = pneg %p166
      %p287 = pneg %p163
      %p288 = pneg %p187
      %p289 = pneg %p184
      %p290 = pneg %p213
      %p291 = pneg %p210
      %s292 = smul.u32 2, %s19
      %p293 = scmp.lt.s32.totalorder %s292, 3
      %s294 = scalar_select %p293, %s292, 3
      %s295 = smul.addr %s294, 4
      %s296 = scalar_lea.vmem %s8, %s295
      %s297 = smul.u32 2, %s19
      %p298 = scmp.lt.s32.totalorder %s297, 3
      %s299 = scalar_select %p298, %s297, 3
      %s300 = smul.addr %s299, 4
      %s301 = scalar_lea.vmem %s0, %s300
      %s302 = smul.u32 2, %s19
      %s303 = smul.u32 2, %s19
      %p304 = scmp.lt.s32.totalorder %s303, 3
      %s305 = scalar_select %p304, %s303, 3
      %s306 = smul.addr %s305, 4
      %s307 = scalar_lea.vmem %s8, %s306
      %s308 = smul.u32 2, %s19
      %v310 = vld [vmem:[%s301] sm:$0xf]
      %v311 = vld [vmem:[%s301 + $0x4] sm:$0xf]
      %v312 = vunpack.c.l.bf16 %v310
      %v313 = vunpack.c.l.bf16 %v311
      %v314 = vld [vmem:[%s1] sm:$0x1]
      %v315 = vld [vmem:[%s2] sm:$0x1]
      %vm316 = vcmask 130048
      %v317 = vsel %vm316, %v312, 0.0
      %318 = vadd.xlane.f32.xlu0 %v317
      %v319 = vpop.xlane.xlu0 %318
      %v320 = vsel %vm316, %v313, 0.0
      %321 = vadd.xlane.f32.xlu0 %v320
      %v322 = vpop.xlane.xlu0 %321
      %v323 = vrcp.pop 16.0
      %v324 = vmul.f32 %v319, %v323
      %v325 = vmul.f32 %v322, %v323
      %v326 = vsub.f32 %v312, %v324
      %v327 = vsub.f32 %v313, %v325
      %v328 = vmul.f32 %v326, %v326
      %v329 = vmul.f32 %v327, %v327
      %v330 = vsel %vm316, %v328, 0.0
      %331 = vadd.xlane.f32.xlu0 %v330
      %v332 = vpop.xlane.xlu0 %331
      %v333 = vsel %vm316, %v329, 0.0
      %334 = vadd.xlane.f32.xlu0 %v333
      %v335 = vpop.xlane.xlu0 %334
      %v336 = vmul.f32 %v332, %v323
      %v337 = vmul.f32 %v335, %v323
      %v338 = vadd.f32 %v336, 1e-05
      %v339 = vadd.f32 %v337, 1e-05
      %v340 = vrsqrt.pop %v338
      %v341 = vrsqrt.pop %v339
      %v342 = vmul.f32 %v326, %v340
      %v343 = vmul.f32 %v327, %v341
      %v345 = vlaneseq
      %v346 = vshrl.u32 %v345, 7
      %v347 = vsub.s32 0, %v346
      %v348 = vrot.slane %v314, %v347
      %v350 = vmul.f32 %v342, %v348
      %v351 = vmul.f32 %v343, %v348
      %v353 = vlaneseq
      %v354 = vshrl.u32 %v353, 7
      %v355 = vsub.s32 0, %v354
      %v356 = vrot.slane %v315, %v355
      %v358 = vadd.f32 %v350, %v356
      %v359 = vadd.f32 %v351, %v356
      %v360 = vpack.c.bf16 %v359, %v358
      %v361 = vld [vmem:[%s3] sm:$0xf]
      %v362 = vld [vmem:[%s3 + $0x4] sm:$0xf]
      %v363 = vld [vmem:[%s4] sm:$0x1]
      %v365 = vlaneseq
      %v366 = vshrl.u32 %v365, 7
      %v367 = vsub.s32 0, %v366
      %v368 = vrot.slane %v363, %v367
      %v372 = vunpack.c.l.b16 %v361
      %v373 = vunpack.c.l.b16 %v362
      %v374 = vpack.c.b16 %v373, %v372
      %v377 = vsel %vm316, %v360, 0
      %379 = vmatprep.subr.bf16.mxu0 0
      %380 = vmatpush1.bf16.msra.mxu0 %v374
      %381 = vmatprep.subr.bf16.mxu0 0
      %382 = vmatpush1.bf16.msra.mxu0 0
      %383 = vmatprep.subr.bf16.mxu0 0
      %384 = vmatpush1.bf16.msra.mxu0 0
      %385 = vmatprep.subr.bf16.mxu0 0
      %386 = vmatpush1.bf16.msra.mxu0 0
      %387 = vmatprep.subr.bf16.mxu0 0
      %388 = vmatpush1.bf16.msra.mxu0 0
      %389 = vmatprep.subr.bf16.mxu0 0
      %390 = vmatpush1.bf16.msra.mxu0 0
      %391 = vmatprep.subr.bf16.mxu0 0
      %392 = vmatpush1.bf16.msra.mxu0 0
      %393 = vmatprep.subr.bf16.mxu0 0
      %394 = vmatpush1.bf16.msra.mxu0 0
      %395 = vmatprep.subr.bf16.mxu0 0
      %396 = vmatpush1.bf16.msra.mxu0 0
      %397 = vmatprep.subr.bf16.mxu0 0
      %398 = vmatpush1.bf16.msra.mxu0 0
      %399 = vmatprep.subr.bf16.mxu0 0
      %400 = vmatpush1.bf16.msra.mxu0 0
      %401 = vmatprep.subr.bf16.mxu0 0
      %402 = vmatpush1.bf16.msra.mxu0 0
      %403 = vmatprep.subr.bf16.mxu0 0
      %404 = vmatpush1.bf16.msra.mxu0 0
      %405 = vmatprep.subr.bf16.mxu0 0
      %406 = vmatpush1.bf16.msra.mxu0 0
      %407 = vmatprep.subr.bf16.mxu0 0
      %408 = vmatpush1.bf16.msra.mxu0 0
      %409 = vmatprep.subr.bf16.mxu0 0
      %410 = vmatpush1.bf16.msra.mxu0 0
      %411 = vmatprep.mubr.bf16.mxu0 0
      %412 = vmatmul.mubr.bf16.gmra.mrb[0].mxu0 %v377
      %v413 = vpop.f32.mrb[0].mxu0
      %v414 = vadd.f32 %v368, %v413
      %v415 = vpop.f32.mrb[0].mxu0
      %v416 = vpop.f32.mrb[0].mxu0
      %v417 = vadd.f32 %v368, %v416
      %v418 = vpop.f32.mrb[0].mxu0
      %419 = vdwg.mxu0
      %v422 = vcombine.high %v414, %v414
      %v423 = vcombine.high %v417, %v417
      %426 = vrot.lane.b32.xlu0 %v414, 120
      %v427 = vpop.permute.xlu0 %426
      %428 = vrot.lane.b32.xlu0 %v422, 120
      %v429 = vpop.permute.xlu0 %428
      %430 = vrot.lane.b32.xlu0 %v417, 120
      %v431 = vpop.permute.xlu0 %430
      %432 = vrot.lane.b32.xlu0 %v423, 120
      %v433 = vpop.permute.xlu0 %432
      %v438 = vmul.f32 %v414, 0.35355338
      %v439 = vmul.f32 %v422, 0.35355338
      %v440 = vmul.f32 %v417, 0.35355338
      %v441 = vmul.f32 %v423, 0.35355338
      %v442 = vmul.f32 %v427, 0.35355338
      %v443 = vmul.f32 %v429, 0.35355338
      %v444 = vmul.f32 %v431, 0.35355338
      %v445 = vmul.f32 %v433, 0.35355338
      %v446 = vpack.c.bf16 %v438, %v438
      %v447 = vpack.c.bf16 %v439, %v439
      %v448 = vpack.c.bf16 %v440, %v440
      %v449 = vpack.c.bf16 %v441, %v441
      %v450 = vpack.c.bf16 %v442, %v442
      %v451 = vpack.c.bf16 %v443, %v443
      %v452 = vpack.c.bf16 %v444, %v444
      %v453 = vpack.c.bf16 %v445, %v445
      %v454 = vpack.c.bf16 %v414, %v414
      %v455 = vpack.c.bf16 %v422, %v422
      %v456 = vpack.c.bf16 %v417, %v417
      %v457 = vpack.c.bf16 %v423, %v423
      %v458 = vpack.c.bf16 %v427, %v427
      %v459 = vpack.c.bf16 %v429, %v429
      %v460 = vpack.c.bf16 %v431, %v431
      %v461 = vpack.c.bf16 %v433, %v433
      %463 = vrot.lane.b32.xlu0 %v454, 112
      %v464 = vpop.permute.xlu0 %463
      %vm465 = vcmask 64512
      %v467 = vsel %vm465, %v446, 0
      %v470 = vsel %vm465, %v464, 0
      %472 = vmatprep.subr.bf16.mxu0 0
      %473 = vmatpush1.bf16.xpose.msra.mxu0 %v470
      %474 = vmatprep.subr.bf16.mxu0 0
      %475 = vmatpush1.bf16.xpose.msra.mxu0 0
      %476 = vmatprep.subr.bf16.mxu0 0
      %477 = vmatpush1.bf16.xpose.msra.mxu0 0
      %478 = vmatprep.subr.bf16.mxu0 0
      %479 = vmatpush1.bf16.xpose.msra.mxu0 0
      %480 = vmatprep.subr.bf16.mxu0 0
      %481 = vmatpush1.bf16.xpose.msra.mxu0 0
      %482 = vmatprep.subr.bf16.mxu0 0
      %483 = vmatpush1.bf16.xpose.msra.mxu0 0
      %484 = vmatprep.subr.bf16.mxu0 0
      %485 = vmatpush1.bf16.xpose.msra.mxu0 0
      %486 = vmatprep.subr.bf16.mxu0 0
      %487 = vmatpush1.bf16.xpose.msra.mxu0 0
      %488 = vmatprep.subr.bf16.mxu0 0
      %489 = vmatpush1.bf16.xpose.msra.mxu0 0
      %490 = vmatprep.subr.bf16.mxu0 0
      %491 = vmatpush1.bf16.xpose.msra.mxu0 0
      %492 = vmatprep.subr.bf16.mxu0 0
      %493 = vmatpush1.bf16.xpose.msra.mxu0 0
      %494 = vmatprep.subr.bf16.mxu0 0
      %495 = vmatpush1.bf16.xpose.msra.mxu0 0
      %496 = vmatprep.subr.bf16.mxu0 0
      %497 = vmatpush1.bf16.xpose.msra.mxu0 0
      %498 = vmatprep.subr.bf16.mxu0 0
      %499 = vmatpush1.bf16.xpose.msra.mxu0 0
      %500 = vmatprep.subr.bf16.mxu0 0
      %501 = vmatpush1.bf16.xpose.msra.mxu0 0
      %502 = vmatprep.subr.bf16.mxu0 0
      %503 = vmatpush1.bf16.xpose.msra.mxu0 0
      %504 = vmatprep.mubr.bf16.mxu0 0
      %505 = vmatmul.mubr.bf16.gmra.mrb[0].mxu0 %v467
      %v506 = vpop.f32.mrb[0].mxu0
      %v507 = vadd.f32 0.0, %v506
      %v508 = vpop.f32.mrb[0].mxu0
      %v509 = vpop.f32.mrb[0].mxu0
      %v510 = vpop.f32.mrb[0].mxu0
      %511 = vdwg.mxu0
      %513 = vrot.lane.b32.xlu0 %v455, 112
      %v514 = vpop.permute.xlu0 %513
      %v516 = vsel %vm465, %v447, 0
      %v519 = vsel %vm465, %v514, 0
      %521 = vmatprep.subr.bf16.mxu0 0
      %522 = vmatpush1.bf16.xpose.msra.mxu0 %v519
      %523 = vmatprep.subr.bf16.mxu0 0
      %524 = vmatpush1.bf16.xpose.msra.mxu0 0
      %525 = vmatprep.subr.bf16.mxu0 0
      %526 = vmatpush1.bf16.xpose.msra.mxu0 0
      %527 = vmatprep.subr.bf16.mxu0 0
      %528 = vmatpush1.bf16.xpose.msra.mxu0 0
      %529 = vmatprep.subr.bf16.mxu0 0
      %530 = vmatpush1.bf16.xpose.msra.mxu0 0
      %531 = vmatprep.subr.bf16.mxu0 0
      %532 = vmatpush1.bf16.xpose.msra.mxu0 0
      %533 = vmatprep.subr.bf16.mxu0 0
      %534 = vmatpush1.bf16.xpose.msra.mxu0 0
      %535 = vmatprep.subr.bf16.mxu0 0
      %536 = vmatpush1.bf16.xpose.msra.mxu0 0
      %537 = vmatprep.subr.bf16.mxu0 0
      %538 = vmatpush1.bf16.xpose.msra.mxu0 0
      %539 = vmatprep.subr.bf16.mxu0 0
      %540 = vmatpush1.bf16.xpose.msra.mxu0 0
      %541 = vmatprep.subr.bf16.mxu0 0
      %542 = vmatpush1.bf16.xpose.msra.mxu0 0
      %543 = vmatprep.subr.bf16.mxu0 0
      %544 = vmatpush1.bf16.xpose.msra.mxu0 0
      %545 = vmatprep.subr.bf16.mxu0 0
      %546 = vmatpush1.bf16.xpose.msra.mxu0 0
      %547 = vmatprep.subr.bf16.mxu0 0
      %548 = vmatpush1.bf16.xpose.msra.mxu0 0
      %549 = vmatprep.subr.bf16.mxu0 0
      %550 = vmatpush1.bf16.xpose.msra.mxu0 0
      %551 = vmatprep.subr.bf16.mxu0 0
      %552 = vmatpush1.bf16.xpose.msra.mxu0 0
      %553 = vmatprep.mubr.bf16.mxu0 0
      %554 = vmatmul.mubr.bf16.gmra.mrb[0].mxu0 %v516
      %v555 = vpop.f32.mrb[0].mxu0
      %v556 = vadd.f32 0.0, %v555
      %v557 = vpop.f32.mrb[0].mxu0
      %v558 = vpop.f32.mrb[0].mxu0
      %v559 = vpop.f32.mrb[0].mxu0
      %560 = vdwg.mxu0
      %562 = vrot.lane.b32.xlu0 %v456, 112
      %v563 = vpop.permute.xlu0 %562
      %v565 = vsel %vm465, %v448, 0
      %v568 = vsel %vm465, %v563, 0
      %570 = vmatprep.subr.bf16.mxu0 0
      %571 = vmatpush1.bf16.xpose.msra.mxu0 %v568
      %572 = vmatprep.subr.bf16.mxu0 0
      %573 = vmatpush1.bf16.xpose.msra.mxu0 0
      %574 = vmatprep.subr.bf16.mxu0 0
      %575 = vmatpush1.bf16.xpose.msra.mxu0 0
      %576 = vmatprep.subr.bf16.mxu0 0
      %577 = vmatpush1.bf16.xpose.msra.mxu0 0
      %578 = vmatprep.subr.bf16.mxu0 0
      %579 = vmatpush1.bf16.xpose.msra.mxu0 0
      %580 = vmatprep.subr.bf16.mxu0 0
      %581 = vmatpush1.bf16.xpose.msra.mxu0 0
      %582 = vmatprep.subr.bf16.mxu0 0
      %583 = vmatpush1.bf16.xpose.msra.mxu0 0
      %584 = vmatprep.subr.bf16.mxu0 0
      %585 = vmatpush1.bf16.xpose.msra.mxu0 0
      %586 = vmatprep.subr.bf16.mxu0 0
      %587 = vmatpush1.bf16.xpose.msra.mxu0 0
      %588 = vmatprep.subr.bf16.mxu0 0
      %589 = vmatpush1.bf16.xpose.msra.mxu0 0
      %590 = vmatprep.subr.bf16.mxu0 0
      %591 = vmatpush1.bf16.xpose.msra.mxu0 0
      %592 = vmatprep.subr.bf16.mxu0 0
      %593 = vmatpush1.bf16.xpose.msra.mxu0 0
      %594 = vmatprep.subr.bf16.mxu0 0
      %595 = vmatpush1.bf16.xpose.msra.mxu0 0
      %596 = vmatprep.subr.bf16.mxu0 0
      %597 = vmatpush1.bf16.xpose.msra.mxu0 0
      %598 = vmatprep.subr.bf16.mxu0 0
      %599 = vmatpush1.bf16.xpose.msra.mxu0 0
      %600 = vmatprep.subr.bf16.mxu0 0
      %601 = vmatpush1.bf16.xpose.msra.mxu0 0
      %602 = vmatprep.mubr.bf16.mxu0 0
      %603 = vmatmul.mubr.bf16.gmra.mrb[0].mxu0 %v565
      %v604 = vpop.f32.mrb[0].mxu0
      %v605 = vadd.f32 0.0, %v604
      %v606 = vpop.f32.mrb[0].mxu0
      %v607 = vpop.f32.mrb[0].mxu0
      %v608 = vpop.f32.mrb[0].mxu0
      %609 = vdwg.mxu0
      %611 = vrot.lane.b32.xlu0 %v457, 112
      %v612 = vpop.permute.xlu0 %611
      %v614 = vsel %vm465, %v449, 0
      %v617 = vsel %vm465, %v612, 0
      %619 = vmatprep.subr.bf16.mxu0 0
      %620 = vmatpush1.bf16.xpose.msra.mxu0 %v617
      %621 = vmatprep.subr.bf16.mxu0 0
      %622 = vmatpush1.bf16.xpose.msra.mxu0 0
      %623 = vmatprep.subr.bf16.mxu0 0
      %624 = vmatpush1.bf16.xpose.msra.mxu0 0
      %625 = vmatprep.subr.bf16.mxu0 0
      %626 = vmatpush1.bf16.xpose.msra.mxu0 0
      %627 = vmatprep.subr.bf16.mxu0 0
      %628 = vmatpush1.bf16.xpose.msra.mxu0 0
      %629 = vmatprep.subr.bf16.mxu0 0
      %630 = vmatpush1.bf16.xpose.msra.mxu0 0
      %631 = vmatprep.subr.bf16.mxu0 0
      %632 = vmatpush1.bf16.xpose.msra.mxu0 0
      %633 = vmatprep.subr.bf16.mxu0 0
      %634 = vmatpush1.bf16.xpose.msra.mxu0 0
      %635 = vmatprep.subr.bf16.mxu0 0
      %636 = vmatpush1.bf16.xpose.msra.mxu0 0
      %637 = vmatprep.subr.bf16.mxu0 0
      %638 = vmatpush1.bf16.xpose.msra.mxu0 0
      %639 = vmatprep.subr.bf16.mxu0 0
      %640 = vmatpush1.bf16.xpose.msra.mxu0 0
      %641 = vmatprep.subr.bf16.mxu0 0
      %642 = vmatpush1.bf16.xpose.msra.mxu0 0
      %643 = vmatprep.subr.bf16.mxu0 0
      %644 = vmatpush1.bf16.xpose.msra.mxu0 0
      %645 = vmatprep.subr.bf16.mxu0 0
      %646 = vmatpush1.bf16.xpose.msra.mxu0 0
      %647 = vmatprep.subr.bf16.mxu0 0
      %648 = vmatpush1.bf16.xpose.msra.mxu0 0
      %649 = vmatprep.subr.bf16.mxu0 0
      %650 = vmatpush1.bf16.xpose.msra.mxu0 0
      %651 = vmatprep.mubr.bf16.mxu0 0
      %652 = vmatmul.mubr.bf16.gmra.mrb[0].mxu0 %v614
      %v653 = vpop.f32.mrb[0].mxu0
      %v654 = vadd.f32 0.0, %v653
      %v655 = vpop.f32.mrb[0].mxu0
      %v656 = vpop.f32.mrb[0].mxu0
      %v657 = vpop.f32.mrb[0].mxu0
      %658 = vdwg.mxu0
      %660 = vrot.lane.b32.xlu0 %v458, 112
      %v661 = vpop.permute.xlu0 %660
      %v663 = vsel %vm465, %v450, 0
      %v666 = vsel %vm465, %v661, 0
      %668 = vmatprep.subr.bf16.mxu0 0
      %669 = vmatpush1.bf16.xpose.msra.mxu0 %v666
      %670 = vmatprep.subr.bf16.mxu0 0
      %671 = vmatpush1.bf16.xpose.msra.mxu0 0
      %672 = vmatprep.subr.bf16.mxu0 0
      %673 = vmatpush1.bf16.xpose.msra.mxu0 0
      %674 = vmatprep.subr.bf16.mxu0 0
      %675 = vmatpush1.bf16.xpose.msra.mxu0 0
      %676 = vmatprep.subr.bf16.mxu0 0
      %677 = vmatpush1.bf16.xpose.msra.mxu0 0
      %678 = vmatprep.subr.bf16.mxu0 0
      %679 = vmatpush1.bf16.xpose.msra.mxu0 0
      %680 = vmatprep.subr.bf16.mxu0 0
      %681 = vmatpush1.bf16.xpose.msra.mxu0 0
      %682 = vmatprep.subr.bf16.mxu0 0
      %683 = vmatpush1.bf16.xpose.msra.mxu0 0
      %684 = vmatprep.subr.bf16.mxu0 0
      %685 = vmatpush1.bf16.xpose.msra.mxu0 0
      %686 = vmatprep.subr.bf16.mxu0 0
      %687 = vmatpush1.bf16.xpose.msra.mxu0 0
      %688 = vmatprep.subr.bf16.mxu0 0
      %689 = vmatpush1.bf16.xpose.msra.mxu0 0
      %690 = vmatprep.subr.bf16.mxu0 0
      %691 = vmatpush1.bf16.xpose.msra.mxu0 0
      %692 = vmatprep.subr.bf16.mxu0 0
      %693 = vmatpush1.bf16.xpose.msra.mxu0 0
      %694 = vmatprep.subr.bf16.mxu0 0
      %695 = vmatpush1.bf16.xpose.msra.mxu0 0
      %696 = vmatprep.subr.bf16.mxu0 0
      %697 = vmatpush1.bf16.xpose.msra.mxu0 0
      %698 = vmatprep.subr.bf16.mxu0 0
      %699 = vmatpush1.bf16.xpose.msra.mxu0 0
      %700 = vmatprep.mubr.bf16.mxu0 0
      %701 = vmatmul.mubr.bf16.gmra.mrb[0].mxu0 %v663
      %v702 = vpop.f32.mrb[0].mxu0
      %v703 = vadd.f32 0.0, %v702
      %v704 = vpop.f32.mrb[0].mxu0
      %v705 = vpop.f32.mrb[0].mxu0
      %v706 = vpop.f32.mrb[0].mxu0
      %707 = vdwg.mxu0
      %709 = vrot.lane.b32.xlu0 %v459, 112
      %v710 = vpop.permute.xlu0 %709
      %v712 = vsel %vm465, %v451, 0
      %v715 = vsel %vm465, %v710, 0
      %717 = vmatprep.subr.bf16.mxu0 0
      %718 = vmatpush1.bf16.xpose.msra.mxu0 %v715
      %719 = vmatprep.subr.bf16.mxu0 0
      %720 = vmatpush1.bf16.xpose.msra.mxu0 0
      %721 = vmatprep.subr.bf16.mxu0 0
      %722 = vmatpush1.bf16.xpose.msra.mxu0 0
      %723 = vmatprep.subr.bf16.mxu0 0
      %724 = vmatpush1.bf16.xpose.msra.mxu0 0
      %725 = vmatprep.subr.bf16.mxu0 0
      %726 = vmatpush1.bf16.xpose.msra.mxu0 0
      %727 = vmatprep.subr.bf16.mxu0 0
      %728 = vmatpush1.bf16.xpose.msra.mxu0 0
      %729 = vmatprep.subr.bf16.mxu0 0
      %730 = vmatpush1.bf16.xpose.msra.mxu0 0
      %731 = vmatprep.subr.bf16.mxu0 0
      %732 = vmatpush1.bf16.xpose.msra.mxu0 0
      %733 = vmatprep.subr.bf16.mxu0 0
      %734 = vmatpush1.bf16.xpose.msra.mxu0 0
      %735 = vmatprep.subr.bf16.mxu0 0
      %736 = vmatpush1.bf16.xpose.msra.mxu0 0
      %737 = vmatprep.subr.bf16.mxu0 0
      %738 = vmatpush1.bf16.xpose.msra.mxu0 0
      %739 = vmatprep.subr.bf16.mxu0 0
      %740 = vmatpush1.bf16.xpose.msra.mxu0 0
      %741 = vmatprep.subr.bf16.mxu0 0
      %742 = vmatpush1.bf16.xpose.msra.mxu0 0
      %743 = vmatprep.subr.bf16.mxu0 0
      %744 = vmatpush1.bf16.xpose.msra.mxu0 0
      %745 = vmatprep.subr.bf16.mxu0 0
      %746 = vmatpush1.bf16.xpose.msra.mxu0 0
      %747 = vmatprep.subr.bf16.mxu0 0
      %748 = vmatpush1.bf16.xpose.msra.mxu0 0
      %749 = vmatprep.mubr.bf16.mxu0 0
      %750 = vmatmul.mubr.bf16.gmra.mrb[0].mxu0 %v712
      %v751 = vpop.f32.mrb[0].mxu0
      %v752 = vadd.f32 0.0, %v751
      %v753 = vpop.f32.mrb[0].mxu0
      %v754 = vpop.f32.mrb[0].mxu0
      %v755 = vpop.f32.mrb[0].mxu0
      %756 = vdwg.mxu0
      %758 = vrot.lane.b32.xlu0 %v460, 112
      %v759 = vpop.permute.xlu0 %758
      %v761 = vsel %vm465, %v452, 0
      %v764 = vsel %vm465, %v759, 0
      %766 = vmatprep.subr.bf16.mxu0 0
      %767 = vmatpush1.bf16.xpose.msra.mxu0 %v764
      %768 = vmatprep.subr.bf16.mxu0 0
      %769 = vmatpush1.bf16.xpose.msra.mxu0 0
      %770 = vmatprep.subr.bf16.mxu0 0
      %771 = vmatpush1.bf16.xpose.msra.mxu0 0
      %772 = vmatprep.subr.bf16.mxu0 0
      %773 = vmatpush1.bf16.xpose.msra.mxu0 0
      %774 = vmatprep.subr.bf16.mxu0 0
      %775 = vmatpush1.bf16.xpose.msra.mxu0 0
      %776 = vmatprep.subr.bf16.mxu0 0
      %777 = vmatpush1.bf16.xpose.msra.mxu0 0
      %778 = vmatprep.subr.bf16.mxu0 0
      %779 = vmatpush1.bf16.xpose.msra.mxu0 0
      %780 = vmatprep.subr.bf16.mxu0 0
      %781 = vmatpush1.bf16.xpose.msra.mxu0 0
      %782 = vmatprep.subr.bf16.mxu0 0
      %783 = vmatpush1.bf16.xpose.msra.mxu0 0
      %784 = vmatprep.subr.bf16.mxu0 0
      %785 = vmatpush1.bf16.xpose.msra.mxu0 0
      %786 = vmatprep.subr.bf16.mxu0 0
      %787 = vmatpush1.bf16.xpose.msra.mxu0 0
      %788 = vmatprep.subr.bf16.mxu0 0
      %789 = vmatpush1.bf16.xpose.msra.mxu0 0
      %790 = vmatprep.subr.bf16.mxu0 0
      %791 = vmatpush1.bf16.xpose.msra.mxu0 0
      %792 = vmatprep.subr.bf16.mxu0 0
      %793 = vmatpush1.bf16.xpose.msra.mxu0 0
      %794 = vmatprep.subr.bf16.mxu0 0
      %795 = vmatpush1.bf16.xpose.msra.mxu0 0
      %796 = vmatprep.subr.bf16.mxu0 0
      %797 = vmatpush1.bf16.xpose.msra.mxu0 0
      %798 = vmatprep.mubr.bf16.mxu0 0
      %799 = vmatmul.mubr.bf16.gmra.mrb[0].mxu0 %v761
      %v800 = vpop.f32.mrb[0].mxu0
      %v801 = vadd.f32 0.0, %v800
      %v802 = vpop.f32.mrb[0].mxu0
      %v803 = vpop.f32.mrb[0].mxu0
      %v804 = vpop.f32.mrb[0].mxu0
      %805 = vdwg.mxu0
      %807 = vrot.lane.b32.xlu0 %v461, 112
      %v808 = vpop.permute.xlu0 %807
      %v810 = vsel %vm465, %v453, 0
      %v813 = vsel %vm465, %v808, 0
      %815 = vmatprep.subr.bf16.mxu0 0
      %816 = vmatpush1.bf16.xpose.msra.mxu0 %v813
      %817 = vmatprep.subr.bf16.mxu0 0
      %818 = vmatpush1.bf16.xpose.msra.mxu0 0
      %819 = vmatprep.subr.bf16.mxu0 0
      %820 = vmatpush1.bf16.xpose.msra.mxu0 0
      %821 = vmatprep.subr.bf16.mxu0 0
      %822 = vmatpush1.bf16.xpose.msra.mxu0 0
      %823 = vmatprep.subr.bf16.mxu0 0
      %824 = vmatpush1.bf16.xpose.msra.mxu0 0
      %825 = vmatprep.subr.bf16.mxu0 0
      %826 = vmatpush1.bf16.xpose.msra.mxu0 0
      %827 = vmatprep.subr.bf16.mxu0 0
      %828 = vmatpush1.bf16.xpose.msra.mxu0 0
      %829 = vmatprep.subr.bf16.mxu0 0
      %830 = vmatpush1.bf16.xpose.msra.mxu0 0
      %831 = vmatprep.subr.bf16.mxu0 0
      %832 = vmatpush1.bf16.xpose.msra.mxu0 0
      %833 = vmatprep.subr.bf16.mxu0 0
      %834 = vmatpush1.bf16.xpose.msra.mxu0 0
      %835 = vmatprep.subr.bf16.mxu0 0
      %836 = vmatpush1.bf16.xpose.msra.mxu0 0
      %837 = vmatprep.subr.bf16.mxu0 0
      %838 = vmatpush1.bf16.xpose.msra.mxu0 0
      %839 = vmatprep.subr.bf16.mxu0 0
      %840 = vmatpush1.bf16.xpose.msra.mxu0 0
      %841 = vmatprep.subr.bf16.mxu0 0
      %842 = vmatpush1.bf16.xpose.msra.mxu0 0
      %843 = vmatprep.subr.bf16.mxu0 0
      %844 = vmatpush1.bf16.xpose.msra.mxu0 0
      %845 = vmatprep.subr.bf16.mxu0 0
      %846 = vmatpush1.bf16.xpose.msra.mxu0 0
      %847 = vmatprep.mubr.bf16.mxu0 0
      %848 = vmatmul.mubr.bf16.gmra.mrb[0].mxu0 %v810
      %v849 = vpop.f32.mrb[0].mxu0
      %v850 = vadd.f32 0.0, %v849
      %v851 = vpop.f32.mrb[0].mxu0
      %v852 = vpop.f32.mrb[0].mxu0
      %v853 = vpop.f32.mrb[0].mxu0
      %854 = vdwg.mxu0
      %v855 = vld [vmem:[%s7] sm:$0xf]
      %v856 = vld [vmem:[%s7 + $0x4] sm:$0xf]
      %v857 = vadd.f32 %v507, %v855
      %v858 = vadd.f32 %v556, %v855
      %v859 = vadd.f32 %v605, %v855
      %v860 = vadd.f32 %v654, %v855
      %v861 = vadd.f32 %v703, %v856
      %v862 = vadd.f32 %v752, %v856
      %v863 = vadd.f32 %v801, %v856
      %v864 = vadd.f32 %v850, %v856
      %vm865 = vcmask 27648
      %v866 = vsel %vm865, %v857, -inf
      %867 = vmax.xlane.f32.xlu0 %v866
      %v868 = vpop.xlane.xlu0 %867
      %v869 = vsel %vm865, %v858, -inf
      %870 = vmax.xlane.f32.xlu0 %v869
      %v871 = vpop.xlane.xlu0 %870
      %v872 = vsel %vm865, %v859, -inf
      %873 = vmax.xlane.f32.xlu0 %v872
      %v874 = vpop.xlane.xlu0 %873
      %v875 = vsel %vm865, %v860, -inf
      %876 = vmax.xlane.f32.xlu0 %v875
      %v877 = vpop.xlane.xlu0 %876
      %v878 = vsel %vm865, %v861, -inf
      %879 = vmax.xlane.f32.xlu0 %v878
      %v880 = vpop.xlane.xlu0 %879
      %v881 = vsel %vm865, %v862, -inf
      %882 = vmax.xlane.f32.xlu0 %v881
      %v883 = vpop.xlane.xlu0 %882
      %v884 = vsel %vm865, %v863, -inf
      %885 = vmax.xlane.f32.xlu0 %v884
      %v886 = vpop.xlane.xlu0 %885
      %v887 = vsel %vm865, %v864, -inf
      %888 = vmax.xlane.f32.xlu0 %v887
      %v889 = vpop.xlane.xlu0 %888
      %v890 = vsub.f32 %v857, %v868
      %v891 = vsub.f32 %v858, %v871
      %v892 = vsub.f32 %v859, %v874
      %v893 = vsub.f32 %v860, %v877
      %v894 = vsub.f32 %v861, %v880
      %v895 = vsub.f32 %v862, %v883
      %v896 = vsub.f32 %v863, %v886
      %v897 = vsub.f32 %v864, %v889
      %v898 = vmul.f32 %v890, 1.442695
      %v899 = vpow.pop %v898
      %v900 = vmul.f32 %v891, 1.442695
      %v901 = vpow.pop %v900
      %v902 = vmul.f32 %v892, 1.442695
      %v903 = vpow.pop %v902
      %v904 = vmul.f32 %v893, 1.442695
      %v905 = vpow.pop %v904
      %v906 = vmul.f32 %v894, 1.442695
      %v907 = vpow.pop %v906
      %v908 = vmul.f32 %v895, 1.442695
      %v909 = vpow.pop %v908
      %v910 = vmul.f32 %v896, 1.442695
      %v911 = vpow.pop %v910
      %v912 = vmul.f32 %v897, 1.442695
      %v913 = vpow.pop %v912
      %v914 = vsel %vm865, %v899, 0.0
      %915 = vadd.xlane.f32.xlu0 %v914
      %v916 = vpop.xlane.xlu0 %915
      %v917 = vsel %vm865, %v901, 0.0
      %918 = vadd.xlane.f32.xlu0 %v917
      %v919 = vpop.xlane.xlu0 %918
      %v920 = vsel %vm865, %v903, 0.0
      %921 = vadd.xlane.f32.xlu0 %v920
      %v922 = vpop.xlane.xlu0 %921
      %v923 = vsel %vm865, %v905, 0.0
      %924 = vadd.xlane.f32.xlu0 %v923
      %v925 = vpop.xlane.xlu0 %924
      %v926 = vsel %vm865, %v907, 0.0
      %927 = vadd.xlane.f32.xlu0 %v926
      %v928 = vpop.xlane.xlu0 %927
      %v929 = vsel %vm865, %v909, 0.0
      %930 = vadd.xlane.f32.xlu0 %v929
      %v931 = vpop.xlane.xlu0 %930
      %v932 = vsel %vm865, %v911, 0.0
      %933 = vadd.xlane.f32.xlu0 %v932
      %v934 = vpop.xlane.xlu0 %933
      %v935 = vsel %vm865, %v913, 0.0
      %936 = vadd.xlane.f32.xlu0 %v935
      %v937 = vpop.xlane.xlu0 %936
      %v938 = vrcp.pop %v916
      %v939 = vrcp.pop %v919
      %v940 = vrcp.pop %v922
      %v941 = vrcp.pop %v925
      %v942 = vrcp.pop %v928
      %v943 = vrcp.pop %v931
      %v944 = vrcp.pop %v934
      %v945 = vrcp.pop %v937
      %v946 = vmul.f32 %v899, %v938
      %v947 = vmul.f32 %v901, %v939
      %v948 = vmul.f32 %v903, %v940
      %v949 = vmul.f32 %v905, %v941
      %v950 = vmul.f32 %v907, %v942
      %v951 = vmul.f32 %v909, %v943
      %v952 = vmul.f32 %v911, %v944
      %v953 = vmul.f32 %v913, %v945
      %v954 = vpack.c.bf16 %v946, %v946
      %v955 = vpack.c.bf16 %v947, %v947
      %v956 = vpack.c.bf16 %v948, %v948
      %v957 = vpack.c.bf16 %v949, %v949
      %v958 = vpack.c.bf16 %v950, %v950
      %v959 = vpack.c.bf16 %v951, %v951
      %v960 = vpack.c.bf16 %v952, %v952
      %v961 = vpack.c.bf16 %v953, %v953
      %962 = vrot.lane.b32.xlu0 %v454, 96
      %v963 = vpop.permute.xlu0 %962
      %vm964 = vcmask 31744
      %v966 = vsel %vm964, %v954, 0
      %vm968 = vcmask 1041408
      %v970 = vsel %vm968, %v963, 0
      %972 = vmatprep.subr.bf16.mxu0 0
      %973 = vmatpush1.bf16.msra.mxu0 %v970
      %974 = vmatprep.subr.bf16.mxu0 0
      %975 = vmatpush1.bf16.msra.mxu0 0
      %976 = vmatprep.subr.bf16.mxu0 0
      %977 = vmatpush1.bf16.msra.mxu0 0
      %978 = vmatprep.subr.bf16.mxu0 0
      %979 = vmatpush1.bf16.msra.mxu0 0
      %980 = vmatprep.subr.bf16.mxu0 0
      %981 = vmatpush1.bf16.msra.mxu0 0
      %982 = vmatprep.subr.bf16.mxu0 0
      %983 = vmatpush1.bf16.msra.mxu0 0
      %984 = vmatprep.subr.bf16.mxu0 0
      %985 = vmatpush1.bf16.msra.mxu0 0
      %986 = vmatprep.subr.bf16.mxu0 0
      %987 = vmatpush1.bf16.msra.mxu0 0
      %988 = vmatprep.subr.bf16.mxu0 0
      %989 = vmatpush1.bf16.msra.mxu0 0
      %990 = vmatprep.subr.bf16.mxu0 0
      %991 = vmatpush1.bf16.msra.mxu0 0
      %992 = vmatprep.subr.bf16.mxu0 0
      %993 = vmatpush1.bf16.msra.mxu0 0
      %994 = vmatprep.subr.bf16.mxu0 0
      %995 = vmatpush1.bf16.msra.mxu0 0
      %996 = vmatprep.subr.bf16.mxu0 0
      %997 = vmatpush1.bf16.msra.mxu0 0
      %998 = vmatprep.subr.bf16.mxu0 0
      %999 = vmatpush1.bf16.msra.mxu0 0
      %1000 = vmatprep.subr.bf16.mxu0 0
      %1001 = vmatpush1.bf16.msra.mxu0 0
      %1002 = vmatprep.subr.bf16.mxu0 0
      %1003 = vmatpush1.bf16.msra.mxu0 0
      %1004 = vmatprep.mubr.bf16.mxu0 0
      %1005 = vmatmul.mubr.bf16.gmra.mrb[0].mxu0 %v966
      %v1006 = vpop.f32.mrb[0].mxu0
      %v1007 = vadd.f32 0.0, %v1006
      %v1008 = vpop.f32.mrb[0].mxu0
      %v1009 = vpop.f32.mrb[0].mxu0
      %v1010 = vpop.f32.mrb[0].mxu0
      %1011 = vdwg.mxu0
      %1012 = vrot.lane.b32.xlu0 %v455, 96
      %v1013 = vpop.permute.xlu0 %1012
      %v1015 = vsel %vm964, %v955, 0
      %v1018 = vsel %vm968, %v1013, 0
      %1020 = vmatprep.subr.bf16.mxu0 0
      %1021 = vmatpush1.bf16.msra.mxu0 %v1018
      %1022 = vmatprep.subr.bf16.mxu0 0
      %1023 = vmatpush1.bf16.msra.mxu0 0
      %1024 = vmatprep.subr.bf16.mxu0 0
      %1025 = vmatpush1.bf16.msra.mxu0 0
      %1026 = vmatprep.subr.bf16.mxu0 0
      %1027 = vmatpush1.bf16.msra.mxu0 0
      %1028 = vmatprep.subr.bf16.mxu0 0
      %1029 = vmatpush1.bf16.msra.mxu0 0
      %1030 = vmatprep.subr.bf16.mxu0 0
      %1031 = vmatpush1.bf16.msra.mxu0 0
      %1032 = vmatprep.subr.bf16.mxu0 0
      %1033 = vmatpush1.bf16.msra.mxu0 0
      %1034 = vmatprep.subr.bf16.mxu0 0
      %1035 = vmatpush1.bf16.msra.mxu0 0
      %1036 = vmatprep.subr.bf16.mxu0 0
      %1037 = vmatpush1.bf16.msra.mxu0 0
      %1038 = vmatprep.subr.bf16.mxu0 0
      %1039 = vmatpush1.bf16.msra.mxu0 0
      %1040 = vmatprep.subr.bf16.mxu0 0
      %1041 = vmatpush1.bf16.msra.mxu0 0
      %1042 = vmatprep.subr.bf16.mxu0 0
      %1043 = vmatpush1.bf16.msra.mxu0 0
      %1044 = vmatprep.subr.bf16.mxu0 0
      %1045 = vmatpush1.bf16.msra.mxu0 0
      %1046 = vmatprep.subr.bf16.mxu0 0
      %1047 = vmatpush1.bf16.msra.mxu0 0
      %1048 = vmatprep.subr.bf16.mxu0 0
      %1049 = vmatpush1.bf16.msra.mxu0 0
      %1050 = vmatprep.subr.bf16.mxu0 0
      %1051 = vmatpush1.bf16.msra.mxu0 0
      %1052 = vmatprep.mubr.bf16.mxu0 0
      %1053 = vmatmul.mubr.bf16.gmra.mrb[0].mxu0 %v1015
      %v1054 = vpop.f32.mrb[0].mxu0
      %v1055 = vadd.f32 0.0, %v1054
      %v1056 = vpop.f32.mrb[0].mxu0
      %v1057 = vpop.f32.mrb[0].mxu0
      %v1058 = vpop.f32.mrb[0].mxu0
      %1059 = vdwg.mxu0
      %1060 = vrot.lane.b32.xlu0 %v456, 96
      %v1061 = vpop.permute.xlu0 %1060
      %v1063 = vsel %vm964, %v956, 0
      %v1066 = vsel %vm968, %v1061, 0
      %1068 = vmatprep.subr.bf16.mxu0 0
      %1069 = vmatpush1.bf16.msra.mxu0 %v1066
      %1070 = vmatprep.subr.bf16.mxu0 0
      %1071 = vmatpush1.bf16.msra.mxu0 0
      %1072 = vmatprep.subr.bf16.mxu0 0
      %1073 = vmatpush1.bf16.msra.mxu0 0
      %1074 = vmatprep.subr.bf16.mxu0 0
      %1075 = vmatpush1.bf16.msra.mxu0 0
      %1076 = vmatprep.subr.bf16.mxu0 0
      %1077 = vmatpush1.bf16.msra.mxu0 0
      %1078 = vmatprep.subr.bf16.mxu0 0
      %1079 = vmatpush1.bf16.msra.mxu0 0
      %1080 = vmatprep.subr.bf16.mxu0 0
      %1081 = vmatpush1.bf16.msra.mxu0 0
      %1082 = vmatprep.subr.bf16.mxu0 0
      %1083 = vmatpush1.bf16.msra.mxu0 0
      %1084 = vmatprep.subr.bf16.mxu0 0
      %1085 = vmatpush1.bf16.msra.mxu0 0
      %1086 = vmatprep.subr.bf16.mxu0 0
      %1087 = vmatpush1.bf16.msra.mxu0 0
      %1088 = vmatprep.subr.bf16.mxu0 0
      %1089 = vmatpush1.bf16.msra.mxu0 0
      %1090 = vmatprep.subr.bf16.mxu0 0
      %1091 = vmatpush1.bf16.msra.mxu0 0
      %1092 = vmatprep.subr.bf16.mxu0 0
      %1093 = vmatpush1.bf16.msra.mxu0 0
      %1094 = vmatprep.subr.bf16.mxu0 0
      %1095 = vmatpush1.bf16.msra.mxu0 0
      %1096 = vmatprep.subr.bf16.mxu0 0
      %1097 = vmatpush1.bf16.msra.mxu0 0
      %1098 = vmatprep.subr.bf16.mxu0 0
      %1099 = vmatpush1.bf16.msra.mxu0 0
      %1100 = vmatprep.mubr.bf16.mxu0 0
      %1101 = vmatmul.mubr.bf16.gmra.mrb[0].mxu0 %v1063
      %v1102 = vpop.f32.mrb[0].mxu0
      %v1103 = vadd.f32 0.0, %v1102
      %v1104 = vpop.f32.mrb[0].mxu0
      %v1105 = vpop.f32.mrb[0].mxu0
      %v1106 = vpop.f32.mrb[0].mxu0
      %1107 = vdwg.mxu0
      %1108 = vrot.lane.b32.xlu0 %v457, 96
      %v1109 = vpop.permute.xlu0 %1108
      %v1111 = vsel %vm964, %v957, 0
      %v1114 = vsel %vm968, %v1109, 0
      %1116 = vmatprep.subr.bf16.mxu0 0
      %1117 = vmatpush1.bf16.msra.mxu0 %v1114
      %1118 = vmatprep.subr.bf16.mxu0 0
      %1119 = vmatpush1.bf16.msra.mxu0 0
      %1120 = vmatprep.subr.bf16.mxu0 0
      %1121 = vmatpush1.bf16.msra.mxu0 0
      %1122 = vmatprep.subr.bf16.mxu0 0
      %1123 = vmatpush1.bf16.msra.mxu0 0
      %1124 = vmatprep.subr.bf16.mxu0 0
      %1125 = vmatpush1.bf16.msra.mxu0 0
      %1126 = vmatprep.subr.bf16.mxu0 0
      %1127 = vmatpush1.bf16.msra.mxu0 0
      %1128 = vmatprep.subr.bf16.mxu0 0
      %1129 = vmatpush1.bf16.msra.mxu0 0
      %1130 = vmatprep.subr.bf16.mxu0 0
      %1131 = vmatpush1.bf16.msra.mxu0 0
      %1132 = vmatprep.subr.bf16.mxu0 0
      %1133 = vmatpush1.bf16.msra.mxu0 0
      %1134 = vmatprep.subr.bf16.mxu0 0
      %1135 = vmatpush1.bf16.msra.mxu0 0
      %1136 = vmatprep.subr.bf16.mxu0 0
      %1137 = vmatpush1.bf16.msra.mxu0 0
      %1138 = vmatprep.subr.bf16.mxu0 0
      %1139 = vmatpush1.bf16.msra.mxu0 0
      %1140 = vmatprep.subr.bf16.mxu0 0
      %1141 = vmatpush1.bf16.msra.mxu0 0
      %1142 = vmatprep.subr.bf16.mxu0 0
      %1143 = vmatpush1.bf16.msra.mxu0 0
      %1144 = vmatprep.subr.bf16.mxu0 0
      %1145 = vmatpush1.bf16.msra.mxu0 0
      %1146 = vmatprep.subr.bf16.mxu0 0
      %1147 = vmatpush1.bf16.msra.mxu0 0
      %1148 = vmatprep.mubr.bf16.mxu0 0
      %1149 = vmatmul.mubr.bf16.gmra.mrb[0].mxu0 %v1111
      %v1150 = vpop.f32.mrb[0].mxu0
      %v1151 = vadd.f32 0.0, %v1150
      %v1152 = vpop.f32.mrb[0].mxu0
      %v1153 = vpop.f32.mrb[0].mxu0
      %v1154 = vpop.f32.mrb[0].mxu0
      %1155 = vdwg.mxu0
      %1156 = vrot.lane.b32.xlu0 %v458, 96
      %v1157 = vpop.permute.xlu0 %1156
      %v1159 = vsel %vm964, %v958, 0
      %v1162 = vsel %vm968, %v1157, 0
      %1164 = vmatprep.subr.bf16.mxu0 0
      %1165 = vmatpush1.bf16.msra.mxu0 %v1162
      %1166 = vmatprep.subr.bf16.mxu0 0
      %1167 = vmatpush1.bf16.msra.mxu0 0
      %1168 = vmatprep.subr.bf16.mxu0 0
      %1169 = vmatpush1.bf16.msra.mxu0 0
      %1170 = vmatprep.subr.bf16.mxu0 0
      %1171 = vmatpush1.bf16.msra.mxu0 0
      %1172 = vmatprep.subr.bf16.mxu0 0
      %1173 = vmatpush1.bf16.msra.mxu0 0
      %1174 = vmatprep.subr.bf16.mxu0 0
      %1175 = vmatpush1.bf16.msra.mxu0 0
      %1176 = vmatprep.subr.bf16.mxu0 0
      %1177 = vmatpush1.bf16.msra.mxu0 0
      %1178 = vmatprep.subr.bf16.mxu0 0
      %1179 = vmatpush1.bf16.msra.mxu0 0
      %1180 = vmatprep.subr.bf16.mxu0 0
      %1181 = vmatpush1.bf16.msra.mxu0 0
      %1182 = vmatprep.subr.bf16.mxu0 0
      %1183 = vmatpush1.bf16.msra.mxu0 0
      %1184 = vmatprep.subr.bf16.mxu0 0
      %1185 = vmatpush1.bf16.msra.mxu0 0
      %1186 = vmatprep.subr.bf16.mxu0 0
      %1187 = vmatpush1.bf16.msra.mxu0 0
      %1188 = vmatprep.subr.bf16.mxu0 0
      %1189 = vmatpush1.bf16.msra.mxu0 0
      %1190 = vmatprep.subr.bf16.mxu0 0
      %1191 = vmatpush1.bf16.msra.mxu0 0
      %1192 = vmatprep.subr.bf16.mxu0 0
      %1193 = vmatpush1.bf16.msra.mxu0 0
      %1194 = vmatprep.subr.bf16.mxu0 0
      %1195 = vmatpush1.bf16.msra.mxu0 0
      %1196 = vmatprep.mubr.bf16.mxu0 0
      %1197 = vmatmul.mubr.bf16.gmra.mrb[0].mxu0 %v1159
      %v1198 = vpop.f32.mrb[0].mxu0
      %v1199 = vadd.f32 0.0, %v1198
      %v1200 = vpop.f32.mrb[0].mxu0
      %v1201 = vpop.f32.mrb[0].mxu0
      %v1202 = vpop.f32.mrb[0].mxu0
      %1203 = vdwg.mxu0
      %1204 = vrot.lane.b32.xlu0 %v459, 96
      %v1205 = vpop.permute.xlu0 %1204
      %v1207 = vsel %vm964, %v959, 0
      %v1210 = vsel %vm968, %v1205, 0
      %1212 = vmatprep.subr.bf16.mxu0 0
      %1213 = vmatpush1.bf16.msra.mxu0 %v1210
      %1214 = vmatprep.subr.bf16.mxu0 0
      %1215 = vmatpush1.bf16.msra.mxu0 0
      %1216 = vmatprep.subr.bf16.mxu0 0
      %1217 = vmatpush1.bf16.msra.mxu0 0
      %1218 = vmatprep.subr.bf16.mxu0 0
      %1219 = vmatpush1.bf16.msra.mxu0 0
      %1220 = vmatprep.subr.bf16.mxu0 0
      %1221 = vmatpush1.bf16.msra.mxu0 0
      %1222 = vmatprep.subr.bf16.mxu0 0
      %1223 = vmatpush1.bf16.msra.mxu0 0
      %1224 = vmatprep.subr.bf16.mxu0 0
      %1225 = vmatpush1.bf16.msra.mxu0 0
      %1226 = vmatprep.subr.bf16.mxu0 0
      %1227 = vmatpush1.bf16.msra.mxu0 0
      %1228 = vmatprep.subr.bf16.mxu0 0
      %1229 = vmatpush1.bf16.msra.mxu0 0
      %1230 = vmatprep.subr.bf16.mxu0 0
      %1231 = vmatpush1.bf16.msra.mxu0 0
      %1232 = vmatprep.subr.bf16.mxu0 0
      %1233 = vmatpush1.bf16.msra.mxu0 0
      %1234 = vmatprep.subr.bf16.mxu0 0
      %1235 = vmatpush1.bf16.msra.mxu0 0
      %1236 = vmatprep.subr.bf16.mxu0 0
      %1237 = vmatpush1.bf16.msra.mxu0 0
      %1238 = vmatprep.subr.bf16.mxu0 0
      %1239 = vmatpush1.bf16.msra.mxu0 0
      %1240 = vmatprep.subr.bf16.mxu0 0
      %1241 = vmatpush1.bf16.msra.mxu0 0
      %1242 = vmatprep.subr.bf16.mxu0 0
      %1243 = vmatpush1.bf16.msra.mxu0 0
      %1244 = vmatprep.mubr.bf16.mxu0 0
      %1245 = vmatmul.mubr.bf16.gmra.mrb[0].mxu0 %v1207
      %v1246 = vpop.f32.mrb[0].mxu0
      %v1247 = vadd.f32 0.0, %v1246
      %v1248 = vpop.f32.mrb[0].mxu0
      %v1249 = vpop.f32.mrb[0].mxu0
      %v1250 = vpop.f32.mrb[0].mxu0
      %1251 = vdwg.mxu0
      %1252 = vrot.lane.b32.xlu0 %v460, 96
      %v1253 = vpop.permute.xlu0 %1252
      %v1255 = vsel %vm964, %v960, 0
      %v1258 = vsel %vm968, %v1253, 0
      %1260 = vmatprep.subr.bf16.mxu0 0
      %1261 = vmatpush1.bf16.msra.mxu0 %v1258
      %1262 = vmatprep.subr.bf16.mxu0 0
      %1263 = vmatpush1.bf16.msra.mxu0 0
      %1264 = vmatprep.subr.bf16.mxu0 0
      %1265 = vmatpush1.bf16.msra.mxu0 0
      %1266 = vmatprep.subr.bf16.mxu0 0
      %1267 = vmatpush1.bf16.msra.mxu0 0
      %1268 = vmatprep.subr.bf16.mxu0 0
      %1269 = vmatpush1.bf16.msra.mxu0 0
      %1270 = vmatprep.subr.bf16.mxu0 0
      %1271 = vmatpush1.bf16.msra.mxu0 0
      %1272 = vmatprep.subr.bf16.mxu0 0
      %1273 = vmatpush1.bf16.msra.mxu0 0
      %1274 = vmatprep.subr.bf16.mxu0 0
      %1275 = vmatpush1.bf16.msra.mxu0 0
      %1276 = vmatprep.subr.bf16.mxu0 0
      %1277 = vmatpush1.bf16.msra.mxu0 0
      %1278 = vmatprep.subr.bf16.mxu0 0
      %1279 = vmatpush1.bf16.msra.mxu0 0
      %1280 = vmatprep.subr.bf16.mxu0 0
      %1281 = vmatpush1.bf16.msra.mxu0 0
      %1282 = vmatprep.subr.bf16.mxu0 0
      %1283 = vmatpush1.bf16.msra.mxu0 0
      %1284 = vmatprep.subr.bf16.mxu0 0
      %1285 = vmatpush1.bf16.msra.mxu0 0
      %1286 = vmatprep.subr.bf16.mxu0 0
      %1287 = vmatpush1.bf16.msra.mxu0 0
      %1288 = vmatprep.subr.bf16.mxu0 0
      %1289 = vmatpush1.bf16.msra.mxu0 0
      %1290 = vmatprep.subr.bf16.mxu0 0
      %1291 = vmatpush1.bf16.msra.mxu0 0
      %1292 = vmatprep.mubr.bf16.mxu0 0
      %1293 = vmatmul.mubr.bf16.gmra.mrb[0].mxu0 %v1255
      %v1294 = vpop.f32.mrb[0].mxu0
      %v1295 = vadd.f32 0.0, %v1294
      %v1296 = vpop.f32.mrb[0].mxu0
      %v1297 = vpop.f32.mrb[0].mxu0
      %v1298 = vpop.f32.mrb[0].mxu0
      %1299 = vdwg.mxu0
      %1300 = vrot.lane.b32.xlu0 %v461, 96
      %v1301 = vpop.permute.xlu0 %1300
      %v1303 = vsel %vm964, %v961, 0
      %v1306 = vsel %vm968, %v1301, 0
      %1308 = vmatprep.subr.bf16.mxu0 0
      %1309 = vmatpush1.bf16.msra.mxu0 %v1306
      %1310 = vmatprep.subr.bf16.mxu0 0
      %1311 = vmatpush1.bf16.msra.mxu0 0
      %1312 = vmatprep.subr.bf16.mxu0 0
      %1313 = vmatpush1.bf16.msra.mxu0 0
      %1314 = vmatprep.subr.bf16.mxu0 0
      %1315 = vmatpush1.bf16.msra.mxu0 0
      %1316 = vmatprep.subr.bf16.mxu0 0
      %1317 = vmatpush1.bf16.msra.mxu0 0
      %1318 = vmatprep.subr.bf16.mxu0 0
      %1319 = vmatpush1.bf16.msra.mxu0 0
      %1320 = vmatprep.subr.bf16.mxu0 0
      %1321 = vmatpush1.bf16.msra.mxu0 0
      %1322 = vmatprep.subr.bf16.mxu0 0
      %1323 = vmatpush1.bf16.msra.mxu0 0
      %1324 = vmatprep.subr.bf16.mxu0 0
      %1325 = vmatpush1.bf16.msra.mxu0 0
      %1326 = vmatprep.subr.bf16.mxu0 0
      %1327 = vmatpush1.bf16.msra.mxu0 0
      %1328 = vmatprep.subr.bf16.mxu0 0
      %1329 = vmatpush1.bf16.msra.mxu0 0
      %1330 = vmatprep.subr.bf16.mxu0 0
      %1331 = vmatpush1.bf16.msra.mxu0 0
      %1332 = vmatprep.subr.bf16.mxu0 0
      %1333 = vmatpush1.bf16.msra.mxu0 0
      %1334 = vmatprep.subr.bf16.mxu0 0
      %1335 = vmatpush1.bf16.msra.mxu0 0
      %1336 = vmatprep.subr.bf16.mxu0 0
      %1337 = vmatpush1.bf16.msra.mxu0 0
      %1338 = vmatprep.subr.bf16.mxu0 0
      %1339 = vmatpush1.bf16.msra.mxu0 0
      %1340 = vmatprep.mubr.bf16.mxu0 0
      %1341 = vmatmul.mubr.bf16.gmra.mrb[0].mxu0 %v1303
      %v1342 = vpop.f32.mrb[0].mxu0
      %v1343 = vadd.f32 0.0, %v1342
      %v1344 = vpop.f32.mrb[0].mxu0
      %v1345 = vpop.f32.mrb[0].mxu0
      %v1346 = vpop.f32.mrb[0].mxu0
      %1347 = vdwg.mxu0
      %v1356 = vcombine.low %v1007, %v1055
      %v1357 = vcombine.low %v1103, %v1151
      %v1358 = vcombine.low %v1199, %v1247
      %v1359 = vcombine.low %v1295, %v1343
      %v1364 = vpack.c.bf16 %v1357, %v1356
      %v1365 = vpack.c.bf16 %v1359, %v1358
      %v1366 = vld [vmem:[%s5] sm:$0xf]
      %v1367 = vld [vmem:[%s5 + $0x4] sm:$0xf]
      %v1369 = vsel %vm465, %v1364, 0
      %vm1371 = vcmask 1043456
      %v1373 = vsel %vm1371, %v1366, 0
      %1375 = vmatprep.subr.bf16.mxu0 0
      %1376 = vmatpush1.bf16.msra.mxu0 %v1373
      %1377 = vmatprep.subr.bf16.mxu0 0
      %1378 = vmatpush1.bf16.msra.mxu0 0
      %1379 = vmatprep.subr.bf16.mxu0 0
      %1380 = vmatpush1.bf16.msra.mxu0 0
      %1381 = vmatprep.subr.bf16.mxu0 0
      %1382 = vmatpush1.bf16.msra.mxu0 0
      %1383 = vmatprep.subr.bf16.mxu0 0
      %1384 = vmatpush1.bf16.msra.mxu0 0
      %1385 = vmatprep.subr.bf16.mxu0 0
      %1386 = vmatpush1.bf16.msra.mxu0 0
      %1387 = vmatprep.subr.bf16.mxu0 0
      %1388 = vmatpush1.bf16.msra.mxu0 0
      %1389 = vmatprep.subr.bf16.mxu0 0
      %1390 = vmatpush1.bf16.msra.mxu0 0
      %1391 = vmatprep.subr.bf16.mxu0 0
      %1392 = vmatpush1.bf16.msra.mxu0 0
      %1393 = vmatprep.subr.bf16.mxu0 0
      %1394 = vmatpush1.bf16.msra.mxu0 0
      %1395 = vmatprep.subr.bf16.mxu0 0
      %1396 = vmatpush1.bf16.msra.mxu0 0
      %1397 = vmatprep.subr.bf16.mxu0 0
      %1398 = vmatpush1.bf16.msra.mxu0 0
      %1399 = vmatprep.subr.bf16.mxu0 0
      %1400 = vmatpush1.bf16.msra.mxu0 0
      %1401 = vmatprep.subr.bf16.mxu0 0
      %1402 = vmatpush1.bf16.msra.mxu0 0
      %1403 = vmatprep.subr.bf16.mxu0 0
      %1404 = vmatpush1.bf16.msra.mxu0 0
      %1405 = vmatprep.subr.bf16.mxu0 0
      %1406 = vmatpush1.bf16.msra.mxu0 0
      %1407 = vmatprep.mubr.bf16.mxu0 0
      %1408 = vmatmul.mubr.bf16.gmra.mrb[0].mxu0 %v1369
      %v1409 = vpop.f32.mrb[0].mxu0
      %v1410 = vadd.f32 0.0, %v1409
      %v1411 = vpop.f32.mrb[0].mxu0
      %v1412 = vpop.f32.mrb[0].mxu0
      %v1413 = vadd.f32 0.0, %v1412
      %v1414 = vpop.f32.mrb[0].mxu0
      %1415 = vdwg.mxu0
      %v1417 = vsel %vm465, %v1365, 0
      %v1420 = vsel %vm1371, %v1367, 0
      %1422 = vmatprep.subr.bf16.mxu0 0
      %1423 = vmatpush1.bf16.msra.mxu0 %v1420
      %1424 = vmatprep.subr.bf16.mxu0 0
      %1425 = vmatpush1.bf16.msra.mxu0 0
      %1426 = vmatprep.subr.bf16.mxu0 0
      %1427 = vmatpush1.bf16.msra.mxu0 0
      %1428 = vmatprep.subr.bf16.mxu0 0
      %1429 = vmatpush1.bf16.msra.mxu0 0
      %1430 = vmatprep.subr.bf16.mxu0 0
      %1431 = vmatpush1.bf16.msra.mxu0 0
      %1432 = vmatprep.subr.bf16.mxu0 0
      %1433 = vmatpush1.bf16.msra.mxu0 0
      %1434 = vmatprep.subr.bf16.mxu0 0
      %1435 = vmatpush1.bf16.msra.mxu0 0
      %1436 = vmatprep.subr.bf16.mxu0 0
      %1437 = vmatpush1.bf16.msra.mxu0 0
      %1438 = vmatprep.subr.bf16.mxu0 0
      %1439 = vmatpush1.bf16.msra.mxu0 0
      %1440 = vmatprep.subr.bf16.mxu0 0
      %1441 = vmatpush1.bf16.msra.mxu0 0
      %1442 = vmatprep.subr.bf16.mxu0 0
      %1443 = vmatpush1.bf16.msra.mxu0 0
      %1444 = vmatprep.subr.bf16.mxu0 0
      %1445 = vmatpush1.bf16.msra.mxu0 0
      %1446 = vmatprep.subr.bf16.mxu0 0
      %1447 = vmatpush1.bf16.msra.mxu0 0
      %1448 = vmatprep.subr.bf16.mxu0 0
      %1449 = vmatpush1.bf16.msra.mxu0 0
      %1450 = vmatprep.subr.bf16.mxu0 0
      %1451 = vmatpush1.bf16.msra.mxu0 0
      %1452 = vmatprep.subr.bf16.mxu0 0
      %1453 = vmatpush1.bf16.msra.mxu0 0
      %1454 = vmatprep.mubr.bf16.mxu0 0
      %1455 = vmatmul.mubr.bf16.gmra.mrb[0].mxu0 %v1417
      %v1456 = vpop.f32.mrb[0].mxu0
      %v1457 = vadd.f32 0.0, %v1456
      %v1458 = vpop.f32.mrb[0].mxu0
      %v1459 = vpop.f32.mrb[0].mxu0
      %v1460 = vadd.f32 0.0, %v1459
      %v1461 = vpop.f32.mrb[0].mxu0
      %1462 = vdwg.mxu0
      %v1463 = vsel %vm316, %v1410, 0.0
      %v1464 = vsel %vm316, %v1457, 0.0
      %v1465 = vadd.f32 %v1463, %v1464
      %v1466 = vsel %vm316, %v1413, 0.0
      %v1467 = vsel %vm316, %v1460, 0.0
      %v1468 = vadd.f32 %v1466, %v1467
      %v1469 = vld [vmem:[%s6] sm:$0x1]
      %v1471 = vlaneseq
      %v1472 = vshrl.u32 %v1471, 7
      %v1473 = vsub.s32 0, %v1472
      %v1474 = vrot.slane %v1469, %v1473
      %v1476 = vadd.f32 %v1465, %v1474
      %v1477 = vadd.f32 %v1468, %v1474
      %v1478 = vadd.f32 %v312, %v1476
      %v1479 = vadd.f32 %v313, %v1477
      %v1480 = vpack.c.bf16 %v1479, %v1478
      %v1482 = vunpack.c.l.b16 %v1480
      %v1483 = vunpack.c.h.b16 %v1480
      %v1484 = vpack.c.b16 %v1482, %v1482
      %v1485 = vpack.c.b16 %v1483, %v1483
      %vm1488 = vcmask 125952
      %1489 = vst.msk [vmem:[%s307] sm:$0xf] %vm1488, %v1484
      %1490 = vst.msk [vmem:[%s307 + $0x4] sm:$0xf] %vm1488, %v1485
      %s1491 = smul.u32 2, %s19
      %p1492 = scmp.lt.s32.totalorder %s1491, 3
      %s1493 = scalar_select %p1492, %s1491, 3
      %s1494 = smul.addr %s1493, 4
      %s1495 = scalar_lea.vmem %s8, %s1494
      // Predicated region
      $region53: #{_lambda_.12} parent=51 // pred_check
        %p1496 = pneg %p210
      $region54: #{_lambda_.12} parent=51 // pred_check_branch
        %1498 = sbr.rel (%p1496) target = $region56
      $region55: #{_lambda_.12} parent=51 // pred_region
        %s1499 = smul.u32 2, %s19
      $region56: #{_lambda_.12} parent=51 // pred_fallthru
        _
    $region52: #{_lambda_.12} parent=5 // pred_fallthru
      _
    %p1500 = scmp.le.s32.totalorder 2, %s14
    // Predicated region
    $region57: #{_lambda_.12} parent=5 // pred_check
      %p1501 = pneg %p1500
    $region58: #{_lambda_.12} parent=5 // pred_check_branch
      %1503 = sbr.rel (%p1501) target = $region60
    $region59: #{_lambda_.12} parent=5 // pred_region
      %s1504 = ssub.s32 %s14, 2
      // Predicated region
      $region61: #{_lambda_.12} parent=59 // pred_check
        %p1505 = pneg %p216
      $region62: #{_lambda_.12} parent=59 // pred_check_branch
        %1507 = sbr.rel (%p1505) target = $region64
      $region63: #{_lambda_.12} parent=59 // pred_region
        %s1508 = smul.u32 2, %s20
        %p1509 = scmp.lt.s32.totalorder %s1508, 3
        %s1510 = scalar_select %p1509, %s1508, 3
        %s1511 = smul.addr %s1510, 4
        %s1512 = scalar_lea.vmem %s8, %s1511
      $region64: #{_lambda_.12} parent=59 // pred_fallthru
        _
    $region60: #{_lambda_.12} parent=5 // pred_fallthru
      _
  $region6: #{_lambda_.12} parent=0 // loop_footer
    %s18 = sadd.s32 1, %s14
  $region7: #{_lambda_.12} parent=0 // loop_footer_branch
    %13 = sbr.rel target = $region3
  $region8: #{_lambda_.12} parent=0 // loop_exit
    _

// kernel: _lambda_.16
$region0: #{_lambda_.16}
  #allocation0 [shape = 'u32[]', space=smem, size = 0x4, offset = 0x4, fixed_abs, tag = 'smem constant byte address 0x4 - core index']
  #allocation1 [shape = 'u32[144,128]{1,0:T(1,128)}', space=vmem, size = 0x12000, scoped, tag = 'internal scratch']
  %s0 = inlined_call_operand.vmem [shape: bf16[8,64], index: 0, kind: input, shape index: {}]
  %s1 = inlined_call_operand.vmem [shape: f32[1,64], index: 1, kind: input, shape index: {}]
  %s2 = inlined_call_operand.vmem [shape: f32[1,64], index: 2, kind: input, shape index: {}]
  %s3 = inlined_call_operand.vmem [shape: bf16[64,32], index: 3, kind: input, shape index: {}]
  %s4 = inlined_call_operand.vmem [shape: bf16[8,32], index: 4, kind: output, shape index: {}]
  %s5 = sld [smem:[#allocation0]]
  $region26: #{_lambda_.16} parent=0
    _
  %s7 = ssub.s32 1, %s5
  %s8 = scalar_select 0, %s7, %s5
  // Predicated region
  $region2: #{_lambda_.16} parent=0 // pred_check
    _
  $region3: #{_lambda_.16} parent=0 // pred_check_branch
    %10 = sbr.rel (0) target = $region5
  $region4: #{_lambda_.16} parent=0 // pred_region
    _
  $region5: #{_lambda_.16} parent=0 // pred_fallthru
    _
  // Predicated region
  $region6: #{_lambda_.16} parent=0 // pred_check
    _
  $region7: #{_lambda_.16} parent=0 // pred_check_branch
    %12 = sbr.rel (0) target = $region9
  $region8: #{_lambda_.16} parent=0 // pred_region
    _
  $region9: #{_lambda_.16} parent=0 // pred_fallthru
    _
  // Predicated region
  $region10: #{_lambda_.16} parent=0 // pred_check
    _
  $region11: #{_lambda_.16} parent=0 // pred_check_branch
    %14 = sbr.rel (0) target = $region13
  $region12: #{_lambda_.16} parent=0 // pred_region
    _
  $region13: #{_lambda_.16} parent=0 // pred_fallthru
    _
  // Predicated region
  $region14: #{_lambda_.16} parent=0 // pred_check
    _
  $region15: #{_lambda_.16} parent=0 // pred_check_branch
    %16 = sbr.rel (0) target = $region17
  $region16: #{_lambda_.16} parent=0 // pred_region
    _
  $region17: #{_lambda_.16} parent=0 // pred_fallthru
    _
  %v18 = vld [vmem:[%s0] sm:$0xf]
  %v19 = vunpack.c.l.bf16 %v18
  %v20 = vld [vmem:[%s1] sm:$0x1]
  %v21 = vld [vmem:[%s2] sm:$0x1]
  %vm22 = vcmask 523264
  %v23 = vsel %vm22, %v19, 0.0
  %24 = vadd.xlane.f32.xlu0 %v23
  %v25 = vpop.xlane.xlu0 %24
  %v26 = vrcp.pop 64.0
  %v27 = vmul.f32 %v25, %v26
  %v28 = vsub.f32 %v19, %v27
  %v29 = vmul.f32 %v28, %v28
  %v30 = vsel %vm22, %v29, 0.0
  %31 = vadd.xlane.f32.xlu0 %v30
  %v32 = vpop.xlane.xlu0 %31
  %v33 = vmul.f32 %v32, %v26
  %v34 = vadd.f32 %v33, 1e-05
  %v35 = vrsqrt.pop %v34
  %v36 = vmul.f32 %v28, %v35
  %v38 = vlaneseq
  %v39 = vshrl.u32 %v38, 7
  %v40 = vsub.s32 0, %v39
  %v41 = vrot.slane %v20, %v40
  %v43 = vmul.f32 %v36, %v41
  %v45 = vlaneseq
  %v46 = vshrl.u32 %v45, 7
  %v47 = vsub.s32 0, %v46
  %v48 = vrot.slane %v21, %v47
  %v50 = vadd.f32 %v43, %v48
  %v51 = vpack.c.bf16 %v50, %v50
  %v52 = vld [vmem:[%s3] sm:$0xf]
  %v53 = vld [vmem:[%s3 + $0x4] sm:$0xf]
  %v54 = vld [vmem:[%s3 + $0x8] sm:$0xf]
  %v55 = vld [vmem:[%s3 + $0xc] sm:$0xf]
  %v56 = vld [vmem:[%s3 + $0x10] sm:$0xf]
  %v57 = vld [vmem:[%s3 + $0x14] sm:$0xf]
  %v58 = vld [vmem:[%s3 + $0x18] sm:$0xf]
  %v59 = vld [vmem:[%s3 + $0x1c] sm:$0xf]
  %v68 = vunpack.c.l.b16 %v52
  %v69 = vunpack.c.l.b16 %v53
  %v70 = vunpack.c.l.b16 %v54
  %v71 = vunpack.c.l.b16 %v55
  %v72 = vunpack.c.l.b16 %v56
  %v73 = vunpack.c.l.b16 %v57
  %v74 = vunpack.c.l.b16 %v58
  %v75 = vunpack.c.l.b16 %v59
  %v76 = vpack.c.b16 %v69, %v68
  %v77 = vpack.c.b16 %v71, %v70
  %v78 = vpack.c.b16 %v73, %v72
  %v79 = vpack.c.b16 %v75, %v74
  %v85 = vsel %vm22, %v51, 0
  %87 = vmatprep.subr.bf16.mxu0 0
  %88 = vmatpush1.bf16.msra.mxu0 %v76
  %89 = vmatprep.subr.bf16.mxu0 0
  %90 = vmatpush1.bf16.msra.mxu0 %v77
  %91 = vmatprep.subr.bf16.mxu0 0
  %92 = vmatpush1.bf16.msra.mxu0 %v78
  %93 = vmatprep.subr.bf16.mxu0 0
  %94 = vmatpush1.bf16.msra.mxu0 %v79
  %95 = vmatprep.subr.bf16.mxu0 0
  %96 = vmatpush1.bf16.msra.mxu0 0
  %97 = vmatprep.subr.bf16.mxu0 0
  %98 = vmatpush1.bf16.msra.mxu0 0
  %99 = vmatprep.subr.bf16.mxu0 0
  %100 = vmatpush1.bf16.msra.mxu0 0
  %101 = vmatprep.subr.bf16.mxu0 0
  %102 = vmatpush1.bf16.msra.mxu0 0
  %103 = vmatprep.subr.bf16.mxu0 0
  %104 = vmatpush1.bf16.msra.mxu0 0
  %105 = vmatprep.subr.bf16.mxu0 0
  %106 = vmatpush1.bf16.msra.mxu0 0
  %107 = vmatprep.subr.bf16.mxu0 0
  %108 = vmatpush1.bf16.msra.mxu0 0
  %109 = vmatprep.subr.bf16.mxu0 0
  %110 = vmatpush1.bf16.msra.mxu0 0
  %111 = vmatprep.subr.bf16.mxu0 0
  %112 = vmatpush1.bf16.msra.mxu0 0
  %113 = vmatprep.subr.bf16.mxu0 0
  %114 = vmatpush1.bf16.msra.mxu0 0
  %115 = vmatprep.subr.bf16.mxu0 0
  %116 = vmatpush1.bf16.msra.mxu0 0
  %117 = vmatprep.subr.bf16.mxu0 0
  %118 = vmatpush1.bf16.msra.mxu0 0
  %119 = vmatprep.mubr.bf16.mxu0 0
  %120 = vmatmul.mubr.bf16.gmra.mrb[0].mxu0 %v85
  %v121 = vpop.f32.mrb[0].mxu0
  %v122 = vadd.f32 0.0, %v121
  %v123 = vpop.f32.mrb[0].mxu0
  %v124 = vpop.f32.mrb[0].mxu0
  %v125 = vpop.f32.mrb[0].mxu0
  %126 = vdwg.mxu0
  %v127 = vpack.c.bf16 %v122, %v122
  %vm128 = vcmask 257024
  %129 = vst.msk [vmem:[%s4] sm:$0xf] %vm128, %v127
  // Predicated region
  $region18: #{_lambda_.16} parent=0 // pred_check
    _
  $region19: #{_lambda_.16} parent=0 // pred_check_branch
    %131 = sbr.rel (0) target = $region21
  $region20: #{_lambda_.16} parent=0 // pred_region
    _
  $region21: #{_lambda_.16} parent=0 // pred_fallthru
    _
  // Predicated region
  $region22: #{_lambda_.16} parent=0 // pred_check
    _
  $region23: #{_lambda_.16} parent=0 // pred_check_branch
    %133 = sbr.rel (0) target = $region25
  $region24: #{_lambda_.16} parent=0 // pred_region
    _
  $region25: #{_lambda_.16} parent=0 // pred_fallthru
    _

// kernel: _lambda_.14
$region0: #{_lambda_.14}
  #allocation0 [shape = 'u32[]', space=smem, size = 0x4, offset = 0x4, fixed_abs, tag = 'smem constant byte address 0x4 - core index']
  #allocation1 [shape = 'u32[144,128]{1,0:T(1,128)}', space=vmem, size = 0x12000, scoped, tag = 'internal scratch']
  %s0 = inlined_call_operand.vmem [shape: bf16[32,16], index: 0, kind: input, shape index: {}]
  %s1 = inlined_call_operand.vmem [shape: f32[1,16], index: 1, kind: input, shape index: {}]
  %s2 = inlined_call_operand.vmem [shape: f32[1,16], index: 2, kind: input, shape index: {}, may-alias: {2,6}]
  %s3 = inlined_call_operand.vmem [shape: bf16[16,48], index: 3, kind: input, shape index: {}]
  %s4 = inlined_call_operand.vmem [shape: f32[1,48], index: 4, kind: input, shape index: {}]
  %s5 = inlined_call_operand.vmem [shape: bf16[2,8,16], index: 5, kind: input, shape index: {}]
  %s6 = inlined_call_operand.vmem [shape: f32[1,16], index: 6, kind: input, shape index: {}, may-alias: {2,6}]
  %s7 = inlined_call_operand.vmem [shape: f32[2,4,4], index: 7, kind: input, shape index: {}]
  %s8 = inlined_call_operand.vmem [shape: f32[4,4,4], index: 8, kind: input, shape index: {}]
  %s9 = inlined_call_operand.vmem [shape: bf16[32,16], index: 9, kind: output, shape index: {}]
  %s10 = sld [smem:[#allocation0]]
  $region69: #{_lambda_.14} parent=0
    _
  %s12 = ssub.s32 1, %s10
  %s13 = scalar_select 0, %s12, %s10
  loop: start=0, step=1, limit=4
  $region2: #{_lambda_.14} parent=0 // loop_pre_header
    _
  $region3: #{_lambda_.14} parent=0 // loop_header
    %s15 = sphi 0, %s19
    %p16 = scmp.ge.s32.totalorder %s15, 4
    %s25 = sphi 0, %s27
    %s28 = sphi 0, %s25
    %s29 = sphi 0, %s28
    %s45 = sphi 0, %s29
    %s49 = sphi 0, %s49
    %s51 = sphi 0, %s49
    %s52 = sphi 0, %s51
    %s66 = sphi 0, %s52
    %s70 = sphi 0, %s70
    %s72 = sphi 0, %s70
    %s73 = sphi 0, %s72
    %s87 = sphi 0, %s73
    %s91 = sphi 0, %s91
    %s93 = sphi 0, %s91
    %s94 = sphi 0, %s93
    %s108 = sphi 0, %s94
    %s112 = sphi 0, %s112
    %s114 = sphi 0, %s112
    %s115 = sphi 0, %s114
    %s129 = sphi 0, %s115
    %s133 = sphi 0, %s133
    %s135 = sphi 0, %s133
    %s136 = sphi 0, %s135
    %s150 = sphi 0, %s136
    %s154 = sphi 0, %s154
    %s156 = sphi 0, %s154
    %s157 = sphi 0, %s156
    %s171 = sphi 0, %s157
    %s175 = sphi 0, %s175
    %s177 = sphi 0, %s175
    %s178 = sphi 0, %s177
    %s192 = sphi 0, %s178
    %s196 = sphi 0, %s196
    %s198 = sphi 0, %s196
    %s199 = sphi 0, %s198
    %s213 = sphi 0, %s199
    %s219 = sphi 0, %s221
    %s222 = sphi 0, %s219
    %s223 = sphi 0, %s222
    %s239 = sphi 0, %s223
  $region4: #{_lambda_.14} parent=0 // loop_header_branch
    %18 = sbr.rel (%p16) target = $region8
  $region5: #{_lambda_.14} parent=0 // loop_body
    %s20 = ssub.s32 %s15, 1
    %s21 = ssub.s32 %s15, 2
    %s22 = sadd.s32 %s15, 1
    %s23 = ssub.s32 %s15, %s22
    %p24 = scmp.eq.s32.totalorder %s23, 0
    %s26 = sadd.s32 %s25, 1
    %s27 = scalar_select %p24, %s25, %s26
    %p30 = pneg %p24
    %p31 = scmp.eq.s32.totalorder %s15, 1
    %p32 = por %p30, %p31
    %p33 = scmp.ne.s32.totalorder %s25, %s28
    %p34 = scmp.eq.s32.totalorder %s15, 0
    %p35 = por %p33, %p34
    %p36 = scmp.ne.s32.totalorder %s25, %s28
    %p37 = scmp.eq.s32.totalorder %s20, 1
    %p38 = por %p36, %p37
    %p39 = scmp.ne.s32.totalorder %s28, %s29
    %p40 = scmp.eq.s32.totalorder %s20, 0
    %p41 = por %p39, %p40
    %p42 = scmp.ne.s32.totalorder %s28, %s29
    %p43 = scmp.eq.s32.totalorder %s21, 1
    %p44 = por %p42, %p43
    %p46 = scmp.ne.s32.totalorder %s29, %s45
    %p47 = scmp.eq.s32.totalorder %s21, 0
    %p48 = por %p46, %p47
    %s50 = sadd.s32 %s49, 1
    %p53 = scmp.eq.s32.totalorder %s15, 1
    %p54 = scmp.ne.s32.totalorder %s49, %s51
    %p55 = scmp.eq.s32.totalorder %s15, 0
    %p56 = por %p54, %p55
    %p57 = scmp.ne.s32.totalorder %s49, %s51
    %p58 = scmp.eq.s32.totalorder %s20, 1
    %p59 = por %p57, %p58
    %p60 = scmp.ne.s32.totalorder %s51, %s52
    %p61 = scmp.eq.s32.totalorder %s20, 0
    %p62 = por %p60, %p61
    %p63 = scmp.ne.s32.totalorder %s51, %s52
    %p64 = scmp.eq.s32.totalorder %s21, 1
    %p65 = por %p63, %p64
    %p67 = scmp.ne.s32.totalorder %s52, %s66
    %p68 = scmp.eq.s32.totalorder %s21, 0
    %p69 = por %p67, %p68
    %s71 = sadd.s32 %s70, 1
    %p74 = scmp.eq.s32.totalorder %s15, 1
    %p75 = scmp.ne.s32.totalorder %s70, %s72
    %p76 = scmp.eq.s32.totalorder %s15, 0
    %p77 = por %p75, %p76
    %p78 = scmp.ne.s32.totalorder %s70, %s72
    %p79 = scmp.eq.s32.totalorder %s20, 1
    %p80 = por %p78, %p79
    %p81 = scmp.ne.s32.totalorder %s72, %s73
    %p82 = scmp.eq.s32.totalorder %s20, 0
    %p83 = por %p81, %p82
    %p84 = scmp.ne.s32.totalorder %s72, %s73
    %p85 = scmp.eq.s32.totalorder %s21, 1
    %p86 = por %p84, %p85
    %p88 = scmp.ne.s32.totalorder %s73, %s87
    %p89 = scmp.eq.s32.totalorder %s21, 0
    %p90 = por %p88, %p89
    %s92 = sadd.s32 %s91, 1
    %p95 = scmp.eq.s32.totalorder %s15, 1
    %p96 = scmp.ne.s32.totalorder %s91, %s93
    %p97 = scmp.eq.s32.totalorder %s15, 0
    %p98 = por %p96, %p97
    %p99 = scmp.ne.s32.totalorder %s91, %s93
    %p100 = scmp.eq.s32.totalorder %s20, 1
    %p101 = por %p99, %p100
    %p102 = scmp.ne.s32.totalorder %s93, %s94
    %p103 = scmp.eq.s32.totalorder %s20, 0
    %p104 = por %p102, %p103
    %p105 = scmp.ne.s32.totalorder %s93, %s94
    %p106 = scmp.eq.s32.totalorder %s21, 1
    %p107 = por %p105, %p106
    %p109 = scmp.ne.s32.totalorder %s94, %s108
    %p110 = scmp.eq.s32.totalorder %s21, 0
    %p111 = por %p109, %p110
    %s113 = sadd.s32 %s112, 1
    %p116 = scmp.eq.s32.totalorder %s15, 1
    %p117 = scmp.ne.s32.totalorder %s112, %s114
    %p118 = scmp.eq.s32.totalorder %s15, 0
    %p119 = por %p117, %p118
    %p120 = scmp.ne.s32.totalorder %s112, %s114
    %p121 = scmp.eq.s32.totalorder %s20, 1
    %p122 = por %p120, %p121
    %p123 = scmp.ne.s32.totalorder %s114, %s115
    %p124 = scmp.eq.s32.totalorder %s20, 0
    %p125 = por %p123, %p124
    %p126 = scmp.ne.s32.totalorder %s114, %s115
    %p127 = scmp.eq.s32.totalorder %s21, 1
    %p128 = por %p126, %p127
    %p130 = scmp.ne.s32.totalorder %s115, %s129
    %p131 = scmp.eq.s32.totalorder %s21, 0
    %p132 = por %p130, %p131
    %s134 = sadd.s32 %s133, 1
    %p137 = scmp.eq.s32.totalorder %s15, 1
    %p138 = scmp.ne.s32.totalorder %s133, %s135
    %p139 = scmp.eq.s32.totalorder %s15, 0
    %p140 = por %p138, %p139
    %p141 = scmp.ne.s32.totalorder %s133, %s135
    %p142 = scmp.eq.s32.totalorder %s20, 1
    %p143 = por %p141, %p142
    %p144 = scmp.ne.s32.totalorder %s135, %s136
    %p145 = scmp.eq.s32.totalorder %s20, 0
    %p146 = por %p144, %p145
    %p147 = scmp.ne.s32.totalorder %s135, %s136
    %p148 = scmp.eq.s32.totalorder %s21, 1
    %p149 = por %p147, %p148
    %p151 = scmp.ne.s32.totalorder %s136, %s150
    %p152 = scmp.eq.s32.totalorder %s21, 0
    %p153 = por %p151, %p152
    %s155 = sadd.s32 %s154, 1
    %p158 = scmp.eq.s32.totalorder %s15, 1
    %p159 = scmp.ne.s32.totalorder %s154, %s156
    %p160 = scmp.eq.s32.totalorder %s15, 0
    %p161 = por %p159, %p160
    %p162 = scmp.ne.s32.totalorder %s154, %s156
    %p163 = scmp.eq.s32.totalorder %s20, 1
    %p164 = por %p162, %p163
    %p165 = scmp.ne.s32.totalorder %s156, %s157
    %p166 = scmp.eq.s32.totalorder %s20, 0
    %p167 = por %p165, %p166
    %p168 = scmp.ne.s32.totalorder %s156, %s157
    %p169 = scmp.eq.s32.totalorder %s21, 1
    %p170 = por %p168, %p169
    %p172 = scmp.ne.s32.totalorder %s157, %s171
    %p173 = scmp.eq.s32.totalorder %s21, 0
    %p174 = por %p172, %p173
    %s176 = sadd.s32 %s175, 1
    %p179 = scmp.eq.s32.totalorder %s15, 1
    %p180 = scmp.ne.s32.totalorder %s175, %s177
    %p181 = scmp.eq.s32.totalorder %s15, 0
    %p182 = por %p180, %p181
    %p183 = scmp.ne.s32.totalorder %s175, %s177
    %p184 = scmp.eq.s32.totalorder %s20, 1
    %p185 = por %p183, %p184
    %p186 = scmp.ne.s32.totalorder %s177, %s178
    %p187 = scmp.eq.s32.totalorder %s20, 0
    %p188 = por %p186, %p187
    %p189 = scmp.ne.s32.totalorder %s177, %s178
    %p190 = scmp.eq.s32.totalorder %s21, 1
    %p191 = por %p189, %p190
    %p193 = scmp.ne.s32.totalorder %s178, %s192
    %p194 = scmp.eq.s32.totalorder %s21, 0
    %p195 = por %p193, %p194
    %s197 = sadd.s32 %s196, 1
    %p200 = scmp.eq.s32.totalorder %s15, 1
    %p201 = scmp.ne.s32.totalorder %s196, %s198
    %p202 = scmp.eq.s32.totalorder %s15, 0
    %p203 = por %p201, %p202
    %p204 = scmp.ne.s32.totalorder %s196, %s198
    %p205 = scmp.eq.s32.totalorder %s20, 1
    %p206 = por %p204, %p205
    %p207 = scmp.ne.s32.totalorder %s198, %s199
    %p208 = scmp.eq.s32.totalorder %s20, 0
    %p209 = por %p207, %p208
    %p210 = scmp.ne.s32.totalorder %s198, %s199
    %p211 = scmp.eq.s32.totalorder %s21, 1
    %p212 = por %p210, %p211
    %p214 = scmp.ne.s32.totalorder %s199, %s213
    %p215 = scmp.eq.s32.totalorder %s21, 0
    %p216 = por %p214, %p215
    %s217 = ssub.s32 %s15, %s22
    %p218 = scmp.eq.s32.totalorder %s217, 0
    %s220 = sadd.s32 %s219, 1
    %s221 = scalar_select %p218, %s219, %s220
    %p224 = pneg %p218
    %p225 = scmp.eq.s32.totalorder %s15, 1
    %p226 = por %p224, %p225
    %p227 = scmp.ne.s32.totalorder %s219, %s222
    %p228 = scmp.eq.s32.totalorder %s15, 0
    %p229 = por %p227, %p228
    %p230 = scmp.ne.s32.totalorder %s219, %s222
    %p231 = scmp.eq.s32.totalorder %s20, 1
    %p232 = por %p230, %p231
    %p233 = scmp.ne.s32.totalorder %s222, %s223
    %p234 = scmp.eq.s32.totalorder %s20, 0
    %p235 = por %p233, %p234
    %p236 = scmp.ne.s32.totalorder %s222, %s223
    %p237 = scmp.eq.s32.totalorder %s21, 1
    %p238 = por %p236, %p237
    %p240 = scmp.ne.s32.totalorder %s223, %s239
    %p241 = scmp.eq.s32.totalorder %s21, 0
    %p242 = por %p240, %p241
    %p243 = scmp.le.s32.totalorder 1, %s15
    %p244 = scmp.lt.s32.totalorder %s15, 3
    %p245 = pnand %p243, %p244
    %p246 = pneg %p245
    // Predicated region
    $region9: #{_lambda_.14} parent=5 // pred_check
      _
    $region10: #{_lambda_.14} parent=5 // pred_check_branch
      %248 = sbr.rel (%p245) target = $region12
    $region11: #{_lambda_.14} parent=5 // pred_region
      %s249 = ssub.s32 %s15, 1
      // Predicated region
      $region13: #{_lambda_.14} parent=11 // pred_check
        %p250 = pneg %p62
      $region14: #{_lambda_.14} parent=11 // pred_check_branch
        %252 = sbr.rel (%p250) target = $region16
      $region15: #{_lambda_.14} parent=11 // pred_region
        _
      $region16: #{_lambda_.14} parent=11 // pred_fallthru
        _
      // Predicated region
      $region17: #{_lambda_.14} parent=11 // pred_check
        %p253 = pneg %p83
      $region18: #{_lambda_.14} parent=11 // pred_check_branch
        %255 = sbr.rel (%p253) target = $region20
      $region19: #{_lambda_.14} parent=11 // pred_region
        _
      $region20: #{_lambda_.14} parent=11 // pred_fallthru
        _
      // Predicated region
      $region21: #{_lambda_.14} parent=11 // pred_check
        %p256 = pneg %p104
      $region22: #{_lambda_.14} parent=11 // pred_check_branch
        %258 = sbr.rel (%p256) target = $region24
      $region23: #{_lambda_.14} parent=11 // pred_region
        _
      $region24: #{_lambda_.14} parent=11 // pred_fallthru
        _
      // Predicated region
      $region25: #{_lambda_.14} parent=11 // pred_check
        %p259 = pneg %p125
      $region26: #{_lambda_.14} parent=11 // pred_check_branch
        %261 = sbr.rel (%p259) target = $region28
      $region27: #{_lambda_.14} parent=11 // pred_region
        _
      $region28: #{_lambda_.14} parent=11 // pred_fallthru
        _
      // Predicated region
      $region29: #{_lambda_.14} parent=11 // pred_check
        %p262 = pneg %p146
      $region30: #{_lambda_.14} parent=11 // pred_check_branch
        %264 = sbr.rel (%p262) target = $region32
      $region31: #{_lambda_.14} parent=11 // pred_region
        _
      $region32: #{_lambda_.14} parent=11 // pred_fallthru
        _
      // Predicated region
      $region33: #{_lambda_.14} parent=11 // pred_check
        %p265 = pneg %p167
      $region34: #{_lambda_.14} parent=11 // pred_check_branch
        %267 = sbr.rel (%p265) target = $region36
      $region35: #{_lambda_.14} parent=11 // pred_region
        _
      $region36: #{_lambda_.14} parent=11 // pred_fallthru
        _
      // Predicated region
      $region37: #{_lambda_.14} parent=11 // pred_check
        %p268 = pneg %p188
      $region38: #{_lambda_.14} parent=11 // pred_check_branch
        %270 = sbr.rel (%p268) target = $region40
      $region39: #{_lambda_.14} parent=11 // pred_region
        _
      $region40: #{_lambda_.14} parent=11 // pred_fallthru
        _
      // Predicated region
      $region41: #{_lambda_.14} parent=11 // pred_check
        %p271 = pneg %p209
      $region42: #{_lambda_.14} parent=11 // pred_check_branch
        %273 = sbr.rel (%p271) target = $region44
      $region43: #{_lambda_.14} parent=11 // pred_region
        _
      $region44: #{_lambda_.14} parent=11 // pred_fallthru
        _
    $region12: #{_lambda_.14} parent=5 // pred_fallthru
      _
    %p274 = scmp.lt.s32.totalorder %s15, 2
    // Predicated region
    $region45: #{_lambda_.14} parent=5 // pred_check
      %p275 = pneg %p274
    $region46: #{_lambda_.14} parent=5 // pred_check_branch
      %277 = sbr.rel (%p275) target = $region48
    $region47: #{_lambda_.14} parent=5 // pred_region
      // Predicated region
      $region49: #{_lambda_.14} parent=47 // pred_check
        %p278 = pneg %p35
      $region50: #{_lambda_.14} parent=47 // pred_check_branch
        %280 = sbr.rel (%p278) target = $region52
      $region51: #{_lambda_.14} parent=47 // pred_region
        %s281 = smul.u32 2, %s15
        %p282 = scmp.lt.s32.totalorder %s281, 3
        %s283 = scalar_select %p282, %s281, 3
        %s284 = smul.addr %s283, 4
        %s285 = scalar_lea.vmem %s0, %s284
        %s286 = smul.u32 2, %s15
      $region52: #{_lambda_.14} parent=47 // pred_fallthru
        _
    $region48: #{_lambda_.14} parent=5 // pred_fallthru
      _
    %p287 = scmp.le.s32.totalorder 1, %s15
    %p288 = scmp.lt.s32.totalorder %s15, 3
    %p289 = pnand %p287, %p288
    %p290 = pneg %p289
    // Predicated region
    $region53: #{_lambda_.14} parent=5 // pred_check
      _
    $region54: #{_lambda_.14} parent=5 // pred_check_branch
      %292 = sbr.rel (%p289) target = $region56
    $region55: #{_lambda_.14} parent=5 // pred_region
      %s293 = ssub.s32 %s15, 1
      %s294 = smul.u32 2, %s20
      %p295 = scmp.lt.s32.totalorder %s294, 3
      %s296 = scalar_select %p295, %s294, 3
      %s297 = smul.addr %s296, 4
      %s298 = scalar_lea.vmem %s0, %s297
      %p299 = pneg %p41
      %p300 = pneg %p38
      %p301 = pneg %p62
      %p302 = pneg %p59
      %p303 = pneg %p83
      %p304 = pneg %p80
      %p305 = pneg %p104
      %p306 = pneg %p101
      %p307 = pneg %p125
      %p308 = pneg %p122
      %p309 = pneg %p146
      %p310 = pneg %p143
      %p311 = pneg %p167
      %p312 = pneg %p164
      %p313 = pneg %p188
      %p314 = pneg %p185
      %p315 = pneg %p209
      %p316 = pneg %p206
      %p317 = pneg %p235
      %p318 = pneg %p232
      %s319 = smul.u32 2, %s20
      %p320 = scmp.lt.s32.totalorder %s319, 3
      %s321 = scalar_select %p320, %s319, 3
      %s322 = smul.addr %s321, 4
      %s323 = scalar_lea.vmem %s9, %s322
      %s324 = smul.u32 2, %s20
      %p325 = scmp.lt.s32.totalorder %s324, 3
      %s326 = scalar_select %p325, %s324, 3
      %s327 = smul.addr %s326, 4
      %s328 = scalar_lea.vmem %s0, %s327
      %s329 = smul.u32 2, %s20
      %s330 = smul.u32 2, %s20
      %p331 = scmp.lt.s32.totalorder %s330, 3
      %s332 = scalar_select %p331, %s330, 3
      %s333 = smul.addr %s332, 4
      %s334 = scalar_lea.vmem %s9, %s333
      %s335 = smul.u32 2, %s20
      %v337 = vld [vmem:[%s328] sm:$0xf]
      %v338 = vld [vmem:[%s328 + $0x4] sm:$0xf]
      %v339 = vunpack.c.l.bf16 %v337
      %v340 = vunpack.c.l.bf16 %v338
      %v341 = vld [vmem:[%s1] sm:$0x1]
      %v342 = vld [vmem:[%s2] sm:$0x1]
      %vm343 = vcmask 130048
      %v344 = vsel %vm343, %v339, 0.0
      %345 = vadd.xlane.f32.xlu0 %v344
      %v346 = vpop.xlane.xlu0 %345
      %v347 = vsel %vm343, %v340, 0.0
      %348 = vadd.xlane.f32.xlu0 %v347
      %v349 = vpop.xlane.xlu0 %348
      %v350 = vrcp.pop 16.0
      %v351 = vmul.f32 %v346, %v350
      %v352 = vmul.f32 %v349, %v350
      %v353 = vsub.f32 %v339, %v351
      %v354 = vsub.f32 %v340, %v352
      %v355 = vmul.f32 %v353, %v353
      %v356 = vmul.f32 %v354, %v354
      %v357 = vsel %vm343, %v355, 0.0
      %358 = vadd.xlane.f32.xlu0 %v357
      %v359 = vpop.xlane.xlu0 %358
      %v360 = vsel %vm343, %v356, 0.0
      %361 = vadd.xlane.f32.xlu0 %v360
      %v362 = vpop.xlane.xlu0 %361
      %v363 = vmul.f32 %v359, %v350
      %v364 = vmul.f32 %v362, %v350
      %v365 = vadd.f32 %v363, 1e-05
      %v366 = vadd.f32 %v364, 1e-05
      %v367 = vrsqrt.pop %v365
      %v368 = vrsqrt.pop %v366
      %v369 = vmul.f32 %v353, %v367
      %v370 = vmul.f32 %v354, %v368
      %v372 = vlaneseq
      %v373 = vshrl.u32 %v372, 7
      %v374 = vsub.s32 0, %v373
      %v375 = vrot.slane %v341, %v374
      %v377 = vmul.f32 %v369, %v375
      %v378 = vmul.f32 %v370, %v375
      %v380 = vlaneseq
      %v381 = vshrl.u32 %v380, 7
      %v382 = vsub.s32 0, %v381
      %v383 = vrot.slane %v342, %v382
      %v385 = vadd.f32 %v377, %v383
      %v386 = vadd.f32 %v378, %v383
      %v387 = vpack.c.bf16 %v386, %v385
      %v388 = vld [vmem:[%s3] sm:$0xf]
      %v389 = vld [vmem:[%s3 + $0x4] sm:$0xf]
      %v390 = vld [vmem:[%s4] sm:$0x1]
      %v392 = vlaneseq
      %v393 = vshrl.u32 %v392, 7
      %v394 = vsub.s32 0, %v393
      %v395 = vrot.slane %v390, %v394
      %v399 = vunpack.c.l.b16 %v388
      %v400 = vunpack.c.l.b16 %v389
      %v401 = vpack.c.b16 %v400, %v399
      %v404 = vsel %vm343, %v387, 0
      %406 = vmatprep.subr.bf16.mxu0 0
      %407 = vmatpush1.bf16.msra.mxu0 %v401
      %408 = vmatprep.subr.bf16.mxu0 0
      %409 = vmatpush1.bf16.msra.mxu0 0
      %410 = vmatprep.subr.bf16.mxu0 0
      %411 = vmatpush1.bf16.msra.mxu0 0
      %412 = vmatprep.subr.bf16.mxu0 0
      %413 = vmatpush1.bf16.msra.mxu0 0
      %414 = vmatprep.subr.bf16.mxu0 0
      %415 = vmatpush1.bf16.msra.mxu0 0
      %416 = vmatprep.subr.bf16.mxu0 0
      %417 = vmatpush1.bf16.msra.mxu0 0
      %418 = vmatprep.subr.bf16.mxu0 0
      %419 = vmatpush1.bf16.msra.mxu0 0
      %420 = vmatprep.subr.bf16.mxu0 0
      %421 = vmatpush1.bf16.msra.mxu0 0
      %422 = vmatprep.subr.bf16.mxu0 0
      %423 = vmatpush1.bf16.msra.mxu0 0
      %424 = vmatprep.subr.bf16.mxu0 0
      %425 = vmatpush1.bf16.msra.mxu0 0
      %426 = vmatprep.subr.bf16.mxu0 0
      %427 = vmatpush1.bf16.msra.mxu0 0
      %428 = vmatprep.subr.bf16.mxu0 0
      %429 = vmatpush1.bf16.msra.mxu0 0
      %430 = vmatprep.subr.bf16.mxu0 0
      %431 = vmatpush1.bf16.msra.mxu0 0
      %432 = vmatprep.subr.bf16.mxu0 0
      %433 = vmatpush1.bf16.msra.mxu0 0
      %434 = vmatprep.subr.bf16.mxu0 0
      %435 = vmatpush1.bf16.msra.mxu0 0
      %436 = vmatprep.subr.bf16.mxu0 0
      %437 = vmatpush1.bf16.msra.mxu0 0
      %438 = vmatprep.mubr.bf16.mxu0 0
      %439 = vmatmul.mubr.bf16.gmra.mrb[0].mxu0 %v404
      %v440 = vpop.f32.mrb[0].mxu0
      %v441 = vadd.f32 %v395, %v440
      %v442 = vpop.f32.mrb[0].mxu0
      %v443 = vpop.f32.mrb[0].mxu0
      %v444 = vadd.f32 %v395, %v443
      %v445 = vpop.f32.mrb[0].mxu0
      %446 = vdwg.mxu0
      %v449 = vcombine.high %v441, %v441
      %v450 = vcombine.high %v444, %v444
      %453 = vrot.lane.b32.xlu0 %v441, 120
      %v454 = vpop.permute.xlu0 %453
      %455 = vrot.lane.b32.xlu0 %v449, 120
      %v456 = vpop.permute.xlu0 %455
      %457 = vrot.lane.b32.xlu0 %v444, 120
      %v458 = vpop.permute.xlu0 %457
      %459 = vrot.lane.b32.xlu0 %v450, 120
      %v460 = vpop.permute.xlu0 %459
      %v465 = vmul.f32 %v441, 0.35355338
      %v466 = vmul.f32 %v449, 0.35355338
      %v467 = vmul.f32 %v444, 0.35355338
      %v468 = vmul.f32 %v450, 0.35355338
      %v469 = vmul.f32 %v454, 0.35355338
      %v470 = vmul.f32 %v456, 0.35355338
      %v471 = vmul.f32 %v458, 0.35355338
      %v472 = vmul.f32 %v460, 0.35355338
      %v473 = vpack.c.bf16 %v465, %v465
      %v474 = vpack.c.bf16 %v466, %v466
      %v475 = vpack.c.bf16 %v467, %v467
      %v476 = vpack.c.bf16 %v468, %v468
      %v477 = vpack.c.bf16 %v469, %v469
      %v478 = vpack.c.bf16 %v470, %v470
      %v479 = vpack.c.bf16 %v471, %v471
      %v480 = vpack.c.bf16 %v472, %v472
      %v481 = vpack.c.bf16 %v441, %v441
      %v482 = vpack.c.bf16 %v449, %v449
      %v483 = vpack.c.bf16 %v444, %v444
      %v484 = vpack.c.bf16 %v450, %v450
      %v485 = vpack.c.bf16 %v454, %v454
      %v486 = vpack.c.bf16 %v456, %v456
      %v487 = vpack.c.bf16 %v458, %v458
      %v488 = vpack.c.bf16 %v460, %v460
      %490 = vrot.lane.b32.xlu0 %v481, 112
      %v491 = vpop.permute.xlu0 %490
      %vm492 = vcmask 64512
      %v494 = vsel %vm492, %v473, 0
      %v497 = vsel %vm492, %v491, 0
      %499 = vmatprep.subr.bf16.mxu0 0
      %500 = vmatpush1.bf16.xpose.msra.mxu0 %v497
      %501 = vmatprep.subr.bf16.mxu0 0
      %502 = vmatpush1.bf16.xpose.msra.mxu0 0
      %503 = vmatprep.subr.bf16.mxu0 0
      %504 = vmatpush1.bf16.xpose.msra.mxu0 0
      %505 = vmatprep.subr.bf16.mxu0 0
      %506 = vmatpush1.bf16.xpose.msra.mxu0 0
      %507 = vmatprep.subr.bf16.mxu0 0
      %508 = vmatpush1.bf16.xpose.msra.mxu0 0
      %509 = vmatprep.subr.bf16.mxu0 0
      %510 = vmatpush1.bf16.xpose.msra.mxu0 0
      %511 = vmatprep.subr.bf16.mxu0 0
      %512 = vmatpush1.bf16.xpose.msra.mxu0 0
      %513 = vmatprep.subr.bf16.mxu0 0
      %514 = vmatpush1.bf16.xpose.msra.mxu0 0
      %515 = vmatprep.subr.bf16.mxu0 0
      %516 = vmatpush1.bf16.xpose.msra.mxu0 0
      %517 = vmatprep.subr.bf16.mxu0 0
      %518 = vmatpush1.bf16.xpose.msra.mxu0 0
      %519 = vmatprep.subr.bf16.mxu0 0
      %520 = vmatpush1.bf16.xpose.msra.mxu0 0
      %521 = vmatprep.subr.bf16.mxu0 0
      %522 = vmatpush1.bf16.xpose.msra.mxu0 0
      %523 = vmatprep.subr.bf16.mxu0 0
      %524 = vmatpush1.bf16.xpose.msra.mxu0 0
      %525 = vmatprep.subr.bf16.mxu0 0
      %526 = vmatpush1.bf16.xpose.msra.mxu0 0
      %527 = vmatprep.subr.bf16.mxu0 0
      %528 = vmatpush1.bf16.xpose.msra.mxu0 0
      %529 = vmatprep.subr.bf16.mxu0 0
      %530 = vmatpush1.bf16.xpose.msra.mxu0 0
      %531 = vmatprep.mubr.bf16.mxu0 0
      %532 = vmatmul.mubr.bf16.gmra.mrb[0].mxu0 %v494
      %v533 = vpop.f32.mrb[0].mxu0
      %v534 = vadd.f32 0.0, %v533
      %v535 = vpop.f32.mrb[0].mxu0
      %v536 = vpop.f32.mrb[0].mxu0
      %v537 = vpop.f32.mrb[0].mxu0
      %538 = vdwg.mxu0
      %540 = vrot.lane.b32.xlu0 %v482, 112
      %v541 = vpop.permute.xlu0 %540
      %v543 = vsel %vm492, %v474, 0
      %v546 = vsel %vm492, %v541, 0
      %548 = vmatprep.subr.bf16.mxu0 0
      %549 = vmatpush1.bf16.xpose.msra.mxu0 %v546
      %550 = vmatprep.subr.bf16.mxu0 0
      %551 = vmatpush1.bf16.xpose.msra.mxu0 0
      %552 = vmatprep.subr.bf16.mxu0 0
      %553 = vmatpush1.bf16.xpose.msra.mxu0 0
      %554 = vmatprep.subr.bf16.mxu0 0
      %555 = vmatpush1.bf16.xpose.msra.mxu0 0
      %556 = vmatprep.subr.bf16.mxu0 0
      %557 = vmatpush1.bf16.xpose.msra.mxu0 0
      %558 = vmatprep.subr.bf16.mxu0 0
      %559 = vmatpush1.bf16.xpose.msra.mxu0 0
      %560 = vmatprep.subr.bf16.mxu0 0
      %561 = vmatpush1.bf16.xpose.msra.mxu0 0
      %562 = vmatprep.subr.bf16.mxu0 0
      %563 = vmatpush1.bf16.xpose.msra.mxu0 0
      %564 = vmatprep.subr.bf16.mxu0 0
      %565 = vmatpush1.bf16.xpose.msra.mxu0 0
      %566 = vmatprep.subr.bf16.mxu0 0
      %567 = vmatpush1.bf16.xpose.msra.mxu0 0
      %568 = vmatprep.subr.bf16.mxu0 0
      %569 = vmatpush1.bf16.xpose.msra.mxu0 0
      %570 = vmatprep.subr.bf16.mxu0 0
      %571 = vmatpush1.bf16.xpose.msra.mxu0 0
      %572 = vmatprep.subr.bf16.mxu0 0
      %573 = vmatpush1.bf16.xpose.msra.mxu0 0
      %574 = vmatprep.subr.bf16.mxu0 0
      %575 = vmatpush1.bf16.xpose.msra.mxu0 0
      %576 = vmatprep.subr.bf16.mxu0 0
      %577 = vmatpush1.bf16.xpose.msra.mxu0 0
      %578 = vmatprep.subr.bf16.mxu0 0
      %579 = vmatpush1.bf16.xpose.msra.mxu0 0
      %580 = vmatprep.mubr.bf16.mxu0 0
      %581 = vmatmul.mubr.bf16.gmra.mrb[0].mxu0 %v543
      %v582 = vpop.f32.mrb[0].mxu0
      %v583 = vadd.f32 0.0, %v582
      %v584 = vpop.f32.mrb[0].mxu0
      %v585 = vpop.f32.mrb[0].mxu0
      %v586 = vpop.f32.mrb[0].mxu0
      %587 = vdwg.mxu0
      %589 = vrot.lane.b32.xlu0 %v483, 112
      %v590 = vpop.permute.xlu0 %589
      %v592 = vsel %vm492, %v475, 0
      %v595 = vsel %vm492, %v590, 0
      %597 = vmatprep.subr.bf16.mxu0 0
      %598 = vmatpush1.bf16.xpose.msra.mxu0 %v595
      %599 = vmatprep.subr.bf16.mxu0 0
      %600 = vmatpush1.bf16.xpose.msra.mxu0 0
      %601 = vmatprep.subr.bf16.mxu0 0
      %602 = vmatpush1.bf16.xpose.msra.mxu0 0
      %603 = vmatprep.subr.bf16.mxu0 0
      %604 = vmatpush1.bf16.xpose.msra.mxu0 0
      %605 = vmatprep.subr.bf16.mxu0 0
      %606 = vmatpush1.bf16.xpose.msra.mxu0 0
      %607 = vmatprep.subr.bf16.mxu0 0
      %608 = vmatpush1.bf16.xpose.msra.mxu0 0
      %609 = vmatprep.subr.bf16.mxu0 0
      %610 = vmatpush1.bf16.xpose.msra.mxu0 0
      %611 = vmatprep.subr.bf16.mxu0 0
      %612 = vmatpush1.bf16.xpose.msra.mxu0 0
      %613 = vmatprep.subr.bf16.mxu0 0
      %614 = vmatpush1.bf16.xpose.msra.mxu0 0
      %615 = vmatprep.subr.bf16.mxu0 0
      %616 = vmatpush1.bf16.xpose.msra.mxu0 0
      %617 = vmatprep.subr.bf16.mxu0 0
      %618 = vmatpush1.bf16.xpose.msra.mxu0 0
      %619 = vmatprep.subr.bf16.mxu0 0
      %620 = vmatpush1.bf16.xpose.msra.mxu0 0
      %621 = vmatprep.subr.bf16.mxu0 0
      %622 = vmatpush1.bf16.xpose.msra.mxu0 0
      %623 = vmatprep.subr.bf16.mxu0 0
      %624 = vmatpush1.bf16.xpose.msra.mxu0 0
      %625 = vmatprep.subr.bf16.mxu0 0
      %626 = vmatpush1.bf16.xpose.msra.mxu0 0
      %627 = vmatprep.subr.bf16.mxu0 0
      %628 = vmatpush1.bf16.xpose.msra.mxu0 0
      %629 = vmatprep.mubr.bf16.mxu0 0
      %630 = vmatmul.mubr.bf16.gmra.mrb[0].mxu0 %v592
      %v631 = vpop.f32.mrb[0].mxu0
      %v632 = vadd.f32 0.0, %v631
      %v633 = vpop.f32.mrb[0].mxu0
      %v634 = vpop.f32.mrb[0].mxu0
      %v635 = vpop.f32.mrb[0].mxu0
      %636 = vdwg.mxu0
      %638 = vrot.lane.b32.xlu0 %v484, 112
      %v639 = vpop.permute.xlu0 %638
      %v641 = vsel %vm492, %v476, 0
      %v644 = vsel %vm492, %v639, 0
      %646 = vmatprep.subr.bf16.mxu0 0
      %647 = vmatpush1.bf16.xpose.msra.mxu0 %v644
      %648 = vmatprep.subr.bf16.mxu0 0
      %649 = vmatpush1.bf16.xpose.msra.mxu0 0
      %650 = vmatprep.subr.bf16.mxu0 0
      %651 = vmatpush1.bf16.xpose.msra.mxu0 0
      %652 = vmatprep.subr.bf16.mxu0 0
      %653 = vmatpush1.bf16.xpose.msra.mxu0 0
      %654 = vmatprep.subr.bf16.mxu0 0
      %655 = vmatpush1.bf16.xpose.msra.mxu0 0
      %656 = vmatprep.subr.bf16.mxu0 0
      %657 = vmatpush1.bf16.xpose.msra.mxu0 0
      %658 = vmatprep.subr.bf16.mxu0 0
      %659 = vmatpush1.bf16.xpose.msra.mxu0 0
      %660 = vmatprep.subr.bf16.mxu0 0
      %661 = vmatpush1.bf16.xpose.msra.mxu0 0
      %662 = vmatprep.subr.bf16.mxu0 0
      %663 = vmatpush1.bf16.xpose.msra.mxu0 0
      %664 = vmatprep.subr.bf16.mxu0 0
      %665 = vmatpush1.bf16.xpose.msra.mxu0 0
      %666 = vmatprep.subr.bf16.mxu0 0
      %667 = vmatpush1.bf16.xpose.msra.mxu0 0
      %668 = vmatprep.subr.bf16.mxu0 0
      %669 = vmatpush1.bf16.xpose.msra.mxu0 0
      %670 = vmatprep.subr.bf16.mxu0 0
      %671 = vmatpush1.bf16.xpose.msra.mxu0 0
      %672 = vmatprep.subr.bf16.mxu0 0
      %673 = vmatpush1.bf16.xpose.msra.mxu0 0
      %674 = vmatprep.subr.bf16.mxu0 0
      %675 = vmatpush1.bf16.xpose.msra.mxu0 0
      %676 = vmatprep.subr.bf16.mxu0 0
      %677 = vmatpush1.bf16.xpose.msra.mxu0 0
      %678 = vmatprep.mubr.bf16.mxu0 0
      %679 = vmatmul.mubr.bf16.gmra.mrb[0].mxu0 %v641
      %v680 = vpop.f32.mrb[0].mxu0
      %v681 = vadd.f32 0.0, %v680
      %v682 = vpop.f32.mrb[0].mxu0
      %v683 = vpop.f32.mrb[0].mxu0
      %v684 = vpop.f32.mrb[0].mxu0
      %685 = vdwg.mxu0
      %687 = vrot.lane.b32.xlu0 %v485, 112
      %v688 = vpop.permute.xlu0 %687
      %v690 = vsel %vm492, %v477, 0
      %v693 = vsel %vm492, %v688, 0
      %695 = vmatprep.subr.bf16.mxu0 0
      %696 = vmatpush1.bf16.xpose.msra.mxu0 %v693
      %697 = vmatprep.subr.bf16.mxu0 0
      %698 = vmatpush1.bf16.xpose.msra.mxu0 0
      %699 = vmatprep.subr.bf16.mxu0 0
      %700 = vmatpush1.bf16.xpose.msra.mxu0 0
      %701 = vmatprep.subr.bf16.mxu0 0
      %702 = vmatpush1.bf16.xpose.msra.mxu0 0
      %703 = vmatprep.subr.bf16.mxu0 0
      %704 = vmatpush1.bf16.xpose.msra.mxu0 0
      %705 = vmatprep.subr.bf16.mxu0 0
      %706 = vmatpush1.bf16.xpose.msra.mxu0 0
      %707 = vmatprep.subr.bf16.mxu0 0
      %708 = vmatpush1.bf16.xpose.msra.mxu0 0
      %709 = vmatprep.subr.bf16.mxu0 0
      %710 = vmatpush1.bf16.xpose.msra.mxu0 0
      %711 = vmatprep.subr.bf16.mxu0 0
      %712 = vmatpush1.bf16.xpose.msra.mxu0 0
      %713 = vmatprep.subr.bf16.mxu0 0
      %714 = vmatpush1.bf16.xpose.msra.mxu0 0
      %715 = vmatprep.subr.bf16.mxu0 0
      %716 = vmatpush1.bf16.xpose.msra.mxu0 0
      %717 = vmatprep.subr.bf16.mxu0 0
      %718 = vmatpush1.bf16.xpose.msra.mxu0 0
      %719 = vmatprep.subr.bf16.mxu0 0
      %720 = vmatpush1.bf16.xpose.msra.mxu0 0
      %721 = vmatprep.subr.bf16.mxu0 0
      %722 = vmatpush1.bf16.xpose.msra.mxu0 0
      %723 = vmatprep.subr.bf16.mxu0 0
      %724 = vmatpush1.bf16.xpose.msra.mxu0 0
      %725 = vmatprep.subr.bf16.mxu0 0
      %726 = vmatpush1.bf16.xpose.msra.mxu0 0
      %727 = vmatprep.mubr.bf16.mxu0 0
      %728 = vmatmul.mubr.bf16.gmra.mrb[0].mxu0 %v690
      %v729 = vpop.f32.mrb[0].mxu0
      %v730 = vadd.f32 0.0, %v729
      %v731 = vpop.f32.mrb[0].mxu0
      %v732 = vpop.f32.mrb[0].mxu0
      %v733 = vpop.f32.mrb[0].mxu0
      %734 = vdwg.mxu0
      %736 = vrot.lane.b32.xlu0 %v486, 112
      %v737 = vpop.permute.xlu0 %736
      %v739 = vsel %vm492, %v478, 0
      %v742 = vsel %vm492, %v737, 0
      %744 = vmatprep.subr.bf16.mxu0 0
      %745 = vmatpush1.bf16.xpose.msra.mxu0 %v742
      %746 = vmatprep.subr.bf16.mxu0 0
      %747 = vmatpush1.bf16.xpose.msra.mxu0 0
      %748 = vmatprep.subr.bf16.mxu0 0
      %749 = vmatpush1.bf16.xpose.msra.mxu0 0
      %750 = vmatprep.subr.bf16.mxu0 0
      %751 = vmatpush1.bf16.xpose.msra.mxu0 0
      %752 = vmatprep.subr.bf16.mxu0 0
      %753 = vmatpush1.bf16.xpose.msra.mxu0 0
      %754 = vmatprep.subr.bf16.mxu0 0
      %755 = vmatpush1.bf16.xpose.msra.mxu0 0
      %756 = vmatprep.subr.bf16.mxu0 0
      %757 = vmatpush1.bf16.xpose.msra.mxu0 0
      %758 = vmatprep.subr.bf16.mxu0 0
      %759 = vmatpush1.bf16.xpose.msra.mxu0 0
      %760 = vmatprep.subr.bf16.mxu0 0
      %761 = vmatpush1.bf16.xpose.msra.mxu0 0
      %762 = vmatprep.subr.bf16.mxu0 0
      %763 = vmatpush1.bf16.xpose.msra.mxu0 0
      %764 = vmatprep.subr.bf16.mxu0 0
      %765 = vmatpush1.bf16.xpose.msra.mxu0 0
      %766 = vmatprep.subr.bf16.mxu0 0
      %767 = vmatpush1.bf16.xpose.msra.mxu0 0
      %768 = vmatprep.subr.bf16.mxu0 0
      %769 = vmatpush1.bf16.xpose.msra.mxu0 0
      %770 = vmatprep.subr.bf16.mxu0 0
      %771 = vmatpush1.bf16.xpose.msra.mxu0 0
      %772 = vmatprep.subr.bf16.mxu0 0
      %773 = vmatpush1.bf16.xpose.msra.mxu0 0
      %774 = vmatprep.subr.bf16.mxu0 0
      %775 = vmatpush1.bf16.xpose.msra.mxu0 0
      %776 = vmatprep.mubr.bf16.mxu0 0
      %777 = vmatmul.mubr.bf16.gmra.mrb[0].mxu0 %v739
      %v778 = vpop.f32.mrb[0].mxu0
      %v779 = vadd.f32 0.0, %v778
      %v780 = vpop.f32.mrb[0].mxu0
      %v781 = vpop.f32.mrb[0].mxu0
      %v782 = vpop.f32.mrb[0].mxu0
      %783 = vdwg.mxu0
      %785 = vrot.lane.b32.xlu0 %v487, 112
      %v786 = vpop.permute.xlu0 %785
      %v788 = vsel %vm492, %v479, 0
      %v791 = vsel %vm492, %v786, 0
      %793 = vmatprep.subr.bf16.mxu0 0
      %794 = vmatpush1.bf16.xpose.msra.mxu0 %v791
      %795 = vmatprep.subr.bf16.mxu0 0
      %796 = vmatpush1.bf16.xpose.msra.mxu0 0
      %797 = vmatprep.subr.bf16.mxu0 0
      %798 = vmatpush1.bf16.xpose.msra.mxu0 0
      %799 = vmatprep.subr.bf16.mxu0 0
      %800 = vmatpush1.bf16.xpose.msra.mxu0 0
      %801 = vmatprep.subr.bf16.mxu0 0
      %802 = vmatpush1.bf16.xpose.msra.mxu0 0
      %803 = vmatprep.subr.bf16.mxu0 0
      %804 = vmatpush1.bf16.xpose.msra.mxu0 0
      %805 = vmatprep.subr.bf16.mxu0 0
      %806 = vmatpush1.bf16.xpose.msra.mxu0 0
      %807 = vmatprep.subr.bf16.mxu0 0
      %808 = vmatpush1.bf16.xpose.msra.mxu0 0
      %809 = vmatprep.subr.bf16.mxu0 0
      %810 = vmatpush1.bf16.xpose.msra.mxu0 0
      %811 = vmatprep.subr.bf16.mxu0 0
      %812 = vmatpush1.bf16.xpose.msra.mxu0 0
      %813 = vmatprep.subr.bf16.mxu0 0
      %814 = vmatpush1.bf16.xpose.msra.mxu0 0
      %815 = vmatprep.subr.bf16.mxu0 0
      %816 = vmatpush1.bf16.xpose.msra.mxu0 0
      %817 = vmatprep.subr.bf16.mxu0 0
      %818 = vmatpush1.bf16.xpose.msra.mxu0 0
      %819 = vmatprep.subr.bf16.mxu0 0
      %820 = vmatpush1.bf16.xpose.msra.mxu0 0
      %821 = vmatprep.subr.bf16.mxu0 0
      %822 = vmatpush1.bf16.xpose.msra.mxu0 0
      %823 = vmatprep.subr.bf16.mxu0 0
      %824 = vmatpush1.bf16.xpose.msra.mxu0 0
      %825 = vmatprep.mubr.bf16.mxu0 0
      %826 = vmatmul.mubr.bf16.gmra.mrb[0].mxu0 %v788
      %v827 = vpop.f32.mrb[0].mxu0
      %v828 = vadd.f32 0.0, %v827
      %v829 = vpop.f32.mrb[0].mxu0
      %v830 = vpop.f32.mrb[0].mxu0
      %v831 = vpop.f32.mrb[0].mxu0
      %832 = vdwg.mxu0
      %834 = vrot.lane.b32.xlu0 %v488, 112
      %v835 = vpop.permute.xlu0 %834
      %v837 = vsel %vm492, %v480, 0
      %v840 = vsel %vm492, %v835, 0
      %842 = vmatprep.subr.bf16.mxu0 0
      %843 = vmatpush1.bf16.xpose.msra.mxu0 %v840
      %844 = vmatprep.subr.bf16.mxu0 0
      %845 = vmatpush1.bf16.xpose.msra.mxu0 0
      %846 = vmatprep.subr.bf16.mxu0 0
      %847 = vmatpush1.bf16.xpose.msra.mxu0 0
      %848 = vmatprep.subr.bf16.mxu0 0
      %849 = vmatpush1.bf16.xpose.msra.mxu0 0
      %850 = vmatprep.subr.bf16.mxu0 0
      %851 = vmatpush1.bf16.xpose.msra.mxu0 0
      %852 = vmatprep.subr.bf16.mxu0 0
      %853 = vmatpush1.bf16.xpose.msra.mxu0 0
      %854 = vmatprep.subr.bf16.mxu0 0
      %855 = vmatpush1.bf16.xpose.msra.mxu0 0
      %856 = vmatprep.subr.bf16.mxu0 0
      %857 = vmatpush1.bf16.xpose.msra.mxu0 0
      %858 = vmatprep.subr.bf16.mxu0 0
      %859 = vmatpush1.bf16.xpose.msra.mxu0 0
      %860 = vmatprep.subr.bf16.mxu0 0
      %861 = vmatpush1.bf16.xpose.msra.mxu0 0
      %862 = vmatprep.subr.bf16.mxu0 0
      %863 = vmatpush1.bf16.xpose.msra.mxu0 0
      %864 = vmatprep.subr.bf16.mxu0 0
      %865 = vmatpush1.bf16.xpose.msra.mxu0 0
      %866 = vmatprep.subr.bf16.mxu0 0
      %867 = vmatpush1.bf16.xpose.msra.mxu0 0
      %868 = vmatprep.subr.bf16.mxu0 0
      %869 = vmatpush1.bf16.xpose.msra.mxu0 0
      %870 = vmatprep.subr.bf16.mxu0 0
      %871 = vmatpush1.bf16.xpose.msra.mxu0 0
      %872 = vmatprep.subr.bf16.mxu0 0
      %873 = vmatpush1.bf16.xpose.msra.mxu0 0
      %874 = vmatprep.mubr.bf16.mxu0 0
      %875 = vmatmul.mubr.bf16.gmra.mrb[0].mxu0 %v837
      %v876 = vpop.f32.mrb[0].mxu0
      %v877 = vadd.f32 0.0, %v876
      %v878 = vpop.f32.mrb[0].mxu0
      %v879 = vpop.f32.mrb[0].mxu0
      %v880 = vpop.f32.mrb[0].mxu0
      %881 = vdwg.mxu0
      %v882 = vld [vmem:[%s7] sm:$0xf]
      %v883 = vld [vmem:[%s7 + $0x4] sm:$0xf]
      %v884 = vadd.f32 %v534, %v882
      %v885 = vadd.f32 %v583, %v882
      %v886 = vadd.f32 %v632, %v882
      %v887 = vadd.f32 %v681, %v882
      %v888 = vadd.f32 %v730, %v883
      %v889 = vadd.f32 %v779, %v883
      %v890 = vadd.f32 %v828, %v883
      %v891 = vadd.f32 %v877, %v883
      %v892 = vld [vmem:[%s8] sm:$0xf]
      %v893 = vld [vmem:[%s8 + $0x4] sm:$0xf]
      %v894 = vld [vmem:[%s8 + $0x8] sm:$0xf]
      %v895 = vld [vmem:[%s8 + $0xc] sm:$0xf]
      %v896 = vadd.f32 %v884, %v892
      %v897 = vadd.f32 %v885, %v893
      %v898 = vadd.f32 %v886, %v894
      %v899 = vadd.f32 %v887, %v895
      %v900 = vadd.f32 %v888, %v892
      %v901 = vadd.f32 %v889, %v893
      %v902 = vadd.f32 %v890, %v894
      %v903 = vadd.f32 %v891, %v895
      %vm904 = vcmask 27648
      %v905 = vsel %vm904, %v896, -inf
      %906 = vmax.xlane.f32.xlu0 %v905
      %v907 = vpop.xlane.xlu0 %906
      %v908 = vsel %vm904, %v897, -inf
      %909 = vmax.xlane.f32.xlu0 %v908
      %v910 = vpop.xlane.xlu0 %909
      %v911 = vsel %vm904, %v898, -inf
      %912 = vmax.xlane.f32.xlu0 %v911
      %v913 = vpop.xlane.xlu0 %912
      %v914 = vsel %vm904, %v899, -inf
      %915 = vmax.xlane.f32.xlu0 %v914
      %v916 = vpop.xlane.xlu0 %915
      %v917 = vsel %vm904, %v900, -inf
      %918 = vmax.xlane.f32.xlu0 %v917
      %v919 = vpop.xlane.xlu0 %918
      %v920 = vsel %vm904, %v901, -inf
      %921 = vmax.xlane.f32.xlu0 %v920
      %v922 = vpop.xlane.xlu0 %921
      %v923 = vsel %vm904, %v902, -inf
      %924 = vmax.xlane.f32.xlu0 %v923
      %v925 = vpop.xlane.xlu0 %924
      %v926 = vsel %vm904, %v903, -inf
      %927 = vmax.xlane.f32.xlu0 %v926
      %v928 = vpop.xlane.xlu0 %927
      %v929 = vsub.f32 %v896, %v907
      %v930 = vsub.f32 %v897, %v910
      %v931 = vsub.f32 %v898, %v913
      %v932 = vsub.f32 %v899, %v916
      %v933 = vsub.f32 %v900, %v919
      %v934 = vsub.f32 %v901, %v922
      %v935 = vsub.f32 %v902, %v925
      %v936 = vsub.f32 %v903, %v928
      %v937 = vmul.f32 %v929, 1.442695
      %v938 = vpow.pop %v937
      %v939 = vmul.f32 %v930, 1.442695
      %v940 = vpow.pop %v939
      %v941 = vmul.f32 %v931, 1.442695
      %v942 = vpow.pop %v941
      %v943 = vmul.f32 %v932, 1.442695
      %v944 = vpow.pop %v943
      %v945 = vmul.f32 %v933, 1.442695
      %v946 = vpow.pop %v945
      %v947 = vmul.f32 %v934, 1.442695
      %v948 = vpow.pop %v947
      %v949 = vmul.f32 %v935, 1.442695
      %v950 = vpow.pop %v949
      %v951 = vmul.f32 %v936, 1.442695
      %v952 = vpow.pop %v951
      %v953 = vsel %vm904, %v938, 0.0
      %954 = vadd.xlane.f32.xlu0 %v953
      %v955 = vpop.xlane.xlu0 %954
      %v956 = vsel %vm904, %v940, 0.0
      %957 = vadd.xlane.f32.xlu0 %v956
      %v958 = vpop.xlane.xlu0 %957
      %v959 = vsel %vm904, %v942, 0.0
      %960 = vadd.xlane.f32.xlu0 %v959
      %v961 = vpop.xlane.xlu0 %960
      %v962 = vsel %vm904, %v944, 0.0
      %963 = vadd.xlane.f32.xlu0 %v962
      %v964 = vpop.xlane.xlu0 %963
      %v965 = vsel %vm904, %v946, 0.0
      %966 = vadd.xlane.f32.xlu0 %v965
      %v967 = vpop.xlane.xlu0 %966
      %v968 = vsel %vm904, %v948, 0.0
      %969 = vadd.xlane.f32.xlu0 %v968
      %v970 = vpop.xlane.xlu0 %969
      %v971 = vsel %vm904, %v950, 0.0
      %972 = vadd.xlane.f32.xlu0 %v971
      %v973 = vpop.xlane.xlu0 %972
      %v974 = vsel %vm904, %v952, 0.0
      %975 = vadd.xlane.f32.xlu0 %v974
      %v976 = vpop.xlane.xlu0 %975
      %v977 = vrcp.pop %v955
      %v978 = vrcp.pop %v958
      %v979 = vrcp.pop %v961
      %v980 = vrcp.pop %v964
      %v981 = vrcp.pop %v967
      %v982 = vrcp.pop %v970
      %v983 = vrcp.pop %v973
      %v984 = vrcp.pop %v976
      %v985 = vmul.f32 %v938, %v977
      %v986 = vmul.f32 %v940, %v978
      %v987 = vmul.f32 %v942, %v979
      %v988 = vmul.f32 %v944, %v980
      %v989 = vmul.f32 %v946, %v981
      %v990 = vmul.f32 %v948, %v982
      %v991 = vmul.f32 %v950, %v983
      %v992 = vmul.f32 %v952, %v984
      %v993 = vpack.c.bf16 %v985, %v985
      %v994 = vpack.c.bf16 %v986, %v986
      %v995 = vpack.c.bf16 %v987, %v987
      %v996 = vpack.c.bf16 %v988, %v988
      %v997 = vpack.c.bf16 %v989, %v989
      %v998 = vpack.c.bf16 %v990, %v990
      %v999 = vpack.c.bf16 %v991, %v991
      %v1000 = vpack.c.bf16 %v992, %v992
      %1001 = vrot.lane.b32.xlu0 %v481, 96
      %v1002 = vpop.permute.xlu0 %1001
      %vm1003 = vcmask 31744
      %v1005 = vsel %vm1003, %v993, 0
      %vm1007 = vcmask 1041408
      %v1009 = vsel %vm1007, %v1002, 0
      %1011 = vmatprep.subr.bf16.mxu0 0
      %1012 = vmatpush1.bf16.msra.mxu0 %v1009
      %1013 = vmatprep.subr.bf16.mxu0 0
      %1014 = vmatpush1.bf16.msra.mxu0 0
      %1015 = vmatprep.subr.bf16.mxu0 0
      %1016 = vmatpush1.bf16.msra.mxu0 0
      %1017 = vmatprep.subr.bf16.mxu0 0
      %1018 = vmatpush1.bf16.msra.mxu0 0
      %1019 = vmatprep.subr.bf16.mxu0 0
      %1020 = vmatpush1.bf16.msra.mxu0 0
      %1021 = vmatprep.subr.bf16.mxu0 0
      %1022 = vmatpush1.bf16.msra.mxu0 0
      %1023 = vmatprep.subr.bf16.mxu0 0
      %1024 = vmatpush1.bf16.msra.mxu0 0
      %1025 = vmatprep.subr.bf16.mxu0 0
      %1026 = vmatpush1.bf16.msra.mxu0 0
      %1027 = vmatprep.subr.bf16.mxu0 0
      %1028 = vmatpush1.bf16.msra.mxu0 0
      %1029 = vmatprep.subr.bf16.mxu0 0
      %1030 = vmatpush1.bf16.msra.mxu0 0
      %1031 = vmatprep.subr.bf16.mxu0 0
      %1032 = vmatpush1.bf16.msra.mxu0 0
      %1033 = vmatprep.subr.bf16.mxu0 0
      %1034 = vmatpush1.bf16.msra.mxu0 0
      %1035 = vmatprep.subr.bf16.mxu0 0
      %1036 = vmatpush1.bf16.msra.mxu0 0
      %1037 = vmatprep.subr.bf16.mxu0 0
      %1038 = vmatpush1.bf16.msra.mxu0 0
      %1039 = vmatprep.subr.bf16.mxu0 0
      %1040 = vmatpush1.bf16.msra.mxu0 0
      %1041 = vmatprep.subr.bf16.mxu0 0
      %1042 = vmatpush1.bf16.msra.mxu0 0
      %1043 = vmatprep.mubr.bf16.mxu0 0
      %1044 = vmatmul.mubr.bf16.gmra.mrb[0].mxu0 %v1005
      %v1045 = vpop.f32.mrb[0].mxu0
      %v1046 = vadd.f32 0.0, %v1045
      %v1047 = vpop.f32.mrb[0].mxu0
      %v1048 = vpop.f32.mrb[0].mxu0
      %v1049 = vpop.f32.mrb[0].mxu0
      %1050 = vdwg.mxu0
      %1051 = vrot.lane.b32.xlu0 %v482, 96
      %v1052 = vpop.permute.xlu0 %1051
      %v1054 = vsel %vm1003, %v994, 0
      %v1057 = vsel %vm1007, %v1052, 0
      %1059 = vmatprep.subr.bf16.mxu0 0
      %1060 = vmatpush1.bf16.msra.mxu0 %v1057
      %1061 = vmatprep.subr.bf16.mxu0 0
      %1062 = vmatpush1.bf16.msra.mxu0 0
      %1063 = vmatprep.subr.bf16.mxu0 0
      %1064 = vmatpush1.bf16.msra.mxu0 0
      %1065 = vmatprep.subr.bf16.mxu0 0
      %1066 = vmatpush1.bf16.msra.mxu0 0
      %1067 = vmatprep.subr.bf16.mxu0 0
      %1068 = vmatpush1.bf16.msra.mxu0 0
      %1069 = vmatprep.subr.bf16.mxu0 0
      %1070 = vmatpush1.bf16.msra.mxu0 0
      %1071 = vmatprep.subr.bf16.mxu0 0
      %1072 = vmatpush1.bf16.msra.mxu0 0
      %1073 = vmatprep.subr.bf16.mxu0 0
      %1074 = vmatpush1.bf16.msra.mxu0 0
      %1075 = vmatprep.subr.bf16.mxu0 0
      %1076 = vmatpush1.bf16.msra.mxu0 0
      %1077 = vmatprep.subr.bf16.mxu0 0
      %1078 = vmatpush1.bf16.msra.mxu0 0
      %1079 = vmatprep.subr.bf16.mxu0 0
      %1080 = vmatpush1.bf16.msra.mxu0 0
      %1081 = vmatprep.subr.bf16.mxu0 0
      %1082 = vmatpush1.bf16.msra.mxu0 0
      %1083 = vmatprep.subr.bf16.mxu0 0
      %1084 = vmatpush1.bf16.msra.mxu0 0
      %1085 = vmatprep.subr.bf16.mxu0 0
      %1086 = vmatpush1.bf16.msra.mxu0 0
      %1087 = vmatprep.subr.bf16.mxu0 0
      %1088 = vmatpush1.bf16.msra.mxu0 0
      %1089 = vmatprep.subr.bf16.mxu0 0
      %1090 = vmatpush1.bf16.msra.mxu0 0
      %1091 = vmatprep.mubr.bf16.mxu0 0
      %1092 = vmatmul.mubr.bf16.gmra.mrb[0].mxu0 %v1054
      %v1093 = vpop.f32.mrb[0].mxu0
      %v1094 = vadd.f32 0.0, %v1093
      %v1095 = vpop.f32.mrb[0].mxu0
      %v1096 = vpop.f32.mrb[0].mxu0
      %v1097 = vpop.f32.mrb[0].mxu0
      %1098 = vdwg.mxu0
      %1099 = vrot.lane.b32.xlu0 %v483, 96
      %v1100 = vpop.permute.xlu0 %1099
      %v1102 = vsel %vm1003, %v995, 0
      %v1105 = vsel %vm1007, %v1100, 0
      %1107 = vmatprep.subr.bf16.mxu0 0
      %1108 = vmatpush1.bf16.msra.mxu0 %v1105
      %1109 = vmatprep.subr.bf16.mxu0 0
      %1110 = vmatpush1.bf16.msra.mxu0 0
      %1111 = vmatprep.subr.bf16.mxu0 0
      %1112 = vmatpush1.bf16.msra.mxu0 0
      %1113 = vmatprep.subr.bf16.mxu0 0
      %1114 = vmatpush1.bf16.msra.mxu0 0
      %1115 = vmatprep.subr.bf16.mxu0 0
      %1116 = vmatpush1.bf16.msra.mxu0 0
      %1117 = vmatprep.subr.bf16.mxu0 0
      %1118 = vmatpush1.bf16.msra.mxu0 0
      %1119 = vmatprep.subr.bf16.mxu0 0
      %1120 = vmatpush1.bf16.msra.mxu0 0
      %1121 = vmatprep.subr.bf16.mxu0 0
      %1122 = vmatpush1.bf16.msra.mxu0 0
      %1123 = vmatprep.subr.bf16.mxu0 0
      %1124 = vmatpush1.bf16.msra.mxu0 0
      %1125 = vmatprep.subr.bf16.mxu0 0
      %1126 = vmatpush1.bf16.msra.mxu0 0
      %1127 = vmatprep.subr.bf16.mxu0 0
      %1128 = vmatpush1.bf16.msra.mxu0 0
      %1129 = vmatprep.subr.bf16.mxu0 0
      %1130 = vmatpush1.bf16.msra.mxu0 0
      %1131 = vmatprep.subr.bf16.mxu0 0
      %1132 = vmatpush1.bf16.msra.mxu0 0
      %1133 = vmatprep.subr.bf16.mxu0 0
      %1134 = vmatpush1.bf16.msra.mxu0 0
      %1135 = vmatprep.subr.bf16.mxu0 0
      %1136 = vmatpush1.bf16.msra.mxu0 0
      %1137 = vmatprep.subr.bf16.mxu0 0
      %1138 = vmatpush1.bf16.msra.mxu0 0
      %1139 = vmatprep.mubr.bf16.mxu0 0
      %1140 = vmatmul.mubr.bf16.gmra.mrb[0].mxu0 %v1102
      %v1141 = vpop.f32.mrb[0].mxu0
      %v1142 = vadd.f32 0.0, %v1141
      %v1143 = vpop.f32.mrb[0].mxu0
      %v1144 = vpop.f32.mrb[0].mxu0
      %v1145 = vpop.f32.mrb[0].mxu0
      %1146 = vdwg.mxu0
      %1147 = vrot.lane.b32.xlu0 %v484, 96
      %v1148 = vpop.permute.xlu0 %1147
      %v1150 = vsel %vm1003, %v996, 0
      %v1153 = vsel %vm1007, %v1148, 0
      %1155 = vmatprep.subr.bf16.mxu0 0
      %1156 = vmatpush1.bf16.msra.mxu0 %v1153
      %1157 = vmatprep.subr.bf16.mxu0 0
      %1158 = vmatpush1.bf16.msra.mxu0 0
      %1159 = vmatprep.subr.bf16.mxu0 0
      %1160 = vmatpush1.bf16.msra.mxu0 0
      %1161 = vmatprep.subr.bf16.mxu0 0
      %1162 = vmatpush1.bf16.msra.mxu0 0
      %1163 = vmatprep.subr.bf16.mxu0 0
      %1164 = vmatpush1.bf16.msra.mxu0 0
      %1165 = vmatprep.subr.bf16.mxu0 0
      %1166 = vmatpush1.bf16.msra.mxu0 0
      %1167 = vmatprep.subr.bf16.mxu0 0
      %1168 = vmatpush1.bf16.msra.mxu0 0
      %1169 = vmatprep.subr.bf16.mxu0 0
      %1170 = vmatpush1.bf16.msra.mxu0 0
      %1171 = vmatprep.subr.bf16.mxu0 0
      %1172 = vmatpush1.bf16.msra.mxu0 0
      %1173 = vmatprep.subr.bf16.mxu0 0
      %1174 = vmatpush1.bf16.msra.mxu0 0
      %1175 = vmatprep.subr.bf16.mxu0 0
      %1176 = vmatpush1.bf16.msra.mxu0 0
      %1177 = vmatprep.subr.bf16.mxu0 0
      %1178 = vmatpush1.bf16.msra.mxu0 0
      %1179 = vmatprep.subr.bf16.mxu0 0
      %1180 = vmatpush1.bf16.msra.mxu0 0
      %1181 = vmatprep.subr.bf16.mxu0 0
      %1182 = vmatpush1.bf16.msra.mxu0 0
      %1183 = vmatprep.subr.bf16.mxu0 0
      %1184 = vmatpush1.bf16.msra.mxu0 0
      %1185 = vmatprep.subr.bf16.mxu0 0
      %1186 = vmatpush1.bf16.msra.mxu0 0
      %1187 = vmatprep.mubr.bf16.mxu0 0
      %1188 = vmatmul.mubr.bf16.gmra.mrb[0].mxu0 %v1150
      %v1189 = vpop.f32.mrb[0].mxu0
      %v1190 = vadd.f32 0.0, %v1189
      %v1191 = vpop.f32.mrb[0].mxu0
      %v1192 = vpop.f32.mrb[0].mxu0
      %v1193 = vpop.f32.mrb[0].mxu0
      %1194 = vdwg.mxu0
      %1195 = vrot.lane.b32.xlu0 %v485, 96
      %v1196 = vpop.permute.xlu0 %1195
      %v1198 = vsel %vm1003, %v997, 0
      %v1201 = vsel %vm1007, %v1196, 0
      %1203 = vmatprep.subr.bf16.mxu0 0
      %1204 = vmatpush1.bf16.msra.mxu0 %v1201
      %1205 = vmatprep.subr.bf16.mxu0 0
      %1206 = vmatpush1.bf16.msra.mxu0 0
      %1207 = vmatprep.subr.bf16.mxu0 0
      %1208 = vmatpush1.bf16.msra.mxu0 0
      %1209 = vmatprep.subr.bf16.mxu0 0
      %1210 = vmatpush1.bf16.msra.mxu0 0
      %1211 = vmatprep.subr.bf16.mxu0 0
      %1212 = vmatpush1.bf16.msra.mxu0 0
      %1213 = vmatprep.subr.bf16.mxu0 0
      %1214 = vmatpush1.bf16.msra.mxu0 0
      %1215 = vmatprep.subr.bf16.mxu0 0
      %1216 = vmatpush1.bf16.msra.mxu0 0
      %1217 = vmatprep.subr.bf16.mxu0 0
      %1218 = vmatpush1.bf16.msra.mxu0 0
      %1219 = vmatprep.subr.bf16.mxu0 0
      %1220 = vmatpush1.bf16.msra.mxu0 0
      %1221 = vmatprep.subr.bf16.mxu0 0
      %1222 = vmatpush1.bf16.msra.mxu0 0
      %1223 = vmatprep.subr.bf16.mxu0 0
      %1224 = vmatpush1.bf16.msra.mxu0 0
      %1225 = vmatprep.subr.bf16.mxu0 0
      %1226 = vmatpush1.bf16.msra.mxu0 0
      %1227 = vmatprep.subr.bf16.mxu0 0
      %1228 = vmatpush1.bf16.msra.mxu0 0
      %1229 = vmatprep.subr.bf16.mxu0 0
      %1230 = vmatpush1.bf16.msra.mxu0 0
      %1231 = vmatprep.subr.bf16.mxu0 0
      %1232 = vmatpush1.bf16.msra.mxu0 0
      %1233 = vmatprep.subr.bf16.mxu0 0
      %1234 = vmatpush1.bf16.msra.mxu0 0
      %1235 = vmatprep.mubr.bf16.mxu0 0
      %1236 = vmatmul.mubr.bf16.gmra.mrb[0].mxu0 %v1198
      %v1237 = vpop.f32.mrb[0].mxu0
      %v1238 = vadd.f32 0.0, %v1237
      %v1239 = vpop.f32.mrb[0].mxu0
      %v1240 = vpop.f32.mrb[0].mxu0
      %v1241 = vpop.f32.mrb[0].mxu0
      %1242 = vdwg.mxu0
      %1243 = vrot.lane.b32.xlu0 %v486, 96
      %v1244 = vpop.permute.xlu0 %1243
      %v1246 = vsel %vm1003, %v998, 0
      %v1249 = vsel %vm1007, %v1244, 0
      %1251 = vmatprep.subr.bf16.mxu0 0
      %1252 = vmatpush1.bf16.msra.mxu0 %v1249
      %1253 = vmatprep.subr.bf16.mxu0 0
      %1254 = vmatpush1.bf16.msra.mxu0 0
      %1255 = vmatprep.subr.bf16.mxu0 0
      %1256 = vmatpush1.bf16.msra.mxu0 0
      %1257 = vmatprep.subr.bf16.mxu0 0
      %1258 = vmatpush1.bf16.msra.mxu0 0
      %1259 = vmatprep.subr.bf16.mxu0 0
      %1260 = vmatpush1.bf16.msra.mxu0 0
      %1261 = vmatprep.subr.bf16.mxu0 0
      %1262 = vmatpush1.bf16.msra.mxu0 0
      %1263 = vmatprep.subr.bf16.mxu0 0
      %1264 = vmatpush1.bf16.msra.mxu0 0
      %1265 = vmatprep.subr.bf16.mxu0 0
      %1266 = vmatpush1.bf16.msra.mxu0 0
      %1267 = vmatprep.subr.bf16.mxu0 0
      %1268 = vmatpush1.bf16.msra.mxu0 0
      %1269 = vmatprep.subr.bf16.mxu0 0
      %1270 = vmatpush1.bf16.msra.mxu0 0
      %1271 = vmatprep.subr.bf16.mxu0 0
      %1272 = vmatpush1.bf16.msra.mxu0 0
      %1273 = vmatprep.subr.bf16.mxu0 0
      %1274 = vmatpush1.bf16.msra.mxu0 0
      %1275 = vmatprep.subr.bf16.mxu0 0
      %1276 = vmatpush1.bf16.msra.mxu0 0
      %1277 = vmatprep.subr.bf16.mxu0 0
      %1278 = vmatpush1.bf16.msra.mxu0 0
      %1279 = vmatprep.subr.bf16.mxu0 0
      %1280 = vmatpush1.bf16.msra.mxu0 0
      %1281 = vmatprep.subr.bf16.mxu0 0
      %1282 = vmatpush1.bf16.msra.mxu0 0
      %1283 = vmatprep.mubr.bf16.mxu0 0
      %1284 = vmatmul.mubr.bf16.gmra.mrb[0].mxu0 %v1246
      %v1285 = vpop.f32.mrb[0].mxu0
      %v1286 = vadd.f32 0.0, %v1285
      %v1287 = vpop.f32.mrb[0].mxu0
      %v1288 = vpop.f32.mrb[0].mxu0
      %v1289 = vpop.f32.mrb[0].mxu0
      %1290 = vdwg.mxu0
      %1291 = vrot.lane.b32.xlu0 %v487, 96
      %v1292 = vpop.permute.xlu0 %1291
      %v1294 = vsel %vm1003, %v999, 0
      %v1297 = vsel %vm1007, %v1292, 0
      %1299 = vmatprep.subr.bf16.mxu0 0
      %1300 = vmatpush1.bf16.msra.mxu0 %v1297
      %1301 = vmatprep.subr.bf16.mxu0 0
      %1302 = vmatpush1.bf16.msra.mxu0 0
      %1303 = vmatprep.subr.bf16.mxu0 0
      %1304 = vmatpush1.bf16.msra.mxu0 0
      %1305 = vmatprep.subr.bf16.mxu0 0
      %1306 = vmatpush1.bf16.msra.mxu0 0
      %1307 = vmatprep.subr.bf16.mxu0 0
      %1308 = vmatpush1.bf16.msra.mxu0 0
      %1309 = vmatprep.subr.bf16.mxu0 0
      %1310 = vmatpush1.bf16.msra.mxu0 0
      %1311 = vmatprep.subr.bf16.mxu0 0
      %1312 = vmatpush1.bf16.msra.mxu0 0
      %1313 = vmatprep.subr.bf16.mxu0 0
      %1314 = vmatpush1.bf16.msra.mxu0 0
      %1315 = vmatprep.subr.bf16.mxu0 0
      %1316 = vmatpush1.bf16.msra.mxu0 0
      %1317 = vmatprep.subr.bf16.mxu0 0
      %1318 = vmatpush1.bf16.msra.mxu0 0
      %1319 = vmatprep.subr.bf16.mxu0 0
      %1320 = vmatpush1.bf16.msra.mxu0 0
      %1321 = vmatprep.subr.bf16.mxu0 0
      %1322 = vmatpush1.bf16.msra.mxu0 0
      %1323 = vmatprep.subr.bf16.mxu0 0
      %1324 = vmatpush1.bf16.msra.mxu0 0
      %1325 = vmatprep.subr.bf16.mxu0 0
      %1326 = vmatpush1.bf16.msra.mxu0 0
      %1327 = vmatprep.subr.bf16.mxu0 0
      %1328 = vmatpush1.bf16.msra.mxu0 0
      %1329 = vmatprep.subr.bf16.mxu0 0
      %1330 = vmatpush1.bf16.msra.mxu0 0
      %1331 = vmatprep.mubr.bf16.mxu0 0
      %1332 = vmatmul.mubr.bf16.gmra.mrb[0].mxu0 %v1294
      %v1333 = vpop.f32.mrb[0].mxu0
      %v1334 = vadd.f32 0.0, %v1333
      %v1335 = vpop.f32.mrb[0].mxu0
      %v1336 = vpop.f32.mrb[0].mxu0
      %v1337 = vpop.f32.mrb[0].mxu0
      %1338 = vdwg.mxu0
      %1339 = vrot.lane.b32.xlu0 %v488, 96
      %v1340 = vpop.permute.xlu0 %1339
      %v1342 = vsel %vm1003, %v1000, 0
      %v1345 = vsel %vm1007, %v1340, 0
      %1347 = vmatprep.subr.bf16.mxu0 0
      %1348 = vmatpush1.bf16.msra.mxu0 %v1345
      %1349 = vmatprep.subr.bf16.mxu0 0
      %1350 = vmatpush1.bf16.msra.mxu0 0
      %1351 = vmatprep.subr.bf16.mxu0 0
      %1352 = vmatpush1.bf16.msra.mxu0 0
      %1353 = vmatprep.subr.bf16.mxu0 0
      %1354 = vmatpush1.bf16.msra.mxu0 0
      %1355 = vmatprep.subr.bf16.mxu0 0
      %1356 = vmatpush1.bf16.msra.mxu0 0
      %1357 = vmatprep.subr.bf16.mxu0 0
      %1358 = vmatpush1.bf16.msra.mxu0 0
      %1359 = vmatprep.subr.bf16.mxu0 0
      %1360 = vmatpush1.bf16.msra.mxu0 0
      %1361 = vmatprep.subr.bf16.mxu0 0
      %1362 = vmatpush1.bf16.msra.mxu0 0
      %1363 = vmatprep.subr.bf16.mxu0 0
      %1364 = vmatpush1.bf16.msra.mxu0 0
      %1365 = vmatprep.subr.bf16.mxu0 0
      %1366 = vmatpush1.bf16.msra.mxu0 0
      %1367 = vmatprep.subr.bf16.mxu0 0
      %1368 = vmatpush1.bf16.msra.mxu0 0
      %1369 = vmatprep.subr.bf16.mxu0 0
      %1370 = vmatpush1.bf16.msra.mxu0 0
      %1371 = vmatprep.subr.bf16.mxu0 0
      %1372 = vmatpush1.bf16.msra.mxu0 0
      %1373 = vmatprep.subr.bf16.mxu0 0
      %1374 = vmatpush1.bf16.msra.mxu0 0
      %1375 = vmatprep.subr.bf16.mxu0 0
      %1376 = vmatpush1.bf16.msra.mxu0 0
      %1377 = vmatprep.subr.bf16.mxu0 0
      %1378 = vmatpush1.bf16.msra.mxu0 0
      %1379 = vmatprep.mubr.bf16.mxu0 0
      %1380 = vmatmul.mubr.bf16.gmra.mrb[0].mxu0 %v1342
      %v1381 = vpop.f32.mrb[0].mxu0
      %v1382 = vadd.f32 0.0, %v1381
      %v1383 = vpop.f32.mrb[0].mxu0
      %v1384 = vpop.f32.mrb[0].mxu0
      %v1385 = vpop.f32.mrb[0].mxu0
      %1386 = vdwg.mxu0
      %v1395 = vcombine.low %v1046, %v1094
      %v1396 = vcombine.low %v1142, %v1190
      %v1397 = vcombine.low %v1238, %v1286
      %v1398 = vcombine.low %v1334, %v1382
      %v1403 = vpack.c.bf16 %v1396, %v1395
      %v1404 = vpack.c.bf16 %v1398, %v1397
      %v1405 = vld [vmem:[%s5] sm:$0xf]
      %v1406 = vld [vmem:[%s5 + $0x4] sm:$0xf]
      %v1408 = vsel %vm492, %v1403, 0
      %vm1410 = vcmask 1043456
      %v1412 = vsel %vm1410, %v1405, 0
      %1414 = vmatprep.subr.bf16.mxu0 0
      %1415 = vmatpush1.bf16.msra.mxu0 %v1412
      %1416 = vmatprep.subr.bf16.mxu0 0
      %1417 = vmatpush1.bf16.msra.mxu0 0
      %1418 = vmatprep.subr.bf16.mxu0 0
      %1419 = vmatpush1.bf16.msra.mxu0 0
      %1420 = vmatprep.subr.bf16.mxu0 0
      %1421 = vmatpush1.bf16.msra.mxu0 0
      %1422 = vmatprep.subr.bf16.mxu0 0
      %1423 = vmatpush1.bf16.msra.mxu0 0
      %1424 = vmatprep.subr.bf16.mxu0 0
      %1425 = vmatpush1.bf16.msra.mxu0 0
      %1426 = vmatprep.subr.bf16.mxu0 0
      %1427 = vmatpush1.bf16.msra.mxu0 0
      %1428 = vmatprep.subr.bf16.mxu0 0
      %1429 = vmatpush1.bf16.msra.mxu0 0
      %1430 = vmatprep.subr.bf16.mxu0 0
      %1431 = vmatpush1.bf16.msra.mxu0 0
      %1432 = vmatprep.subr.bf16.mxu0 0
      %1433 = vmatpush1.bf16.msra.mxu0 0
      %1434 = vmatprep.subr.bf16.mxu0 0
      %1435 = vmatpush1.bf16.msra.mxu0 0
      %1436 = vmatprep.subr.bf16.mxu0 0
      %1437 = vmatpush1.bf16.msra.mxu0 0
      %1438 = vmatprep.subr.bf16.mxu0 0
      %1439 = vmatpush1.bf16.msra.mxu0 0
      %1440 = vmatprep.subr.bf16.mxu0 0
      %1441 = vmatpush1.bf16.msra.mxu0 0
      %1442 = vmatprep.subr.bf16.mxu0 0
      %1443 = vmatpush1.bf16.msra.mxu0 0
      %1444 = vmatprep.subr.bf16.mxu0 0
      %1445 = vmatpush1.bf16.msra.mxu0 0
      %1446 = vmatprep.mubr.bf16.mxu0 0
      %1447 = vmatmul.mubr.bf16.gmra.mrb[0].mxu0 %v1408
      %v1448 = vpop.f32.mrb[0].mxu0
      %v1449 = vadd.f32 0.0, %v1448
      %v1450 = vpop.f32.mrb[0].mxu0
      %v1451 = vpop.f32.mrb[0].mxu0
      %v1452 = vadd.f32 0.0, %v1451
      %v1453 = vpop.f32.mrb[0].mxu0
      %1454 = vdwg.mxu0
      %v1456 = vsel %vm492, %v1404, 0
      %v1459 = vsel %vm1410, %v1406, 0
      %1461 = vmatprep.subr.bf16.mxu0 0
      %1462 = vmatpush1.bf16.msra.mxu0 %v1459
      %1463 = vmatprep.subr.bf16.mxu0 0
      %1464 = vmatpush1.bf16.msra.mxu0 0
      %1465 = vmatprep.subr.bf16.mxu0 0
      %1466 = vmatpush1.bf16.msra.mxu0 0
      %1467 = vmatprep.subr.bf16.mxu0 0
      %1468 = vmatpush1.bf16.msra.mxu0 0
      %1469 = vmatprep.subr.bf16.mxu0 0
      %1470 = vmatpush1.bf16.msra.mxu0 0
      %1471 = vmatprep.subr.bf16.mxu0 0
      %1472 = vmatpush1.bf16.msra.mxu0 0
      %1473 = vmatprep.subr.bf16.mxu0 0
      %1474 = vmatpush1.bf16.msra.mxu0 0
      %1475 = vmatprep.subr.bf16.mxu0 0
      %1476 = vmatpush1.bf16.msra.mxu0 0
      %1477 = vmatprep.subr.bf16.mxu0 0
      %1478 = vmatpush1.bf16.msra.mxu0 0
      %1479 = vmatprep.subr.bf16.mxu0 0
      %1480 = vmatpush1.bf16.msra.mxu0 0
      %1481 = vmatprep.subr.bf16.mxu0 0
      %1482 = vmatpush1.bf16.msra.mxu0 0
      %1483 = vmatprep.subr.bf16.mxu0 0
      %1484 = vmatpush1.bf16.msra.mxu0 0
      %1485 = vmatprep.subr.bf16.mxu0 0
      %1486 = vmatpush1.bf16.msra.mxu0 0
      %1487 = vmatprep.subr.bf16.mxu0 0
      %1488 = vmatpush1.bf16.msra.mxu0 0
      %1489 = vmatprep.subr.bf16.mxu0 0
      %1490 = vmatpush1.bf16.msra.mxu0 0
      %1491 = vmatprep.subr.bf16.mxu0 0
      %1492 = vmatpush1.bf16.msra.mxu0 0
      %1493 = vmatprep.mubr.bf16.mxu0 0
      %1494 = vmatmul.mubr.bf16.gmra.mrb[0].mxu0 %v1456
      %v1495 = vpop.f32.mrb[0].mxu0
      %v1496 = vadd.f32 0.0, %v1495
      %v1497 = vpop.f32.mrb[0].mxu0
      %v1498 = vpop.f32.mrb[0].mxu0
      %v1499 = vadd.f32 0.0, %v1498
      %v1500 = vpop.f32.mrb[0].mxu0
      %1501 = vdwg.mxu0
      %v1502 = vsel %vm343, %v1449, 0.0
      %v1503 = vsel %vm343, %v1496, 0.0
      %v1504 = vadd.f32 %v1502, %v1503
      %v1505 = vsel %vm343, %v1452, 0.0
      %v1506 = vsel %vm343, %v1499, 0.0
      %v1507 = vadd.f32 %v1505, %v1506
      %v1508 = vld [vmem:[%s6] sm:$0x1]
      %v1510 = vlaneseq
      %v1511 = vshrl.u32 %v1510, 7
      %v1512 = vsub.s32 0, %v1511
      %v1513 = vrot.slane %v1508, %v1512
      %v1515 = vadd.f32 %v1504, %v1513
      %v1516 = vadd.f32 %v1507, %v1513
      %v1517 = vadd.f32 %v339, %v1515
      %v1518 = vadd.f32 %v340, %v1516
      %v1519 = vpack.c.bf16 %v1518, %v1517
      %v1521 = vunpack.c.l.b16 %v1519
      %v1522 = vunpack.c.h.b16 %v1519
      %v1523 = vpack.c.b16 %v1521, %v1521
      %v1524 = vpack.c.b16 %v1522, %v1522
      %vm1527 = vcmask 125952
      %1528 = vst.msk [vmem:[%s334] sm:$0xf] %vm1527, %v1523
      %1529 = vst.msk [vmem:[%s334 + $0x4] sm:$0xf] %vm1527, %v1524
      %s1530 = smul.u32 2, %s20
      %p1531 = scmp.lt.s32.totalorder %s1530, 3
      %s1532 = scalar_select %p1531, %s1530, 3
      %s1533 = smul.addr %s1532, 4
      %s1534 = scalar_lea.vmem %s9, %s1533
      // Predicated region
      $region57: #{_lambda_.14} parent=55 // pred_check
        %p1535 = pneg %p232
      $region58: #{_lambda_.14} parent=55 // pred_check_branch
        %1537 = sbr.rel (%p1535) target = $region60
      $region59: #{_lambda_.14} parent=55 // pred_region
        %s1538 = smul.u32 2, %s20
      $region60: #{_lambda_.14} parent=55 // pred_fallthru
        _
    $region56: #{_lambda_.14} parent=5 // pred_fallthru
      _
    %p1539 = scmp.le.s32.totalorder 2, %s15
    // Predicated region
    $region61: #{_lambda_.14} parent=5 // pred_check
      %p1540 = pneg %p1539
    $region62: #{_lambda_.14} parent=5 // pred_check_branch
      %1542 = sbr.rel (%p1540) target = $region64
    $region63: #{_lambda_.14} parent=5 // pred_region
      %s1543 = ssub.s32 %s15, 2
      // Predicated region
      $region65: #{_lambda_.14} parent=63 // pred_check
        %p1544 = pneg %p238
      $region66: #{_lambda_.14} parent=63 // pred_check_branch
        %1546 = sbr.rel (%p1544) target = $region68
      $region67: #{_lambda_.14} parent=63 // pred_region
        %s1547 = smul.u32 2, %s21
        %p1548 = scmp.lt.s32.totalorder %s1547, 3
        %s1549 = scalar_select %p1548, %s1547, 3
        %s1550 = smul.addr %s1549, 4
        %s1551 = scalar_lea.vmem %s9, %s1550
      $region68: #{_lambda_.14} parent=63 // pred_fallthru
        _
    $region64: #{_lambda_.14} parent=5 // pred_fallthru
      _
  $region6: #{_lambda_.14} parent=0 // loop_footer
    %s19 = sadd.s32 1, %s15
  $region7: #{_lambda_.14} parent=0 // loop_footer_branch
    %14 = sbr.rel target = $region3
  $region8: #{_lambda_.14} parent=0 // loop_exit
    _

// kernel: _lambda_.18
$region0: #{_lambda_.18}
  #allocation0 [shape = 'u32[]', space=smem, size = 0x4, offset = 0x4, fixed_abs, tag = 'smem constant byte address 0x4 - core index']
  #allocation1 [shape = 'u32[144,128]{1,0:T(1,128)}', space=vmem, size = 0x12000, scoped, tag = 'internal scratch']
  %s0 = inlined_call_operand.vmem [shape: bf16[8,32], index: 0, kind: input, shape index: {}]
  %s1 = inlined_call_operand.vmem [shape: f32[1,32], index: 1, kind: input, shape index: {}]
  %s2 = inlined_call_operand.vmem [shape: f32[1,32], index: 2, kind: input, shape index: {}, may-alias: {2,6}]
  %s3 = inlined_call_operand.vmem [shape: bf16[32,128], index: 3, kind: input, shape index: {}]
  %s4 = inlined_call_operand.vmem [shape: f32[1,128], index: 4, kind: input, shape index: {}]
  %s5 = inlined_call_operand.vmem [shape: bf16[128,32], index: 5, kind: input, shape index: {}]
  %s6 = inlined_call_operand.vmem [shape: f32[1,32], index: 6, kind: input, shape index: {}, may-alias: {2,6}]
  %s7 = inlined_call_operand.vmem [shape: bf16[8,32], index: 7, kind: output, shape index: {}]
  %s8 = sld [smem:[#allocation0]]
  $region38: #{_lambda_.18} parent=0
    _
  %s10 = ssub.s32 1, %s8
  %s11 = scalar_select 0, %s10, %s8
  // Predicated region
  $region2: #{_lambda_.18} parent=0 // pred_check
    _
  $region3: #{_lambda_.18} parent=0 // pred_check_branch
    %13 = sbr.rel (0) target = $region5
  $region4: #{_lambda_.18} parent=0 // pred_region
    _
  $region5: #{_lambda_.18} parent=0 // pred_fallthru
    _
  // Predicated region
  $region6: #{_lambda_.18} parent=0 // pred_check
    _
  $region7: #{_lambda_.18} parent=0 // pred_check_branch
    %15 = sbr.rel (0) target = $region9
  $region8: #{_lambda_.18} parent=0 // pred_region
    _
  $region9: #{_lambda_.18} parent=0 // pred_fallthru
    _
  // Predicated region
  $region10: #{_lambda_.18} parent=0 // pred_check
    _
  $region11: #{_lambda_.18} parent=0 // pred_check_branch
    %17 = sbr.rel (0) target = $region13
  $region12: #{_lambda_.18} parent=0 // pred_region
    _
  $region13: #{_lambda_.18} parent=0 // pred_fallthru
    _
  // Predicated region
  $region14: #{_lambda_.18} parent=0 // pred_check
    _
  $region15: #{_lambda_.18} parent=0 // pred_check_branch
    %19 = sbr.rel (0) target = $region17
  $region16: #{_lambda_.18} parent=0 // pred_region
    _
  $region17: #{_lambda_.18} parent=0 // pred_fallthru
    _
  // Predicated region
  $region18: #{_lambda_.18} parent=0 // pred_check
    _
  $region19: #{_lambda_.18} parent=0 // pred_check_branch
    %21 = sbr.rel (0) target = $region21
  $region20: #{_lambda_.18} parent=0 // pred_region
    _
  $region21: #{_lambda_.18} parent=0 // pred_fallthru
    _
  // Predicated region
  $region22: #{_lambda_.18} parent=0 // pred_check
    _
  $region23: #{_lambda_.18} parent=0 // pred_check_branch
    %23 = sbr.rel (0) target = $region25
  $region24: #{_lambda_.18} parent=0 // pred_region
    _
  $region25: #{_lambda_.18} parent=0 // pred_fallthru
    _
  // Predicated region
  $region26: #{_lambda_.18} parent=0 // pred_check
    _
  $region27: #{_lambda_.18} parent=0 // pred_check_branch
    %25 = sbr.rel (0) target = $region29
  $region28: #{_lambda_.18} parent=0 // pred_region
    _
  $region29: #{_lambda_.18} parent=0 // pred_fallthru
    _
  %v27 = vld [vmem:[%s0] sm:$0xf]
  %v28 = vunpack.c.l.bf16 %v27
  %v29 = vld [vmem:[%s1] sm:$0x1]
  %v30 = vld [vmem:[%s2] sm:$0x1]
  %vm31 = vcmask 261120
  %v32 = vsel %vm31, %v28, 0.0
  %33 = vadd.xlane.f32.xlu0 %v32
  %v34 = vpop.xlane.xlu0 %33
  %v35 = vrcp.pop 32.0
  %v36 = vmul.f32 %v34, %v35
  %v37 = vsub.f32 %v28, %v36
  %v38 = vmul.f32 %v37, %v37
  %v39 = vsel %vm31, %v38, 0.0
  %40 = vadd.xlane.f32.xlu0 %v39
  %v41 = vpop.xlane.xlu0 %40
  %v42 = vmul.f32 %v41, %v35
  %v43 = vadd.f32 %v42, 1e-05
  %v44 = vrsqrt.pop %v43
  %v45 = vmul.f32 %v37, %v44
  %v47 = vlaneseq
  %v48 = vshrl.u32 %v47, 7
  %v49 = vsub.s32 0, %v48
  %v50 = vrot.slane %v29, %v49
  %v52 = vmul.f32 %v45, %v50
  %v54 = vlaneseq
  %v55 = vshrl.u32 %v54, 7
  %v56 = vsub.s32 0, %v55
  %v57 = vrot.slane %v30, %v56
  %v59 = vadd.f32 %v52, %v57
  %v60 = vpack.c.bf16 %v59, %v59
  %v61 = vld [vmem:[%s3] sm:$0xf]
  %v62 = vld [vmem:[%s3 + $0x4] sm:$0xf]
  %v63 = vld [vmem:[%s3 + $0x8] sm:$0xf]
  %v64 = vld [vmem:[%s3 + $0xc] sm:$0xf]
  %v65 = vld [vmem:[%s4] sm:$0x1]
  %v67 = vlaneseq
  %v68 = vshrl.u32 %v67, 7
  %v69 = vsub.s32 0, %v68
  %v70 = vrot.slane %v65, %v69
  %v76 = vunpack.c.l.b16 %v61
  %v77 = vunpack.c.l.b16 %v62
  %v78 = vunpack.c.l.b16 %v63
  %v79 = vunpack.c.l.b16 %v64
  %v80 = vpack.c.b16 %v77, %v76
  %v81 = vpack.c.b16 %v79, %v78
  %v85 = vsel %vm31, %v60, 0
  %87 = vmatprep.subr.bf16.mxu0 0
  %88 = vmatpush1.bf16.msra.mxu0 %v80
  %89 = vmatprep.subr.bf16.mxu0 0
  %90 = vmatpush1.bf16.msra.mxu0 %v81
  %91 = vmatprep.subr.bf16.mxu0 0
  %92 = vmatpush1.bf16.msra.mxu0 0
  %93 = vmatprep.subr.bf16.mxu0 0
  %94 = vmatpush1.bf16.msra.mxu0 0
  %95 = vmatprep.subr.bf16.mxu0 0
  %96 = vmatpush1.bf16.msra.mxu0 0
  %97 = vmatprep.subr.bf16.mxu0 0
  %98 = vmatpush1.bf16.msra.mxu0 0
  %99 = vmatprep.subr.bf16.mxu0 0
  %100 = vmatpush1.bf16.msra.mxu0 0
  %101 = vmatprep.subr.bf16.mxu0 0
  %102 = vmatpush1.bf16.msra.mxu0 0
  %103 = vmatprep.subr.bf16.mxu0 0
  %104 = vmatpush1.bf16.msra.mxu0 0
  %105 = vmatprep.subr.bf16.mxu0 0
  %106 = vmatpush1.bf16.msra.mxu0 0
  %107 = vmatprep.subr.bf16.mxu0 0
  %108 = vmatpush1.bf16.msra.mxu0 0
  %109 = vmatprep.subr.bf16.mxu0 0
  %110 = vmatpush1.bf16.msra.mxu0 0
  %111 = vmatprep.subr.bf16.mxu0 0
  %112 = vmatpush1.bf16.msra.mxu0 0
  %113 = vmatprep.subr.bf16.mxu0 0
  %114 = vmatpush1.bf16.msra.mxu0 0
  %115 = vmatprep.subr.bf16.mxu0 0
  %116 = vmatpush1.bf16.msra.mxu0 0
  %117 = vmatprep.subr.bf16.mxu0 0
  %118 = vmatpush1.bf16.msra.mxu0 0
  %119 = vmatprep.mubr.bf16.mxu0 0
  %120 = vmatmul.mubr.bf16.gmra.mrb[0].mxu0 %v85
  %v121 = vpop.f32.mrb[0].mxu0
  %v122 = vadd.f32 %v70, %v121
  %v123 = vpop.f32.mrb[0].mxu0
  %v124 = vpop.f32.mrb[0].mxu0
  %v125 = vpop.f32.mrb[0].mxu0
  %126 = vdwg.mxu0
  %v127 = vmul.f32 %v122, 0.5
  %v128 = vmul.f32 %v122, 0.70710677
  %v129 = vand.u32 2147483647, %v128
  %v130 = vmul.f32 %v129, 0.3275911
  %v131 = vadd.f32 %v130, 1.0
  %v132 = vrcp.pop %v131
  %v133 = vmul.f32 1.0, %v132
  %v134 = vmul.f32 %v133, 1.0614054
  %v135 = vadd.f32 %v134, -1.4531521
  %v136 = vmul.f32 %v135, %v133
  %v137 = vadd.f32 %v136, 1.4214138
  %v138 = vmul.f32 %v137, %v133
  %v139 = vadd.f32 %v138, -0.28449672
  %v140 = vmul.f32 %v139, %v133
  %v141 = vadd.f32 %v140, 0.2548296
  %v142 = vmul.f32 %v141, %v133
  %v143 = vsub.f32 0.0, %v129
  %v144 = vmul.f32 %v143, %v129
  %v145 = vmul.f32 %v144, 1.442695
  %v146 = vpow.pop %v145
  %v147 = vmul.f32 %v142, %v146
  %v148 = vsub.f32 1.0, %v147
  %vm149 = vcmp.ge.f32.partialorder %v128, 0.0
  %v150 = vsub.f32 0.0, %v148
  %v151 = vsel %vm149, %v148, %v150
  %v152 = vadd.f32 %v151, 1.0
  %v153 = vmul.f32 %v127, %v152
  %v154 = vpack.c.bf16 %v153, %v153
  %v155 = vld [vmem:[%s5] sm:$0xf]
  %v156 = vld [vmem:[%s5 + $0x4] sm:$0xf]
  %v157 = vld [vmem:[%s5 + $0x8] sm:$0xf]
  %v158 = vld [vmem:[%s5 + $0xc] sm:$0xf]
  %v159 = vld [vmem:[%s5 + $0x10] sm:$0xf]
  %v160 = vld [vmem:[%s5 + $0x14] sm:$0xf]
  %v161 = vld [vmem:[%s5 + $0x18] sm:$0xf]
  %v162 = vld [vmem:[%s5 + $0x1c] sm:$0xf]
  %v163 = vld [vmem:[%s5 + $0x20] sm:$0xf]
  %v164 = vld [vmem:[%s5 + $0x24] sm:$0xf]
  %v165 = vld [vmem:[%s5 + $0x28] sm:$0xf]
  %v166 = vld [vmem:[%s5 + $0x2c] sm:$0xf]
  %v167 = vld [vmem:[%s5 + $0x30] sm:$0xf]
  %v168 = vld [vmem:[%s5 + $0x34] sm:$0xf]
  %v169 = vld [vmem:[%s5 + $0x38] sm:$0xf]
  %v170 = vld [vmem:[%s5 + $0x3c] sm:$0xf]
  %v171 = vld [vmem:[%s6] sm:$0x1]
  %v173 = vlaneseq
  %v174 = vshrl.u32 %v173, 7
  %v175 = vsub.s32 0, %v174
  %v176 = vrot.slane %v171, %v175
  %v194 = vunpack.c.l.b16 %v155
  %v195 = vunpack.c.l.b16 %v156
  %v196 = vunpack.c.l.b16 %v157
  %v197 = vunpack.c.l.b16 %v158
  %v198 = vunpack.c.l.b16 %v159
  %v199 = vunpack.c.l.b16 %v160
  %v200 = vunpack.c.l.b16 %v161
  %v201 = vunpack.c.l.b16 %v162
  %v202 = vunpack.c.l.b16 %v163
  %v203 = vunpack.c.l.b16 %v164
  %v204 = vunpack.c.l.b16 %v165
  %v205 = vunpack.c.l.b16 %v166
  %v206 = vunpack.c.l.b16 %v167
  %v207 = vunpack.c.l.b16 %v168
  %v208 = vunpack.c.l.b16 %v169
  %v209 = vunpack.c.l.b16 %v170
  %v210 = vpack.c.b16 %v195, %v194
  %v211 = vpack.c.b16 %v197, %v196
  %v212 = vpack.c.b16 %v199, %v198
  %v213 = vpack.c.b16 %v201, %v200
  %v214 = vpack.c.b16 %v203, %v202
  %v215 = vpack.c.b16 %v205, %v204
  %v216 = vpack.c.b16 %v207, %v206
  %v217 = vpack.c.b16 %v209, %v208
  %226 = vmatprep.subr.bf16.mxu0 0
  %227 = vmatpush1.bf16.msra.mxu0 %v210
  %228 = vmatprep.subr.bf16.mxu0 0
  %229 = vmatpush1.bf16.msra.mxu0 %v211
  %230 = vmatprep.subr.bf16.mxu0 0
  %231 = vmatpush1.bf16.msra.mxu0 %v212
  %232 = vmatprep.subr.bf16.mxu0 0
  %233 = vmatpush1.bf16.msra.mxu0 %v213
  %234 = vmatprep.subr.bf16.mxu0 0
  %235 = vmatpush1.bf16.msra.mxu0 %v214
  %236 = vmatprep.subr.bf16.mxu0 0
  %237 = vmatpush1.bf16.msra.mxu0 %v215
  %238 = vmatprep.subr.bf16.mxu0 0
  %239 = vmatpush1.bf16.msra.mxu0 %v216
  %240 = vmatprep.subr.bf16.mxu0 0
  %241 = vmatpush1.bf16.msra.mxu0 %v217
  %242 = vmatprep.subr.bf16.mxu0 0
  %243 = vmatpush1.bf16.msra.mxu0 0
  %244 = vmatprep.subr.bf16.mxu0 0
  %245 = vmatpush1.bf16.msra.mxu0 0
  %246 = vmatprep.subr.bf16.mxu0 0
  %247 = vmatpush1.bf16.msra.mxu0 0
  %248 = vmatprep.subr.bf16.mxu0 0
  %249 = vmatpush1.bf16.msra.mxu0 0
  %250 = vmatprep.subr.bf16.mxu0 0
  %251 = vmatpush1.bf16.msra.mxu0 0
  %252 = vmatprep.subr.bf16.mxu0 0
  %253 = vmatpush1.bf16.msra.mxu0 0
  %254 = vmatprep.subr.bf16.mxu0 0
  %255 = vmatpush1.bf16.msra.mxu0 0
  %256 = vmatprep.subr.bf16.mxu0 0
  %257 = vmatpush1.bf16.msra.mxu0 0
  %258 = vmatprep.mubr.bf16.mxu0 0
  %259 = vmatmul.mubr.bf16.gmra.mrb[0].mxu0 %v154
  %v260 = vpop.f32.mrb[0].mxu0
  %v261 = vadd.f32 %v176, %v260
  %v262 = vpop.f32.mrb[0].mxu0
  %v263 = vpop.f32.mrb[0].mxu0
  %v264 = vpop.f32.mrb[0].mxu0
  %265 = vdwg.mxu0
  %v266 = vadd.f32 %v28, %v261
  %v267 = vpack.c.bf16 %v266, %v266
  %vm268 = vcmask 257024
  %269 = vst.msk [vmem:[%s7] sm:$0xf] %vm268, %v267
  // Predicated region
  $region30: #{_lambda_.18} parent=0 // pred_check
    _
  $region31: #{_lambda_.18} parent=0 // pred_check_branch
    %271 = sbr.rel (0) target = $region33
  $region32: #{_lambda_.18} parent=0 // pred_region
    _
  $region33: #{_lambda_.18} parent=0 // pred_fallthru
    _
  // Predicated region
  $region34: #{_lambda_.18} parent=0 // pred_check
    _
  $region35: #{_lambda_.18} parent=0 // pred_check_branch
    %273 = sbr.rel (0) target = $region37
  $region36: #{_lambda_.18} parent=0 // pred_region
    _
  $region37: #{_lambda_.18} parent=0 // pred_fallthru
    _

// kernel: _lambda_.21
$region0: #{_lambda_.21}
  #allocation0 [shape = 'u32[]', space=smem, size = 0x4, offset = 0x4, fixed_abs, tag = 'smem constant byte address 0x4 - core index']
  #allocation1 [shape = 'u32[144,128]{1,0:T(1,128)}', space=vmem, size = 0x12000, scoped, tag = 'internal scratch']
  %s0 = inlined_call_operand.vmem [shape: bf16[2,4,32], index: 0, kind: input, shape index: {}]
  %s1 = inlined_call_operand.vmem [shape: f32[1,32], index: 1, kind: input, shape index: {}]
  %s2 = inlined_call_operand.vmem [shape: f32[1,32], index: 2, kind: input, shape index: {}]
  %s3 = inlined_call_operand.vmem [shape: bf16[32,5], index: 3, kind: input, shape index: {}]
  %s4 = inlined_call_operand.vmem [shape: f32[1,5], index: 4, kind: input, shape index: {}]
  %s5 = inlined_call_operand.hbm [shape: f32[2,5], index: 5, kind: output, shape index: {}]
  %s6 = sld [smem:[#allocation0]]
  $region30: #{_lambda_.21} parent=0
    _
  %s8 = ssub.s32 1, %s6
  %s9 = scalar_select 0, %s8, %s6
  $region1: #{_lambda_.21} parent=0
    #allocation2 [shape = 'u8[1024]{0}', space=vmem, size = 0x400, scoped, tag = 'output window, operand 0, single buffered']
    #allocation3 [shape = 's32[1]{0}', space=sflag, size = 0x4, scoped, tag = 'scoped memory for _lambda_.21']
    %10 = vsyncpa [#allocation3], 0
    // Predicated region
    $region2: #{_lambda_.21} parent=1 // pred_check
      _
    $region3: #{_lambda_.21} parent=1 // pred_check_branch
      %12 = sbr.rel (0) target = $region5
    $region4: #{_lambda_.21} parent=1 // pred_region
      _
    $region5: #{_lambda_.21} parent=1 // pred_fallthru
      _
    // Predicated region
    $region6: #{_lambda_.21} parent=1 // pred_check
      _
    $region7: #{_lambda_.21} parent=1 // pred_check_branch
      %14 = sbr.rel (0) target = $region9
    $region8: #{_lambda_.21} parent=1 // pred_region
      _
    $region9: #{_lambda_.21} parent=1 // pred_fallthru
      _
    // Predicated region
    $region10: #{_lambda_.21} parent=1 // pred_check
      _
    $region11: #{_lambda_.21} parent=1 // pred_check_branch
      %16 = sbr.rel (0) target = $region13
    $region12: #{_lambda_.21} parent=1 // pred_region
      _
    $region13: #{_lambda_.21} parent=1 // pred_fallthru
      _
    // Predicated region
    $region14: #{_lambda_.21} parent=1 // pred_check
      _
    $region15: #{_lambda_.21} parent=1 // pred_check_branch
      %18 = sbr.rel (0) target = $region17
    $region16: #{_lambda_.21} parent=1 // pred_region
      _
    $region17: #{_lambda_.21} parent=1 // pred_fallthru
      _
    // Predicated region
    $region18: #{_lambda_.21} parent=1 // pred_check
      _
    $region19: #{_lambda_.21} parent=1 // pred_check_branch
      %20 = sbr.rel (0) target = $region21
    $region20: #{_lambda_.21} parent=1 // pred_region
      _
    $region21: #{_lambda_.21} parent=1 // pred_fallthru
      _
    %v22 = vld [vmem:[%s0] sm:$0x3]
    %v23 = vld [vmem:[%s0 + $0x2] sm:$0x3]
    %v24 = vunpack.c.l.bf16 %v22
    %v25 = vunpack.c.l.bf16 %v23
    %v26 = vld [vmem:[%s1] sm:$0x1]
    %v27 = vld [vmem:[%s2] sm:$0x1]
    %vm28 = vcmask 257024
    %v29 = vsel %vm28, %v24, 0.0
    %30 = vadd.xlane.f32.xlu0 %v29
    %v31 = vpop.xlane.xlu0 %30
    %v32 = vsel %vm28, %v25, 0.0
    %33 = vadd.xlane.f32.xlu0 %v32
    %v34 = vpop.xlane.xlu0 %33
    %v35 = vrcp.pop 32.0
    %v36 = vmul.f32 %v31, %v35
    %v37 = vmul.f32 %v34, %v35
    %v38 = vsub.f32 %v24, %v36
    %v39 = vsub.f32 %v25, %v37
    %v40 = vmul.f32 %v38, %v38
    %v41 = vmul.f32 %v39, %v39
    %v42 = vsel %vm28, %v40, 0.0
    %43 = vadd.xlane.f32.xlu0 %v42
    %v44 = vpop.xlane.xlu0 %43
    %v45 = vsel %vm28, %v41, 0.0
    %46 = vadd.xlane.f32.xlu0 %v45
    %v47 = vpop.xlane.xlu0 %46
    %v48 = vmul.f32 %v44, %v35
    %v49 = vmul.f32 %v47, %v35
    %v50 = vadd.f32 %v48, 1e-05
    %v51 = vadd.f32 %v49, 1e-05
    %v52 = vrsqrt.pop %v50
    %v53 = vrsqrt.pop %v51
    %v54 = vmul.f32 %v38, %v52
    %v55 = vmul.f32 %v39, %v53
    %v57 = vlaneseq
    %v58 = vshrl.u32 %v57, 7
    %v59 = vsub.s32 0, %v58
    %v60 = vrot.slane %v26, %v59
    %v62 = vmul.f32 %v54, %v60
    %v63 = vmul.f32 %v55, %v60
    %v65 = vlaneseq
    %v66 = vshrl.u32 %v65, 7
    %v67 = vsub.s32 0, %v66
    %v68 = vrot.slane %v27, %v67
    %v70 = vadd.f32 %v62, %v68
    %v71 = vadd.f32 %v63, %v68
    %v72 = vsel %vm28, %v70, 0.0
    %v73 = vrot.slane %v72, 4
    %v74 = vadd.f32 %v72, %v73
    %v75 = vrot.slane %v74, 2
    %v76 = vadd.f32 %v74, %v75
    %v77 = vrot.slane %v76, 1
    %v78 = vadd.f32 %v76, %v77
    %v79 = vsel %vm28, %v71, 0.0
    %v80 = vrot.slane %v79, 4
    %v81 = vadd.f32 %v79, %v80
    %v82 = vrot.slane %v81, 2
    %v83 = vadd.f32 %v81, %v82
    %v84 = vrot.slane %v83, 1
    %v85 = vadd.f32 %v83, %v84
    %v86 = vrcp.pop 4.0
    %v87 = vmul.f32 %v78, %v86
    %v88 = vmul.f32 %v85, %v86
    %v89 = vpack.c.bf16 %v87, %v87
    %v90 = vpack.c.bf16 %v88, %v88
    %v91 = vld [vmem:[%s3] sm:$0xf]
    %v92 = vld [vmem:[%s3 + $0x4] sm:$0xf]
    %v93 = vld [vmem:[%s3 + $0x8] sm:$0xf]
    %v94 = vld [vmem:[%s3 + $0xc] sm:$0xf]
    %v95 = vld [vmem:[%s4] sm:$0x1]
    %v97 = vlaneseq
    %v98 = vshrl.u32 %v97, 7
    %v99 = vsub.s32 0, %v98
    %v100 = vrot.slane %v95, %v99
    %v104 = vunpack.c.l.b16 %v89
    %v105 = vunpack.c.l.b16 %v90
    %vm106 = vcmask 1041409
    %v107 = vsel %vm106, %v105, %v104
    %v108 = vpack.c.b16 %v107, %v107
    %v113 = vunpack.c.l.b16 %v91
    %v114 = vunpack.c.l.b16 %v92
    %v115 = vunpack.c.l.b16 %v93
    %v116 = vunpack.c.l.b16 %v94
    %v117 = vpack.c.b16 %v114, %v113
    %v118 = vpack.c.b16 %v116, %v115
    %vm121 = vcmask 261120
    %v123 = vsel %vm121, %v108, 0
    %125 = vmatprep.subr.bf16.mxu0 0
    %126 = vmatpush1.bf16.msra.mxu0 %v117
    %127 = vmatprep.subr.bf16.mxu0 0
    %128 = vmatpush1.bf16.msra.mxu0 %v118
    %129 = vmatprep.subr.bf16.mxu0 0
    %130 = vmatpush1.bf16.msra.mxu0 0
    %131 = vmatprep.subr.bf16.mxu0 0
    %132 = vmatpush1.bf16.msra.mxu0 0
    %133 = vmatprep.subr.bf16.mxu0 0
    %134 = vmatpush1.bf16.msra.mxu0 0
    %135 = vmatprep.subr.bf16.mxu0 0
    %136 = vmatpush1.bf16.msra.mxu0 0
    %137 = vmatprep.subr.bf16.mxu0 0
    %138 = vmatpush1.bf16.msra.mxu0 0
    %139 = vmatprep.subr.bf16.mxu0 0
    %140 = vmatpush1.bf16.msra.mxu0 0
    %141 = vmatprep.subr.bf16.mxu0 0
    %142 = vmatpush1.bf16.msra.mxu0 0
    %143 = vmatprep.subr.bf16.mxu0 0
    %144 = vmatpush1.bf16.msra.mxu0 0
    %145 = vmatprep.subr.bf16.mxu0 0
    %146 = vmatpush1.bf16.msra.mxu0 0
    %147 = vmatprep.subr.bf16.mxu0 0
    %148 = vmatpush1.bf16.msra.mxu0 0
    %149 = vmatprep.subr.bf16.mxu0 0
    %150 = vmatpush1.bf16.msra.mxu0 0
    %151 = vmatprep.subr.bf16.mxu0 0
    %152 = vmatpush1.bf16.msra.mxu0 0
    %153 = vmatprep.subr.bf16.mxu0 0
    %154 = vmatpush1.bf16.msra.mxu0 0
    %155 = vmatprep.subr.bf16.mxu0 0
    %156 = vmatpush1.bf16.msra.mxu0 0
    %157 = vmatprep.mubr.bf16.mxu0 0
    %158 = vmatmul.mubr.bf16.gmra.mrb[0].mxu0 %v123
    %v159 = vpop.f32.mrb[0].mxu0
    %v160 = vadd.f32 %v100, %v159
    %v161 = vpop.f32.mrb[0].mxu0
    %v162 = vpop.f32.mrb[0].mxu0
    %v163 = vpop.f32.mrb[0].mxu0
    %164 = vdwg.mxu0
    %vm165 = vcmask 33792
    %166 = vst.msk [vmem:[#allocation2] sm:$0x3] %vm165, %v160
    // Predicated region
    $region22: #{_lambda_.21} parent=1 // pred_check
      _
    $region23: #{_lambda_.21} parent=1 // pred_check_branch
      %168 = sbr.rel (0) target = $region25
    $region24: #{_lambda_.21} parent=1 // pred_region
      %s170 = ssub.s32 32, 32
      %171 = vsyncadd [#allocation3], %s170
      %s173 = sshll.u32 [#allocation2], 4
      %s174 = int_to_ptr.vmem [resolvable:$true] %s173
      %176 = dma.vmem_to_hbm [thread:$0]  %s174, 32, %s5, [#allocation3]
    $region25: #{_lambda_.21} parent=1 // pred_fallthru
      _
    // Predicated region
    $region26: #{_lambda_.21} parent=1 // pred_check
      _
    $region27: #{_lambda_.21} parent=1 // pred_check_branch
      %178 = sbr.rel (0) target = $region29
    $region28: #{_lambda_.21} parent=1 // pred_region
      %179 = dma.done [#allocation3], 32
    $region29: #{_lambda_.21} parent=1 // pred_fallthru
      _
    %180 = vsyncpa [#allocation3], 1

// kernel: _lambda_.17
$region0: #{_lambda_.17}
  #allocation0 [shape = 'u32[]', space=smem, size = 0x4, offset = 0x4, fixed_abs, tag = 'smem constant byte address 0x4 - core index']
  #allocation1 [shape = 'u32[144,128]{1,0:T(1,128)}', space=vmem, size = 0x12000, scoped, tag = 'internal scratch']
  %s0 = inlined_call_operand.vmem [shape: bf16[8,32], index: 0, kind: input, shape index: {}]
  %s1 = inlined_call_operand.vmem [shape: f32[1,32], index: 1, kind: input, shape index: {}]
  %s2 = inlined_call_operand.vmem [shape: f32[1,32], index: 2, kind: input, shape index: {}, may-alias: {2,6}]
  %s3 = inlined_call_operand.vmem [shape: bf16[32,96], index: 3, kind: input, shape index: {}]
  %s4 = inlined_call_operand.vmem [shape: f32[1,96], index: 4, kind: input, shape index: {}]
  %s5 = inlined_call_operand.vmem [shape: bf16[4,8,32], index: 5, kind: input, shape index: {}]
  %s6 = inlined_call_operand.vmem [shape: f32[1,32], index: 6, kind: input, shape index: {}, may-alias: {2,6}]
  %s7 = inlined_call_operand.vmem [shape: f32[4,4,4], index: 7, kind: input, shape index: {}]
  %s8 = inlined_call_operand.vmem [shape: bf16[8,32], index: 8, kind: output, shape index: {}]
  %s9 = sld [smem:[#allocation0]]
  $region42: #{_lambda_.17} parent=0
    _
  %s11 = ssub.s32 1, %s9
  %s12 = scalar_select 0, %s11, %s9
  // Predicated region
  $region2: #{_lambda_.17} parent=0 // pred_check
    _
  $region3: #{_lambda_.17} parent=0 // pred_check_branch
    %14 = sbr.rel (0) target = $region5
  $region4: #{_lambda_.17} parent=0 // pred_region
    _
  $region5: #{_lambda_.17} parent=0 // pred_fallthru
    _
  // Predicated region
  $region6: #{_lambda_.17} parent=0 // pred_check
    _
  $region7: #{_lambda_.17} parent=0 // pred_check_branch
    %16 = sbr.rel (0) target = $region9
  $region8: #{_lambda_.17} parent=0 // pred_region
    _
  $region9: #{_lambda_.17} parent=0 // pred_fallthru
    _
  // Predicated region
  $region10: #{_lambda_.17} parent=0 // pred_check
    _
  $region11: #{_lambda_.17} parent=0 // pred_check_branch
    %18 = sbr.rel (0) target = $region13
  $region12: #{_lambda_.17} parent=0 // pred_region
    _
  $region13: #{_lambda_.17} parent=0 // pred_fallthru
    _
  // Predicated region
  $region14: #{_lambda_.17} parent=0 // pred_check
    _
  $region15: #{_lambda_.17} parent=0 // pred_check_branch
    %20 = sbr.rel (0) target = $region17
  $region16: #{_lambda_.17} parent=0 // pred_region
    _
  $region17: #{_lambda_.17} parent=0 // pred_fallthru
    _
  // Predicated region
  $region18: #{_lambda_.17} parent=0 // pred_check
    _
  $region19: #{_lambda_.17} parent=0 // pred_check_branch
    %22 = sbr.rel (0) target = $region21
  $region20: #{_lambda_.17} parent=0 // pred_region
    _
  $region21: #{_lambda_.17} parent=0 // pred_fallthru
    _
  // Predicated region
  $region22: #{_lambda_.17} parent=0 // pred_check
    _
  $region23: #{_lambda_.17} parent=0 // pred_check_branch
    %24 = sbr.rel (0) target = $region25
  $region24: #{_lambda_.17} parent=0 // pred_region
    _
  $region25: #{_lambda_.17} parent=0 // pred_fallthru
    _
  // Predicated region
  $region26: #{_lambda_.17} parent=0 // pred_check
    _
  $region27: #{_lambda_.17} parent=0 // pred_check_branch
    %26 = sbr.rel (0) target = $region29
  $region28: #{_lambda_.17} parent=0 // pred_region
    _
  $region29: #{_lambda_.17} parent=0 // pred_fallthru
    _
  // Predicated region
  $region30: #{_lambda_.17} parent=0 // pred_check
    _
  $region31: #{_lambda_.17} parent=0 // pred_check_branch
    %28 = sbr.rel (0) target = $region33
  $region32: #{_lambda_.17} parent=0 // pred_region
    _
  $region33: #{_lambda_.17} parent=0 // pred_fallthru
    _
  %v30 = vld [vmem:[%s0] sm:$0xf]
  %v31 = vunpack.c.l.bf16 %v30
  %v32 = vld [vmem:[%s1] sm:$0x1]
  %v33 = vld [vmem:[%s2] sm:$0x1]
  %vm34 = vcmask 261120
  %v35 = vsel %vm34, %v31, 0.0
  %36 = vadd.xlane.f32.xlu0 %v35
  %v37 = vpop.xlane.xlu0 %36
  %v38 = vrcp.pop 32.0
  %v39 = vmul.f32 %v37, %v38
  %v40 = vsub.f32 %v31, %v39
  %v41 = vmul.f32 %v40, %v40
  %v42 = vsel %vm34, %v41, 0.0
  %43 = vadd.xlane.f32.xlu0 %v42
  %v44 = vpop.xlane.xlu0 %43
  %v45 = vmul.f32 %v44, %v38
  %v46 = vadd.f32 %v45, 1e-05
  %v47 = vrsqrt.pop %v46
  %v48 = vmul.f32 %v40, %v47
  %v50 = vlaneseq
  %v51 = vshrl.u32 %v50, 7
  %v52 = vsub.s32 0, %v51
  %v53 = vrot.slane %v32, %v52
  %v55 = vmul.f32 %v48, %v53
  %v57 = vlaneseq
  %v58 = vshrl.u32 %v57, 7
  %v59 = vsub.s32 0, %v58
  %v60 = vrot.slane %v33, %v59
  %v62 = vadd.f32 %v55, %v60
  %v63 = vpack.c.bf16 %v62, %v62
  %v64 = vld [vmem:[%s3] sm:$0xf]
  %v65 = vld [vmem:[%s3 + $0x4] sm:$0xf]
  %v66 = vld [vmem:[%s3 + $0x8] sm:$0xf]
  %v67 = vld [vmem:[%s3 + $0xc] sm:$0xf]
  %v68 = vld [vmem:[%s4] sm:$0x1]
  %v70 = vlaneseq
  %v71 = vshrl.u32 %v70, 7
  %v72 = vsub.s32 0, %v71
  %v73 = vrot.slane %v68, %v72
  %v79 = vunpack.c.l.b16 %v64
  %v80 = vunpack.c.l.b16 %v65
  %v81 = vunpack.c.l.b16 %v66
  %v82 = vunpack.c.l.b16 %v67
  %v83 = vpack.c.b16 %v80, %v79
  %v84 = vpack.c.b16 %v82, %v81
  %v88 = vsel %vm34, %v63, 0
  %90 = vmatprep.subr.bf16.mxu0 0
  %91 = vmatpush1.bf16.msra.mxu0 %v83
  %92 = vmatprep.subr.bf16.mxu0 0
  %93 = vmatpush1.bf16.msra.mxu0 %v84
  %94 = vmatprep.subr.bf16.mxu0 0
  %95 = vmatpush1.bf16.msra.mxu0 0
  %96 = vmatprep.subr.bf16.mxu0 0
  %97 = vmatpush1.bf16.msra.mxu0 0
  %98 = vmatprep.subr.bf16.mxu0 0
  %99 = vmatpush1.bf16.msra.mxu0 0
  %100 = vmatprep.subr.bf16.mxu0 0
  %101 = vmatpush1.bf16.msra.mxu0 0
  %102 = vmatprep.subr.bf16.mxu0 0
  %103 = vmatpush1.bf16.msra.mxu0 0
  %104 = vmatprep.subr.bf16.mxu0 0
  %105 = vmatpush1.bf16.msra.mxu0 0
  %106 = vmatprep.subr.bf16.mxu0 0
  %107 = vmatpush1.bf16.msra.mxu0 0
  %108 = vmatprep.subr.bf16.mxu0 0
  %109 = vmatpush1.bf16.msra.mxu0 0
  %110 = vmatprep.subr.bf16.mxu0 0
  %111 = vmatpush1.bf16.msra.mxu0 0
  %112 = vmatprep.subr.bf16.mxu0 0
  %113 = vmatpush1.bf16.msra.mxu0 0
  %114 = vmatprep.subr.bf16.mxu0 0
  %115 = vmatpush1.bf16.msra.mxu0 0
  %116 = vmatprep.subr.bf16.mxu0 0
  %117 = vmatpush1.bf16.msra.mxu0 0
  %118 = vmatprep.subr.bf16.mxu0 0
  %119 = vmatpush1.bf16.msra.mxu0 0
  %120 = vmatprep.subr.bf16.mxu0 0
  %121 = vmatpush1.bf16.msra.mxu0 0
  %122 = vmatprep.mubr.bf16.mxu0 0
  %123 = vmatmul.mubr.bf16.gmra.mrb[0].mxu0 %v88
  %v124 = vpop.f32.mrb[0].mxu0
  %v125 = vadd.f32 %v73, %v124
  %v126 = vpop.f32.mrb[0].mxu0
  %v127 = vpop.f32.mrb[0].mxu0
  %v128 = vpop.f32.mrb[0].mxu0
  %129 = vdwg.mxu0
  %v131 = vcombine.high %v125, %v125
  %133 = vrot.lane.b32.xlu0 %v125, 120
  %v134 = vpop.permute.xlu0 %133
  %135 = vrot.lane.b32.xlu0 %v131, 120
  %v136 = vpop.permute.xlu0 %135
  %139 = vrot.lane.b32.xlu0 %v125, 112
  %v140 = vpop.permute.xlu0 %139
  %141 = vrot.lane.b32.xlu0 %v131, 112
  %v142 = vpop.permute.xlu0 %141
  %145 = vrot.lane.b32.xlu0 %v125, 104
  %v146 = vpop.permute.xlu0 %145
  %147 = vrot.lane.b32.xlu0 %v131, 104
  %v148 = vpop.permute.xlu0 %147
  %v151 = vmul.f32 %v125, 0.35355338
  %v152 = vmul.f32 %v131, 0.35355338
  %v153 = vmul.f32 %v134, 0.35355338
  %v154 = vmul.f32 %v136, 0.35355338
  %v155 = vmul.f32 %v140, 0.35355338
  %v156 = vmul.f32 %v142, 0.35355338
  %v157 = vmul.f32 %v146, 0.35355338
  %v158 = vmul.f32 %v148, 0.35355338
  %v159 = vpack.c.bf16 %v151, %v151
  %v160 = vpack.c.bf16 %v152, %v152
  %v161 = vpack.c.bf16 %v153, %v153
  %v162 = vpack.c.bf16 %v154, %v154
  %v163 = vpack.c.bf16 %v155, %v155
  %v164 = vpack.c.bf16 %v156, %v156
  %v165 = vpack.c.bf16 %v157, %v157
  %v166 = vpack.c.bf16 %v158, %v158
  %v167 = vpack.c.bf16 %v125, %v125
  %v168 = vpack.c.bf16 %v131, %v131
  %v169 = vpack.c.bf16 %v134, %v134
  %v170 = vpack.c.bf16 %v136, %v136
  %v171 = vpack.c.bf16 %v140, %v140
  %v172 = vpack.c.bf16 %v142, %v142
  %v173 = vpack.c.bf16 %v146, %v146
  %v174 = vpack.c.bf16 %v148, %v148
  %176 = vrot.lane.b32.xlu0 %v167, 96
  %v177 = vpop.permute.xlu0 %176
  %vm178 = vcmask 64512
  %v180 = vsel %vm178, %v159, 0
  %v183 = vsel %vm178, %v177, 0
  %185 = vmatprep.subr.bf16.mxu0 0
  %186 = vmatpush1.bf16.xpose.msra.mxu0 %v183
  %187 = vmatprep.subr.bf16.mxu0 0
  %188 = vmatpush1.bf16.xpose.msra.mxu0 0
  %189 = vmatprep.subr.bf16.mxu0 0
  %190 = vmatpush1.bf16.xpose.msra.mxu0 0
  %191 = vmatprep.subr.bf16.mxu0 0
  %192 = vmatpush1.bf16.xpose.msra.mxu0 0
  %193 = vmatprep.subr.bf16.mxu0 0
  %194 = vmatpush1.bf16.xpose.msra.mxu0 0
  %195 = vmatprep.subr.bf16.mxu0 0
  %196 = vmatpush1.bf16.xpose.msra.mxu0 0
  %197 = vmatprep.subr.bf16.mxu0 0
  %198 = vmatpush1.bf16.xpose.msra.mxu0 0
  %199 = vmatprep.subr.bf16.mxu0 0
  %200 = vmatpush1.bf16.xpose.msra.mxu0 0
  %201 = vmatprep.subr.bf16.mxu0 0
  %202 = vmatpush1.bf16.xpose.msra.mxu0 0
  %203 = vmatprep.subr.bf16.mxu0 0
  %204 = vmatpush1.bf16.xpose.msra.mxu0 0
  %205 = vmatprep.subr.bf16.mxu0 0
  %206 = vmatpush1.bf16.xpose.msra.mxu0 0
  %207 = vmatprep.subr.bf16.mxu0 0
  %208 = vmatpush1.bf16.xpose.msra.mxu0 0
  %209 = vmatprep.subr.bf16.mxu0 0
  %210 = vmatpush1.bf16.xpose.msra.mxu0 0
  %211 = vmatprep.subr.bf16.mxu0 0
  %212 = vmatpush1.bf16.xpose.msra.mxu0 0
  %213 = vmatprep.subr.bf16.mxu0 0
  %214 = vmatpush1.bf16.xpose.msra.mxu0 0
  %215 = vmatprep.subr.bf16.mxu0 0
  %216 = vmatpush1.bf16.xpose.msra.mxu0 0
  %217 = vmatprep.mubr.bf16.mxu0 0
  %218 = vmatmul.mubr.bf16.gmra.mrb[0].mxu0 %v180
  %v219 = vpop.f32.mrb[0].mxu0
  %v220 = vadd.f32 0.0, %v219
  %v221 = vpop.f32.mrb[0].mxu0
  %v222 = vpop.f32.mrb[0].mxu0
  %v223 = vpop.f32.mrb[0].mxu0
  %224 = vdwg.mxu0
  %226 = vrot.lane.b32.xlu0 %v168, 96
  %v227 = vpop.permute.xlu0 %226
  %v229 = vsel %vm178, %v160, 0
  %v232 = vsel %vm178, %v227, 0
  %234 = vmatprep.subr.bf16.mxu0 0
  %235 = vmatpush1.bf16.xpose.msra.mxu0 %v232
  %236 = vmatprep.subr.bf16.mxu0 0
  %237 = vmatpush1.bf16.xpose.msra.mxu0 0
  %238 = vmatprep.subr.bf16.mxu0 0
  %239 = vmatpush1.bf16.xpose.msra.mxu0 0
  %240 = vmatprep.subr.bf16.mxu0 0
  %241 = vmatpush1.bf16.xpose.msra.mxu0 0
  %242 = vmatprep.subr.bf16.mxu0 0
  %243 = vmatpush1.bf16.xpose.msra.mxu0 0
  %244 = vmatprep.subr.bf16.mxu0 0
  %245 = vmatpush1.bf16.xpose.msra.mxu0 0
  %246 = vmatprep.subr.bf16.mxu0 0
  %247 = vmatpush1.bf16.xpose.msra.mxu0 0
  %248 = vmatprep.subr.bf16.mxu0 0
  %249 = vmatpush1.bf16.xpose.msra.mxu0 0
  %250 = vmatprep.subr.bf16.mxu0 0
  %251 = vmatpush1.bf16.xpose.msra.mxu0 0
  %252 = vmatprep.subr.bf16.mxu0 0
  %253 = vmatpush1.bf16.xpose.msra.mxu0 0
  %254 = vmatprep.subr.bf16.mxu0 0
  %255 = vmatpush1.bf16.xpose.msra.mxu0 0
  %256 = vmatprep.subr.bf16.mxu0 0
  %257 = vmatpush1.bf16.xpose.msra.mxu0 0
  %258 = vmatprep.subr.bf16.mxu0 0
  %259 = vmatpush1.bf16.xpose.msra.mxu0 0
  %260 = vmatprep.subr.bf16.mxu0 0
  %261 = vmatpush1.bf16.xpose.msra.mxu0 0
  %262 = vmatprep.subr.bf16.mxu0 0
  %263 = vmatpush1.bf16.xpose.msra.mxu0 0
  %264 = vmatprep.subr.bf16.mxu0 0
  %265 = vmatpush1.bf16.xpose.msra.mxu0 0
  %266 = vmatprep.mubr.bf16.mxu0 0
  %267 = vmatmul.mubr.bf16.gmra.mrb[0].mxu0 %v229
  %v268 = vpop.f32.mrb[0].mxu0
  %v269 = vadd.f32 0.0, %v268
  %v270 = vpop.f32.mrb[0].mxu0
  %v271 = vpop.f32.mrb[0].mxu0
  %v272 = vpop.f32.mrb[0].mxu0
  %273 = vdwg.mxu0
  %275 = vrot.lane.b32.xlu0 %v169, 96
  %v276 = vpop.permute.xlu0 %275
  %v278 = vsel %vm178, %v161, 0
  %v281 = vsel %vm178, %v276, 0
  %283 = vmatprep.subr.bf16.mxu0 0
  %284 = vmatpush1.bf16.xpose.msra.mxu0 %v281
  %285 = vmatprep.subr.bf16.mxu0 0
  %286 = vmatpush1.bf16.xpose.msra.mxu0 0
  %287 = vmatprep.subr.bf16.mxu0 0
  %288 = vmatpush1.bf16.xpose.msra.mxu0 0
  %289 = vmatprep.subr.bf16.mxu0 0
  %290 = vmatpush1.bf16.xpose.msra.mxu0 0
  %291 = vmatprep.subr.bf16.mxu0 0
  %292 = vmatpush1.bf16.xpose.msra.mxu0 0
  %293 = vmatprep.subr.bf16.mxu0 0
  %294 = vmatpush1.bf16.xpose.msra.mxu0 0
  %295 = vmatprep.subr.bf16.mxu0 0
  %296 = vmatpush1.bf16.xpose.msra.mxu0 0
  %297 = vmatprep.subr.bf16.mxu0 0
  %298 = vmatpush1.bf16.xpose.msra.mxu0 0
  %299 = vmatprep.subr.bf16.mxu0 0
  %300 = vmatpush1.bf16.xpose.msra.mxu0 0
  %301 = vmatprep.subr.bf16.mxu0 0
  %302 = vmatpush1.bf16.xpose.msra.mxu0 0
  %303 = vmatprep.subr.bf16.mxu0 0
  %304 = vmatpush1.bf16.xpose.msra.mxu0 0
  %305 = vmatprep.subr.bf16.mxu0 0
  %306 = vmatpush1.bf16.xpose.msra.mxu0 0
  %307 = vmatprep.subr.bf16.mxu0 0
  %308 = vmatpush1.bf16.xpose.msra.mxu0 0
  %309 = vmatprep.subr.bf16.mxu0 0
  %310 = vmatpush1.bf16.xpose.msra.mxu0 0
  %311 = vmatprep.subr.bf16.mxu0 0
  %312 = vmatpush1.bf16.xpose.msra.mxu0 0
  %313 = vmatprep.subr.bf16.mxu0 0
  %314 = vmatpush1.bf16.xpose.msra.mxu0 0
  %315 = vmatprep.mubr.bf16.mxu0 0
  %316 = vmatmul.mubr.bf16.gmra.mrb[0].mxu0 %v278
  %v317 = vpop.f32.mrb[0].mxu0
  %v318 = vadd.f32 0.0, %v317
  %v319 = vpop.f32.mrb[0].mxu0
  %v320 = vpop.f32.mrb[0].mxu0
  %v321 = vpop.f32.mrb[0].mxu0
  %322 = vdwg.mxu0
  %324 = vrot.lane.b32.xlu0 %v170, 96
  %v325 = vpop.permute.xlu0 %324
  %v327 = vsel %vm178, %v162, 0
  %v330 = vsel %vm178, %v325, 0
  %332 = vmatprep.subr.bf16.mxu0 0
  %333 = vmatpush1.bf16.xpose.msra.mxu0 %v330
  %334 = vmatprep.subr.bf16.mxu0 0
  %335 = vmatpush1.bf16.xpose.msra.mxu0 0
  %336 = vmatprep.subr.bf16.mxu0 0
  %337 = vmatpush1.bf16.xpose.msra.mxu0 0
  %338 = vmatprep.subr.bf16.mxu0 0
  %339 = vmatpush1.bf16.xpose.msra.mxu0 0
  %340 = vmatprep.subr.bf16.mxu0 0
  %341 = vmatpush1.bf16.xpose.msra.mxu0 0
  %342 = vmatprep.subr.bf16.mxu0 0
  %343 = vmatpush1.bf16.xpose.msra.mxu0 0
  %344 = vmatprep.subr.bf16.mxu0 0
  %345 = vmatpush1.bf16.xpose.msra.mxu0 0
  %346 = vmatprep.subr.bf16.mxu0 0
  %347 = vmatpush1.bf16.xpose.msra.mxu0 0
  %348 = vmatprep.subr.bf16.mxu0 0
  %349 = vmatpush1.bf16.xpose.msra.mxu0 0
  %350 = vmatprep.subr.bf16.mxu0 0
  %351 = vmatpush1.bf16.xpose.msra.mxu0 0
  %352 = vmatprep.subr.bf16.mxu0 0
  %353 = vmatpush1.bf16.xpose.msra.mxu0 0
  %354 = vmatprep.subr.bf16.mxu0 0
  %355 = vmatpush1.bf16.xpose.msra.mxu0 0
  %356 = vmatprep.subr.bf16.mxu0 0
  %357 = vmatpush1.bf16.xpose.msra.mxu0 0
  %358 = vmatprep.subr.bf16.mxu0 0
  %359 = vmatpush1.bf16.xpose.msra.mxu0 0
  %360 = vmatprep.subr.bf16.mxu0 0
  %361 = vmatpush1.bf16.xpose.msra.mxu0 0
  %362 = vmatprep.subr.bf16.mxu0 0
  %363 = vmatpush1.bf16.xpose.msra.mxu0 0
  %364 = vmatprep.mubr.bf16.mxu0 0
  %365 = vmatmul.mubr.bf16.gmra.mrb[0].mxu0 %v327
  %v366 = vpop.f32.mrb[0].mxu0
  %v367 = vadd.f32 0.0, %v366
  %v368 = vpop.f32.mrb[0].mxu0
  %v369 = vpop.f32.mrb[0].mxu0
  %v370 = vpop.f32.mrb[0].mxu0
  %371 = vdwg.mxu0
  %373 = vrot.lane.b32.xlu0 %v171, 96
  %v374 = vpop.permute.xlu0 %373
  %v376 = vsel %vm178, %v163, 0
  %v379 = vsel %vm178, %v374, 0
  %381 = vmatprep.subr.bf16.mxu0 0
  %382 = vmatpush1.bf16.xpose.msra.mxu0 %v379
  %383 = vmatprep.subr.bf16.mxu0 0
  %384 = vmatpush1.bf16.xpose.msra.mxu0 0
  %385 = vmatprep.subr.bf16.mxu0 0
  %386 = vmatpush1.bf16.xpose.msra.mxu0 0
  %387 = vmatprep.subr.bf16.mxu0 0
  %388 = vmatpush1.bf16.xpose.msra.mxu0 0
  %389 = vmatprep.subr.bf16.mxu0 0
  %390 = vmatpush1.bf16.xpose.msra.mxu0 0
  %391 = vmatprep.subr.bf16.mxu0 0
  %392 = vmatpush1.bf16.xpose.msra.mxu0 0
  %393 = vmatprep.subr.bf16.mxu0 0
  %394 = vmatpush1.bf16.xpose.msra.mxu0 0
  %395 = vmatprep.subr.bf16.mxu0 0
  %396 = vmatpush1.bf16.xpose.msra.mxu0 0
  %397 = vmatprep.subr.bf16.mxu0 0
  %398 = vmatpush1.bf16.xpose.msra.mxu0 0
  %399 = vmatprep.subr.bf16.mxu0 0
  %400 = vmatpush1.bf16.xpose.msra.mxu0 0
  %401 = vmatprep.subr.bf16.mxu0 0
  %402 = vmatpush1.bf16.xpose.msra.mxu0 0
  %403 = vmatprep.subr.bf16.mxu0 0
  %404 = vmatpush1.bf16.xpose.msra.mxu0 0
  %405 = vmatprep.subr.bf16.mxu0 0
  %406 = vmatpush1.bf16.xpose.msra.mxu0 0
  %407 = vmatprep.subr.bf16.mxu0 0
  %408 = vmatpush1.bf16.xpose.msra.mxu0 0
  %409 = vmatprep.subr.bf16.mxu0 0
  %410 = vmatpush1.bf16.xpose.msra.mxu0 0
  %411 = vmatprep.subr.bf16.mxu0 0
  %412 = vmatpush1.bf16.xpose.msra.mxu0 0
  %413 = vmatprep.mubr.bf16.mxu0 0
  %414 = vmatmul.mubr.bf16.gmra.mrb[0].mxu0 %v376
  %v415 = vpop.f32.mrb[0].mxu0
  %v416 = vadd.f32 0.0, %v415
  %v417 = vpop.f32.mrb[0].mxu0
  %v418 = vpop.f32.mrb[0].mxu0
  %v419 = vpop.f32.mrb[0].mxu0
  %420 = vdwg.mxu0
  %422 = vrot.lane.b32.xlu0 %v172, 96
  %v423 = vpop.permute.xlu0 %422
  %v425 = vsel %vm178, %v164, 0
  %v428 = vsel %vm178, %v423, 0
  %430 = vmatprep.subr.bf16.mxu0 0
  %431 = vmatpush1.bf16.xpose.msra.mxu0 %v428
  %432 = vmatprep.subr.bf16.mxu0 0
  %433 = vmatpush1.bf16.xpose.msra.mxu0 0
  %434 = vmatprep.subr.bf16.mxu0 0
  %435 = vmatpush1.bf16.xpose.msra.mxu0 0
  %436 = vmatprep.subr.bf16.mxu0 0
  %437 = vmatpush1.bf16.xpose.msra.mxu0 0
  %438 = vmatprep.subr.bf16.mxu0 0
  %439 = vmatpush1.bf16.xpose.msra.mxu0 0
  %440 = vmatprep.subr.bf16.mxu0 0
  %441 = vmatpush1.bf16.xpose.msra.mxu0 0
  %442 = vmatprep.subr.bf16.mxu0 0
  %443 = vmatpush1.bf16.xpose.msra.mxu0 0
  %444 = vmatprep.subr.bf16.mxu0 0
  %445 = vmatpush1.bf16.xpose.msra.mxu0 0
  %446 = vmatprep.subr.bf16.mxu0 0
  %447 = vmatpush1.bf16.xpose.msra.mxu0 0
  %448 = vmatprep.subr.bf16.mxu0 0
  %449 = vmatpush1.bf16.xpose.msra.mxu0 0
  %450 = vmatprep.subr.bf16.mxu0 0
  %451 = vmatpush1.bf16.xpose.msra.mxu0 0
  %452 = vmatprep.subr.bf16.mxu0 0
  %453 = vmatpush1.bf16.xpose.msra.mxu0 0
  %454 = vmatprep.subr.bf16.mxu0 0
  %455 = vmatpush1.bf16.xpose.msra.mxu0 0
  %456 = vmatprep.subr.bf16.mxu0 0
  %457 = vmatpush1.bf16.xpose.msra.mxu0 0
  %458 = vmatprep.subr.bf16.mxu0 0
  %459 = vmatpush1.bf16.xpose.msra.mxu0 0
  %460 = vmatprep.subr.bf16.mxu0 0
  %461 = vmatpush1.bf16.xpose.msra.mxu0 0
  %462 = vmatprep.mubr.bf16.mxu0 0
  %463 = vmatmul.mubr.bf16.gmra.mrb[0].mxu0 %v425
  %v464 = vpop.f32.mrb[0].mxu0
  %v465 = vadd.f32 0.0, %v464
  %v466 = vpop.f32.mrb[0].mxu0
  %v467 = vpop.f32.mrb[0].mxu0
  %v468 = vpop.f32.mrb[0].mxu0
  %469 = vdwg.mxu0
  %471 = vrot.lane.b32.xlu0 %v173, 96
  %v472 = vpop.permute.xlu0 %471
  %v474 = vsel %vm178, %v165, 0
  %v477 = vsel %vm178, %v472, 0
  %479 = vmatprep.subr.bf16.mxu0 0
  %480 = vmatpush1.bf16.xpose.msra.mxu0 %v477
  %481 = vmatprep.subr.bf16.mxu0 0
  %482 = vmatpush1.bf16.xpose.msra.mxu0 0
  %483 = vmatprep.subr.bf16.mxu0 0
  %484 = vmatpush1.bf16.xpose.msra.mxu0 0
  %485 = vmatprep.subr.bf16.mxu0 0
  %486 = vmatpush1.bf16.xpose.msra.mxu0 0
  %487 = vmatprep.subr.bf16.mxu0 0
  %488 = vmatpush1.bf16.xpose.msra.mxu0 0
  %489 = vmatprep.subr.bf16.mxu0 0
  %490 = vmatpush1.bf16.xpose.msra.mxu0 0
  %491 = vmatprep.subr.bf16.mxu0 0
  %492 = vmatpush1.bf16.xpose.msra.mxu0 0
  %493 = vmatprep.subr.bf16.mxu0 0
  %494 = vmatpush1.bf16.xpose.msra.mxu0 0
  %495 = vmatprep.subr.bf16.mxu0 0
  %496 = vmatpush1.bf16.xpose.msra.mxu0 0
  %497 = vmatprep.subr.bf16.mxu0 0
  %498 = vmatpush1.bf16.xpose.msra.mxu0 0
  %499 = vmatprep.subr.bf16.mxu0 0
  %500 = vmatpush1.bf16.xpose.msra.mxu0 0
  %501 = vmatprep.subr.bf16.mxu0 0
  %502 = vmatpush1.bf16.xpose.msra.mxu0 0
  %503 = vmatprep.subr.bf16.mxu0 0
  %504 = vmatpush1.bf16.xpose.msra.mxu0 0
  %505 = vmatprep.subr.bf16.mxu0 0
  %506 = vmatpush1.bf16.xpose.msra.mxu0 0
  %507 = vmatprep.subr.bf16.mxu0 0
  %508 = vmatpush1.bf16.xpose.msra.mxu0 0
  %509 = vmatprep.subr.bf16.mxu0 0
  %510 = vmatpush1.bf16.xpose.msra.mxu0 0
  %511 = vmatprep.mubr.bf16.mxu0 0
  %512 = vmatmul.mubr.bf16.gmra.mrb[0].mxu0 %v474
  %v513 = vpop.f32.mrb[0].mxu0
  %v514 = vadd.f32 0.0, %v513
  %v515 = vpop.f32.mrb[0].mxu0
  %v516 = vpop.f32.mrb[0].mxu0
  %v517 = vpop.f32.mrb[0].mxu0
  %518 = vdwg.mxu0
  %520 = vrot.lane.b32.xlu0 %v174, 96
  %v521 = vpop.permute.xlu0 %520
  %v523 = vsel %vm178, %v166, 0
  %v526 = vsel %vm178, %v521, 0
  %528 = vmatprep.subr.bf16.mxu0 0
  %529 = vmatpush1.bf16.xpose.msra.mxu0 %v526
  %530 = vmatprep.subr.bf16.mxu0 0
  %531 = vmatpush1.bf16.xpose.msra.mxu0 0
  %532 = vmatprep.subr.bf16.mxu0 0
  %533 = vmatpush1.bf16.xpose.msra.mxu0 0
  %534 = vmatprep.subr.bf16.mxu0 0
  %535 = vmatpush1.bf16.xpose.msra.mxu0 0
  %536 = vmatprep.subr.bf16.mxu0 0
  %537 = vmatpush1.bf16.xpose.msra.mxu0 0
  %538 = vmatprep.subr.bf16.mxu0 0
  %539 = vmatpush1.bf16.xpose.msra.mxu0 0
  %540 = vmatprep.subr.bf16.mxu0 0
  %541 = vmatpush1.bf16.xpose.msra.mxu0 0
  %542 = vmatprep.subr.bf16.mxu0 0
  %543 = vmatpush1.bf16.xpose.msra.mxu0 0
  %544 = vmatprep.subr.bf16.mxu0 0
  %545 = vmatpush1.bf16.xpose.msra.mxu0 0
  %546 = vmatprep.subr.bf16.mxu0 0
  %547 = vmatpush1.bf16.xpose.msra.mxu0 0
  %548 = vmatprep.subr.bf16.mxu0 0
  %549 = vmatpush1.bf16.xpose.msra.mxu0 0
  %550 = vmatprep.subr.bf16.mxu0 0
  %551 = vmatpush1.bf16.xpose.msra.mxu0 0
  %552 = vmatprep.subr.bf16.mxu0 0
  %553 = vmatpush1.bf16.xpose.msra.mxu0 0
  %554 = vmatprep.subr.bf16.mxu0 0
  %555 = vmatpush1.bf16.xpose.msra.mxu0 0
  %556 = vmatprep.subr.bf16.mxu0 0
  %557 = vmatpush1.bf16.xpose.msra.mxu0 0
  %558 = vmatprep.subr.bf16.mxu0 0
  %559 = vmatpush1.bf16.xpose.msra.mxu0 0
  %560 = vmatprep.mubr.bf16.mxu0 0
  %561 = vmatmul.mubr.bf16.gmra.mrb[0].mxu0 %v523
  %v562 = vpop.f32.mrb[0].mxu0
  %v563 = vadd.f32 0.0, %v562
  %v564 = vpop.f32.mrb[0].mxu0
  %v565 = vpop.f32.mrb[0].mxu0
  %v566 = vpop.f32.mrb[0].mxu0
  %567 = vdwg.mxu0
  %v568 = vld [vmem:[%s7] sm:$0xf]
  %v569 = vld [vmem:[%s7 + $0x4] sm:$0xf]
  %v570 = vld [vmem:[%s7 + $0x8] sm:$0xf]
  %v571 = vld [vmem:[%s7 + $0xc] sm:$0xf]
  %v572 = vadd.f32 %v220, %v568
  %v573 = vadd.f32 %v269, %v568
  %v574 = vadd.f32 %v318, %v569
  %v575 = vadd.f32 %v367, %v569
  %v576 = vadd.f32 %v416, %v570
  %v577 = vadd.f32 %v465, %v570
  %v578 = vadd.f32 %v514, %v571
  %v579 = vadd.f32 %v563, %v571
  %vm580 = vcmask 27648
  %v581 = vsel %vm580, %v572, -inf
  %582 = vmax.xlane.f32.xlu0 %v581
  %v583 = vpop.xlane.xlu0 %582
  %v584 = vsel %vm580, %v573, -inf
  %585 = vmax.xlane.f32.xlu0 %v584
  %v586 = vpop.xlane.xlu0 %585
  %v587 = vsel %vm580, %v574, -inf
  %588 = vmax.xlane.f32.xlu0 %v587
  %v589 = vpop.xlane.xlu0 %588
  %v590 = vsel %vm580, %v575, -inf
  %591 = vmax.xlane.f32.xlu0 %v590
  %v592 = vpop.xlane.xlu0 %591
  %v593 = vsel %vm580, %v576, -inf
  %594 = vmax.xlane.f32.xlu0 %v593
  %v595 = vpop.xlane.xlu0 %594
  %v596 = vsel %vm580, %v577, -inf
  %597 = vmax.xlane.f32.xlu0 %v596
  %v598 = vpop.xlane.xlu0 %597
  %v599 = vsel %vm580, %v578, -inf
  %600 = vmax.xlane.f32.xlu0 %v599
  %v601 = vpop.xlane.xlu0 %600
  %v602 = vsel %vm580, %v579, -inf
  %603 = vmax.xlane.f32.xlu0 %v602
  %v604 = vpop.xlane.xlu0 %603
  %v605 = vsub.f32 %v572, %v583
  %v606 = vsub.f32 %v573, %v586
  %v607 = vsub.f32 %v574, %v589
  %v608 = vsub.f32 %v575, %v592
  %v609 = vsub.f32 %v576, %v595
  %v610 = vsub.f32 %v577, %v598
  %v611 = vsub.f32 %v578, %v601
  %v612 = vsub.f32 %v579, %v604
  %v613 = vmul.f32 %v605, 1.442695
  %v614 = vpow.pop %v613
  %v615 = vmul.f32 %v606, 1.442695
  %v616 = vpow.pop %v615
  %v617 = vmul.f32 %v607, 1.442695
  %v618 = vpow.pop %v617
  %v619 = vmul.f32 %v608, 1.442695
  %v620 = vpow.pop %v619
  %v621 = vmul.f32 %v609, 1.442695
  %v622 = vpow.pop %v621
  %v623 = vmul.f32 %v610, 1.442695
  %v624 = vpow.pop %v623
  %v625 = vmul.f32 %v611, 1.442695
  %v626 = vpow.pop %v625
  %v627 = vmul.f32 %v612, 1.442695
  %v628 = vpow.pop %v627
  %v629 = vsel %vm580, %v614, 0.0
  %630 = vadd.xlane.f32.xlu0 %v629
  %v631 = vpop.xlane.xlu0 %630
  %v632 = vsel %vm580, %v616, 0.0
  %633 = vadd.xlane.f32.xlu0 %v632
  %v634 = vpop.xlane.xlu0 %633
  %v635 = vsel %vm580, %v618, 0.0
  %636 = vadd.xlane.f32.xlu0 %v635
  %v637 = vpop.xlane.xlu0 %636
  %v638 = vsel %vm580, %v620, 0.0
  %639 = vadd.xlane.f32.xlu0 %v638
  %v640 = vpop.xlane.xlu0 %639
  %v641 = vsel %vm580, %v622, 0.0
  %642 = vadd.xlane.f32.xlu0 %v641
  %v643 = vpop.xlane.xlu0 %642
  %v644 = vsel %vm580, %v624, 0.0
  %645 = vadd.xlane.f32.xlu0 %v644
  %v646 = vpop.xlane.xlu0 %645
  %v647 = vsel %vm580, %v626, 0.0
  %648 = vadd.xlane.f32.xlu0 %v647
  %v649 = vpop.xlane.xlu0 %648
  %v650 = vsel %vm580, %v628, 0.0
  %651 = vadd.xlane.f32.xlu0 %v650
  %v652 = vpop.xlane.xlu0 %651
  %v653 = vrcp.pop %v631
  %v654 = vrcp.pop %v634
  %v655 = vrcp.pop %v637
  %v656 = vrcp.pop %v640
  %v657 = vrcp.pop %v643
  %v658 = vrcp.pop %v646
  %v659 = vrcp.pop %v649
  %v660 = vrcp.pop %v652
  %v661 = vmul.f32 %v614, %v653
  %v662 = vmul.f32 %v616, %v654
  %v663 = vmul.f32 %v618, %v655
  %v664 = vmul.f32 %v620, %v656
  %v665 = vmul.f32 %v622, %v657
  %v666 = vmul.f32 %v624, %v658
  %v667 = vmul.f32 %v626, %v659
  %v668 = vmul.f32 %v628, %v660
  %v669 = vpack.c.bf16 %v661, %v661
  %v670 = vpack.c.bf16 %v662, %v662
  %v671 = vpack.c.bf16 %v663, %v663
  %v672 = vpack.c.bf16 %v664, %v664
  %v673 = vpack.c.bf16 %v665, %v665
  %v674 = vpack.c.bf16 %v666, %v666
  %v675 = vpack.c.bf16 %v667, %v667
  %v676 = vpack.c.bf16 %v668, %v668
  %677 = vrot.lane.b32.xlu0 %v167, 64
  %v678 = vpop.permute.xlu0 %677
  %vm679 = vcmask 31744
  %v681 = vsel %vm679, %v669, 0
  %vm683 = vcmask 1041408
  %v685 = vsel %vm683, %v678, 0
  %687 = vmatprep.subr.bf16.mxu0 0
  %688 = vmatpush1.bf16.msra.mxu0 %v685
  %689 = vmatprep.subr.bf16.mxu0 0
  %690 = vmatpush1.bf16.msra.mxu0 0
  %691 = vmatprep.subr.bf16.mxu0 0
  %692 = vmatpush1.bf16.msra.mxu0 0
  %693 = vmatprep.subr.bf16.mxu0 0
  %694 = vmatpush1.bf16.msra.mxu0 0
  %695 = vmatprep.subr.bf16.mxu0 0
  %696 = vmatpush1.bf16.msra.mxu0 0
  %697 = vmatprep.subr.bf16.mxu0 0
  %698 = vmatpush1.bf16.msra.mxu0 0
  %699 = vmatprep.subr.bf16.mxu0 0
  %700 = vmatpush1.bf16.msra.mxu0 0
  %701 = vmatprep.subr.bf16.mxu0 0
  %702 = vmatpush1.bf16.msra.mxu0 0
  %703 = vmatprep.subr.bf16.mxu0 0
  %704 = vmatpush1.bf16.msra.mxu0 0
  %705 = vmatprep.subr.bf16.mxu0 0
  %706 = vmatpush1.bf16.msra.mxu0 0
  %707 = vmatprep.subr.bf16.mxu0 0
  %708 = vmatpush1.bf16.msra.mxu0 0
  %709 = vmatprep.subr.bf16.mxu0 0
  %710 = vmatpush1.bf16.msra.mxu0 0
  %711 = vmatprep.subr.bf16.mxu0 0
  %712 = vmatpush1.bf16.msra.mxu0 0
  %713 = vmatprep.subr.bf16.mxu0 0
  %714 = vmatpush1.bf16.msra.mxu0 0
  %715 = vmatprep.subr.bf16.mxu0 0
  %716 = vmatpush1.bf16.msra.mxu0 0
  %717 = vmatprep.subr.bf16.mxu0 0
  %718 = vmatpush1.bf16.msra.mxu0 0
  %719 = vmatprep.mubr.bf16.mxu0 0
  %720 = vmatmul.mubr.bf16.gmra.mrb[0].mxu0 %v681
  %v721 = vpop.f32.mrb[0].mxu0
  %v722 = vadd.f32 0.0, %v721
  %v723 = vpop.f32.mrb[0].mxu0
  %v724 = vpop.f32.mrb[0].mxu0
  %v725 = vpop.f32.mrb[0].mxu0
  %726 = vdwg.mxu0
  %727 = vrot.lane.b32.xlu0 %v168, 64
  %v728 = vpop.permute.xlu0 %727
  %v730 = vsel %vm679, %v670, 0
  %v733 = vsel %vm683, %v728, 0
  %735 = vmatprep.subr.bf16.mxu0 0
  %736 = vmatpush1.bf16.msra.mxu0 %v733
  %737 = vmatprep.subr.bf16.mxu0 0
  %738 = vmatpush1.bf16.msra.mxu0 0
  %739 = vmatprep.subr.bf16.mxu0 0
  %740 = vmatpush1.bf16.msra.mxu0 0
  %741 = vmatprep.subr.bf16.mxu0 0
  %742 = vmatpush1.bf16.msra.mxu0 0
  %743 = vmatprep.subr.bf16.mxu0 0
  %744 = vmatpush1.bf16.msra.mxu0 0
  %745 = vmatprep.subr.bf16.mxu0 0
  %746 = vmatpush1.bf16.msra.mxu0 0
  %747 = vmatprep.subr.bf16.mxu0 0
  %748 = vmatpush1.bf16.msra.mxu0 0
  %749 = vmatprep.subr.bf16.mxu0 0
  %750 = vmatpush1.bf16.msra.mxu0 0
  %751 = vmatprep.subr.bf16.mxu0 0
  %752 = vmatpush1.bf16.msra.mxu0 0
  %753 = vmatprep.subr.bf16.mxu0 0
  %754 = vmatpush1.bf16.msra.mxu0 0
  %755 = vmatprep.subr.bf16.mxu0 0
  %756 = vmatpush1.bf16.msra.mxu0 0
  %757 = vmatprep.subr.bf16.mxu0 0
  %758 = vmatpush1.bf16.msra.mxu0 0
  %759 = vmatprep.subr.bf16.mxu0 0
  %760 = vmatpush1.bf16.msra.mxu0 0
  %761 = vmatprep.subr.bf16.mxu0 0
  %762 = vmatpush1.bf16.msra.mxu0 0
  %763 = vmatprep.subr.bf16.mxu0 0
  %764 = vmatpush1.bf16.msra.mxu0 0
  %765 = vmatprep.subr.bf16.mxu0 0
  %766 = vmatpush1.bf16.msra.mxu0 0
  %767 = vmatprep.mubr.bf16.mxu0 0
  %768 = vmatmul.mubr.bf16.gmra.mrb[0].mxu0 %v730
  %v769 = vpop.f32.mrb[0].mxu0
  %v770 = vadd.f32 0.0, %v769
  %v771 = vpop.f32.mrb[0].mxu0
  %v772 = vpop.f32.mrb[0].mxu0
  %v773 = vpop.f32.mrb[0].mxu0
  %774 = vdwg.mxu0
  %775 = vrot.lane.b32.xlu0 %v169, 64
  %v776 = vpop.permute.xlu0 %775
  %v778 = vsel %vm679, %v671, 0
  %v781 = vsel %vm683, %v776, 0
  %783 = vmatprep.subr.bf16.mxu0 0
  %784 = vmatpush1.bf16.msra.mxu0 %v781
  %785 = vmatprep.subr.bf16.mxu0 0
  %786 = vmatpush1.bf16.msra.mxu0 0
  %787 = vmatprep.subr.bf16.mxu0 0
  %788 = vmatpush1.bf16.msra.mxu0 0
  %789 = vmatprep.subr.bf16.mxu0 0
  %790 = vmatpush1.bf16.msra.mxu0 0
  %791 = vmatprep.subr.bf16.mxu0 0
  %792 = vmatpush1.bf16.msra.mxu0 0
  %793 = vmatprep.subr.bf16.mxu0 0
  %794 = vmatpush1.bf16.msra.mxu0 0
  %795 = vmatprep.subr.bf16.mxu0 0
  %796 = vmatpush1.bf16.msra.mxu0 0
  %797 = vmatprep.subr.bf16.mxu0 0
  %798 = vmatpush1.bf16.msra.mxu0 0
  %799 = vmatprep.subr.bf16.mxu0 0
  %800 = vmatpush1.bf16.msra.mxu0 0
  %801 = vmatprep.subr.bf16.mxu0 0
  %802 = vmatpush1.bf16.msra.mxu0 0
  %803 = vmatprep.subr.bf16.mxu0 0
  %804 = vmatpush1.bf16.msra.mxu0 0
  %805 = vmatprep.subr.bf16.mxu0 0
  %806 = vmatpush1.bf16.msra.mxu0 0
  %807 = vmatprep.subr.bf16.mxu0 0
  %808 = vmatpush1.bf16.msra.mxu0 0
  %809 = vmatprep.subr.bf16.mxu0 0
  %810 = vmatpush1.bf16.msra.mxu0 0
  %811 = vmatprep.subr.bf16.mxu0 0
  %812 = vmatpush1.bf16.msra.mxu0 0
  %813 = vmatprep.subr.bf16.mxu0 0
  %814 = vmatpush1.bf16.msra.mxu0 0
  %815 = vmatprep.mubr.bf16.mxu0 0
  %816 = vmatmul.mubr.bf16.gmra.mrb[0].mxu0 %v778
  %v817 = vpop.f32.mrb[0].mxu0
  %v818 = vadd.f32 0.0, %v817
  %v819 = vpop.f32.mrb[0].mxu0
  %v820 = vpop.f32.mrb[0].mxu0
  %v821 = vpop.f32.mrb[0].mxu0
  %822 = vdwg.mxu0
  %823 = vrot.lane.b32.xlu0 %v170, 64
  %v824 = vpop.permute.xlu0 %823
  %v826 = vsel %vm679, %v672, 0
  %v829 = vsel %vm683, %v824, 0
  %831 = vmatprep.subr.bf16.mxu0 0
  %832 = vmatpush1.bf16.msra.mxu0 %v829
  %833 = vmatprep.subr.bf16.mxu0 0
  %834 = vmatpush1.bf16.msra.mxu0 0
  %835 = vmatprep.subr.bf16.mxu0 0
  %836 = vmatpush1.bf16.msra.mxu0 0
  %837 = vmatprep.subr.bf16.mxu0 0
  %838 = vmatpush1.bf16.msra.mxu0 0
  %839 = vmatprep.subr.bf16.mxu0 0
  %840 = vmatpush1.bf16.msra.mxu0 0
  %841 = vmatprep.subr.bf16.mxu0 0
  %842 = vmatpush1.bf16.msra.mxu0 0
  %843 = vmatprep.subr.bf16.mxu0 0
  %844 = vmatpush1.bf16.msra.mxu0 0
  %845 = vmatprep.subr.bf16.mxu0 0
  %846 = vmatpush1.bf16.msra.mxu0 0
  %847 = vmatprep.subr.bf16.mxu0 0
  %848 = vmatpush1.bf16.msra.mxu0 0
  %849 = vmatprep.subr.bf16.mxu0 0
  %850 = vmatpush1.bf16.msra.mxu0 0
  %851 = vmatprep.subr.bf16.mxu0 0
  %852 = vmatpush1.bf16.msra.mxu0 0
  %853 = vmatprep.subr.bf16.mxu0 0
  %854 = vmatpush1.bf16.msra.mxu0 0
  %855 = vmatprep.subr.bf16.mxu0 0
  %856 = vmatpush1.bf16.msra.mxu0 0
  %857 = vmatprep.subr.bf16.mxu0 0
  %858 = vmatpush1.bf16.msra.mxu0 0
  %859 = vmatprep.subr.bf16.mxu0 0
  %860 = vmatpush1.bf16.msra.mxu0 0
  %861 = vmatprep.subr.bf16.mxu0 0
  %862 = vmatpush1.bf16.msra.mxu0 0
  %863 = vmatprep.mubr.bf16.mxu0 0
  %864 = vmatmul.mubr.bf16.gmra.mrb[0].mxu0 %v826
  %v865 = vpop.f32.mrb[0].mxu0
  %v866 = vadd.f32 0.0, %v865
  %v867 = vpop.f32.mrb[0].mxu0
  %v868 = vpop.f32.mrb[0].mxu0
  %v869 = vpop.f32.mrb[0].mxu0
  %870 = vdwg.mxu0
  %871 = vrot.lane.b32.xlu0 %v171, 64
  %v872 = vpop.permute.xlu0 %871
  %v874 = vsel %vm679, %v673, 0
  %v877 = vsel %vm683, %v872, 0
  %879 = vmatprep.subr.bf16.mxu0 0
  %880 = vmatpush1.bf16.msra.mxu0 %v877
  %881 = vmatprep.subr.bf16.mxu0 0
  %882 = vmatpush1.bf16.msra.mxu0 0
  %883 = vmatprep.subr.bf16.mxu0 0
  %884 = vmatpush1.bf16.msra.mxu0 0
  %885 = vmatprep.subr.bf16.mxu0 0
  %886 = vmatpush1.bf16.msra.mxu0 0
  %887 = vmatprep.subr.bf16.mxu0 0
  %888 = vmatpush1.bf16.msra.mxu0 0
  %889 = vmatprep.subr.bf16.mxu0 0
  %890 = vmatpush1.bf16.msra.mxu0 0
  %891 = vmatprep.subr.bf16.mxu0 0
  %892 = vmatpush1.bf16.msra.mxu0 0
  %893 = vmatprep.subr.bf16.mxu0 0
  %894 = vmatpush1.bf16.msra.mxu0 0
  %895 = vmatprep.subr.bf16.mxu0 0
  %896 = vmatpush1.bf16.msra.mxu0 0
  %897 = vmatprep.subr.bf16.mxu0 0
  %898 = vmatpush1.bf16.msra.mxu0 0
  %899 = vmatprep.subr.bf16.mxu0 0
  %900 = vmatpush1.bf16.msra.mxu0 0
  %901 = vmatprep.subr.bf16.mxu0 0
  %902 = vmatpush1.bf16.msra.mxu0 0
  %903 = vmatprep.subr.bf16.mxu0 0
  %904 = vmatpush1.bf16.msra.mxu0 0
  %905 = vmatprep.subr.bf16.mxu0 0
  %906 = vmatpush1.bf16.msra.mxu0 0
  %907 = vmatprep.subr.bf16.mxu0 0
  %908 = vmatpush1.bf16.msra.mxu0 0
  %909 = vmatprep.subr.bf16.mxu0 0
  %910 = vmatpush1.bf16.msra.mxu0 0
  %911 = vmatprep.mubr.bf16.mxu0 0
  %912 = vmatmul.mubr.bf16.gmra.mrb[0].mxu0 %v874
  %v913 = vpop.f32.mrb[0].mxu0
  %v914 = vadd.f32 0.0, %v913
  %v915 = vpop.f32.mrb[0].mxu0
  %v916 = vpop.f32.mrb[0].mxu0
  %v917 = vpop.f32.mrb[0].mxu0
  %918 = vdwg.mxu0
  %919 = vrot.lane.b32.xlu0 %v172, 64
  %v920 = vpop.permute.xlu0 %919
  %v922 = vsel %vm679, %v674, 0
  %v925 = vsel %vm683, %v920, 0
  %927 = vmatprep.subr.bf16.mxu0 0
  %928 = vmatpush1.bf16.msra.mxu0 %v925
  %929 = vmatprep.subr.bf16.mxu0 0
  %930 = vmatpush1.bf16.msra.mxu0 0
  %931 = vmatprep.subr.bf16.mxu0 0
  %932 = vmatpush1.bf16.msra.mxu0 0
  %933 = vmatprep.subr.bf16.mxu0 0
  %934 = vmatpush1.bf16.msra.mxu0 0
  %935 = vmatprep.subr.bf16.mxu0 0
  %936 = vmatpush1.bf16.msra.mxu0 0
  %937 = vmatprep.subr.bf16.mxu0 0
  %938 = vmatpush1.bf16.msra.mxu0 0
  %939 = vmatprep.subr.bf16.mxu0 0
  %940 = vmatpush1.bf16.msra.mxu0 0
  %941 = vmatprep.subr.bf16.mxu0 0
  %942 = vmatpush1.bf16.msra.mxu0 0
  %943 = vmatprep.subr.bf16.mxu0 0
  %944 = vmatpush1.bf16.msra.mxu0 0
  %945 = vmatprep.subr.bf16.mxu0 0
  %946 = vmatpush1.bf16.msra.mxu0 0
  %947 = vmatprep.subr.bf16.mxu0 0
  %948 = vmatpush1.bf16.msra.mxu0 0
  %949 = vmatprep.subr.bf16.mxu0 0
  %950 = vmatpush1.bf16.msra.mxu0 0
  %951 = vmatprep.subr.bf16.mxu0 0
  %952 = vmatpush1.bf16.msra.mxu0 0
  %953 = vmatprep.subr.bf16.mxu0 0
  %954 = vmatpush1.bf16.msra.mxu0 0
  %955 = vmatprep.subr.bf16.mxu0 0
  %956 = vmatpush1.bf16.msra.mxu0 0
  %957 = vmatprep.subr.bf16.mxu0 0
  %958 = vmatpush1.bf16.msra.mxu0 0
  %959 = vmatprep.mubr.bf16.mxu0 0
  %960 = vmatmul.mubr.bf16.gmra.mrb[0].mxu0 %v922
  %v961 = vpop.f32.mrb[0].mxu0
  %v962 = vadd.f32 0.0, %v961
  %v963 = vpop.f32.mrb[0].mxu0
  %v964 = vpop.f32.mrb[0].mxu0
  %v965 = vpop.f32.mrb[0].mxu0
  %966 = vdwg.mxu0
  %967 = vrot.lane.b32.xlu0 %v173, 64
  %v968 = vpop.permute.xlu0 %967
  %v970 = vsel %vm679, %v675, 0
  %v973 = vsel %vm683, %v968, 0
  %975 = vmatprep.subr.bf16.mxu0 0
  %976 = vmatpush1.bf16.msra.mxu0 %v973
  %977 = vmatprep.subr.bf16.mxu0 0
  %978 = vmatpush1.bf16.msra.mxu0 0
  %979 = vmatprep.subr.bf16.mxu0 0
  %980 = vmatpush1.bf16.msra.mxu0 0
  %981 = vmatprep.subr.bf16.mxu0 0
  %982 = vmatpush1.bf16.msra.mxu0 0
  %983 = vmatprep.subr.bf16.mxu0 0
  %984 = vmatpush1.bf16.msra.mxu0 0
  %985 = vmatprep.subr.bf16.mxu0 0
  %986 = vmatpush1.bf16.msra.mxu0 0
  %987 = vmatprep.subr.bf16.mxu0 0
  %988 = vmatpush1.bf16.msra.mxu0 0
  %989 = vmatprep.subr.bf16.mxu0 0
  %990 = vmatpush1.bf16.msra.mxu0 0
  %991 = vmatprep.subr.bf16.mxu0 0
  %992 = vmatpush1.bf16.msra.mxu0 0
  %993 = vmatprep.subr.bf16.mxu0 0
  %994 = vmatpush1.bf16.msra.mxu0 0
  %995 = vmatprep.subr.bf16.mxu0 0
  %996 = vmatpush1.bf16.msra.mxu0 0
  %997 = vmatprep.subr.bf16.mxu0 0
  %998 = vmatpush1.bf16.msra.mxu0 0
  %999 = vmatprep.subr.bf16.mxu0 0
  %1000 = vmatpush1.bf16.msra.mxu0 0
  %1001 = vmatprep.subr.bf16.mxu0 0
  %1002 = vmatpush1.bf16.msra.mxu0 0
  %1003 = vmatprep.subr.bf16.mxu0 0
  %1004 = vmatpush1.bf16.msra.mxu0 0
  %1005 = vmatprep.subr.bf16.mxu0 0
  %1006 = vmatpush1.bf16.msra.mxu0 0
  %1007 = vmatprep.mubr.bf16.mxu0 0
  %1008 = vmatmul.mubr.bf16.gmra.mrb[0].mxu0 %v970
  %v1009 = vpop.f32.mrb[0].mxu0
  %v1010 = vadd.f32 0.0, %v1009
  %v1011 = vpop.f32.mrb[0].mxu0
  %v1012 = vpop.f32.mrb[0].mxu0
  %v1013 = vpop.f32.mrb[0].mxu0
  %1014 = vdwg.mxu0
  %1015 = vrot.lane.b32.xlu0 %v174, 64
  %v1016 = vpop.permute.xlu0 %1015
  %v1018 = vsel %vm679, %v676, 0
  %v1021 = vsel %vm683, %v1016, 0
  %1023 = vmatprep.subr.bf16.mxu0 0
  %1024 = vmatpush1.bf16.msra.mxu0 %v1021
  %1025 = vmatprep.subr.bf16.mxu0 0
  %1026 = vmatpush1.bf16.msra.mxu0 0
  %1027 = vmatprep.subr.bf16.mxu0 0
  %1028 = vmatpush1.bf16.msra.mxu0 0
  %1029 = vmatprep.subr.bf16.mxu0 0
  %1030 = vmatpush1.bf16.msra.mxu0 0
  %1031 = vmatprep.subr.bf16.mxu0 0
  %1032 = vmatpush1.bf16.msra.mxu0 0
  %1033 = vmatprep.subr.bf16.mxu0 0
  %1034 = vmatpush1.bf16.msra.mxu0 0
  %1035 = vmatprep.subr.bf16.mxu0 0
  %1036 = vmatpush1.bf16.msra.mxu0 0
  %1037 = vmatprep.subr.bf16.mxu0 0
  %1038 = vmatpush1.bf16.msra.mxu0 0
  %1039 = vmatprep.subr.bf16.mxu0 0
  %1040 = vmatpush1.bf16.msra.mxu0 0
  %1041 = vmatprep.subr.bf16.mxu0 0
  %1042 = vmatpush1.bf16.msra.mxu0 0
  %1043 = vmatprep.subr.bf16.mxu0 0
  %1044 = vmatpush1.bf16.msra.mxu0 0
  %1045 = vmatprep.subr.bf16.mxu0 0
  %1046 = vmatpush1.bf16.msra.mxu0 0
  %1047 = vmatprep.subr.bf16.mxu0 0
  %1048 = vmatpush1.bf16.msra.mxu0 0
  %1049 = vmatprep.subr.bf16.mxu0 0
  %1050 = vmatpush1.bf16.msra.mxu0 0
  %1051 = vmatprep.subr.bf16.mxu0 0
  %1052 = vmatpush1.bf16.msra.mxu0 0
  %1053 = vmatprep.subr.bf16.mxu0 0
  %1054 = vmatpush1.bf16.msra.mxu0 0
  %1055 = vmatprep.mubr.bf16.mxu0 0
  %1056 = vmatmul.mubr.bf16.gmra.mrb[0].mxu0 %v1018
  %v1057 = vpop.f32.mrb[0].mxu0
  %v1058 = vadd.f32 0.0, %v1057
  %v1059 = vpop.f32.mrb[0].mxu0
  %v1060 = vpop.f32.mrb[0].mxu0
  %v1061 = vpop.f32.mrb[0].mxu0
  %1062 = vdwg.mxu0
  %v1071 = vcombine.low %v722, %v770
  %v1072 = vcombine.low %v818, %v866
  %v1073 = vcombine.low %v914, %v962
  %v1074 = vcombine.low %v1010, %v1058
  %v1079 = vpack.c.bf16 %v1071, %v1071
  %v1080 = vpack.c.bf16 %v1072, %v1072
  %v1081 = vpack.c.bf16 %v1073, %v1073
  %v1082 = vpack.c.bf16 %v1074, %v1074
  %v1083 = vld [vmem:[%s5] sm:$0xf]
  %v1084 = vld [vmem:[%s5 + $0x4] sm:$0xf]
  %v1085 = vld [vmem:[%s5 + $0x8] sm:$0xf]
  %v1086 = vld [vmem:[%s5 + $0xc] sm:$0xf]
  %v1088 = vsel %vm178, %v1079, 0
  %vm1090 = vcmask 1043456
  %v1092 = vsel %vm1090, %v1083, 0
  %1094 = vmatprep.subr.bf16.mxu0 0
  %1095 = vmatpush1.bf16.msra.mxu0 %v1092
  %1096 = vmatprep.subr.bf16.mxu0 0
  %1097 = vmatpush1.bf16.msra.mxu0 0
  %1098 = vmatprep.subr.bf16.mxu0 0
  %1099 = vmatpush1.bf16.msra.mxu0 0
  %1100 = vmatprep.subr.bf16.mxu0 0
  %1101 = vmatpush1.bf16.msra.mxu0 0
  %1102 = vmatprep.subr.bf16.mxu0 0
  %1103 = vmatpush1.bf16.msra.mxu0 0
  %1104 = vmatprep.subr.bf16.mxu0 0
  %1105 = vmatpush1.bf16.msra.mxu0 0
  %1106 = vmatprep.subr.bf16.mxu0 0
  %1107 = vmatpush1.bf16.msra.mxu0 0
  %1108 = vmatprep.subr.bf16.mxu0 0
  %1109 = vmatpush1.bf16.msra.mxu0 0
  %1110 = vmatprep.subr.bf16.mxu0 0
  %1111 = vmatpush1.bf16.msra.mxu0 0
  %1112 = vmatprep.subr.bf16.mxu0 0
  %1113 = vmatpush1.bf16.msra.mxu0 0
  %1114 = vmatprep.subr.bf16.mxu0 0
  %1115 = vmatpush1.bf16.msra.mxu0 0
  %1116 = vmatprep.subr.bf16.mxu0 0
  %1117 = vmatpush1.bf16.msra.mxu0 0
  %1118 = vmatprep.subr.bf16.mxu0 0
  %1119 = vmatpush1.bf16.msra.mxu0 0
  %1120 = vmatprep.subr.bf16.mxu0 0
  %1121 = vmatpush1.bf16.msra.mxu0 0
  %1122 = vmatprep.subr.bf16.mxu0 0
  %1123 = vmatpush1.bf16.msra.mxu0 0
  %1124 = vmatprep.subr.bf16.mxu0 0
  %1125 = vmatpush1.bf16.msra.mxu0 0
  %1126 = vmatprep.mubr.bf16.mxu0 0
  %1127 = vmatmul.mubr.bf16.gmra.mrb[0].mxu0 %v1088
  %v1128 = vpop.f32.mrb[0].mxu0
  %v1129 = vadd.f32 0.0, %v1128
  %v1130 = vpop.f32.mrb[0].mxu0
  %v1131 = vpop.f32.mrb[0].mxu0
  %v1132 = vpop.f32.mrb[0].mxu0
  %1133 = vdwg.mxu0
  %v1135 = vsel %vm178, %v1080, 0
  %v1138 = vsel %vm1090, %v1084, 0
  %1140 = vmatprep.subr.bf16.mxu0 0
  %1141 = vmatpush1.bf16.msra.mxu0 %v1138
  %1142 = vmatprep.subr.bf16.mxu0 0
  %1143 = vmatpush1.bf16.msra.mxu0 0
  %1144 = vmatprep.subr.bf16.mxu0 0
  %1145 = vmatpush1.bf16.msra.mxu0 0
  %1146 = vmatprep.subr.bf16.mxu0 0
  %1147 = vmatpush1.bf16.msra.mxu0 0
  %1148 = vmatprep.subr.bf16.mxu0 0
  %1149 = vmatpush1.bf16.msra.mxu0 0
  %1150 = vmatprep.subr.bf16.mxu0 0
  %1151 = vmatpush1.bf16.msra.mxu0 0
  %1152 = vmatprep.subr.bf16.mxu0 0
  %1153 = vmatpush1.bf16.msra.mxu0 0
  %1154 = vmatprep.subr.bf16.mxu0 0
  %1155 = vmatpush1.bf16.msra.mxu0 0
  %1156 = vmatprep.subr.bf16.mxu0 0
  %1157 = vmatpush1.bf16.msra.mxu0 0
  %1158 = vmatprep.subr.bf16.mxu0 0
  %1159 = vmatpush1.bf16.msra.mxu0 0
  %1160 = vmatprep.subr.bf16.mxu0 0
  %1161 = vmatpush1.bf16.msra.mxu0 0
  %1162 = vmatprep.subr.bf16.mxu0 0
  %1163 = vmatpush1.bf16.msra.mxu0 0
  %1164 = vmatprep.subr.bf16.mxu0 0
  %1165 = vmatpush1.bf16.msra.mxu0 0
  %1166 = vmatprep.subr.bf16.mxu0 0
  %1167 = vmatpush1.bf16.msra.mxu0 0
  %1168 = vmatprep.subr.bf16.mxu0 0
  %1169 = vmatpush1.bf16.msra.mxu0 0
  %1170 = vmatprep.subr.bf16.mxu0 0
  %1171 = vmatpush1.bf16.msra.mxu0 0
  %1172 = vmatprep.mubr.bf16.mxu0 0
  %1173 = vmatmul.mubr.bf16.gmra.mrb[0].mxu0 %v1135
  %v1174 = vpop.f32.mrb[0].mxu0
  %v1175 = vadd.f32 0.0, %v1174
  %v1176 = vpop.f32.mrb[0].mxu0
  %v1177 = vpop.f32.mrb[0].mxu0
  %v1178 = vpop.f32.mrb[0].mxu0
  %1179 = vdwg.mxu0
  %v1181 = vsel %vm178, %v1081, 0
  %v1184 = vsel %vm1090, %v1085, 0
  %1186 = vmatprep.subr.bf16.mxu0 0
  %1187 = vmatpush1.bf16.msra.mxu0 %v1184
  %1188 = vmatprep.subr.bf16.mxu0 0
  %1189 = vmatpush1.bf16.msra.mxu0 0
  %1190 = vmatprep.subr.bf16.mxu0 0
  %1191 = vmatpush1.bf16.msra.mxu0 0
  %1192 = vmatprep.subr.bf16.mxu0 0
  %1193 = vmatpush1.bf16.msra.mxu0 0
  %1194 = vmatprep.subr.bf16.mxu0 0
  %1195 = vmatpush1.bf16.msra.mxu0 0
  %1196 = vmatprep.subr.bf16.mxu0 0
  %1197 = vmatpush1.bf16.msra.mxu0 0
  %1198 = vmatprep.subr.bf16.mxu0 0
  %1199 = vmatpush1.bf16.msra.mxu0 0
  %1200 = vmatprep.subr.bf16.mxu0 0
  %1201 = vmatpush1.bf16.msra.mxu0 0
  %1202 = vmatprep.subr.bf16.mxu0 0
  %1203 = vmatpush1.bf16.msra.mxu0 0
  %1204 = vmatprep.subr.bf16.mxu0 0
  %1205 = vmatpush1.bf16.msra.mxu0 0
  %1206 = vmatprep.subr.bf16.mxu0 0
  %1207 = vmatpush1.bf16.msra.mxu0 0
  %1208 = vmatprep.subr.bf16.mxu0 0
  %1209 = vmatpush1.bf16.msra.mxu0 0
  %1210 = vmatprep.subr.bf16.mxu0 0
  %1211 = vmatpush1.bf16.msra.mxu0 0
  %1212 = vmatprep.subr.bf16.mxu0 0
  %1213 = vmatpush1.bf16.msra.mxu0 0
  %1214 = vmatprep.subr.bf16.mxu0 0
  %1215 = vmatpush1.bf16.msra.mxu0 0
  %1216 = vmatprep.subr.bf16.mxu0 0
  %1217 = vmatpush1.bf16.msra.mxu0 0
  %1218 = vmatprep.mubr.bf16.mxu0 0
  %1219 = vmatmul.mubr.bf16.gmra.mrb[0].mxu0 %v1181
  %v1220 = vpop.f32.mrb[0].mxu0
  %v1221 = vadd.f32 0.0, %v1220
  %v1222 = vpop.f32.mrb[0].mxu0
  %v1223 = vpop.f32.mrb[0].mxu0
  %v1224 = vpop.f32.mrb[0].mxu0
  %1225 = vdwg.mxu0
  %v1227 = vsel %vm178, %v1082, 0
  %v1230 = vsel %vm1090, %v1086, 0
  %1232 = vmatprep.subr.bf16.mxu0 0
  %1233 = vmatpush1.bf16.msra.mxu0 %v1230
  %1234 = vmatprep.subr.bf16.mxu0 0
  %1235 = vmatpush1.bf16.msra.mxu0 0
  %1236 = vmatprep.subr.bf16.mxu0 0
  %1237 = vmatpush1.bf16.msra.mxu0 0
  %1238 = vmatprep.subr.bf16.mxu0 0
  %1239 = vmatpush1.bf16.msra.mxu0 0
  %1240 = vmatprep.subr.bf16.mxu0 0
  %1241 = vmatpush1.bf16.msra.mxu0 0
  %1242 = vmatprep.subr.bf16.mxu0 0
  %1243 = vmatpush1.bf16.msra.mxu0 0
  %1244 = vmatprep.subr.bf16.mxu0 0
  %1245 = vmatpush1.bf16.msra.mxu0 0
  %1246 = vmatprep.subr.bf16.mxu0 0
  %1247 = vmatpush1.bf16.msra.mxu0 0
  %1248 = vmatprep.subr.bf16.mxu0 0
  %1249 = vmatpush1.bf16.msra.mxu0 0
  %1250 = vmatprep.subr.bf16.mxu0 0
  %1251 = vmatpush1.bf16.msra.mxu0 0
  %1252 = vmatprep.subr.bf16.mxu0 0
  %1253 = vmatpush1.bf16.msra.mxu0 0
  %1254 = vmatprep.subr.bf16.mxu0 0
  %1255 = vmatpush1.bf16.msra.mxu0 0
  %1256 = vmatprep.subr.bf16.mxu0 0
  %1257 = vmatpush1.bf16.msra.mxu0 0
  %1258 = vmatprep.subr.bf16.mxu0 0
  %1259 = vmatpush1.bf16.msra.mxu0 0
  %1260 = vmatprep.subr.bf16.mxu0 0
  %1261 = vmatpush1.bf16.msra.mxu0 0
  %1262 = vmatprep.subr.bf16.mxu0 0
  %1263 = vmatpush1.bf16.msra.mxu0 0
  %1264 = vmatprep.mubr.bf16.mxu0 0
  %1265 = vmatmul.mubr.bf16.gmra.mrb[0].mxu0 %v1227
  %v1266 = vpop.f32.mrb[0].mxu0
  %v1267 = vadd.f32 0.0, %v1266
  %v1268 = vpop.f32.mrb[0].mxu0
  %v1269 = vpop.f32.mrb[0].mxu0
  %v1270 = vpop.f32.mrb[0].mxu0
  %1271 = vdwg.mxu0
  %v1272 = vsel %vm34, %v1129, 0.0
  %v1273 = vsel %vm34, %v1175, 0.0
  %v1274 = vadd.f32 %v1272, %v1273
  %v1275 = vsel %vm34, %v1221, 0.0
  %v1276 = vadd.f32 %v1274, %v1275
  %v1277 = vsel %vm34, %v1267, 0.0
  %v1278 = vadd.f32 %v1276, %v1277
  %v1279 = vld [vmem:[%s6] sm:$0x1]
  %v1281 = vlaneseq
  %v1282 = vshrl.u32 %v1281, 7
  %v1283 = vsub.s32 0, %v1282
  %v1284 = vrot.slane %v1279, %v1283
  %v1286 = vadd.f32 %v1278, %v1284
  %v1287 = vadd.f32 %v31, %v1286
  %v1288 = vpack.c.bf16 %v1287, %v1287
  %vm1289 = vcmask 257024
  %1290 = vst.msk [vmem:[%s8] sm:$0xf] %vm1289, %v1288
  // Predicated region
  $region34: #{_lambda_.17} parent=0 // pred_check
    _
  $region35: #{_lambda_.17} parent=0 // pred_check_branch
    %1292 = sbr.rel (0) target = $region37
  $region36: #{_lambda_.17} parent=0 // pred_region
    _
  $region37: #{_lambda_.17} parent=0 // pred_fallthru
    _
  // Predicated region
  $region38: #{_lambda_.17} parent=0 // pred_check
    _
  $region39: #{_lambda_.17} parent=0 // pred_check_branch
    %1294 = sbr.rel (0) target = $region41
  $region40: #{_lambda_.17} parent=0 // pred_region
    _
  $region41: #{_lambda_.17} parent=0 // pred_fallthru
    _

</llo_original>
